<compile_context>
chip_gen: v6e
topology: v6e:2x2x1
jax: 0.10.0
libtpu: 0.0.40
codegen_flags: <defaults>
</compile_context>

<pallas_src>
import functools

import jax
import jax.numpy as jnp
from jax.experimental import pallas as pl
from jax.experimental.pallas import tpu as pltpu


# ----------------------------------------------------------------------------
# Config (small, deterministic, consistent with Net3.__init__)
# ----------------------------------------------------------------------------
class C:
    WORD_EMBED_SIZE = 64
    HIDDEN_SIZE = 128
    FLAT_MLP_SIZE = 128
    FLAT_GLIMPSES = 1
    FLAT_OUT_SIZE = 128
    FRAME_FEAT_SIZE = 64
    CLIP_FEAT_SIZE = 64
    DROPOUT_R = 0.1  # eval mode -> identity


TOKEN_SIZE = 50
ANSWER_SIZE = 8

B = 2          # real batch
BATCH_PAD = 8  # batch padded to one f32 sublane block
T_Q = 8        # question length
S_FRAME = 8    # number of frame features
S_CLIP = 4     # number of clip features


# ----------------------------------------------------------------------------
# In-kernel helpers (traced inside the Pallas body; values only, 2-D ops)
# ----------------------------------------------------------------------------
def _mm(x, w):
    """MXU matmul: cast activation to the weight dtype (bf16), accumulate f32."""
    return jnp.dot(x.astype(w.dtype), w, preferred_element_type=jnp.float32)


def _lstm_cell(gx, h, c, whh):
    """One LSTM step. gx = x @ W_ih + b precomputed; PyTorch gate order."""
    hdim = whh.shape[0]
    gates = gx + _mm(h, whh)
    i = jax.nn.sigmoid(gates[:, 0 * hdim:1 * hdim])
    f = jax.nn.sigmoid(gates[:, 1 * hdim:2 * hdim])
    g = jnp.tanh(gates[:, 2 * hdim:3 * hdim])
    o = jax.nn.sigmoid(gates[:, 3 * hdim:4 * hdim])
    c_new = f * c + i * g
    h_new = o * jnp.tanh(c_new)
    return h_new, c_new


def _layer_norm(x, gamma, beta, eps=1e-6):
    mu = jnp.mean(x, axis=-1, keepdims=True)
    var = jnp.mean((x - mu) ** 2, axis=-1, keepdims=True)
    return (x - mu) * jax.lax.rsqrt(var + eps) * gamma + beta


def _att_flat(x_list, bias_tm, w_pack, vec_pack):
    """AttFlat (FLAT_GLIMPSES == 1) on a list of per-timestep (BP, H) values.

    bias_tm  : (S*BP, 1) f32 additive mask bias (-1e9 on padded positions)
    w_pack   : (H, FM + FO) bf16  -> [:, :FM] = fc_w, [:, FM:] = merge_w
    vec_pack : (3, 128) f32       -> rows: fc_b, mlp_w (glimpse vector), merge_b
               (assumes FLAT_MLP_SIZE == FLAT_OUT_SIZE == HIDDEN_SIZE == 128)
    """
    S = len(x_list)
    BP = x_list[0].shape[0]
    FM = vec_pack.shape[1]

    fc_w = w_pack[:, :FM]
    mg_w = w_pack[:, FM:]
    fc_b = vec_pack[0:1, :]
    mlp_w = vec_pack[1:2, :]
    mg_b = vec_pack[2:3, :]

    x_cat = jnp.concatenate(x_list, axis=0)                      # (S*BP, H)
    hmid = jnp.maximum(_mm(x_cat, fc_w) + fc_b, 0.0)             # (S*BP, FM)
    # Glimpse logits: VPU multiply + lane reduce instead of an N=1 MXU matmul.
    # The mlp bias is dropped (softmax is shift-invariant); mask is additive.
    logits = jnp.sum(hmid * mlp_w, axis=-1, keepdims=True) + bias_tm  # (S*BP, 1)

    lt = [logits[t * BP:(t + 1) * BP, :] for t in range(S)]      # (BP, 1) each
    m = lt[0]
    for t in range(1, S):
        m = jnp.maximum(m, lt[t])
    es = [jnp.exp(l - m) for l in lt]
    denom = es[0]
    for t in range(1, S):
        denom = denom + es[t]
    inv = pl.reciprocal(denom, approx=True)                      # EUP slot

    pooled = (es[0] * inv) * x_list[0]
    for t in range(1, S):
        pooled = pooled + (es[t] * inv) * x_list[t]              # (BP, H)

    return _mm(pooled, mg_w) + mg_b                              # (BP, FO)


# ----------------------------------------------------------------------------
# Fused Net3 forward kernel
# ----------------------------------------------------------------------------
def _net3_fused_kernel(
    # activations / masks (VMEM)
    lang_x_ref, frame_x_ref, clip_x_ref,
    lang_bias_ref, frame_bias_ref, clip_bias_ref,
    # question LSTM (VMEM)
    q_wih_ref, q_whh_ref, q_b_ref,
    # AttFlat packed weights (VMEM)
    al_w_ref, al_v_ref, af_w_ref, af_v_ref, ac_w_ref, ac_v_ref,
    # frame / clip linear (VMEM)
    flin_w_ref, flin_b_ref, clin_w_ref, clin_b_ref,
    # epilogue small params (VMEM)
    ep_ln_ref, ep_bias_ref, proj_w_ref, proj_b_ref,
    # epilogue big weights (HBM, manually prefetched)
    l0_wih_hbm, l0_whh_hbm, l1_wih_hbm, l1_whh_hbm, pf1_w_hbm,
    # output
    o_ref,
    # scratch
    l0_wih_v, l0_whh_v, l1_wih_v, l1_whh_v, pf1_w_v, dma_sem,
):
    BP = o_ref.shape[0]
    H = q_whh_ref.shape[0]
    FO = pf1_w_v.shape[1]

    # -- prefetch the epilogue weights (HBM -> VMEM) behind branch compute ----
    copies = []
    for i, (src, dst) in enumerate((
            (l0_wih_hbm, l0_wih_v), (l0_whh_hbm, l0_whh_v),
            (l1_wih_hbm, l1_wih_v), (l1_whh_hbm, l1_whh_v),
            (pf1_w_hbm, pf1_w_v))):
        cp = pltpu.make_async_copy(src, dst, dma_sem.at[i])
        cp.start()
        copies.append(cp)

    # -------------------- language branch: LSTM + AttFlat --------------------
    T = lang_x_ref.shape[0] // BP
    gx = _mm(lang_x_ref[...], q_wih_ref[...]) + q_b_ref[...]     # (T*BP, 4H)
    q_whh = q_whh_ref[...]
    h = jnp.zeros((BP, H), jnp.float32)
    c = jnp.zeros((BP, H), jnp.float32)
    h_list = []
    for t in range(T):                                           # static unroll
        h, c = _lstm_cell(gx[t * BP:(t + 1) * BP, :], h, c, q_whh)
        h_list.append(h)
    lang_f = _att_flat(h_list, lang_bias_ref[...], al_w_ref[...], al_v_ref[...])

    # -------------------- visual branches: linear + AttFlat ------------------
    # TODO(synk): the VLC backbone class is not defined in the reference source;
    # it is treated as an identity pass-through here.
    SF = frame_x_ref.shape[0] // BP
    fh = _mm(frame_x_ref[...], flin_w_ref[...]) + flin_b_ref[...]
    f_list = [fh[t * BP:(t + 1) * BP, :] for t in range(SF)]
    frame_f = _att_flat(f_list, frame_bias_ref[...], af_w_ref[...], af_v_ref[...])

    SC = clip_x_ref.shape[0] // BP
    ch = _mm(clip_x_ref[...], clin_w_ref[...]) + clin_b_ref[...]
    c_list = [ch[t * BP:(t + 1) * BP, :] for t in range(SC)]
    clip_f = _att_flat(c_list, clip_bias_ref[...], ac_w_ref[...], ac_v_ref[...])

    # ------------------------------- epilogue --------------------------------
    for cp in copies:
        cp.wait()

    pn_g, pn_b = ep_ln_ref[0:1, :], ep_ln_ref[1:2, :]
    pnl_g, pnl_b = ep_ln_ref[2:3, :], ep_ln_ref[3:4, :]
    pf1_b = ep_ln_ref[4:5, :]

    proj_feat_0 = _layer_norm(lang_f + frame_f + clip_f, pn_g, pn_b)

    # 3-token "sequence" for the fusion LSTM, time-major.
    seq = jnp.concatenate([lang_f, frame_f, clip_f], axis=0)     # (3*BP, FO)

    # fusion LSTM layer 0: both directions in one hoisted input projection.
    gx0 = _mm(seq, l0_wih_v[...]) + ep_bias_ref[0:1, :]          # (3*BP, 8*FO)
    gx0_f, gx0_b = gx0[:, :4 * FO], gx0[:, 4 * FO:]
    l0_whh = l0_whh_v[...]
    whh0_f, whh0_b = l0_whh[:FO, :], l0_whh[FO:, :]

    h = jnp.zeros((BP, FO), jnp.float32)
    c = jnp.zeros((BP, FO), jnp.float32)
    yf = []
    for t in range(3):                                           # forward
        h, c = _lstm_cell(gx0_f[t * BP:(t + 1) * BP, :], h, c, whh0_f)
        yf.append(h)
    h = jnp.zeros((BP, FO), jnp.float32)
    c = jnp.zeros((BP, FO), jnp.float32)
    yb = [None, None, None]
    for t in range(2, -1, -1):                                   # backward
        h, c = _lstm_cell(gx0_b[t * BP:(t + 1) * BP, :], h, c, whh0_b)
        yb[t] = h

    # fusion LSTM layer 1: input = concat(forward, backward) along features.
    y_cat = jnp.concatenate(
        [jnp.concatenate(yf, axis=0), jnp.concatenate(yb, axis=0)], axis=1)
    gx1 = _mm(y_cat, l1_wih_v[...]) + ep_bias_ref[1:2, :]        # (3*BP, 8*FO)
    gx1_f, gx1_b = gx1[:, :4 * FO], gx1[:, 4 * FO:]
    l1_whh = l1_whh_v[...]
    whh1_f, whh1_b = l1_whh[:FO, :], l1_whh[FO:, :]

    h = jnp.zeros((BP, FO), jnp.float32)
    c = jnp.zeros((BP, FO), jnp.float32)
    zf_sum = jnp.zeros((BP, FO), jnp.float32)
    for t in range(3):
        h, c = _lstm_cell(gx1_f[t * BP:(t + 1) * BP, :], h, c, whh1_f)
        zf_sum = zf_sum + h
    h = jnp.zeros((BP, FO), jnp.float32)
    c = jnp.zeros((BP, FO), jnp.float32)
    zb_sum = jnp.zeros((BP, FO), jnp.float32)
    for t in range(2, -1, -1):
        h, c = _lstm_cell(gx1_b[t * BP:(t + 1) * BP, :], h, c, whh1_b)
        zb_sum = zb_sum + h

    # proj_feat_1 = Linear(sum_t concat(zf_t, zb_t)) + LayerNorm.
    z_cat = jnp.concatenate([zf_sum, zb_sum], axis=1)            # (BP, 2*FO)
    p1 = _mm(z_cat, pf1_w_v[...]) + pf1_b
    p1 = _layer_norm(p1, pnl_g, pnl_b)

    logits = _mm(proj_feat_0 + p1, proj_w_ref[...]) + proj_b_ref[...]
    o_ref[...] = jax.nn.sigmoid(logits).astype(o_ref.dtype)


# ----------------------------------------------------------------------------
# Host-side staging helpers
# ----------------------------------------------------------------------------
def _time_major_pad(x, bp):
    """[B, S, D] -> [S*bp, D] (row = t*bp + b) with batch zero-padded to bp."""
    Bn, S, D = x.shape
    x = jnp.pad(x, ((0, bp - Bn), (0, 0), (0, 0)))
    return jnp.transpose(x, (1, 0, 2)).reshape(S * bp, D)


def _mask_bias_tm(mask, bp):
    """[B, S] bool -> [S*bp, 1] f32 additive mask bias (-1e9 on padded pos)."""
    Bn, S = mask.shape
    m = jnp.pad(mask, ((0, bp - Bn), (0, 0)))
    return (m.astype(jnp.float32) * jnp.float32(-1e9)).T.reshape(S * bp, 1)


# ----------------------------------------------------------------------------
# Net3 forward (single fused pallas_call)
# ----------------------------------------------------------------------------
def net3_forward(pk, frame_feat, clip_feat, ques_ix):
    Bn = ques_ix.shape[0]
    BP = BATCH_PAD
    FO = C.FLAT_OUT_SIZE

    # Padding masks + embedding gather (tiny XLA glue fused with staging).
    lang_bias = _mask_bias_tm(ques_ix == 0, BP)
    frame_bias = _mask_bias_tm(jnp.sum(jnp.abs(frame_feat), axis=-1) == 0, BP)
    clip_bias = _mask_bias_tm(jnp.sum(jnp.abs(clip_feat), axis=-1) == 0, BP)

    lang_x = _time_major_pad(pk["emb"][ques_ix], BP)
    frame_x = _time_major_pad(frame_feat.astype(jnp.float32), BP)
    clip_x = _time_major_pad(clip_feat.astype(jnp.float32), BP)

    n_vmem_in = 23
    n_any_in = 5
    in_specs = ([pl.BlockSpec(memory_space=pltpu.MemorySpace.VMEM)] * n_vmem_in
                + [pl.BlockSpec(memory_space=pl.ANY)] * n_any_in)

    out = pl.pallas_call(
        _net3_fused_kernel,
        out_shape=jax.ShapeDtypeStruct((BP, ANSWER_SIZE), jnp.float32),
        in_specs=in_specs,
        out_specs=pl.BlockSpec(memory_space=pltpu.MemorySpace.VMEM),
        scratch_shapes=[
            pltpu.VMEM((FO, 8 * FO), jnp.bfloat16),       # fusion L0 W_ih [f|b]
            pltpu.VMEM((2 * FO, 4 * FO), jnp.bfloat16),   # fusion L0 W_hh [f;b]
            pltpu.VMEM((2 * FO, 8 * FO), jnp.bfloat16),   # fusion L1 W_ih [f|b]
            pltpu.VMEM((2 * FO, 4 * FO), jnp.bfloat16),   # fusion L1 W_hh [f;b]
            pltpu.VMEM((2 * FO, FO), jnp.bfloat16),       # proj_feat_1 weight
            pltpu.SemaphoreType.DMA((5,)),
        ],
        cost_estimate=pl.CostEstimate(flops=55_000_000,
                                      transcendentals=110_000,
                                      bytes_accessed=2_000_000),
    )(
        lang_x, frame_x, clip_x, lang_bias, frame_bias, clip_bias,
        pk["q_wih"], pk["q_whh"], pk["q_b"],
        pk["al_w"], pk["al_v"], pk["af_w"], pk["af_v"], pk["ac_w"], pk["ac_v"],
        pk["flin_w"], pk["flin_b"], pk["clin_w"], pk["clin_b"],
        pk["ep_ln"], pk["ep_bias"], pk["proj_w"], pk["proj_b"],
        pk["l0_wih"], pk["l0_whh"], pk["l1_wih"], pk["l1_whh"], pk["pf1_w"],
    )
    return out[:Bn]


# ----------------------------------------------------------------------------
# Deterministic parameter init (Net3 shapes; weights are transposed w.r.t.
# PyTorch's (out, in) storage) and host-side packing to kernel layout.
# ----------------------------------------------------------------------------
def init_params(key):
    keys = iter(jax.random.split(key, 64))

    def nrm(shape, scale=0.05):
        return (jax.random.normal(next(keys), shape) * scale).astype(jnp.float32)

    H, WE = C.HIDDEN_SIZE, C.WORD_EMBED_SIZE
    FM, G, FO = C.FLAT_MLP_SIZE, C.FLAT_GLIMPSES, C.FLAT_OUT_SIZE

    def attflat_params():
        return {
            "fc_w": nrm((H, FM)), "fc_b": nrm((FM,)),
            "mlp_w": nrm((FM, G)), "mlp_b": nrm((G,)),
            "merge_w": nrm((H * G, FO)), "merge_b": nrm((FO,)),
        }

    def lstm_params(in_size, hid_size):
        return (nrm((in_size, 4 * hid_size)),   # W_ih^T
                nrm((hid_size, 4 * hid_size)),  # W_hh^T
                nrm((4 * hid_size,)))           # b_ih + b_hh folded

    return {
        "emb": nrm((TOKEN_SIZE, WE), scale=0.1),
        "lstm_lang": lstm_params(WE, H),
        "frame_lin": (nrm((C.FRAME_FEAT_SIZE, H)), nrm((H,))),
        "clip_lin": (nrm((C.CLIP_FEAT_SIZE, H)), nrm((H,))),
        "attflat_lang": attflat_params(),
        "attflat_frame": attflat_params(),
        "attflat_clip": attflat_params(),
        "fusion_l0_f": lstm_params(FO, FO),
        "fusion_l0_b": lstm_params(FO, FO),
        "fusion_l1_f": lstm_params(2 * FO, FO),
        "fusion_l1_b": lstm_params(2 * FO, FO),
        "proj_norm": (jnp.ones((FO,), jnp.float32), jnp.zeros((FO,), jnp.float32)),
        "proj_feat_1": (nrm((2 * FO, FO)), nrm((FO,))),
        "proj_norm_lstm": (jnp.ones((FO,), jnp.float32), jnp.zeros((FO,), jnp.float32)),
        "proj_w": nrm((FO, ANSWER_SIZE)),
        "proj_b": nrm((ANSWER_SIZE,)),
    }


def pack_params(p):
    """One-time host-side packing: bf16 weights, fwd/bwd concat, bias folding."""
    bf = lambda x: x.astype(jnp.bfloat16)

    def att_pack(a):
        w = bf(jnp.concatenate([a["fc_w"], a["merge_w"]], axis=1))     # (H, FM+FO)
        # mlp_b is dropped: softmax is invariant to a constant logit shift.
        vec = jnp.stack([a["fc_b"], a["mlp_w"][:, 0], a["merge_b"]], axis=0)
        return w, vec.astype(jnp.float32)                              # (3, 128)

    al_w, al_v = att_pack(p["attflat_lang"])
    af_w, af_v = att_pack(p["attflat_frame"])
    ac_w, ac_v = att_pack(p["attflat_clip"])

    l0f, l0b = p["fusion_l0_f"], p["fusion_l0_b"]
    l1f, l1b = p["fusion_l1_f"], p["fusion_l1_b"]

    return {
        "emb": p["emb"],
        "q_wih": bf(p["lstm_lang"][0]),
        "q_whh": bf(p["lstm_lang"][1]),
        "q_b": p["lstm_lang"][2].reshape(1, -1),
        "al_w": al_w, "al_v": al_v,
        "af_w": af_w, "af_v": af_v,
        "ac_w": ac_w, "ac_v": ac_v,
        "flin_w": bf(p["frame_lin"][0]), "flin_b": p["frame_lin"][1].reshape(1, -1),
        "clin_w": bf(p["clip_lin"][0]), "clin_b": p["clip_lin"][1].reshape(1, -1),
        # epilogue small params
        "ep_ln": jnp.stack([p["proj_norm"][0], p["proj_norm"][1],
                            p["proj_norm_lstm"][0], p["proj_norm_lstm"][1],
                            p["proj_feat_1"][1]], axis=0),             # (5, FO)
        "ep_bias": jnp.stack([jnp.concatenate([l0f[2], l0b[2]]),
                              jnp.concatenate([l1f[2], l1b[2]])], axis=0),  # (2, 8FO)
        "proj_w": p["proj_w"],
        "proj_b": p["proj_b"].reshape(1, -1),
        # epilogue big weights (prefetched via pl.ANY inside the kernel)
        "l0_wih": bf(jnp.concatenate([l0f[0], l0b[0]], axis=1)),       # (FO, 8FO)
        "l0_whh": bf(jnp.concatenate([l0f[1], l0b[1]], axis=0)),       # (2FO, 4FO)
        "l1_wih": bf(jnp.concatenate([l1f[0], l1b[0]], axis=1)),       # (2FO, 8FO)
        "l1_whh": bf(jnp.concatenate([l1f[1], l1b[1]], axis=0)),       # (2FO, 4FO)
        "pf1_w": bf(p["proj_feat_1"][0]),                              # (2FO, FO)
    }


# ----------------------------------------------------------------------------
# Main
# ----------------------------------------------------------------------------
if __name__ == "__main__":
    key = jax.random.PRNGKey(0)
    k_par, k_frame, k_clip, k_q = jax.random.split(key, 4)

    packed = pack_params(init_params(k_par))

    frame_feat = jax.random.normal(k_frame, (B, S_FRAME, C.FRAME_FEAT_SIZE), jnp.float32)
    clip_feat = jax.random.normal(k_clip, (B, S_CLIP, C.CLIP_FEAT_SIZE), jnp.float32)
    ques_ix = jax.random.randint(k_q, (B, T_Q), 1, TOKEN_SIZE, jnp.int32)

    # Introduce padding so the masks are exercised (token 0 / all-zero rows).
    ques_ix = ques_ix.at[0, -2:].set(0)
    frame_feat = frame_feat.at[1, -3:, :].set(0.0)
    clip_feat = clip_feat.at[1, -1:, :].set(0.0)

    fwd = jax.jit(net3_forward)
    out = fwd(packed, frame_feat, clip_feat, ques_ix)
    out = jax.block_until_ready(out)

    assert out.shape == (B, ANSWER_SIZE)
    assert bool(jnp.all(jnp.isfinite(out)))
    assert bool(jnp.all((out >= 0.0) & (out <= 1.0)))  # sigmoid range
    print("KERNEL_OK")
</pallas_src>

<mosaic_0001>
module attributes {stable_mosaic.version = 11 : i64} {
  func.func @_net3_fused_kernel(%arg0: memref<64x64xf32, #tpu.memory_space<vmem>>, %arg1: memref<64x64xf32, #tpu.memory_space<vmem>>, %arg2: memref<32x64xf32, #tpu.memory_space<vmem>>, %arg3: memref<64x1xf32, #tpu.memory_space<vmem>>, %arg4: memref<64x1xf32, #tpu.memory_space<vmem>>, %arg5: memref<32x1xf32, #tpu.memory_space<vmem>>, %arg6: memref<64x512xbf16, #tpu.memory_space<vmem>>, %arg7: memref<128x512xbf16, #tpu.memory_space<vmem>>, %arg8: memref<1x512xf32, #tpu.memory_space<vmem>>, %arg9: memref<128x256xbf16, #tpu.memory_space<vmem>>, %arg10: memref<3x128xf32, #tpu.memory_space<vmem>>, %arg11: memref<128x256xbf16, #tpu.memory_space<vmem>>, %arg12: memref<3x128xf32, #tpu.memory_space<vmem>>, %arg13: memref<128x256xbf16, #tpu.memory_space<vmem>>, %arg14: memref<3x128xf32, #tpu.memory_space<vmem>>, %arg15: memref<64x128xbf16, #tpu.memory_space<vmem>>, %arg16: memref<1x128xf32, #tpu.memory_space<vmem>>, %arg17: memref<64x128xbf16, #tpu.memory_space<vmem>>, %arg18: memref<1x128xf32, #tpu.memory_space<vmem>>, %arg19: memref<5x128xf32, #tpu.memory_space<vmem>>, %arg20: memref<2x1024xf32, #tpu.memory_space<vmem>>, %arg21: memref<128x8xf32, #tpu.memory_space<vmem>>, %arg22: memref<1x8xf32, #tpu.memory_space<vmem>>, %arg23: memref<128x1024xbf16, #tpu.memory_space<any>>, %arg24: memref<256x512xbf16, #tpu.memory_space<any>>, %arg25: memref<256x1024xbf16, #tpu.memory_space<any>>, %arg26: memref<256x512xbf16, #tpu.memory_space<any>>, %arg27: memref<256x128xbf16, #tpu.memory_space<any>>, %arg28: memref<8x8xf32, #tpu.memory_space<vmem>>, %arg29: memref<128x1024xbf16, #tpu.memory_space<vmem>>, %arg30: memref<256x512xbf16, #tpu.memory_space<vmem>>, %arg31: memref<256x1024xbf16, #tpu.memory_space<vmem>>, %arg32: memref<256x512xbf16, #tpu.memory_space<vmem>>, %arg33: memref<256x128xbf16, #tpu.memory_space<vmem>>, %arg34: memref<5x!tpu.dma_semaphore, #tpu.memory_space<semaphore_mem>>) attributes {dimension_semantics = [], scalar_prefetch = 0 : i64, scratch_operands = 6 : i64, tpu.core_type = #tpu.core_type<tc>} {
    %c0_i32 = arith.constant 0 : i32
    %0 = tpu.memref_slice %arg34[%c0_i32] : memref<5x!tpu.dma_semaphore, #tpu.memory_space<semaphore_mem>> -> memref<1x!tpu.dma_semaphore, #tpu.memory_space<semaphore_mem>>
    %1 = tpu.memref_squeeze %0 : memref<1x!tpu.dma_semaphore, #tpu.memory_space<semaphore_mem>> -> memref<!tpu.dma_semaphore, #tpu.memory_space<semaphore_mem>>
    tpu.enqueue_dma source(%arg23 : memref<128x1024xbf16, #tpu.memory_space<any>>) target(%arg29 : memref<128x1024xbf16, #tpu.memory_space<vmem>>) target_semaphore(%1 : memref<!tpu.dma_semaphore, #tpu.memory_space<semaphore_mem>>)
    %c1_i32 = arith.constant 1 : i32
    %2 = tpu.memref_slice %arg34[%c1_i32] : memref<5x!tpu.dma_semaphore, #tpu.memory_space<semaphore_mem>> -> memref<1x!tpu.dma_semaphore, #tpu.memory_space<semaphore_mem>>
    %3 = tpu.memref_squeeze %2 : memref<1x!tpu.dma_semaphore, #tpu.memory_space<semaphore_mem>> -> memref<!tpu.dma_semaphore, #tpu.memory_space<semaphore_mem>>
    tpu.enqueue_dma source(%arg24 : memref<256x512xbf16, #tpu.memory_space<any>>) target(%arg30 : memref<256x512xbf16, #tpu.memory_space<vmem>>) target_semaphore(%3 : memref<!tpu.dma_semaphore, #tpu.memory_space<semaphore_mem>>)
    %c2_i32 = arith.constant 2 : i32
    %4 = tpu.memref_slice %arg34[%c2_i32] : memref<5x!tpu.dma_semaphore, #tpu.memory_space<semaphore_mem>> -> memref<1x!tpu.dma_semaphore, #tpu.memory_space<semaphore_mem>>
    %5 = tpu.memref_squeeze %4 : memref<1x!tpu.dma_semaphore, #tpu.memory_space<semaphore_mem>> -> memref<!tpu.dma_semaphore, #tpu.memory_space<semaphore_mem>>
    tpu.enqueue_dma source(%arg25 : memref<256x1024xbf16, #tpu.memory_space<any>>) target(%arg31 : memref<256x1024xbf16, #tpu.memory_space<vmem>>) target_semaphore(%5 : memref<!tpu.dma_semaphore, #tpu.memory_space<semaphore_mem>>)
    %c3_i32 = arith.constant 3 : i32
    %6 = tpu.memref_slice %arg34[%c3_i32] : memref<5x!tpu.dma_semaphore, #tpu.memory_space<semaphore_mem>> -> memref<1x!tpu.dma_semaphore, #tpu.memory_space<semaphore_mem>>
    %7 = tpu.memref_squeeze %6 : memref<1x!tpu.dma_semaphore, #tpu.memory_space<semaphore_mem>> -> memref<!tpu.dma_semaphore, #tpu.memory_space<semaphore_mem>>
    tpu.enqueue_dma source(%arg26 : memref<256x512xbf16, #tpu.memory_space<any>>) target(%arg32 : memref<256x512xbf16, #tpu.memory_space<vmem>>) target_semaphore(%7 : memref<!tpu.dma_semaphore, #tpu.memory_space<semaphore_mem>>)
    %c4_i32 = arith.constant 4 : i32
    %8 = tpu.memref_slice %arg34[%c4_i32] : memref<5x!tpu.dma_semaphore, #tpu.memory_space<semaphore_mem>> -> memref<1x!tpu.dma_semaphore, #tpu.memory_space<semaphore_mem>>
    %9 = tpu.memref_squeeze %8 : memref<1x!tpu.dma_semaphore, #tpu.memory_space<semaphore_mem>> -> memref<!tpu.dma_semaphore, #tpu.memory_space<semaphore_mem>>
    tpu.enqueue_dma source(%arg27 : memref<256x128xbf16, #tpu.memory_space<any>>) target(%arg33 : memref<256x128xbf16, #tpu.memory_space<vmem>>) target_semaphore(%9 : memref<!tpu.dma_semaphore, #tpu.memory_space<semaphore_mem>>)
    %c0 = arith.constant 0 : index
    %c0_0 = arith.constant 0 : index
    %10 = vector.load %arg0[%c0, %c0_0] : memref<64x64xf32, #tpu.memory_space<vmem>>, vector<64x64xf32>
    %c0_1 = arith.constant 0 : index
    %c0_2 = arith.constant 0 : index
    %11 = vector.load %arg6[%c0_1, %c0_2] : memref<64x512xbf16, #tpu.memory_space<vmem>>, vector<64x512xbf16>
    %12 = arith.truncf %10 : vector<64x64xf32> to vector<64x64xbf16>
    %cst = arith.constant dense<0.000000e+00> : vector<64x512xf32>
    %13 = tpu.matmul %12, %11, %cst {dimension_numbers = #tpu.dot_dimension_numbers<[1], [0], [0], [1], [0, 0, 1, 1], [], []>} : vector<64x64xbf16>, vector<64x512xbf16>, vector<64x512xf32> -> vector<64x512xf32>
    %c0_3 = arith.constant 0 : index
    %c0_4 = arith.constant 0 : index
    %14 = vector.load %arg8[%c0_3, %c0_4] : memref<1x512xf32, #tpu.memory_space<vmem>>, vector<1x512xf32>
    %15 = vector.broadcast %14 : vector<1x512xf32> to vector<64x512xf32>
    %16 = arith.addf %13, %15 : vector<64x512xf32>
    %c0_5 = arith.constant 0 : index
    %c0_6 = arith.constant 0 : index
    %17 = vector.load %arg7[%c0_5, %c0_6] : memref<128x512xbf16, #tpu.memory_space<vmem>>, vector<128x512xbf16>
    %cst_7 = arith.constant 0.000000e+00 : f32
    %18 = vector.broadcast %cst_7 : f32 to vector<8x128xf32>
    %cst_8 = arith.constant 0.000000e+00 : f32
    %19 = vector.broadcast %cst_8 : f32 to vector<8x128xf32>
    %20 = vector.extract_strided_slice %16 {offsets = [0, 0], sizes = [8, 512], strides = [1, 1]} : vector<64x512xf32> to vector<8x512xf32>
    %21 = arith.truncf %18 : vector<8x128xf32> to vector<8x128xbf16>
    %cst_9 = arith.constant dense<0.000000e+00> : vector<8x512xf32>
    %22 = tpu.matmul %21, %17, %cst_9 {dimension_numbers = #tpu.dot_dimension_numbers<[1], [0], [0], [1], [0, 0, 1, 1], [], []>} : vector<8x128xbf16>, vector<128x512xbf16>, vector<8x512xf32> -> vector<8x512xf32>
    %23 = arith.addf %20, %22 : vector<8x512xf32>
    %24 = vector.extract_strided_slice %23 {offsets = [0, 0], sizes = [8, 128], strides = [1, 1]} : vector<8x512xf32> to vector<8x128xf32>
    %25 = arith.negf %24 : vector<8x128xf32>
    %26 = math.exp %25 : vector<8x128xf32>
    %cst_10 = arith.constant 1.000000e+00 : f32
    %27 = vector.broadcast %cst_10 : f32 to vector<8x128xf32>
    %28 = arith.addf %27, %26 : vector<8x128xf32>
    %29 = arith.divf %27, %28 : vector<8x128xf32>
    %30 = vector.extract_strided_slice %23 {offsets = [0, 128], sizes = [8, 128], strides = [1, 1]} : vector<8x512xf32> to vector<8x128xf32>
    %31 = arith.negf %30 : vector<8x128xf32>
    %32 = math.exp %31 : vector<8x128xf32>
    %cst_11 = arith.constant 1.000000e+00 : f32
    %33 = vector.broadcast %cst_11 : f32 to vector<8x128xf32>
    %34 = arith.addf %33, %32 : vector<8x128xf32>
    %35 = arith.divf %33, %34 : vector<8x128xf32>
    %36 = vector.extract_strided_slice %23 {offsets = [0, 256], sizes = [8, 128], strides = [1, 1]} : vector<8x512xf32> to vector<8x128xf32>
    %37 = math.tanh %36 : vector<8x128xf32>
    %38 = vector.extract_strided_slice %23 {offsets = [0, 384], sizes = [8, 128], strides = [1, 1]} : vector<8x512xf32> to vector<8x128xf32>
    %39 = arith.negf %38 : vector<8x128xf32>
    %40 = math.exp %39 : vector<8x128xf32>
    %cst_12 = arith.constant 1.000000e+00 : f32
    %41 = vector.broadcast %cst_12 : f32 to vector<8x128xf32>
    %42 = arith.addf %41, %40 : vector<8x128xf32>
    %43 = arith.divf %41, %42 : vector<8x128xf32>
    %44 = arith.mulf %35, %19 : vector<8x128xf32>
    %45 = arith.mulf %29, %37 : vector<8x128xf32>
    %46 = arith.addf %44, %45 : vector<8x128xf32>
    %47 = math.tanh %46 : vector<8x128xf32>
    %48 = arith.mulf %43, %47 : vector<8x128xf32>
    %49 = vector.extract_strided_slice %16 {offsets = [8, 0], sizes = [8, 512], strides = [1, 1]} : vector<64x512xf32> to vector<8x512xf32>
    %50 = arith.truncf %48 : vector<8x128xf32> to vector<8x128xbf16>
    %cst_13 = arith.constant dense<0.000000e+00> : vector<8x512xf32>
    %51 = tpu.matmul %50, %17, %cst_13 {dimension_numbers = #tpu.dot_dimension_numbers<[1], [0], [0], [1], [0, 0, 1, 1], [], []>} : vector<8x128xbf16>, vector<128x512xbf16>, vector<8x512xf32> -> vector<8x512xf32>
    %52 = arith.addf %49, %51 : vector<8x512xf32>
    %53 = vector.extract_strided_slice %52 {offsets = [0, 0], sizes = [8, 128], strides = [1, 1]} : vector<8x512xf32> to vector<8x128xf32>
    %54 = arith.negf %53 : vector<8x128xf32>
    %55 = math.exp %54 : vector<8x128xf32>
    %cst_14 = arith.constant 1.000000e+00 : f32
    %56 = vector.broadcast %cst_14 : f32 to vector<8x128xf32>
    %57 = arith.addf %56, %55 : vector<8x128xf32>
    %58 = arith.divf %56, %57 : vector<8x128xf32>
    %59 = vector.extract_strided_slice %52 {offsets = [0, 128], sizes = [8, 128], strides = [1, 1]} : vector<8x512xf32> to vector<8x128xf32>
    %60 = arith.negf %59 : vector<8x128xf32>
    %61 = math.exp %60 : vector<8x128xf32>
    %cst_15 = arith.constant 1.000000e+00 : f32
    %62 = vector.broadcast %cst_15 : f32 to vector<8x128xf32>
    %63 = arith.addf %62, %61 : vector<8x128xf32>
    %64 = arith.divf %62, %63 : vector<8x128xf32>
    %65 = vector.extract_strided_slice %52 {offsets = [0, 256], sizes = [8, 128], strides = [1, 1]} : vector<8x512xf32> to vector<8x128xf32>
    %66 = math.tanh %65 : vector<8x128xf32>
    %67 = vector.extract_strided_slice %52 {offsets = [0, 384], sizes = [8, 128], strides = [1, 1]} : vector<8x512xf32> to vector<8x128xf32>
    %68 = arith.negf %67 : vector<8x128xf32>
    %69 = math.exp %68 : vector<8x128xf32>
    %cst_16 = arith.constant 1.000000e+00 : f32
    %70 = vector.broadcast %cst_16 : f32 to vector<8x128xf32>
    %71 = arith.addf %70, %69 : vector<8x128xf32>
    %72 = arith.divf %70, %71 : vector<8x128xf32>
    %73 = arith.mulf %64, %46 : vector<8x128xf32>
    %74 = arith.mulf %58, %66 : vector<8x128xf32>
    %75 = arith.addf %73, %74 : vector<8x128xf32>
    %76 = math.tanh %75 : vector<8x128xf32>
    %77 = arith.mulf %72, %76 : vector<8x128xf32>
    %78 = vector.extract_strided_slice %16 {offsets = [16, 0], sizes = [8, 512], strides = [1, 1]} : vector<64x512xf32> to vector<8x512xf32>
    %79 = arith.truncf %77 : vector<8x128xf32> to vector<8x128xbf16>
    %cst_17 = arith.constant dense<0.000000e+00> : vector<8x512xf32>
    %80 = tpu.matmul %79, %17, %cst_17 {dimension_numbers = #tpu.dot_dimension_numbers<[1], [0], [0], [1], [0, 0, 1, 1], [], []>} : vector<8x128xbf16>, vector<128x512xbf16>, vector<8x512xf32> -> vector<8x512xf32>
    %81 = arith.addf %78, %80 : vector<8x512xf32>
    %82 = vector.extract_strided_slice %81 {offsets = [0, 0], sizes = [8, 128], strides = [1, 1]} : vector<8x512xf32> to vector<8x128xf32>
    %83 = arith.negf %82 : vector<8x128xf32>
    %84 = math.exp %83 : vector<8x128xf32>
    %cst_18 = arith.constant 1.000000e+00 : f32
    %85 = vector.broadcast %cst_18 : f32 to vector<8x128xf32>
    %86 = arith.addf %85, %84 : vector<8x128xf32>
    %87 = arith.divf %85, %86 : vector<8x128xf32>
    %88 = vector.extract_strided_slice %81 {offsets = [0, 128], sizes = [8, 128], strides = [1, 1]} : vector<8x512xf32> to vector<8x128xf32>
    %89 = arith.negf %88 : vector<8x128xf32>
    %90 = math.exp %89 : vector<8x128xf32>
    %cst_19 = arith.constant 1.000000e+00 : f32
    %91 = vector.broadcast %cst_19 : f32 to vector<8x128xf32>
    %92 = arith.addf %91, %90 : vector<8x128xf32>
    %93 = arith.divf %91, %92 : vector<8x128xf32>
    %94 = vector.extract_strided_slice %81 {offsets = [0, 256], sizes = [8, 128], strides = [1, 1]} : vector<8x512xf32> to vector<8x128xf32>
    %95 = math.tanh %94 : vector<8x128xf32>
    %96 = vector.extract_strided_slice %81 {offsets = [0, 384], sizes = [8, 128], strides = [1, 1]} : vector<8x512xf32> to vector<8x128xf32>
    %97 = arith.negf %96 : vector<8x128xf32>
    %98 = math.exp %97 : vector<8x128xf32>
    %cst_20 = arith.constant 1.000000e+00 : f32
    %99 = vector.broadcast %cst_20 : f32 to vector<8x128xf32>
    %100 = arith.addf %99, %98 : vector<8x128xf32>
    %101 = arith.divf %99, %100 : vector<8x128xf32>
    %102 = arith.mulf %93, %75 : vector<8x128xf32>
    %103 = arith.mulf %87, %95 : vector<8x128xf32>
    %104 = arith.addf %102, %103 : vector<8x128xf32>
    %105 = math.tanh %104 : vector<8x128xf32>
    %106 = arith.mulf %101, %105 : vector<8x128xf32>
    %107 = vector.extract_strided_slice %16 {offsets = [24, 0], sizes = [8, 512], strides = [1, 1]} : vector<64x512xf32> to vector<8x512xf32>
    %108 = arith.truncf %106 : vector<8x128xf32> to vector<8x128xbf16>
    %cst_21 = arith.constant dense<0.000000e+00> : vector<8x512xf32>
    %109 = tpu.matmul %108, %17, %cst_21 {dimension_numbers = #tpu.dot_dimension_numbers<[1], [0], [0], [1], [0, 0, 1, 1], [], []>} : vector<8x128xbf16>, vector<128x512xbf16>, vector<8x512xf32> -> vector<8x512xf32>
    %110 = arith.addf %107, %109 : vector<8x512xf32>
    %111 = vector.extract_strided_slice %110 {offsets = [0, 0], sizes = [8, 128], strides = [1, 1]} : vector<8x512xf32> to vector<8x128xf32>
    %112 = arith.negf %111 : vector<8x128xf32>
    %113 = math.exp %112 : vector<8x128xf32>
    %cst_22 = arith.constant 1.000000e+00 : f32
    %114 = vector.broadcast %cst_22 : f32 to vector<8x128xf32>
    %115 = arith.addf %114, %113 : vector<8x128xf32>
    %116 = arith.divf %114, %115 : vector<8x128xf32>
    %117 = vector.extract_strided_slice %110 {offsets = [0, 128], sizes = [8, 128], strides = [1, 1]} : vector<8x512xf32> to vector<8x128xf32>
    %118 = arith.negf %117 : vector<8x128xf32>
    %119 = math.exp %118 : vector<8x128xf32>
    %cst_23 = arith.constant 1.000000e+00 : f32
    %120 = vector.broadcast %cst_23 : f32 to vector<8x128xf32>
    %121 = arith.addf %120, %119 : vector<8x128xf32>
    %122 = arith.divf %120, %121 : vector<8x128xf32>
    %123 = vector.extract_strided_slice %110 {offsets = [0, 256], sizes = [8, 128], strides = [1, 1]} : vector<8x512xf32> to vector<8x128xf32>
    %124 = math.tanh %123 : vector<8x128xf32>
    %125 = vector.extract_strided_slice %110 {offsets = [0, 384], sizes = [8, 128], strides = [1, 1]} : vector<8x512xf32> to vector<8x128xf32>
    %126 = arith.negf %125 : vector<8x128xf32>
    %127 = math.exp %126 : vector<8x128xf32>
    %cst_24 = arith.constant 1.000000e+00 : f32
    %128 = vector.broadcast %cst_24 : f32 to vector<8x128xf32>
    %129 = arith.addf %128, %127 : vector<8x128xf32>
    %130 = arith.divf %128, %129 : vector<8x128xf32>
    %131 = arith.mulf %122, %104 : vector<8x128xf32>
    %132 = arith.mulf %116, %124 : vector<8x128xf32>
    %133 = arith.addf %131, %132 : vector<8x128xf32>
    %134 = math.tanh %133 : vector<8x128xf32>
    %135 = arith.mulf %130, %134 : vector<8x128xf32>
    %136 = vector.extract_strided_slice %16 {offsets = [32, 0], sizes = [8, 512], strides = [1, 1]} : vector<64x512xf32> to vector<8x512xf32>
    %137 = arith.truncf %135 : vector<8x128xf32> to vector<8x128xbf16>
    %cst_25 = arith.constant dense<0.000000e+00> : vector<8x512xf32>
    %138 = tpu.matmul %137, %17, %cst_25 {dimension_numbers = #tpu.dot_dimension_numbers<[1], [0], [0], [1], [0, 0, 1, 1], [], []>} : vector<8x128xbf16>, vector<128x512xbf16>, vector<8x512xf32> -> vector<8x512xf32>
    %139 = arith.addf %136, %138 : vector<8x512xf32>
    %140 = vector.extract_strided_slice %139 {offsets = [0, 0], sizes = [8, 128], strides = [1, 1]} : vector<8x512xf32> to vector<8x128xf32>
    %141 = arith.negf %140 : vector<8x128xf32>
    %142 = math.exp %141 : vector<8x128xf32>
    %cst_26 = arith.constant 1.000000e+00 : f32
    %143 = vector.broadcast %cst_26 : f32 to vector<8x128xf32>
    %144 = arith.addf %143, %142 : vector<8x128xf32>
    %145 = arith.divf %143, %144 : vector<8x128xf32>
    %146 = vector.extract_strided_slice %139 {offsets = [0, 128], sizes = [8, 128], strides = [1, 1]} : vector<8x512xf32> to vector<8x128xf32>
    %147 = arith.negf %146 : vector<8x128xf32>
    %148 = math.exp %147 : vector<8x128xf32>
    %cst_27 = arith.constant 1.000000e+00 : f32
    %149 = vector.broadcast %cst_27 : f32 to vector<8x128xf32>
    %150 = arith.addf %149, %148 : vector<8x128xf32>
    %151 = arith.divf %149, %150 : vector<8x128xf32>
    %152 = vector.extract_strided_slice %139 {offsets = [0, 256], sizes = [8, 128], strides = [1, 1]} : vector<8x512xf32> to vector<8x128xf32>
    %153 = math.tanh %152 : vector<8x128xf32>
    %154 = vector.extract_strided_slice %139 {offsets = [0, 384], sizes = [8, 128], strides = [1, 1]} : vector<8x512xf32> to vector<8x128xf32>
    %155 = arith.negf %154 : vector<8x128xf32>
    %156 = math.exp %155 : vector<8x128xf32>
    %cst_28 = arith.constant 1.000000e+00 : f32
    %157 = vector.broadcast %cst_28 : f32 to vector<8x128xf32>
    %158 = arith.addf %157, %156 : vector<8x128xf32>
    %159 = arith.divf %157, %158 : vector<8x128xf32>
    %160 = arith.mulf %151, %133 : vector<8x128xf32>
    %161 = arith.mulf %145, %153 : vector<8x128xf32>
    %162 = arith.addf %160, %161 : vector<8x128xf32>
    %163 = math.tanh %162 : vector<8x128xf32>
    %164 = arith.mulf %159, %163 : vector<8x128xf32>
    %165 = vector.extract_strided_slice %16 {offsets = [40, 0], sizes = [8, 512], strides = [1, 1]} : vector<64x512xf32> to vector<8x512xf32>
    %166 = arith.truncf %164 : vector<8x128xf32> to vector<8x128xbf16>
    %cst_29 = arith.constant dense<0.000000e+00> : vector<8x512xf32>
    %167 = tpu.matmul %166, %17, %cst_29 {dimension_numbers = #tpu.dot_dimension_numbers<[1], [0], [0], [1], [0, 0, 1, 1], [], []>} : vector<8x128xbf16>, vector<128x512xbf16>, vector<8x512xf32> -> vector<8x512xf32>
    %168 = arith.addf %165, %167 : vector<8x512xf32>
    %169 = vector.extract_strided_slice %168 {offsets = [0, 0], sizes = [8, 128], strides = [1, 1]} : vector<8x512xf32> to vector<8x128xf32>
    %170 = arith.negf %169 : vector<8x128xf32>
    %171 = math.exp %170 : vector<8x128xf32>
    %cst_30 = arith.constant 1.000000e+00 : f32
    %172 = vector.broadcast %cst_30 : f32 to vector<8x128xf32>
    %173 = arith.addf %172, %171 : vector<8x128xf32>
    %174 = arith.divf %172, %173 : vector<8x128xf32>
    %175 = vector.extract_strided_slice %168 {offsets = [0, 128], sizes = [8, 128], strides = [1, 1]} : vector<8x512xf32> to vector<8x128xf32>
    %176 = arith.negf %175 : vector<8x128xf32>
    %177 = math.exp %176 : vector<8x128xf32>
    %cst_31 = arith.constant 1.000000e+00 : f32
    %178 = vector.broadcast %cst_31 : f32 to vector<8x128xf32>
    %179 = arith.addf %178, %177 : vector<8x128xf32>
    %180 = arith.divf %178, %179 : vector<8x128xf32>
    %181 = vector.extract_strided_slice %168 {offsets = [0, 256], sizes = [8, 128], strides = [1, 1]} : vector<8x512xf32> to vector<8x128xf32>
    %182 = math.tanh %181 : vector<8x128xf32>
    %183 = vector.extract_strided_slice %168 {offsets = [0, 384], sizes = [8, 128], strides = [1, 1]} : vector<8x512xf32> to vector<8x128xf32>
    %184 = arith.negf %183 : vector<8x128xf32>
    %185 = math.exp %184 : vector<8x128xf32>
    %cst_32 = arith.constant 1.000000e+00 : f32
    %186 = vector.broadcast %cst_32 : f32 to vector<8x128xf32>
    %187 = arith.addf %186, %185 : vector<8x128xf32>
    %188 = arith.divf %186, %187 : vector<8x128xf32>
    %189 = arith.mulf %180, %162 : vector<8x128xf32>
    %190 = arith.mulf %174, %182 : vector<8x128xf32>
    %191 = arith.addf %189, %190 : vector<8x128xf32>
    %192 = math.tanh %191 : vector<8x128xf32>
    %193 = arith.mulf %188, %192 : vector<8x128xf32>
    %194 = vector.extract_strided_slice %16 {offsets = [48, 0], sizes = [8, 512], strides = [1, 1]} : vector<64x512xf32> to vector<8x512xf32>
    %195 = arith.truncf %193 : vector<8x128xf32> to vector<8x128xbf16>
    %cst_33 = arith.constant dense<0.000000e+00> : vector<8x512xf32>
    %196 = tpu.matmul %195, %17, %cst_33 {dimension_numbers = #tpu.dot_dimension_numbers<[1], [0], [0], [1], [0, 0, 1, 1], [], []>} : vector<8x128xbf16>, vector<128x512xbf16>, vector<8x512xf32> -> vector<8x512xf32>
    %197 = arith.addf %194, %196 : vector<8x512xf32>
    %198 = vector.extract_strided_slice %197 {offsets = [0, 0], sizes = [8, 128], strides = [1, 1]} : vector<8x512xf32> to vector<8x128xf32>
    %199 = arith.negf %198 : vector<8x128xf32>
    %200 = math.exp %199 : vector<8x128xf32>
    %cst_34 = arith.constant 1.000000e+00 : f32
    %201 = vector.broadcast %cst_34 : f32 to vector<8x128xf32>
    %202 = arith.addf %201, %200 : vector<8x128xf32>
    %203 = arith.divf %201, %202 : vector<8x128xf32>
    %204 = vector.extract_strided_slice %197 {offsets = [0, 128], sizes = [8, 128], strides = [1, 1]} : vector<8x512xf32> to vector<8x128xf32>
    %205 = arith.negf %204 : vector<8x128xf32>
    %206 = math.exp %205 : vector<8x128xf32>
    %cst_35 = arith.constant 1.000000e+00 : f32
    %207 = vector.broadcast %cst_35 : f32 to vector<8x128xf32>
    %208 = arith.addf %207, %206 : vector<8x128xf32>
    %209 = arith.divf %207, %208 : vector<8x128xf32>
    %210 = vector.extract_strided_slice %197 {offsets = [0, 256], sizes = [8, 128], strides = [1, 1]} : vector<8x512xf32> to vector<8x128xf32>
    %211 = math.tanh %210 : vector<8x128xf32>
    %212 = vector.extract_strided_slice %197 {offsets = [0, 384], sizes = [8, 128], strides = [1, 1]} : vector<8x512xf32> to vector<8x128xf32>
    %213 = arith.negf %212 : vector<8x128xf32>
    %214 = math.exp %213 : vector<8x128xf32>
    %cst_36 = arith.constant 1.000000e+00 : f32
    %215 = vector.broadcast %cst_36 : f32 to vector<8x128xf32>
    %216 = arith.addf %215, %214 : vector<8x128xf32>
    %217 = arith.divf %215, %216 : vector<8x128xf32>
    %218 = arith.mulf %209, %191 : vector<8x128xf32>
    %219 = arith.mulf %203, %211 : vector<8x128xf32>
    %220 = arith.addf %218, %219 : vector<8x128xf32>
    %221 = math.tanh %220 : vector<8x128xf32>
    %222 = arith.mulf %217, %221 : vector<8x128xf32>
    %223 = vector.extract_strided_slice %16 {offsets = [56, 0], sizes = [8, 512], strides = [1, 1]} : vector<64x512xf32> to vector<8x512xf32>
    %224 = arith.truncf %222 : vector<8x128xf32> to vector<8x128xbf16>
    %cst_37 = arith.constant dense<0.000000e+00> : vector<8x512xf32>
    %225 = tpu.matmul %224, %17, %cst_37 {dimension_numbers = #tpu.dot_dimension_numbers<[1], [0], [0], [1], [0, 0, 1, 1], [], []>} : vector<8x128xbf16>, vector<128x512xbf16>, vector<8x512xf32> -> vector<8x512xf32>
    %226 = arith.addf %223, %225 : vector<8x512xf32>
    %227 = vector.extract_strided_slice %226 {offsets = [0, 0], sizes = [8, 128], strides = [1, 1]} : vector<8x512xf32> to vector<8x128xf32>
    %228 = arith.negf %227 : vector<8x128xf32>
    %229 = math.exp %228 : vector<8x128xf32>
    %cst_38 = arith.constant 1.000000e+00 : f32
    %230 = vector.broadcast %cst_38 : f32 to vector<8x128xf32>
    %231 = arith.addf %230, %229 : vector<8x128xf32>
    %232 = arith.divf %230, %231 : vector<8x128xf32>
    %233 = vector.extract_strided_slice %226 {offsets = [0, 128], sizes = [8, 128], strides = [1, 1]} : vector<8x512xf32> to vector<8x128xf32>
    %234 = arith.negf %233 : vector<8x128xf32>
    %235 = math.exp %234 : vector<8x128xf32>
    %cst_39 = arith.constant 1.000000e+00 : f32
    %236 = vector.broadcast %cst_39 : f32 to vector<8x128xf32>
    %237 = arith.addf %236, %235 : vector<8x128xf32>
    %238 = arith.divf %236, %237 : vector<8x128xf32>
    %239 = vector.extract_strided_slice %226 {offsets = [0, 256], sizes = [8, 128], strides = [1, 1]} : vector<8x512xf32> to vector<8x128xf32>
    %240 = math.tanh %239 : vector<8x128xf32>
    %241 = vector.extract_strided_slice %226 {offsets = [0, 384], sizes = [8, 128], strides = [1, 1]} : vector<8x512xf32> to vector<8x128xf32>
    %242 = arith.negf %241 : vector<8x128xf32>
    %243 = math.exp %242 : vector<8x128xf32>
    %cst_40 = arith.constant 1.000000e+00 : f32
    %244 = vector.broadcast %cst_40 : f32 to vector<8x128xf32>
    %245 = arith.addf %244, %243 : vector<8x128xf32>
    %246 = arith.divf %244, %245 : vector<8x128xf32>
    %247 = arith.mulf %238, %220 : vector<8x128xf32>
    %248 = arith.mulf %232, %240 : vector<8x128xf32>
    %249 = arith.addf %247, %248 : vector<8x128xf32>
    %250 = math.tanh %249 : vector<8x128xf32>
    %251 = arith.mulf %246, %250 : vector<8x128xf32>
    %c0_41 = arith.constant 0 : index
    %c0_42 = arith.constant 0 : index
    %252 = vector.load %arg3[%c0_41, %c0_42] : memref<64x1xf32, #tpu.memory_space<vmem>>, vector<64x1xf32>
    %c0_43 = arith.constant 0 : index
    %c0_44 = arith.constant 0 : index
    %253 = vector.load %arg9[%c0_43, %c0_44] : memref<128x256xbf16, #tpu.memory_space<vmem>>, vector<128x256xbf16>
    %c0_45 = arith.constant 0 : index
    %c0_46 = arith.constant 0 : index
    %254 = vector.load %arg10[%c0_45, %c0_46] : memref<3x128xf32, #tpu.memory_space<vmem>>, vector<3x128xf32>
    %255 = vector.extract_strided_slice %253 {offsets = [0, 0], sizes = [128, 128], strides = [1, 1]} : vector<128x256xbf16> to vector<128x128xbf16>
    %256 = vector.extract_strided_slice %253 {offsets = [0, 128], sizes = [128, 128], strides = [1, 1]} : vector<128x256xbf16> to vector<128x128xbf16>
    %257 = vector.extract_strided_slice %254 {offsets = [0, 0], sizes = [1, 128], strides = [1, 1]} : vector<3x128xf32> to vector<1x128xf32>
    %258 = vector.extract_strided_slice %254 {offsets = [1, 0], sizes = [1, 128], strides = [1, 1]} : vector<3x128xf32> to vector<1x128xf32>
    %259 = vector.extract_strided_slice %254 {offsets = [2, 0], sizes = [1, 128], strides = [1, 1]} : vector<3x128xf32> to vector<1x128xf32>
    %260 = tpu.concatenate %48, %77, %106, %135, %164, %193, %222, %251 in 0 : vector<8x128xf32>, vector<8x128xf32>, vector<8x128xf32>, vector<8x128xf32>, vector<8x128xf32>, vector<8x128xf32>, vector<8x128xf32>, vector<8x128xf32> -> vector<64x128xf32>
    %261 = arith.truncf %260 : vector<64x128xf32> to vector<64x128xbf16>
    %cst_47 = arith.constant dense<0.000000e+00> : vector<64x128xf32>
    %262 = tpu.matmul %261, %255, %cst_47 {dimension_numbers = #tpu.dot_dimension_numbers<[1], [0], [0], [1], [0, 0, 1, 1], [], []>} : vector<64x128xbf16>, vector<128x128xbf16>, vector<64x128xf32> -> vector<64x128xf32>
    %263 = vector.broadcast %257 : vector<1x128xf32> to vector<64x128xf32>
    %264 = arith.addf %262, %263 : vector<64x128xf32>
    %cst_48 = arith.constant 0.000000e+00 : f32
    %265 = vector.broadcast %cst_48 : f32 to vector<64x128xf32>
    %266 = arith.maximumf %264, %265 : vector<64x128xf32>
    %267 = vector.broadcast %258 : vector<1x128xf32> to vector<64x128xf32>
    %268 = arith.mulf %266, %267 : vector<64x128xf32>
    %cst_49 = arith.constant dense<0.000000e+00> : vector<64xf32>
    %269 = vector.multi_reduction <add>, %268, %cst_49 [1] : vector<64x128xf32> to vector<64xf32>
    %270 = vector.shape_cast %269 : vector<64xf32> to vector<64x1xf32>
    %271 = arith.addf %270, %252 : vector<64x1xf32>
    %272 = vector.extract_strided_slice %271 {offsets = [0, 0], sizes = [8, 1], strides = [1, 1]} : vector<64x1xf32> to vector<8x1xf32>
    %273 = vector.extract_strided_slice %271 {offsets = [8, 0], sizes = [8, 1], strides = [1, 1]} : vector<64x1xf32> to vector<8x1xf32>
    %274 = vector.extract_strided_slice %271 {offsets = [16, 0], sizes = [8, 1], strides = [1, 1]} : vector<64x1xf32> to vector<8x1xf32>
    %275 = vector.extract_strided_slice %271 {offsets = [24, 0], sizes = [8, 1], strides = [1, 1]} : vector<64x1xf32> to vector<8x1xf32>
    %276 = vector.extract_strided_slice %271 {offsets = [32, 0], sizes = [8, 1], strides = [1, 1]} : vector<64x1xf32> to vector<8x1xf32>
    %277 = vector.extract_strided_slice %271 {offsets = [40, 0], sizes = [8, 1], strides = [1, 1]} : vector<64x1xf32> to vector<8x1xf32>
    %278 = vector.extract_strided_slice %271 {offsets = [48, 0], sizes = [8, 1], strides = [1, 1]} : vector<64x1xf32> to vector<8x1xf32>
    %279 = vector.extract_strided_slice %271 {offsets = [56, 0], sizes = [8, 1], strides = [1, 1]} : vector<64x1xf32> to vector<8x1xf32>
    %280 = arith.maximumf %272, %273 : vector<8x1xf32>
    %281 = arith.maximumf %280, %274 : vector<8x1xf32>
    %282 = arith.maximumf %281, %275 : vector<8x1xf32>
    %283 = arith.maximumf %282, %276 : vector<8x1xf32>
    %284 = arith.maximumf %283, %277 : vector<8x1xf32>
    %285 = arith.maximumf %284, %278 : vector<8x1xf32>
    %286 = arith.maximumf %285, %279 : vector<8x1xf32>
    %287 = arith.subf %272, %286 : vector<8x1xf32>
    %288 = math.exp %287 : vector<8x1xf32>
    %289 = arith.subf %273, %286 : vector<8x1xf32>
    %290 = math.exp %289 : vector<8x1xf32>
    %291 = arith.subf %274, %286 : vector<8x1xf32>
    %292 = math.exp %291 : vector<8x1xf32>
    %293 = arith.subf %275, %286 : vector<8x1xf32>
    %294 = math.exp %293 : vector<8x1xf32>
    %295 = arith.subf %276, %286 : vector<8x1xf32>
    %296 = math.exp %295 : vector<8x1xf32>
    %297 = arith.subf %277, %286 : vector<8x1xf32>
    %298 = math.exp %297 : vector<8x1xf32>
    %299 = arith.subf %278, %286 : vector<8x1xf32>
    %300 = math.exp %299 : vector<8x1xf32>
    %301 = arith.subf %279, %286 : vector<8x1xf32>
    %302 = math.exp %301 : vector<8x1xf32>
    %303 = arith.addf %288, %290 : vector<8x1xf32>
    %304 = arith.addf %303, %292 : vector<8x1xf32>
    %305 = arith.addf %304, %294 : vector<8x1xf32>
    %306 = arith.addf %305, %296 : vector<8x1xf32>
    %307 = arith.addf %306, %298 : vector<8x1xf32>
    %308 = arith.addf %307, %300 : vector<8x1xf32>
    %309 = arith.addf %308, %302 : vector<8x1xf32>
    %310 = tpu.reciprocal %309 {approx = true} : vector<8x1xf32> -> vector<8x1xf32>
    %311 = arith.mulf %288, %310 : vector<8x1xf32>
    %312 = vector.broadcast %311 : vector<8x1xf32> to vector<8x128xf32>
    %313 = arith.mulf %312, %48 : vector<8x128xf32>
    %314 = arith.mulf %290, %310 : vector<8x1xf32>
    %315 = vector.broadcast %314 : vector<8x1xf32> to vector<8x128xf32>
    %316 = arith.mulf %315, %77 : vector<8x128xf32>
    %317 = arith.addf %313, %316 : vector<8x128xf32>
    %318 = arith.mulf %292, %310 : vector<8x1xf32>
    %319 = vector.broadcast %318 : vector<8x1xf32> to vector<8x128xf32>
    %320 = arith.mulf %319, %106 : vector<8x128xf32>
    %321 = arith.addf %317, %320 : vector<8x128xf32>
    %322 = arith.mulf %294, %310 : vector<8x1xf32>
    %323 = vector.broadcast %322 : vector<8x1xf32> to vector<8x128xf32>
    %324 = arith.mulf %323, %135 : vector<8x128xf32>
    %325 = arith.addf %321, %324 : vector<8x128xf32>
    %326 = arith.mulf %296, %310 : vector<8x1xf32>
    %327 = vector.broadcast %326 : vector<8x1xf32> to vector<8x128xf32>
    %328 = arith.mulf %327, %164 : vector<8x128xf32>
    %329 = arith.addf %325, %328 : vector<8x128xf32>
    %330 = arith.mulf %298, %310 : vector<8x1xf32>
    %331 = vector.broadcast %330 : vector<8x1xf32> to vector<8x128xf32>
    %332 = arith.mulf %331, %193 : vector<8x128xf32>
    %333 = arith.addf %329, %332 : vector<8x128xf32>
    %334 = arith.mulf %300, %310 : vector<8x1xf32>
    %335 = vector.broadcast %334 : vector<8x1xf32> to vector<8x128xf32>
    %336 = arith.mulf %335, %222 : vector<8x128xf32>
    %337 = arith.addf %333, %336 : vector<8x128xf32>
    %338 = arith.mulf %302, %310 : vector<8x1xf32>
    %339 = vector.broadcast %338 : vector<8x1xf32> to vector<8x128xf32>
    %340 = arith.mulf %339, %251 : vector<8x128xf32>
    %341 = arith.addf %337, %340 : vector<8x128xf32>
    %342 = arith.truncf %341 : vector<8x128xf32> to vector<8x128xbf16>
    %cst_50 = arith.constant dense<0.000000e+00> : vector<8x128xf32>
    %343 = tpu.matmul %342, %256, %cst_50 {dimension_numbers = #tpu.dot_dimension_numbers<[1], [0], [0], [1], [0, 0, 1, 1], [], []>} : vector<8x128xbf16>, vector<128x128xbf16>, vector<8x128xf32> -> vector<8x128xf32>
    %344 = vector.broadcast %259 : vector<1x128xf32> to vector<8x128xf32>
    %345 = arith.addf %343, %344 : vector<8x128xf32>
    %c0_51 = arith.constant 0 : index
    %c0_52 = arith.constant 0 : index
    %346 = vector.load %arg1[%c0_51, %c0_52] : memref<64x64xf32, #tpu.memory_space<vmem>>, vector<64x64xf32>
    %c0_53 = arith.constant 0 : index
    %c0_54 = arith.constant 0 : index
    %347 = vector.load %arg15[%c0_53, %c0_54] : memref<64x128xbf16, #tpu.memory_space<vmem>>, vector<64x128xbf16>
    %348 = arith.truncf %346 : vector<64x64xf32> to vector<64x64xbf16>
    %cst_55 = arith.constant dense<0.000000e+00> : vector<64x128xf32>
    %349 = tpu.matmul %348, %347, %cst_55 {dimension_numbers = #tpu.dot_dimension_numbers<[1], [0], [0], [1], [0, 0, 1, 1], [], []>} : vector<64x64xbf16>, vector<64x128xbf16>, vector<64x128xf32> -> vector<64x128xf32>
    %c0_56 = arith.constant 0 : index
    %c0_57 = arith.constant 0 : index
    %350 = vector.load %arg16[%c0_56, %c0_57] : memref<1x128xf32, #tpu.memory_space<vmem>>, vector<1x128xf32>
    %351 = vector.broadcast %350 : vector<1x128xf32> to vector<64x128xf32>
    %352 = arith.addf %349, %351 : vector<64x128xf32>
    %353 = vector.extract_strided_slice %352 {offsets = [0, 0], sizes = [8, 128], strides = [1, 1]} : vector<64x128xf32> to vector<8x128xf32>
    %354 = vector.extract_strided_slice %352 {offsets = [8, 0], sizes = [8, 128], strides = [1, 1]} : vector<64x128xf32> to vector<8x128xf32>
    %355 = vector.extract_strided_slice %352 {offsets = [16, 0], sizes = [8, 128], strides = [1, 1]} : vector<64x128xf32> to vector<8x128xf32>
    %356 = vector.extract_strided_slice %352 {offsets = [24, 0], sizes = [8, 128], strides = [1, 1]} : vector<64x128xf32> to vector<8x128xf32>
    %357 = vector.extract_strided_slice %352 {offsets = [32, 0], sizes = [8, 128], strides = [1, 1]} : vector<64x128xf32> to vector<8x128xf32>
    %358 = vector.extract_strided_slice %352 {offsets = [40, 0], sizes = [8, 128], strides = [1, 1]} : vector<64x128xf32> to vector<8x128xf32>
    %359 = vector.extract_strided_slice %352 {offsets = [48, 0], sizes = [8, 128], strides = [1, 1]} : vector<64x128xf32> to vector<8x128xf32>
    %360 = vector.extract_strided_slice %352 {offsets = [56, 0], sizes = [8, 128], strides = [1, 1]} : vector<64x128xf32> to vector<8x128xf32>
    %c0_58 = arith.constant 0 : index
    %c0_59 = arith.constant 0 : index
    %361 = vector.load %arg4[%c0_58, %c0_59] : memref<64x1xf32, #tpu.memory_space<vmem>>, vector<64x1xf32>
    %c0_60 = arith.constant 0 : index
    %c0_61 = arith.constant 0 : index
    %362 = vector.load %arg11[%c0_60, %c0_61] : memref<128x256xbf16, #tpu.memory_space<vmem>>, vector<128x256xbf16>
    %c0_62 = arith.constant 0 : index
    %c0_63 = arith.constant 0 : index
    %363 = vector.load %arg12[%c0_62, %c0_63] : memref<3x128xf32, #tpu.memory_space<vmem>>, vector<3x128xf32>
    %364 = vector.extract_strided_slice %362 {offsets = [0, 0], sizes = [128, 128], strides = [1, 1]} : vector<128x256xbf16> to vector<128x128xbf16>
    %365 = vector.extract_strided_slice %362 {offsets = [0, 128], sizes = [128, 128], strides = [1, 1]} : vector<128x256xbf16> to vector<128x128xbf16>
    %366 = vector.extract_strided_slice %363 {offsets = [0, 0], sizes = [1, 128], strides = [1, 1]} : vector<3x128xf32> to vector<1x128xf32>
    %367 = vector.extract_strided_slice %363 {offsets = [1, 0], sizes = [1, 128], strides = [1, 1]} : vector<3x128xf32> to vector<1x128xf32>
    %368 = vector.extract_strided_slice %363 {offsets = [2, 0], sizes = [1, 128], strides = [1, 1]} : vector<3x128xf32> to vector<1x128xf32>
    %369 = tpu.concatenate %353, %354, %355, %356, %357, %358, %359, %360 in 0 : vector<8x128xf32>, vector<8x128xf32>, vector<8x128xf32>, vector<8x128xf32>, vector<8x128xf32>, vector<8x128xf32>, vector<8x128xf32>, vector<8x128xf32> -> vector<64x128xf32>
    %370 = arith.truncf %369 : vector<64x128xf32> to vector<64x128xbf16>
    %cst_64 = arith.constant dense<0.000000e+00> : vector<64x128xf32>
    %371 = tpu.matmul %370, %364, %cst_64 {dimension_numbers = #tpu.dot_dimension_numbers<[1], [0], [0], [1], [0, 0, 1, 1], [], []>} : vector<64x128xbf16>, vector<128x128xbf16>, vector<64x128xf32> -> vector<64x128xf32>
    %372 = vector.broadcast %366 : vector<1x128xf32> to vector<64x128xf32>
    %373 = arith.addf %371, %372 : vector<64x128xf32>
    %cst_65 = arith.constant 0.000000e+00 : f32
    %374 = vector.broadcast %cst_65 : f32 to vector<64x128xf32>
    %375 = arith.maximumf %373, %374 : vector<64x128xf32>
    %376 = vector.broadcast %367 : vector<1x128xf32> to vector<64x128xf32>
    %377 = arith.mulf %375, %376 : vector<64x128xf32>
    %cst_66 = arith.constant dense<0.000000e+00> : vector<64xf32>
    %378 = vector.multi_reduction <add>, %377, %cst_66 [1] : vector<64x128xf32> to vector<64xf32>
    %379 = vector.shape_cast %378 : vector<64xf32> to vector<64x1xf32>
    %380 = arith.addf %379, %361 : vector<64x1xf32>
    %381 = vector.extract_strided_slice %380 {offsets = [0, 0], sizes = [8, 1], strides = [1, 1]} : vector<64x1xf32> to vector<8x1xf32>
    %382 = vector.extract_strided_slice %380 {offsets = [8, 0], sizes = [8, 1], strides = [1, 1]} : vector<64x1xf32> to vector<8x1xf32>
    %383 = vector.extract_strided_slice %380 {offsets = [16, 0], sizes = [8, 1], strides = [1, 1]} : vector<64x1xf32> to vector<8x1xf32>
    %384 = vector.extract_strided_slice %380 {offsets = [24, 0], sizes = [8, 1], strides = [1, 1]} : vector<64x1xf32> to vector<8x1xf32>
    %385 = vector.extract_strided_slice %380 {offsets = [32, 0], sizes = [8, 1], strides = [1, 1]} : vector<64x1xf32> to vector<8x1xf32>
    %386 = vector.extract_strided_slice %380 {offsets = [40, 0], sizes = [8, 1], strides = [1, 1]} : vector<64x1xf32> to vector<8x1xf32>
    %387 = vector.extract_strided_slice %380 {offsets = [48, 0], sizes = [8, 1], strides = [1, 1]} : vector<64x1xf32> to vector<8x1xf32>
    %388 = vector.extract_strided_slice %380 {offsets = [56, 0], sizes = [8, 1], strides = [1, 1]} : vector<64x1xf32> to vector<8x1xf32>
    %389 = arith.maximumf %381, %382 : vector<8x1xf32>
    %390 = arith.maximumf %389, %383 : vector<8x1xf32>
    %391 = arith.maximumf %390, %384 : vector<8x1xf32>
    %392 = arith.maximumf %391, %385 : vector<8x1xf32>
    %393 = arith.maximumf %392, %386 : vector<8x1xf32>
    %394 = arith.maximumf %393, %387 : vector<8x1xf32>
    %395 = arith.maximumf %394, %388 : vector<8x1xf32>
    %396 = arith.subf %381, %395 : vector<8x1xf32>
    %397 = math.exp %396 : vector<8x1xf32>
    %398 = arith.subf %382, %395 : vector<8x1xf32>
    %399 = math.exp %398 : vector<8x1xf32>
    %400 = arith.subf %383, %395 : vector<8x1xf32>
    %401 = math.exp %400 : vector<8x1xf32>
    %402 = arith.subf %384, %395 : vector<8x1xf32>
    %403 = math.exp %402 : vector<8x1xf32>
    %404 = arith.subf %385, %395 : vector<8x1xf32>
    %405 = math.exp %404 : vector<8x1xf32>
    %406 = arith.subf %386, %395 : vector<8x1xf32>
    %407 = math.exp %406 : vector<8x1xf32>
    %408 = arith.subf %387, %395 : vector<8x1xf32>
    %409 = math.exp %408 : vector<8x1xf32>
    %410 = arith.subf %388, %395 : vector<8x1xf32>
    %411 = math.exp %410 : vector<8x1xf32>
    %412 = arith.addf %397, %399 : vector<8x1xf32>
    %413 = arith.addf %412, %401 : vector<8x1xf32>
    %414 = arith.addf %413, %403 : vector<8x1xf32>
    %415 = arith.addf %414, %405 : vector<8x1xf32>
    %416 = arith.addf %415, %407 : vector<8x1xf32>
    %417 = arith.addf %416, %409 : vector<8x1xf32>
    %418 = arith.addf %417, %411 : vector<8x1xf32>
    %419 = tpu.reciprocal %418 {approx = true} : vector<8x1xf32> -> vector<8x1xf32>
    %420 = arith.mulf %397, %419 : vector<8x1xf32>
    %421 = vector.broadcast %420 : vector<8x1xf32> to vector<8x128xf32>
    %422 = arith.mulf %421, %353 : vector<8x128xf32>
    %423 = arith.mulf %399, %419 : vector<8x1xf32>
    %424 = vector.broadcast %423 : vector<8x1xf32> to vector<8x128xf32>
    %425 = arith.mulf %424, %354 : vector<8x128xf32>
    %426 = arith.addf %422, %425 : vector<8x128xf32>
    %427 = arith.mulf %401, %419 : vector<8x1xf32>
    %428 = vector.broadcast %427 : vector<8x1xf32> to vector<8x128xf32>
    %429 = arith.mulf %428, %355 : vector<8x128xf32>
    %430 = arith.addf %426, %429 : vector<8x128xf32>
    %431 = arith.mulf %403, %419 : vector<8x1xf32>
    %432 = vector.broadcast %431 : vector<8x1xf32> to vector<8x128xf32>
    %433 = arith.mulf %432, %356 : vector<8x128xf32>
    %434 = arith.addf %430, %433 : vector<8x128xf32>
    %435 = arith.mulf %405, %419 : vector<8x1xf32>
    %436 = vector.broadcast %435 : vector<8x1xf32> to vector<8x128xf32>
    %437 = arith.mulf %436, %357 : vector<8x128xf32>
    %438 = arith.addf %434, %437 : vector<8x128xf32>
    %439 = arith.mulf %407, %419 : vector<8x1xf32>
    %440 = vector.broadcast %439 : vector<8x1xf32> to vector<8x128xf32>
    %441 = arith.mulf %440, %358 : vector<8x128xf32>
    %442 = arith.addf %438, %441 : vector<8x128xf32>
    %443 = arith.mulf %409, %419 : vector<8x1xf32>
    %444 = vector.broadcast %443 : vector<8x1xf32> to vector<8x128xf32>
    %445 = arith.mulf %444, %359 : vector<8x128xf32>
    %446 = arith.addf %442, %445 : vector<8x128xf32>
    %447 = arith.mulf %411, %419 : vector<8x1xf32>
    %448 = vector.broadcast %447 : vector<8x1xf32> to vector<8x128xf32>
    %449 = arith.mulf %448, %360 : vector<8x128xf32>
    %450 = arith.addf %446, %449 : vector<8x128xf32>
    %451 = arith.truncf %450 : vector<8x128xf32> to vector<8x128xbf16>
    %cst_67 = arith.constant dense<0.000000e+00> : vector<8x128xf32>
    %452 = tpu.matmul %451, %365, %cst_67 {dimension_numbers = #tpu.dot_dimension_numbers<[1], [0], [0], [1], [0, 0, 1, 1], [], []>} : vector<8x128xbf16>, vector<128x128xbf16>, vector<8x128xf32> -> vector<8x128xf32>
    %453 = vector.broadcast %368 : vector<1x128xf32> to vector<8x128xf32>
    %454 = arith.addf %452, %453 : vector<8x128xf32>
    %c0_68 = arith.constant 0 : index
    %c0_69 = arith.constant 0 : index
    %455 = vector.load %arg2[%c0_68, %c0_69] : memref<32x64xf32, #tpu.memory_space<vmem>>, vector<32x64xf32>
    %c0_70 = arith.constant 0 : index
    %c0_71 = arith.constant 0 : index
    %456 = vector.load %arg17[%c0_70, %c0_71] : memref<64x128xbf16, #tpu.memory_space<vmem>>, vector<64x128xbf16>
    %457 = arith.truncf %455 : vector<32x64xf32> to vector<32x64xbf16>
    %cst_72 = arith.constant dense<0.000000e+00> : vector<32x128xf32>
    %458 = tpu.matmul %457, %456, %cst_72 {dimension_numbers = #tpu.dot_dimension_numbers<[1], [0], [0], [1], [0, 0, 1, 1], [], []>} : vector<32x64xbf16>, vector<64x128xbf16>, vector<32x128xf32> -> vector<32x128xf32>
    %c0_73 = arith.constant 0 : index
    %c0_74 = arith.constant 0 : index
    %459 = vector.load %arg18[%c0_73, %c0_74] : memref<1x128xf32, #tpu.memory_space<vmem>>, vector<1x128xf32>
    %460 = vector.broadcast %459 : vector<1x128xf32> to vector<32x128xf32>
    %461 = arith.addf %458, %460 : vector<32x128xf32>
    %462 = vector.extract_strided_slice %461 {offsets = [0, 0], sizes = [8, 128], strides = [1, 1]} : vector<32x128xf32> to vector<8x128xf32>
    %463 = vector.extract_strided_slice %461 {offsets = [8, 0], sizes = [8, 128], strides = [1, 1]} : vector<32x128xf32> to vector<8x128xf32>
    %464 = vector.extract_strided_slice %461 {offsets = [16, 0], sizes = [8, 128], strides = [1, 1]} : vector<32x128xf32> to vector<8x128xf32>
    %465 = vector.extract_strided_slice %461 {offsets = [24, 0], sizes = [8, 128], strides = [1, 1]} : vector<32x128xf32> to vector<8x128xf32>
    %c0_75 = arith.constant 0 : index
    %c0_76 = arith.constant 0 : index
    %466 = vector.load %arg5[%c0_75, %c0_76] : memref<32x1xf32, #tpu.memory_space<vmem>>, vector<32x1xf32>
    %c0_77 = arith.constant 0 : index
    %c0_78 = arith.constant 0 : index
    %467 = vector.load %arg13[%c0_77, %c0_78] : memref<128x256xbf16, #tpu.memory_space<vmem>>, vector<128x256xbf16>
    %c0_79 = arith.constant 0 : index
    %c0_80 = arith.constant 0 : index
    %468 = vector.load %arg14[%c0_79, %c0_80] : memref<3x128xf32, #tpu.memory_space<vmem>>, vector<3x128xf32>
    %469 = vector.extract_strided_slice %467 {offsets = [0, 0], sizes = [128, 128], strides = [1, 1]} : vector<128x256xbf16> to vector<128x128xbf16>
    %470 = vector.extract_strided_slice %467 {offsets = [0, 128], sizes = [128, 128], strides = [1, 1]} : vector<128x256xbf16> to vector<128x128xbf16>
    %471 = vector.extract_strided_slice %468 {offsets = [0, 0], sizes = [1, 128], strides = [1, 1]} : vector<3x128xf32> to vector<1x128xf32>
    %472 = vector.extract_strided_slice %468 {offsets = [1, 0], sizes = [1, 128], strides = [1, 1]} : vector<3x128xf32> to vector<1x128xf32>
    %473 = vector.extract_strided_slice %468 {offsets = [2, 0], sizes = [1, 128], strides = [1, 1]} : vector<3x128xf32> to vector<1x128xf32>
    %474 = tpu.concatenate %462, %463, %464, %465 in 0 : vector<8x128xf32>, vector<8x128xf32>, vector<8x128xf32>, vector<8x128xf32> -> vector<32x128xf32>
    %475 = arith.truncf %474 : vector<32x128xf32> to vector<32x128xbf16>
    %cst_81 = arith.constant dense<0.000000e+00> : vector<32x128xf32>
    %476 = tpu.matmul %475, %469, %cst_81 {dimension_numbers = #tpu.dot_dimension_numbers<[1], [0], [0], [1], [0, 0, 1, 1], [], []>} : vector<32x128xbf16>, vector<128x128xbf16>, vector<32x128xf32> -> vector<32x128xf32>
    %477 = vector.broadcast %471 : vector<1x128xf32> to vector<32x128xf32>
    %478 = arith.addf %476, %477 : vector<32x128xf32>
    %cst_82 = arith.constant 0.000000e+00 : f32
    %479 = vector.broadcast %cst_82 : f32 to vector<32x128xf32>
    %480 = arith.maximumf %478, %479 : vector<32x128xf32>
    %481 = vector.broadcast %472 : vector<1x128xf32> to vector<32x128xf32>
    %482 = arith.mulf %480, %481 : vector<32x128xf32>
    %cst_83 = arith.constant dense<0.000000e+00> : vector<32xf32>
    %483 = vector.multi_reduction <add>, %482, %cst_83 [1] : vector<32x128xf32> to vector<32xf32>
    %484 = vector.shape_cast %483 : vector<32xf32> to vector<32x1xf32>
    %485 = arith.addf %484, %466 : vector<32x1xf32>
    %486 = vector.extract_strided_slice %485 {offsets = [0, 0], sizes = [8, 1], strides = [1, 1]} : vector<32x1xf32> to vector<8x1xf32>
    %487 = vector.extract_strided_slice %485 {offsets = [8, 0], sizes = [8, 1], strides = [1, 1]} : vector<32x1xf32> to vector<8x1xf32>
    %488 = vector.extract_strided_slice %485 {offsets = [16, 0], sizes = [8, 1], strides = [1, 1]} : vector<32x1xf32> to vector<8x1xf32>
    %489 = vector.extract_strided_slice %485 {offsets = [24, 0], sizes = [8, 1], strides = [1, 1]} : vector<32x1xf32> to vector<8x1xf32>
    %490 = arith.maximumf %486, %487 : vector<8x1xf32>
    %491 = arith.maximumf %490, %488 : vector<8x1xf32>
    %492 = arith.maximumf %491, %489 : vector<8x1xf32>
    %493 = arith.subf %486, %492 : vector<8x1xf32>
    %494 = math.exp %493 : vector<8x1xf32>
    %495 = arith.subf %487, %492 : vector<8x1xf32>
    %496 = math.exp %495 : vector<8x1xf32>
    %497 = arith.subf %488, %492 : vector<8x1xf32>
    %498 = math.exp %497 : vector<8x1xf32>
    %499 = arith.subf %489, %492 : vector<8x1xf32>
    %500 = math.exp %499 : vector<8x1xf32>
    %501 = arith.addf %494, %496 : vector<8x1xf32>
    %502 = arith.addf %501, %498 : vector<8x1xf32>
    %503 = arith.addf %502, %500 : vector<8x1xf32>
    %504 = tpu.reciprocal %503 {approx = true} : vector<8x1xf32> -> vector<8x1xf32>
    %505 = arith.mulf %494, %504 : vector<8x1xf32>
    %506 = vector.broadcast %505 : vector<8x1xf32> to vector<8x128xf32>
    %507 = arith.mulf %506, %462 : vector<8x128xf32>
    %508 = arith.mulf %496, %504 : vector<8x1xf32>
    %509 = vector.broadcast %508 : vector<8x1xf32> to vector<8x128xf32>
    %510 = arith.mulf %509, %463 : vector<8x128xf32>
    %511 = arith.addf %507, %510 : vector<8x128xf32>
    %512 = arith.mulf %498, %504 : vector<8x1xf32>
    %513 = vector.broadcast %512 : vector<8x1xf32> to vector<8x128xf32>
    %514 = arith.mulf %513, %464 : vector<8x128xf32>
    %515 = arith.addf %511, %514 : vector<8x128xf32>
    %516 = arith.mulf %500, %504 : vector<8x1xf32>
    %517 = vector.broadcast %516 : vector<8x1xf32> to vector<8x128xf32>
    %518 = arith.mulf %517, %465 : vector<8x128xf32>
    %519 = arith.addf %515, %518 : vector<8x128xf32>
    %520 = arith.truncf %519 : vector<8x128xf32> to vector<8x128xbf16>
    %cst_84 = arith.constant dense<0.000000e+00> : vector<8x128xf32>
    %521 = tpu.matmul %520, %470, %cst_84 {dimension_numbers = #tpu.dot_dimension_numbers<[1], [0], [0], [1], [0, 0, 1, 1], [], []>} : vector<8x128xbf16>, vector<128x128xbf16>, vector<8x128xf32> -> vector<8x128xf32>
    %522 = vector.broadcast %473 : vector<1x128xf32> to vector<8x128xf32>
    %523 = arith.addf %521, %522 : vector<8x128xf32>
    %c0_i32_85 = arith.constant 0 : i32
    %524 = tpu.memref_slice %arg34[%c0_i32_85] : memref<5x!tpu.dma_semaphore, #tpu.memory_space<semaphore_mem>> -> memref<1x!tpu.dma_semaphore, #tpu.memory_space<semaphore_mem>>
    %525 = tpu.memref_squeeze %524 : memref<1x!tpu.dma_semaphore, #tpu.memory_space<semaphore_mem>> -> memref<!tpu.dma_semaphore, #tpu.memory_space<semaphore_mem>>
    tpu.wait_dma2 semaphore(%525 : memref<!tpu.dma_semaphore, #tpu.memory_space<semaphore_mem>>) src(%arg23 : memref<128x1024xbf16, #tpu.memory_space<any>>) dst(%arg29 : memref<128x1024xbf16, #tpu.memory_space<vmem>>)
    %c1_i32_86 = arith.constant 1 : i32
    %526 = tpu.memref_slice %arg34[%c1_i32_86] : memref<5x!tpu.dma_semaphore, #tpu.memory_space<semaphore_mem>> -> memref<1x!tpu.dma_semaphore, #tpu.memory_space<semaphore_mem>>
    %527 = tpu.memref_squeeze %526 : memref<1x!tpu.dma_semaphore, #tpu.memory_space<semaphore_mem>> -> memref<!tpu.dma_semaphore, #tpu.memory_space<semaphore_mem>>
    tpu.wait_dma2 semaphore(%527 : memref<!tpu.dma_semaphore, #tpu.memory_space<semaphore_mem>>) src(%arg24 : memref<256x512xbf16, #tpu.memory_space<any>>) dst(%arg30 : memref<256x512xbf16, #tpu.memory_space<vmem>>)
    %c2_i32_87 = arith.constant 2 : i32
    %528 = tpu.memref_slice %arg34[%c2_i32_87] : memref<5x!tpu.dma_semaphore, #tpu.memory_space<semaphore_mem>> -> memref<1x!tpu.dma_semaphore, #tpu.memory_space<semaphore_mem>>
    %529 = tpu.memref_squeeze %528 : memref<1x!tpu.dma_semaphore, #tpu.memory_space<semaphore_mem>> -> memref<!tpu.dma_semaphore, #tpu.memory_space<semaphore_mem>>
    tpu.wait_dma2 semaphore(%529 : memref<!tpu.dma_semaphore, #tpu.memory_space<semaphore_mem>>) src(%arg25 : memref<256x1024xbf16, #tpu.memory_space<any>>) dst(%arg31 : memref<256x1024xbf16, #tpu.memory_space<vmem>>)
    %c3_i32_88 = arith.constant 3 : i32
    %530 = tpu.memref_slice %arg34[%c3_i32_88] : memref<5x!tpu.dma_semaphore, #tpu.memory_space<semaphore_mem>> -> memref<1x!tpu.dma_semaphore, #tpu.memory_space<semaphore_mem>>
    %531 = tpu.memref_squeeze %530 : memref<1x!tpu.dma_semaphore, #tpu.memory_space<semaphore_mem>> -> memref<!tpu.dma_semaphore, #tpu.memory_space<semaphore_mem>>
    tpu.wait_dma2 semaphore(%531 : memref<!tpu.dma_semaphore, #tpu.memory_space<semaphore_mem>>) src(%arg26 : memref<256x512xbf16, #tpu.memory_space<any>>) dst(%arg32 : memref<256x512xbf16, #tpu.memory_space<vmem>>)
    %c4_i32_89 = arith.constant 4 : i32
    %532 = tpu.memref_slice %arg34[%c4_i32_89] : memref<5x!tpu.dma_semaphore, #tpu.memory_space<semaphore_mem>> -> memref<1x!tpu.dma_semaphore, #tpu.memory_space<semaphore_mem>>
    %533 = tpu.memref_squeeze %532 : memref<1x!tpu.dma_semaphore, #tpu.memory_space<semaphore_mem>> -> memref<!tpu.dma_semaphore, #tpu.memory_space<semaphore_mem>>
    tpu.wait_dma2 semaphore(%533 : memref<!tpu.dma_semaphore, #tpu.memory_space<semaphore_mem>>) src(%arg27 : memref<256x128xbf16, #tpu.memory_space<any>>) dst(%arg33 : memref<256x128xbf16, #tpu.memory_space<vmem>>)
    %c0_90 = arith.constant 0 : index
    %c0_91 = arith.constant 0 : index
    %534 = vector.load %arg19[%c0_90, %c0_91] : memref<5x128xf32, #tpu.memory_space<vmem>>, vector<1x128xf32>
    %c1 = arith.constant 1 : index
    %c0_92 = arith.constant 0 : index
    %535 = vector.load %arg19[%c1, %c0_92] : memref<5x128xf32, #tpu.memory_space<vmem>>, vector<1x128xf32>
    %c2 = arith.constant 2 : index
    %c0_93 = arith.constant 0 : index
    %536 = vector.load %arg19[%c2, %c0_93] : memref<5x128xf32, #tpu.memory_space<vmem>>, vector<1x128xf32>
    %c3 = arith.constant 3 : index
    %c0_94 = arith.constant 0 : index
    %537 = vector.load %arg19[%c3, %c0_94] : memref<5x128xf32, #tpu.memory_space<vmem>>, vector<1x128xf32>
    %c4 = arith.constant 4 : index
    %c0_95 = arith.constant 0 : index
    %538 = vector.load %arg19[%c4, %c0_95] : memref<5x128xf32, #tpu.memory_space<vmem>>, vector<1x128xf32>
    %539 = arith.addf %345, %454 : vector<8x128xf32>
    %540 = arith.addf %539, %523 : vector<8x128xf32>
    %cst_96 = arith.constant dense<0.000000e+00> : vector<8xf32>
    %541 = vector.multi_reduction <add>, %540, %cst_96 [1] : vector<8x128xf32> to vector<8xf32>
    %542 = vector.shape_cast %541 : vector<8xf32> to vector<8x1xf32>
    %cst_97 = arith.constant 1.280000e+02 : f32
    %543 = vector.broadcast %cst_97 : f32 to vector<8x1xf32>
    %544 = arith.divf %542, %543 : vector<8x1xf32>
    %545 = vector.broadcast %544 : vector<8x1xf32> to vector<8x128xf32>
    %546 = arith.subf %540, %545 : vector<8x128xf32>
    %547 = arith.mulf %546, %546 : vector<8x128xf32>
    %cst_98 = arith.constant dense<0.000000e+00> : vector<8xf32>
    %548 = vector.multi_reduction <add>, %547, %cst_98 [1] : vector<8x128xf32> to vector<8xf32>
    %549 = vector.shape_cast %548 : vector<8xf32> to vector<8x1xf32>
    %cst_99 = arith.constant 1.280000e+02 : f32
    %550 = vector.broadcast %cst_99 : f32 to vector<8x1xf32>
    %551 = arith.divf %549, %550 : vector<8x1xf32>
    %552 = vector.broadcast %544 : vector<8x1xf32> to vector<8x128xf32>
    %553 = arith.subf %540, %552 : vector<8x128xf32>
    %cst_100 = arith.constant 9.99999997E-7 : f32
    %554 = vector.broadcast %cst_100 : f32 to vector<8x1xf32>
    %555 = arith.addf %551, %554 : vector<8x1xf32>
    %556 = math.rsqrt %555 : vector<8x1xf32>
    %557 = vector.broadcast %556 : vector<8x1xf32> to vector<8x128xf32>
    %558 = arith.mulf %553, %557 : vector<8x128xf32>
    %559 = vector.broadcast %534 : vector<1x128xf32> to vector<8x128xf32>
    %560 = arith.mulf %558, %559 : vector<8x128xf32>
    %561 = vector.broadcast %535 : vector<1x128xf32> to vector<8x128xf32>
    %562 = arith.addf %560, %561 : vector<8x128xf32>
    %563 = tpu.concatenate %345, %454, %523 in 0 : vector<8x128xf32>, vector<8x128xf32>, vector<8x128xf32> -> vector<24x128xf32>
    %c0_101 = arith.constant 0 : index
    %c0_102 = arith.constant 0 : index
    %564 = vector.load %arg29[%c0_101, %c0_102] : memref<128x1024xbf16, #tpu.memory_space<vmem>>, vector<128x1024xbf16>
    %565 = arith.truncf %563 : vector<24x128xf32> to vector<24x128xbf16>
    %cst_103 = arith.constant dense<0.000000e+00> : vector<24x1024xf32>
    %566 = tpu.matmul %565, %564, %cst_103 {dimension_numbers = #tpu.dot_dimension_numbers<[1], [0], [0], [1], [0, 0, 1, 1], [], []>} : vector<24x128xbf16>, vector<128x1024xbf16>, vector<24x1024xf32> -> vector<24x1024xf32>
    %c0_104 = arith.constant 0 : index
    %c0_105 = arith.constant 0 : index
    %567 = vector.load %arg20[%c0_104, %c0_105] : memref<2x1024xf32, #tpu.memory_space<vmem>>, vector<1x1024xf32>
    %568 = vector.broadcast %567 : vector<1x1024xf32> to vector<24x1024xf32>
    %569 = arith.addf %566, %568 : vector<24x1024xf32>
    %570 = vector.extract_strided_slice %569 {offsets = [0, 0], sizes = [24, 512], strides = [1, 1]} : vector<24x1024xf32> to vector<24x512xf32>
    %571 = vector.extract_strided_slice %569 {offsets = [0, 512], sizes = [24, 512], strides = [1, 1]} : vector<24x1024xf32> to vector<24x512xf32>
    %c0_106 = arith.constant 0 : index
    %c0_107 = arith.constant 0 : index
    %572 = vector.load %arg30[%c0_106, %c0_107] : memref<256x512xbf16, #tpu.memory_space<vmem>>, vector<256x512xbf16>
    %573 = vector.extract_strided_slice %572 {offsets = [0, 0], sizes = [128, 512], strides = [1, 1]} : vector<256x512xbf16> to vector<128x512xbf16>
    %574 = vector.extract_strided_slice %572 {offsets = [128, 0], sizes = [128, 512], strides = [1, 1]} : vector<256x512xbf16> to vector<128x512xbf16>
    %cst_108 = arith.constant 0.000000e+00 : f32
    %575 = vector.broadcast %cst_108 : f32 to vector<8x128xf32>
    %cst_109 = arith.constant 0.000000e+00 : f32
    %576 = vector.broadcast %cst_109 : f32 to vector<8x128xf32>
    %577 = vector.extract_strided_slice %570 {offsets = [0, 0], sizes = [8, 512], strides = [1, 1]} : vector<24x512xf32> to vector<8x512xf32>
    %578 = arith.truncf %575 : vector<8x128xf32> to vector<8x128xbf16>
    %cst_110 = arith.constant dense<0.000000e+00> : vector<8x512xf32>
    %579 = tpu.matmul %578, %573, %cst_110 {dimension_numbers = #tpu.dot_dimension_numbers<[1], [0], [0], [1], [0, 0, 1, 1], [], []>} : vector<8x128xbf16>, vector<128x512xbf16>, vector<8x512xf32> -> vector<8x512xf32>
    %580 = arith.addf %577, %579 : vector<8x512xf32>
    %581 = vector.extract_strided_slice %580 {offsets = [0, 0], sizes = [8, 128], strides = [1, 1]} : vector<8x512xf32> to vector<8x128xf32>
    %582 = arith.negf %581 : vector<8x128xf32>
    %583 = math.exp %582 : vector<8x128xf32>
    %cst_111 = arith.constant 1.000000e+00 : f32
    %584 = vector.broadcast %cst_111 : f32 to vector<8x128xf32>
    %585 = arith.addf %584, %583 : vector<8x128xf32>
    %586 = arith.divf %584, %585 : vector<8x128xf32>
    %587 = vector.extract_strided_slice %580 {offsets = [0, 128], sizes = [8, 128], strides = [1, 1]} : vector<8x512xf32> to vector<8x128xf32>
    %588 = arith.negf %587 : vector<8x128xf32>
    %589 = math.exp %588 : vector<8x128xf32>
    %cst_112 = arith.constant 1.000000e+00 : f32
    %590 = vector.broadcast %cst_112 : f32 to vector<8x128xf32>
    %591 = arith.addf %590, %589 : vector<8x128xf32>
    %592 = arith.divf %590, %591 : vector<8x128xf32>
    %593 = vector.extract_strided_slice %580 {offsets = [0, 256], sizes = [8, 128], strides = [1, 1]} : vector<8x512xf32> to vector<8x128xf32>
    %594 = math.tanh %593 : vector<8x128xf32>
    %595 = vector.extract_strided_slice %580 {offsets = [0, 384], sizes = [8, 128], strides = [1, 1]} : vector<8x512xf32> to vector<8x128xf32>
    %596 = arith.negf %595 : vector<8x128xf32>
    %597 = math.exp %596 : vector<8x128xf32>
    %cst_113 = arith.constant 1.000000e+00 : f32
    %598 = vector.broadcast %cst_113 : f32 to vector<8x128xf32>
    %599 = arith.addf %598, %597 : vector<8x128xf32>
    %600 = arith.divf %598, %599 : vector<8x128xf32>
    %601 = arith.mulf %592, %576 : vector<8x128xf32>
    %602 = arith.mulf %586, %594 : vector<8x128xf32>
    %603 = arith.addf %601, %602 : vector<8x128xf32>
    %604 = math.tanh %603 : vector<8x128xf32>
    %605 = arith.mulf %600, %604 : vector<8x128xf32>
    %606 = vector.extract_strided_slice %570 {offsets = [8, 0], sizes = [8, 512], strides = [1, 1]} : vector<24x512xf32> to vector<8x512xf32>
    %607 = arith.truncf %605 : vector<8x128xf32> to vector<8x128xbf16>
    %cst_114 = arith.constant dense<0.000000e+00> : vector<8x512xf32>
    %608 = tpu.matmul %607, %573, %cst_114 {dimension_numbers = #tpu.dot_dimension_numbers<[1], [0], [0], [1], [0, 0, 1, 1], [], []>} : vector<8x128xbf16>, vector<128x512xbf16>, vector<8x512xf32> -> vector<8x512xf32>
    %609 = arith.addf %606, %608 : vector<8x512xf32>
    %610 = vector.extract_strided_slice %609 {offsets = [0, 0], sizes = [8, 128], strides = [1, 1]} : vector<8x512xf32> to vector<8x128xf32>
    %611 = arith.negf %610 : vector<8x128xf32>
    %612 = math.exp %611 : vector<8x128xf32>
    %cst_115 = arith.constant 1.000000e+00 : f32
    %613 = vector.broadcast %cst_115 : f32 to vector<8x128xf32>
    %614 = arith.addf %613, %612 : vector<8x128xf32>
    %615 = arith.divf %613, %614 : vector<8x128xf32>
    %616 = vector.extract_strided_slice %609 {offsets = [0, 128], sizes = [8, 128], strides = [1, 1]} : vector<8x512xf32> to vector<8x128xf32>
    %617 = arith.negf %616 : vector<8x128xf32>
    %618 = math.exp %617 : vector<8x128xf32>
    %cst_116 = arith.constant 1.000000e+00 : f32
    %619 = vector.broadcast %cst_116 : f32 to vector<8x128xf32>
    %620 = arith.addf %619, %618 : vector<8x128xf32>
    %621 = arith.divf %619, %620 : vector<8x128xf32>
    %622 = vector.extract_strided_slice %609 {offsets = [0, 256], sizes = [8, 128], strides = [1, 1]} : vector<8x512xf32> to vector<8x128xf32>
    %623 = math.tanh %622 : vector<8x128xf32>
    %624 = vector.extract_strided_slice %609 {offsets = [0, 384], sizes = [8, 128], strides = [1, 1]} : vector<8x512xf32> to vector<8x128xf32>
    %625 = arith.negf %624 : vector<8x128xf32>
    %626 = math.exp %625 : vector<8x128xf32>
    %cst_117 = arith.constant 1.000000e+00 : f32
    %627 = vector.broadcast %cst_117 : f32 to vector<8x128xf32>
    %628 = arith.addf %627, %626 : vector<8x128xf32>
    %629 = arith.divf %627, %628 : vector<8x128xf32>
    %630 = arith.mulf %621, %603 : vector<8x128xf32>
    %631 = arith.mulf %615, %623 : vector<8x128xf32>
    %632 = arith.addf %630, %631 : vector<8x128xf32>
    %633 = math.tanh %632 : vector<8x128xf32>
    %634 = arith.mulf %629, %633 : vector<8x128xf32>
    %635 = vector.extract_strided_slice %570 {offsets = [16, 0], sizes = [8, 512], strides = [1, 1]} : vector<24x512xf32> to vector<8x512xf32>
    %636 = arith.truncf %634 : vector<8x128xf32> to vector<8x128xbf16>
    %cst_118 = arith.constant dense<0.000000e+00> : vector<8x512xf32>
    %637 = tpu.matmul %636, %573, %cst_118 {dimension_numbers = #tpu.dot_dimension_numbers<[1], [0], [0], [1], [0, 0, 1, 1], [], []>} : vector<8x128xbf16>, vector<128x512xbf16>, vector<8x512xf32> -> vector<8x512xf32>
    %638 = arith.addf %635, %637 : vector<8x512xf32>
    %639 = vector.extract_strided_slice %638 {offsets = [0, 0], sizes = [8, 128], strides = [1, 1]} : vector<8x512xf32> to vector<8x128xf32>
    %640 = arith.negf %639 : vector<8x128xf32>
    %641 = math.exp %640 : vector<8x128xf32>
    %cst_119 = arith.constant 1.000000e+00 : f32
    %642 = vector.broadcast %cst_119 : f32 to vector<8x128xf32>
    %643 = arith.addf %642, %641 : vector<8x128xf32>
    %644 = arith.divf %642, %643 : vector<8x128xf32>
    %645 = vector.extract_strided_slice %638 {offsets = [0, 128], sizes = [8, 128], strides = [1, 1]} : vector<8x512xf32> to vector<8x128xf32>
    %646 = arith.negf %645 : vector<8x128xf32>
    %647 = math.exp %646 : vector<8x128xf32>
    %cst_120 = arith.constant 1.000000e+00 : f32
    %648 = vector.broadcast %cst_120 : f32 to vector<8x128xf32>
    %649 = arith.addf %648, %647 : vector<8x128xf32>
    %650 = arith.divf %648, %649 : vector<8x128xf32>
    %651 = vector.extract_strided_slice %638 {offsets = [0, 256], sizes = [8, 128], strides = [1, 1]} : vector<8x512xf32> to vector<8x128xf32>
    %652 = math.tanh %651 : vector<8x128xf32>
    %653 = vector.extract_strided_slice %638 {offsets = [0, 384], sizes = [8, 128], strides = [1, 1]} : vector<8x512xf32> to vector<8x128xf32>
    %654 = arith.negf %653 : vector<8x128xf32>
    %655 = math.exp %654 : vector<8x128xf32>
    %cst_121 = arith.constant 1.000000e+00 : f32
    %656 = vector.broadcast %cst_121 : f32 to vector<8x128xf32>
    %657 = arith.addf %656, %655 : vector<8x128xf32>
    %658 = arith.divf %656, %657 : vector<8x128xf32>
    %659 = arith.mulf %650, %632 : vector<8x128xf32>
    %660 = arith.mulf %644, %652 : vector<8x128xf32>
    %661 = arith.addf %659, %660 : vector<8x128xf32>
    %662 = math.tanh %661 : vector<8x128xf32>
    %663 = arith.mulf %658, %662 : vector<8x128xf32>
    %cst_122 = arith.constant 0.000000e+00 : f32
    %664 = vector.broadcast %cst_122 : f32 to vector<8x128xf32>
    %cst_123 = arith.constant 0.000000e+00 : f32
    %665 = vector.broadcast %cst_123 : f32 to vector<8x128xf32>
    %666 = vector.extract_strided_slice %571 {offsets = [16, 0], sizes = [8, 512], strides = [1, 1]} : vector<24x512xf32> to vector<8x512xf32>
    %667 = arith.truncf %664 : vector<8x128xf32> to vector<8x128xbf16>
    %cst_124 = arith.constant dense<0.000000e+00> : vector<8x512xf32>
    %668 = tpu.matmul %667, %574, %cst_124 {dimension_numbers = #tpu.dot_dimension_numbers<[1], [0], [0], [1], [0, 0, 1, 1], [], []>} : vector<8x128xbf16>, vector<128x512xbf16>, vector<8x512xf32> -> vector<8x512xf32>
    %669 = arith.addf %666, %668 : vector<8x512xf32>
    %670 = vector.extract_strided_slice %669 {offsets = [0, 0], sizes = [8, 128], strides = [1, 1]} : vector<8x512xf32> to vector<8x128xf32>
    %671 = arith.negf %670 : vector<8x128xf32>
    %672 = math.exp %671 : vector<8x128xf32>
    %cst_125 = arith.constant 1.000000e+00 : f32
    %673 = vector.broadcast %cst_125 : f32 to vector<8x128xf32>
    %674 = arith.addf %673, %672 : vector<8x128xf32>
    %675 = arith.divf %673, %674 : vector<8x128xf32>
    %676 = vector.extract_strided_slice %669 {offsets = [0, 128], sizes = [8, 128], strides = [1, 1]} : vector<8x512xf32> to vector<8x128xf32>
    %677 = arith.negf %676 : vector<8x128xf32>
    %678 = math.exp %677 : vector<8x128xf32>
    %cst_126 = arith.constant 1.000000e+00 : f32
    %679 = vector.broadcast %cst_126 : f32 to vector<8x128xf32>
    %680 = arith.addf %679, %678 : vector<8x128xf32>
    %681 = arith.divf %679, %680 : vector<8x128xf32>
    %682 = vector.extract_strided_slice %669 {offsets = [0, 256], sizes = [8, 128], strides = [1, 1]} : vector<8x512xf32> to vector<8x128xf32>
    %683 = math.tanh %682 : vector<8x128xf32>
    %684 = vector.extract_strided_slice %669 {offsets = [0, 384], sizes = [8, 128], strides = [1, 1]} : vector<8x512xf32> to vector<8x128xf32>
    %685 = arith.negf %684 : vector<8x128xf32>
    %686 = math.exp %685 : vector<8x128xf32>
    %cst_127 = arith.constant 1.000000e+00 : f32
    %687 = vector.broadcast %cst_127 : f32 to vector<8x128xf32>
    %688 = arith.addf %687, %686 : vector<8x128xf32>
    %689 = arith.divf %687, %688 : vector<8x128xf32>
    %690 = arith.mulf %681, %665 : vector<8x128xf32>
    %691 = arith.mulf %675, %683 : vector<8x128xf32>
    %692 = arith.addf %690, %691 : vector<8x128xf32>
    %693 = math.tanh %692 : vector<8x128xf32>
    %694 = arith.mulf %689, %693 : vector<8x128xf32>
    %695 = vector.extract_strided_slice %571 {offsets = [8, 0], sizes = [8, 512], strides = [1, 1]} : vector<24x512xf32> to vector<8x512xf32>
    %696 = arith.truncf %694 : vector<8x128xf32> to vector<8x128xbf16>
    %cst_128 = arith.constant dense<0.000000e+00> : vector<8x512xf32>
    %697 = tpu.matmul %696, %574, %cst_128 {dimension_numbers = #tpu.dot_dimension_numbers<[1], [0], [0], [1], [0, 0, 1, 1], [], []>} : vector<8x128xbf16>, vector<128x512xbf16>, vector<8x512xf32> -> vector<8x512xf32>
    %698 = arith.addf %695, %697 : vector<8x512xf32>
    %699 = vector.extract_strided_slice %698 {offsets = [0, 0], sizes = [8, 128], strides = [1, 1]} : vector<8x512xf32> to vector<8x128xf32>
    %700 = arith.negf %699 : vector<8x128xf32>
    %701 = math.exp %700 : vector<8x128xf32>
    %cst_129 = arith.constant 1.000000e+00 : f32
    %702 = vector.broadcast %cst_129 : f32 to vector<8x128xf32>
    %703 = arith.addf %702, %701 : vector<8x128xf32>
    %704 = arith.divf %702, %703 : vector<8x128xf32>
    %705 = vector.extract_strided_slice %698 {offsets = [0, 128], sizes = [8, 128], strides = [1, 1]} : vector<8x512xf32> to vector<8x128xf32>
    %706 = arith.negf %705 : vector<8x128xf32>
    %707 = math.exp %706 : vector<8x128xf32>
    %cst_130 = arith.constant 1.000000e+00 : f32
    %708 = vector.broadcast %cst_130 : f32 to vector<8x128xf32>
    %709 = arith.addf %708, %707 : vector<8x128xf32>
    %710 = arith.divf %708, %709 : vector<8x128xf32>
    %711 = vector.extract_strided_slice %698 {offsets = [0, 256], sizes = [8, 128], strides = [1, 1]} : vector<8x512xf32> to vector<8x128xf32>
    %712 = math.tanh %711 : vector<8x128xf32>
    %713 = vector.extract_strided_slice %698 {offsets = [0, 384], sizes = [8, 128], strides = [1, 1]} : vector<8x512xf32> to vector<8x128xf32>
    %714 = arith.negf %713 : vector<8x128xf32>
    %715 = math.exp %714 : vector<8x128xf32>
    %cst_131 = arith.constant 1.000000e+00 : f32
    %716 = vector.broadcast %cst_131 : f32 to vector<8x128xf32>
    %717 = arith.addf %716, %715 : vector<8x128xf32>
    %718 = arith.divf %716, %717 : vector<8x128xf32>
    %719 = arith.mulf %710, %692 : vector<8x128xf32>
    %720 = arith.mulf %704, %712 : vector<8x128xf32>
    %721 = arith.addf %719, %720 : vector<8x128xf32>
    %722 = math.tanh %721 : vector<8x128xf32>
    %723 = arith.mulf %718, %722 : vector<8x128xf32>
    %724 = vector.extract_strided_slice %571 {offsets = [0, 0], sizes = [8, 512], strides = [1, 1]} : vector<24x512xf32> to vector<8x512xf32>
    %725 = arith.truncf %723 : vector<8x128xf32> to vector<8x128xbf16>
    %cst_132 = arith.constant dense<0.000000e+00> : vector<8x512xf32>
    %726 = tpu.matmul %725, %574, %cst_132 {dimension_numbers = #tpu.dot_dimension_numbers<[1], [0], [0], [1], [0, 0, 1, 1], [], []>} : vector<8x128xbf16>, vector<128x512xbf16>, vector<8x512xf32> -> vector<8x512xf32>
    %727 = arith.addf %724, %726 : vector<8x512xf32>
    %728 = vector.extract_strided_slice %727 {offsets = [0, 0], sizes = [8, 128], strides = [1, 1]} : vector<8x512xf32> to vector<8x128xf32>
    %729 = arith.negf %728 : vector<8x128xf32>
    %730 = math.exp %729 : vector<8x128xf32>
    %cst_133 = arith.constant 1.000000e+00 : f32
    %731 = vector.broadcast %cst_133 : f32 to vector<8x128xf32>
    %732 = arith.addf %731, %730 : vector<8x128xf32>
    %733 = arith.divf %731, %732 : vector<8x128xf32>
    %734 = vector.extract_strided_slice %727 {offsets = [0, 128], sizes = [8, 128], strides = [1, 1]} : vector<8x512xf32> to vector<8x128xf32>
    %735 = arith.negf %734 : vector<8x128xf32>
    %736 = math.exp %735 : vector<8x128xf32>
    %cst_134 = arith.constant 1.000000e+00 : f32
    %737 = vector.broadcast %cst_134 : f32 to vector<8x128xf32>
    %738 = arith.addf %737, %736 : vector<8x128xf32>
    %739 = arith.divf %737, %738 : vector<8x128xf32>
    %740 = vector.extract_strided_slice %727 {offsets = [0, 256], sizes = [8, 128], strides = [1, 1]} : vector<8x512xf32> to vector<8x128xf32>
    %741 = math.tanh %740 : vector<8x128xf32>
    %742 = vector.extract_strided_slice %727 {offsets = [0, 384], sizes = [8, 128], strides = [1, 1]} : vector<8x512xf32> to vector<8x128xf32>
    %743 = arith.negf %742 : vector<8x128xf32>
    %744 = math.exp %743 : vector<8x128xf32>
    %cst_135 = arith.constant 1.000000e+00 : f32
    %745 = vector.broadcast %cst_135 : f32 to vector<8x128xf32>
    %746 = arith.addf %745, %744 : vector<8x128xf32>
    %747 = arith.divf %745, %746 : vector<8x128xf32>
    %748 = arith.mulf %739, %721 : vector<8x128xf32>
    %749 = arith.mulf %733, %741 : vector<8x128xf32>
    %750 = arith.addf %748, %749 : vector<8x128xf32>
    %751 = math.tanh %750 : vector<8x128xf32>
    %752 = arith.mulf %747, %751 : vector<8x128xf32>
    %753 = tpu.concatenate %605, %634, %663 in 0 : vector<8x128xf32>, vector<8x128xf32>, vector<8x128xf32> -> vector<24x128xf32>
    %754 = tpu.concatenate %752, %723, %694 in 0 : vector<8x128xf32>, vector<8x128xf32>, vector<8x128xf32> -> vector<24x128xf32>
    %755 = tpu.concatenate %753, %754 in 1 : vector<24x128xf32>, vector<24x128xf32> -> vector<24x256xf32>
    %c0_136 = arith.constant 0 : index
    %c0_137 = arith.constant 0 : index
    %756 = vector.load %arg31[%c0_136, %c0_137] : memref<256x1024xbf16, #tpu.memory_space<vmem>>, vector<256x1024xbf16>
    %757 = arith.truncf %755 : vector<24x256xf32> to vector<24x256xbf16>
    %cst_138 = arith.constant dense<0.000000e+00> : vector<24x1024xf32>
    %758 = tpu.matmul %757, %756, %cst_138 {dimension_numbers = #tpu.dot_dimension_numbers<[1], [0], [0], [1], [0, 0, 1, 1], [], []>} : vector<24x256xbf16>, vector<256x1024xbf16>, vector<24x1024xf32> -> vector<24x1024xf32>
    %c1_139 = arith.constant 1 : index
    %c0_140 = arith.constant 0 : index
    %759 = vector.load %arg20[%c1_139, %c0_140] : memref<2x1024xf32, #tpu.memory_space<vmem>>, vector<1x1024xf32>
    %760 = vector.broadcast %759 : vector<1x1024xf32> to vector<24x1024xf32>
    %761 = arith.addf %758, %760 : vector<24x1024xf32>
    %762 = vector.extract_strided_slice %761 {offsets = [0, 0], sizes = [24, 512], strides = [1, 1]} : vector<24x1024xf32> to vector<24x512xf32>
    %763 = vector.extract_strided_slice %761 {offsets = [0, 512], sizes = [24, 512], strides = [1, 1]} : vector<24x1024xf32> to vector<24x512xf32>
    %c0_141 = arith.constant 0 : index
    %c0_142 = arith.constant 0 : index
    %764 = vector.load %arg32[%c0_141, %c0_142] : memref<256x512xbf16, #tpu.memory_space<vmem>>, vector<256x512xbf16>
    %765 = vector.extract_strided_slice %764 {offsets = [0, 0], sizes = [128, 512], strides = [1, 1]} : vector<256x512xbf16> to vector<128x512xbf16>
    %766 = vector.extract_strided_slice %764 {offsets = [128, 0], sizes = [128, 512], strides = [1, 1]} : vector<256x512xbf16> to vector<128x512xbf16>
    %cst_143 = arith.constant 0.000000e+00 : f32
    %767 = vector.broadcast %cst_143 : f32 to vector<8x128xf32>
    %cst_144 = arith.constant 0.000000e+00 : f32
    %768 = vector.broadcast %cst_144 : f32 to vector<8x128xf32>
    %cst_145 = arith.constant 0.000000e+00 : f32
    %769 = vector.broadcast %cst_145 : f32 to vector<8x128xf32>
    %770 = vector.extract_strided_slice %762 {offsets = [0, 0], sizes = [8, 512], strides = [1, 1]} : vector<24x512xf32> to vector<8x512xf32>
    %771 = arith.truncf %767 : vector<8x128xf32> to vector<8x128xbf16>
    %cst_146 = arith.constant dense<0.000000e+00> : vector<8x512xf32>
    %772 = tpu.matmul %771, %765, %cst_146 {dimension_numbers = #tpu.dot_dimension_numbers<[1], [0], [0], [1], [0, 0, 1, 1], [], []>} : vector<8x128xbf16>, vector<128x512xbf16>, vector<8x512xf32> -> vector<8x512xf32>
    %773 = arith.addf %770, %772 : vector<8x512xf32>
    %774 = vector.extract_strided_slice %773 {offsets = [0, 0], sizes = [8, 128], strides = [1, 1]} : vector<8x512xf32> to vector<8x128xf32>
    %775 = arith.negf %774 : vector<8x128xf32>
    %776 = math.exp %775 : vector<8x128xf32>
    %cst_147 = arith.constant 1.000000e+00 : f32
    %777 = vector.broadcast %cst_147 : f32 to vector<8x128xf32>
    %778 = arith.addf %777, %776 : vector<8x128xf32>
    %779 = arith.divf %777, %778 : vector<8x128xf32>
    %780 = vector.extract_strided_slice %773 {offsets = [0, 128], sizes = [8, 128], strides = [1, 1]} : vector<8x512xf32> to vector<8x128xf32>
    %781 = arith.negf %780 : vector<8x128xf32>
    %782 = math.exp %781 : vector<8x128xf32>
    %cst_148 = arith.constant 1.000000e+00 : f32
    %783 = vector.broadcast %cst_148 : f32 to vector<8x128xf32>
    %784 = arith.addf %783, %782 : vector<8x128xf32>
    %785 = arith.divf %783, %784 : vector<8x128xf32>
    %786 = vector.extract_strided_slice %773 {offsets = [0, 256], sizes = [8, 128], strides = [1, 1]} : vector<8x512xf32> to vector<8x128xf32>
    %787 = math.tanh %786 : vector<8x128xf32>
    %788 = vector.extract_strided_slice %773 {offsets = [0, 384], sizes = [8, 128], strides = [1, 1]} : vector<8x512xf32> to vector<8x128xf32>
    %789 = arith.negf %788 : vector<8x128xf32>
    %790 = math.exp %789 : vector<8x128xf32>
    %cst_149 = arith.constant 1.000000e+00 : f32
    %791 = vector.broadcast %cst_149 : f32 to vector<8x128xf32>
    %792 = arith.addf %791, %790 : vector<8x128xf32>
    %793 = arith.divf %791, %792 : vector<8x128xf32>
    %794 = arith.mulf %785, %768 : vector<8x128xf32>
    %795 = arith.mulf %779, %787 : vector<8x128xf32>
    %796 = arith.addf %794, %795 : vector<8x128xf32>
    %797 = math.tanh %796 : vector<8x128xf32>
    %798 = arith.mulf %793, %797 : vector<8x128xf32>
    %799 = arith.addf %769, %798 : vector<8x128xf32>
    %800 = vector.extract_strided_slice %762 {offsets = [8, 0], sizes = [8, 512], strides = [1, 1]} : vector<24x512xf32> to vector<8x512xf32>
    %801 = arith.truncf %798 : vector<8x128xf32> to vector<8x128xbf16>
    %cst_150 = arith.constant dense<0.000000e+00> : vector<8x512xf32>
    %802 = tpu.matmul %801, %765, %cst_150 {dimension_numbers = #tpu.dot_dimension_numbers<[1], [0], [0], [1], [0, 0, 1, 1], [], []>} : vector<8x128xbf16>, vector<128x512xbf16>, vector<8x512xf32> -> vector<8x512xf32>
    %803 = arith.addf %800, %802 : vector<8x512xf32>
    %804 = vector.extract_strided_slice %803 {offsets = [0, 0], sizes = [8, 128], strides = [1, 1]} : vector<8x512xf32> to vector<8x128xf32>
    %805 = arith.negf %804 : vector<8x128xf32>
    %806 = math.exp %805 : vector<8x128xf32>
    %cst_151 = arith.constant 1.000000e+00 : f32
    %807 = vector.broadcast %cst_151 : f32 to vector<8x128xf32>
    %808 = arith.addf %807, %806 : vector<8x128xf32>
    %809 = arith.divf %807, %808 : vector<8x128xf32>
    %810 = vector.extract_strided_slice %803 {offsets = [0, 128], sizes = [8, 128], strides = [1, 1]} : vector<8x512xf32> to vector<8x128xf32>
    %811 = arith.negf %810 : vector<8x128xf32>
    %812 = math.exp %811 : vector<8x128xf32>
    %cst_152 = arith.constant 1.000000e+00 : f32
    %813 = vector.broadcast %cst_152 : f32 to vector<8x128xf32>
    %814 = arith.addf %813, %812 : vector<8x128xf32>
    %815 = arith.divf %813, %814 : vector<8x128xf32>
    %816 = vector.extract_strided_slice %803 {offsets = [0, 256], sizes = [8, 128], strides = [1, 1]} : vector<8x512xf32> to vector<8x128xf32>
    %817 = math.tanh %816 : vector<8x128xf32>
    %818 = vector.extract_strided_slice %803 {offsets = [0, 384], sizes = [8, 128], strides = [1, 1]} : vector<8x512xf32> to vector<8x128xf32>
    %819 = arith.negf %818 : vector<8x128xf32>
    %820 = math.exp %819 : vector<8x128xf32>
    %cst_153 = arith.constant 1.000000e+00 : f32
    %821 = vector.broadcast %cst_153 : f32 to vector<8x128xf32>
    %822 = arith.addf %821, %820 : vector<8x128xf32>
    %823 = arith.divf %821, %822 : vector<8x128xf32>
    %824 = arith.mulf %815, %796 : vector<8x128xf32>
    %825 = arith.mulf %809, %817 : vector<8x128xf32>
    %826 = arith.addf %824, %825 : vector<8x128xf32>
    %827 = math.tanh %826 : vector<8x128xf32>
    %828 = arith.mulf %823, %827 : vector<8x128xf32>
    %829 = arith.addf %799, %828 : vector<8x128xf32>
    %830 = vector.extract_strided_slice %762 {offsets = [16, 0], sizes = [8, 512], strides = [1, 1]} : vector<24x512xf32> to vector<8x512xf32>
    %831 = arith.truncf %828 : vector<8x128xf32> to vector<8x128xbf16>
    %cst_154 = arith.constant dense<0.000000e+00> : vector<8x512xf32>
    %832 = tpu.matmul %831, %765, %cst_154 {dimension_numbers = #tpu.dot_dimension_numbers<[1], [0], [0], [1], [0, 0, 1, 1], [], []>} : vector<8x128xbf16>, vector<128x512xbf16>, vector<8x512xf32> -> vector<8x512xf32>
    %833 = arith.addf %830, %832 : vector<8x512xf32>
    %834 = vector.extract_strided_slice %833 {offsets = [0, 0], sizes = [8, 128], strides = [1, 1]} : vector<8x512xf32> to vector<8x128xf32>
    %835 = arith.negf %834 : vector<8x128xf32>
    %836 = math.exp %835 : vector<8x128xf32>
    %cst_155 = arith.constant 1.000000e+00 : f32
    %837 = vector.broadcast %cst_155 : f32 to vector<8x128xf32>
    %838 = arith.addf %837, %836 : vector<8x128xf32>
    %839 = arith.divf %837, %838 : vector<8x128xf32>
    %840 = vector.extract_strided_slice %833 {offsets = [0, 128], sizes = [8, 128], strides = [1, 1]} : vector<8x512xf32> to vector<8x128xf32>
    %841 = arith.negf %840 : vector<8x128xf32>
    %842 = math.exp %841 : vector<8x128xf32>
    %cst_156 = arith.constant 1.000000e+00 : f32
    %843 = vector.broadcast %cst_156 : f32 to vector<8x128xf32>
    %844 = arith.addf %843, %842 : vector<8x128xf32>
    %845 = arith.divf %843, %844 : vector<8x128xf32>
    %846 = vector.extract_strided_slice %833 {offsets = [0, 256], sizes = [8, 128], strides = [1, 1]} : vector<8x512xf32> to vector<8x128xf32>
    %847 = math.tanh %846 : vector<8x128xf32>
    %848 = vector.extract_strided_slice %833 {offsets = [0, 384], sizes = [8, 128], strides = [1, 1]} : vector<8x512xf32> to vector<8x128xf32>
    %849 = arith.negf %848 : vector<8x128xf32>
    %850 = math.exp %849 : vector<8x128xf32>
    %cst_157 = arith.constant 1.000000e+00 : f32
    %851 = vector.broadcast %cst_157 : f32 to vector<8x128xf32>
    %852 = arith.addf %851, %850 : vector<8x128xf32>
    %853 = arith.divf %851, %852 : vector<8x128xf32>
    %854 = arith.mulf %845, %826 : vector<8x128xf32>
    %855 = arith.mulf %839, %847 : vector<8x128xf32>
    %856 = arith.addf %854, %855 : vector<8x128xf32>
    %857 = math.tanh %856 : vector<8x128xf32>
    %858 = arith.mulf %853, %857 : vector<8x128xf32>
    %859 = arith.addf %829, %858 : vector<8x128xf32>
    %cst_158 = arith.constant 0.000000e+00 : f32
    %860 = vector.broadcast %cst_158 : f32 to vector<8x128xf32>
    %cst_159 = arith.constant 0.000000e+00 : f32
    %861 = vector.broadcast %cst_159 : f32 to vector<8x128xf32>
    %cst_160 = arith.constant 0.000000e+00 : f32
    %862 = vector.broadcast %cst_160 : f32 to vector<8x128xf32>
    %863 = vector.extract_strided_slice %763 {offsets = [16, 0], sizes = [8, 512], strides = [1, 1]} : vector<24x512xf32> to vector<8x512xf32>
    %864 = arith.truncf %860 : vector<8x128xf32> to vector<8x128xbf16>
    %cst_161 = arith.constant dense<0.000000e+00> : vector<8x512xf32>
    %865 = tpu.matmul %864, %766, %cst_161 {dimension_numbers = #tpu.dot_dimension_numbers<[1], [0], [0], [1], [0, 0, 1, 1], [], []>} : vector<8x128xbf16>, vector<128x512xbf16>, vector<8x512xf32> -> vector<8x512xf32>
    %866 = arith.addf %863, %865 : vector<8x512xf32>
    %867 = vector.extract_strided_slice %866 {offsets = [0, 0], sizes = [8, 128], strides = [1, 1]} : vector<8x512xf32> to vector<8x128xf32>
    %868 = arith.negf %867 : vector<8x128xf32>
    %869 = math.exp %868 : vector<8x128xf32>
    %cst_162 = arith.constant 1.000000e+00 : f32
    %870 = vector.broadcast %cst_162 : f32 to vector<8x128xf32>
    %871 = arith.addf %870, %869 : vector<8x128xf32>
    %872 = arith.divf %870, %871 : vector<8x128xf32>
    %873 = vector.extract_strided_slice %866 {offsets = [0, 128], sizes = [8, 128], strides = [1, 1]} : vector<8x512xf32> to vector<8x128xf32>
    %874 = arith.negf %873 : vector<8x128xf32>
    %875 = math.exp %874 : vector<8x128xf32>
    %cst_163 = arith.constant 1.000000e+00 : f32
    %876 = vector.broadcast %cst_163 : f32 to vector<8x128xf32>
    %877 = arith.addf %876, %875 : vector<8x128xf32>
    %878 = arith.divf %876, %877 : vector<8x128xf32>
    %879 = vector.extract_strided_slice %866 {offsets = [0, 256], sizes = [8, 128], strides = [1, 1]} : vector<8x512xf32> to vector<8x128xf32>
    %880 = math.tanh %879 : vector<8x128xf32>
    %881 = vector.extract_strided_slice %866 {offsets = [0, 384], sizes = [8, 128], strides = [1, 1]} : vector<8x512xf32> to vector<8x128xf32>
    %882 = arith.negf %881 : vector<8x128xf32>
    %883 = math.exp %882 : vector<8x128xf32>
    %cst_164 = arith.constant 1.000000e+00 : f32
    %884 = vector.broadcast %cst_164 : f32 to vector<8x128xf32>
    %885 = arith.addf %884, %883 : vector<8x128xf32>
    %886 = arith.divf %884, %885 : vector<8x128xf32>
    %887 = arith.mulf %878, %861 : vector<8x128xf32>
    %888 = arith.mulf %872, %880 : vector<8x128xf32>
    %889 = arith.addf %887, %888 : vector<8x128xf32>
    %890 = math.tanh %889 : vector<8x128xf32>
    %891 = arith.mulf %886, %890 : vector<8x128xf32>
    %892 = arith.addf %862, %891 : vector<8x128xf32>
    %893 = vector.extract_strided_slice %763 {offsets = [8, 0], sizes = [8, 512], strides = [1, 1]} : vector<24x512xf32> to vector<8x512xf32>
    %894 = arith.truncf %891 : vector<8x128xf32> to vector<8x128xbf16>
    %cst_165 = arith.constant dense<0.000000e+00> : vector<8x512xf32>
    %895 = tpu.matmul %894, %766, %cst_165 {dimension_numbers = #tpu.dot_dimension_numbers<[1], [0], [0], [1], [0, 0, 1, 1], [], []>} : vector<8x128xbf16>, vector<128x512xbf16>, vector<8x512xf32> -> vector<8x512xf32>
    %896 = arith.addf %893, %895 : vector<8x512xf32>
    %897 = vector.extract_strided_slice %896 {offsets = [0, 0], sizes = [8, 128], strides = [1, 1]} : vector<8x512xf32> to vector<8x128xf32>
    %898 = arith.negf %897 : vector<8x128xf32>
    %899 = math.exp %898 : vector<8x128xf32>
    %cst_166 = arith.constant 1.000000e+00 : f32
    %900 = vector.broadcast %cst_166 : f32 to vector<8x128xf32>
    %901 = arith.addf %900, %899 : vector<8x128xf32>
    %902 = arith.divf %900, %901 : vector<8x128xf32>
    %903 = vector.extract_strided_slice %896 {offsets = [0, 128], sizes = [8, 128], strides = [1, 1]} : vector<8x512xf32> to vector<8x128xf32>
    %904 = arith.negf %903 : vector<8x128xf32>
    %905 = math.exp %904 : vector<8x128xf32>
    %cst_167 = arith.constant 1.000000e+00 : f32
    %906 = vector.broadcast %cst_167 : f32 to vector<8x128xf32>
    %907 = arith.addf %906, %905 : vector<8x128xf32>
    %908 = arith.divf %906, %907 : vector<8x128xf32>
    %909 = vector.extract_strided_slice %896 {offsets = [0, 256], sizes = [8, 128], strides = [1, 1]} : vector<8x512xf32> to vector<8x128xf32>
    %910 = math.tanh %909 : vector<8x128xf32>
    %911 = vector.extract_strided_slice %896 {offsets = [0, 384], sizes = [8, 128], strides = [1, 1]} : vector<8x512xf32> to vector<8x128xf32>
    %912 = arith.negf %911 : vector<8x128xf32>
    %913 = math.exp %912 : vector<8x128xf32>
    %cst_168 = arith.constant 1.000000e+00 : f32
    %914 = vector.broadcast %cst_168 : f32 to vector<8x128xf32>
    %915 = arith.addf %914, %913 : vector<8x128xf32>
    %916 = arith.divf %914, %915 : vector<8x128xf32>
    %917 = arith.mulf %908, %889 : vector<8x128xf32>
    %918 = arith.mulf %902, %910 : vector<8x128xf32>
    %919 = arith.addf %917, %918 : vector<8x128xf32>
    %920 = math.tanh %919 : vector<8x128xf32>
    %921 = arith.mulf %916, %920 : vector<8x128xf32>
    %922 = arith.addf %892, %921 : vector<8x128xf32>
    %923 = vector.extract_strided_slice %763 {offsets = [0, 0], sizes = [8, 512], strides = [1, 1]} : vector<24x512xf32> to vector<8x512xf32>
    %924 = arith.truncf %921 : vector<8x128xf32> to vector<8x128xbf16>
    %cst_169 = arith.constant dense<0.000000e+00> : vector<8x512xf32>
    %925 = tpu.matmul %924, %766, %cst_169 {dimension_numbers = #tpu.dot_dimension_numbers<[1], [0], [0], [1], [0, 0, 1, 1], [], []>} : vector<8x128xbf16>, vector<128x512xbf16>, vector<8x512xf32> -> vector<8x512xf32>
    %926 = arith.addf %923, %925 : vector<8x512xf32>
    %927 = vector.extract_strided_slice %926 {offsets = [0, 0], sizes = [8, 128], strides = [1, 1]} : vector<8x512xf32> to vector<8x128xf32>
    %928 = arith.negf %927 : vector<8x128xf32>
    %929 = math.exp %928 : vector<8x128xf32>
    %cst_170 = arith.constant 1.000000e+00 : f32
    %930 = vector.broadcast %cst_170 : f32 to vector<8x128xf32>
    %931 = arith.addf %930, %929 : vector<8x128xf32>
    %932 = arith.divf %930, %931 : vector<8x128xf32>
    %933 = vector.extract_strided_slice %926 {offsets = [0, 128], sizes = [8, 128], strides = [1, 1]} : vector<8x512xf32> to vector<8x128xf32>
    %934 = arith.negf %933 : vector<8x128xf32>
    %935 = math.exp %934 : vector<8x128xf32>
    %cst_171 = arith.constant 1.000000e+00 : f32
    %936 = vector.broadcast %cst_171 : f32 to vector<8x128xf32>
    %937 = arith.addf %936, %935 : vector<8x128xf32>
    %938 = arith.divf %936, %937 : vector<8x128xf32>
    %939 = vector.extract_strided_slice %926 {offsets = [0, 256], sizes = [8, 128], strides = [1, 1]} : vector<8x512xf32> to vector<8x128xf32>
    %940 = math.tanh %939 : vector<8x128xf32>
    %941 = vector.extract_strided_slice %926 {offsets = [0, 384], sizes = [8, 128], strides = [1, 1]} : vector<8x512xf32> to vector<8x128xf32>
    %942 = arith.negf %941 : vector<8x128xf32>
    %943 = math.exp %942 : vector<8x128xf32>
    %cst_172 = arith.constant 1.000000e+00 : f32
    %944 = vector.broadcast %cst_172 : f32 to vector<8x128xf32>
    %945 = arith.addf %944, %943 : vector<8x128xf32>
    %946 = arith.divf %944, %945 : vector<8x128xf32>
    %947 = arith.mulf %938, %919 : vector<8x128xf32>
    %948 = arith.mulf %932, %940 : vector<8x128xf32>
    %949 = arith.addf %947, %948 : vector<8x128xf32>
    %950 = math.tanh %949 : vector<8x128xf32>
    %951 = arith.mulf %946, %950 : vector<8x128xf32>
    %952 = arith.addf %922, %951 : vector<8x128xf32>
    %953 = tpu.concatenate %859, %952 in 1 : vector<8x128xf32>, vector<8x128xf32> -> vector<8x256xf32>
    %c0_173 = arith.constant 0 : index
    %c0_174 = arith.constant 0 : index
    %954 = vector.load %arg33[%c0_173, %c0_174] : memref<256x128xbf16, #tpu.memory_space<vmem>>, vector<256x128xbf16>
    %955 = arith.truncf %953 : vector<8x256xf32> to vector<8x256xbf16>
    %cst_175 = arith.constant dense<0.000000e+00> : vector<8x128xf32>
    %956 = tpu.matmul %955, %954, %cst_175 {dimension_numbers = #tpu.dot_dimension_numbers<[1], [0], [0], [1], [0, 0, 1, 1], [], []>} : vector<8x256xbf16>, vector<256x128xbf16>, vector<8x128xf32> -> vector<8x128xf32>
    %957 = vector.broadcast %538 : vector<1x128xf32> to vector<8x128xf32>
    %958 = arith.addf %956, %957 : vector<8x128xf32>
    %cst_176 = arith.constant dense<0.000000e+00> : vector<8xf32>
    %959 = vector.multi_reduction <add>, %958, %cst_176 [1] : vector<8x128xf32> to vector<8xf32>
    %960 = vector.shape_cast %959 : vector<8xf32> to vector<8x1xf32>
    %cst_177 = arith.constant 1.280000e+02 : f32
    %961 = vector.broadcast %cst_177 : f32 to vector<8x1xf32>
    %962 = arith.divf %960, %961 : vector<8x1xf32>
    %963 = vector.broadcast %962 : vector<8x1xf32> to vector<8x128xf32>
    %964 = arith.subf %958, %963 : vector<8x128xf32>
    %965 = arith.mulf %964, %964 : vector<8x128xf32>
    %cst_178 = arith.constant dense<0.000000e+00> : vector<8xf32>
    %966 = vector.multi_reduction <add>, %965, %cst_178 [1] : vector<8x128xf32> to vector<8xf32>
    %967 = vector.shape_cast %966 : vector<8xf32> to vector<8x1xf32>
    %cst_179 = arith.constant 1.280000e+02 : f32
    %968 = vector.broadcast %cst_179 : f32 to vector<8x1xf32>
    %969 = arith.divf %967, %968 : vector<8x1xf32>
    %970 = vector.broadcast %962 : vector<8x1xf32> to vector<8x128xf32>
    %971 = arith.subf %958, %970 : vector<8x128xf32>
    %cst_180 = arith.constant 9.99999997E-7 : f32
    %972 = vector.broadcast %cst_180 : f32 to vector<8x1xf32>
    %973 = arith.addf %969, %972 : vector<8x1xf32>
    %974 = math.rsqrt %973 : vector<8x1xf32>
    %975 = vector.broadcast %974 : vector<8x1xf32> to vector<8x128xf32>
    %976 = arith.mulf %971, %975 : vector<8x128xf32>
    %977 = vector.broadcast %536 : vector<1x128xf32> to vector<8x128xf32>
    %978 = arith.mulf %976, %977 : vector<8x128xf32>
    %979 = vector.broadcast %537 : vector<1x128xf32> to vector<8x128xf32>
    %980 = arith.addf %978, %979 : vector<8x128xf32>
    %981 = arith.addf %562, %980 : vector<8x128xf32>
    %c0_181 = arith.constant 0 : index
    %c0_182 = arith.constant 0 : index
    %982 = vector.load %arg21[%c0_181, %c0_182] : memref<128x8xf32, #tpu.memory_space<vmem>>, vector<128x8xf32>
    %cst_183 = arith.constant dense<0.000000e+00> : vector<8x8xf32>
    %983 = tpu.matmul %981, %982, %cst_183 {dimension_numbers = #tpu.dot_dimension_numbers<[1], [0], [0], [1], [0, 0, 1, 1], [], []>} : vector<8x128xf32>, vector<128x8xf32>, vector<8x8xf32> -> vector<8x8xf32>
    %c0_184 = arith.constant 0 : index
    %c0_185 = arith.constant 0 : index
    %984 = vector.load %arg22[%c0_184, %c0_185] : memref<1x8xf32, #tpu.memory_space<vmem>>, vector<1x8xf32>
    %985 = vector.broadcast %984 : vector<1x8xf32> to vector<8x8xf32>
    %986 = arith.addf %983, %985 : vector<8x8xf32>
    %987 = arith.negf %986 : vector<8x8xf32>
    %988 = math.exp %987 : vector<8x8xf32>
    %cst_186 = arith.constant 1.000000e+00 : f32
    %989 = vector.broadcast %cst_186 : f32 to vector<8x8xf32>
    %990 = arith.addf %989, %988 : vector<8x8xf32>
    %991 = arith.divf %989, %990 : vector<8x8xf32>
    %c0_187 = arith.constant 0 : index
    %c0_188 = arith.constant 0 : index
    %992 = vector.load %arg28[%c0_187, %c0_188] : memref<8x8xf32, #tpu.memory_space<vmem>>, vector<8x8xf32>
    tpu.vector_store %arg28[%c0_187, %c0_188], %991 {strides = array<i32>} : memref<8x8xf32, #tpu.memory_space<vmem>>, vector<8x8xf32>,
    return
  }
}

</mosaic_0001>

<llo_original>
// kernel: net3_forward.1
$region0: #{net3_forward.1}
  #allocation0 [shape = 'u32[]', space=smem, size = 0x4, offset = 0x4, fixed_abs, tag = 'smem constant byte address 0x4 - core index']
  #allocation1 [shape = 'u32[144,128]{1,0:T(1,128)}', space=vmem, size = 0x12000, scoped, tag = 'internal scratch']
  #allocation2 [shape = 'bf16[128,1024]{1,0:T(8,128)(2,1)}', space=vmem, size = 0x40000, scoped, tag = 'scratch operand']
  #allocation3 [shape = 'bf16[256,512]{1,0:T(8,128)(2,1)}', space=vmem, size = 0x40000, scoped, tag = 'scratch operand']
  #allocation4 [shape = 'bf16[256,1024]{1,0:T(8,128)(2,1)}', space=vmem, size = 0x80000, scoped, tag = 'scratch operand']
  #allocation5 [shape = 'bf16[256,512]{1,0:T(8,128)(2,1)}', space=vmem, size = 0x40000, scoped, tag = 'scratch operand']
  #allocation6 [shape = 'bf16[256,128]{1,0:T(8,128)(2,1)}', space=vmem, size = 0x10000, scoped, tag = 'scratch operand']
  #allocation7 [shape = 's32[5]{0}', space=sflag, size = 0x14, scoped, tag = 'scratch operand']
  #allocation33 [shape = 's32[]', space=sflag, size = 0x4, offset = 0, fixed_abs, tag = 'sflag constant byte address 0x0 - dummy sync flag']
  #allocation34 [shape = 's32[]', space=sflag, size = 0x4, offset = 0, fixed_abs, tag = 'sflag constant byte address 0x0 - dummy sync flag']
  #allocation35 [shape = 'u32[]', space=smem, size = 0x4, offset = 0x44, fixed_abs, tag = 'smem constant byte address 0x44 - assertion arg 0']
  #allocation36 [shape = 'u32[]', space=smem, size = 0x4, offset = 0x48, fixed_abs, tag = 'smem constant byte address 0x48 - assertion arg 1']
  #allocation37 [shape = 's32[]', space=sflag, size = 0x4, offset = 0, fixed_abs, tag = 'sflag constant byte address 0x0 - dummy sync flag']
  #allocation38 [shape = 's32[]', space=sflag, size = 0x4, offset = 0, fixed_abs, tag = 'sflag constant byte address 0x0 - dummy sync flag']
  #allocation39 [shape = 's32[]', space=sflag, size = 0x4, offset = 0, fixed_abs, tag = 'sflag constant byte address 0x0 - dummy sync flag']
  #allocation40 [shape = 's32[]', space=sflag, size = 0x4, offset = 0, fixed_abs, tag = 'sflag constant byte address 0x0 - dummy sync flag']
  #allocation41 [shape = 's32[]', space=sflag, size = 0x4, offset = 0, fixed_abs, tag = 'sflag constant byte address 0x0 - dummy sync flag']
  #allocation42 [shape = 's32[]', space=sflag, size = 0x4, offset = 0, fixed_abs, tag = 'sflag constant byte address 0x0 - dummy sync flag']
  #allocation43 [shape = 's32[]', space=sflag, size = 0x4, offset = 0, fixed_abs, tag = 'sflag constant byte address 0x0 - dummy sync flag']
  %s0 = inlined_call_operand.vmem [shape: f32[64,64], index: 0, kind: input, shape index: {}]
  %s1 = inlined_call_operand.vmem [shape: f32[64,64], index: 1, kind: input, shape index: {}]
  %s2 = inlined_call_operand.vmem [shape: f32[32,64], index: 2, kind: input, shape index: {}]
  %s3 = inlined_call_operand.vmem [shape: f32[64,1], index: 3, kind: input, shape index: {}]
  %s4 = inlined_call_operand.vmem [shape: f32[64,1], index: 4, kind: input, shape index: {}]
  %s5 = inlined_call_operand.vmem [shape: f32[32,1], index: 5, kind: input, shape index: {}]
  %s6 = inlined_call_operand.hbm [shape: bf16[64,512], index: 6, kind: input, shape index: {}]
  %s7 = inlined_call_operand.hbm [shape: bf16[128,512], index: 7, kind: input, shape index: {}]
  %s8 = inlined_call_operand.hbm [shape: f32[1,512], index: 8, kind: input, shape index: {}]
  %s9 = inlined_call_operand.hbm [shape: bf16[128,256], index: 9, kind: input, shape index: {}]
  %s10 = inlined_call_operand.hbm [shape: f32[3,128], index: 10, kind: input, shape index: {}]
  %s11 = inlined_call_operand.hbm [shape: bf16[128,256], index: 11, kind: input, shape index: {}]
  %s12 = inlined_call_operand.hbm [shape: f32[3,128], index: 12, kind: input, shape index: {}]
  %s13 = inlined_call_operand.hbm [shape: bf16[128,256], index: 13, kind: input, shape index: {}]
  %s14 = inlined_call_operand.hbm [shape: f32[3,128], index: 14, kind: input, shape index: {}]
  %s15 = inlined_call_operand.hbm [shape: bf16[64,128], index: 15, kind: input, shape index: {}]
  %s16 = inlined_call_operand.hbm [shape: f32[1,128], index: 16, kind: input, shape index: {}]
  %s17 = inlined_call_operand.hbm [shape: bf16[64,128], index: 17, kind: input, shape index: {}]
  %s18 = inlined_call_operand.hbm [shape: f32[1,128], index: 18, kind: input, shape index: {}]
  %s19 = inlined_call_operand.hbm [shape: f32[5,128], index: 19, kind: input, shape index: {}]
  %s20 = inlined_call_operand.hbm [shape: f32[2,1024], index: 20, kind: input, shape index: {}]
  %s21 = inlined_call_operand.vmem [shape: f32[128,8], index: 21, kind: input, shape index: {}]
  %s22 = inlined_call_operand.hbm [shape: f32[1,8], index: 22, kind: input, shape index: {}]
  %s23 = inlined_call_operand.hbm [shape: bf16[128,1024], index: 23, kind: input, shape index: {}]
  %s24 = inlined_call_operand.hbm [shape: bf16[256,512], index: 24, kind: input, shape index: {}]
  %s25 = inlined_call_operand.vmem [shape: bf16[256,1024], index: 25, kind: input, shape index: {}]
  %s26 = inlined_call_operand.hbm [shape: bf16[256,512], index: 26, kind: input, shape index: {}]
  %s27 = inlined_call_operand.hbm [shape: bf16[256,128], index: 27, kind: input, shape index: {}]
  %s28 = inlined_call_operand.vmem [shape: f32[8,8], index: 28, kind: output, shape index: {}]
  %s29 = sld [smem:[#allocation0]]
  $region216: #{net3_forward.1} parent=0
    _
  %s31 = ssub.s32 1, %s29
  %s32 = scalar_select 0, %s31, %s29
  $region1: #{net3_forward.1} parent=0
    #allocation8 [shape = 'u8[65536]{0}', space=vmem, size = 0x10000, scoped, tag = 'input window, operand 6, single buffered']
    #allocation9 [shape = 's32[1]{0}', space=sflag, size = 0x4, scoped, tag = 'scoped memory for net3_forward.1']
    #allocation10 [shape = 'u8[131072]{0}', space=vmem, size = 0x20000, scoped, tag = 'input window, operand 7, single buffered']
    #allocation11 [shape = 's32[1]{0}', space=sflag, size = 0x4, scoped, tag = 'scoped memory for net3_forward.1']
    #allocation12 [shape = 'u8[2048]{0}', space=vmem, size = 0x800, scoped, tag = 'input window, operand 8, single buffered']
    #allocation13 [shape = 'u8[65536]{0}', space=vmem, size = 0x10000, scoped, tag = 'input window, operand 9, single buffered']
    #allocation14 [shape = 's32[1]{0}', space=sflag, size = 0x4, scoped, tag = 'scoped memory for net3_forward.1']
    #allocation15 [shape = 'u8[2048]{0}', space=vmem, size = 0x800, scoped, tag = 'input window, operand 10, single buffered']
    #allocation16 [shape = 'u8[65536]{0}', space=vmem, size = 0x10000, scoped, tag = 'input window, operand 11, single buffered']
    #allocation17 [shape = 's32[1]{0}', space=sflag, size = 0x4, scoped, tag = 'scoped memory for net3_forward.1']
    #allocation18 [shape = 'u8[2048]{0}', space=vmem, size = 0x800, scoped, tag = 'input window, operand 12, single buffered']
    #allocation19 [shape = 'u8[65536]{0}', space=vmem, size = 0x10000, scoped, tag = 'input window, operand 13, single buffered']
    #allocation20 [shape = 's32[1]{0}', space=sflag, size = 0x4, scoped, tag = 'scoped memory for net3_forward.1']
    #allocation21 [shape = 'u8[2048]{0}', space=vmem, size = 0x800, scoped, tag = 'input window, operand 14, single buffered']
    #allocation22 [shape = 'u8[16384]{0}', space=vmem, size = 0x4000, scoped, tag = 'input window, operand 15, single buffered']
    #allocation23 [shape = 's32[1]{0}', space=sflag, size = 0x4, scoped, tag = 'scoped memory for net3_forward.1']
    #allocation24 [shape = 'u8[512]{0}', space=vmem, size = 0x400, scoped, tag = 'input window, operand 16, single buffered']
    #allocation25 [shape = 'u8[16384]{0}', space=vmem, size = 0x4000, scoped, tag = 'input window, operand 17, single buffered']
    #allocation26 [shape = 's32[1]{0}', space=sflag, size = 0x4, scoped, tag = 'scoped memory for net3_forward.1']
    #allocation27 [shape = 'u8[512]{0}', space=vmem, size = 0x400, scoped, tag = 'input window, operand 18, single buffered']
    #allocation28 [shape = 'u8[4096]{0}', space=vmem, size = 0x1000, scoped, tag = 'input window, operand 19, single buffered']
    #allocation29 [shape = 's32[1]{0}', space=sflag, size = 0x4, scoped, tag = 'scoped memory for net3_forward.1']
    #allocation30 [shape = 'u8[8192]{0}', space=vmem, size = 0x2000, scoped, tag = 'input window, operand 20, single buffered']
    #allocation31 [shape = 'u8[512]{0}', space=vmem, size = 0x400, scoped, tag = 'input window, operand 22, single buffered']
    #allocation32 [shape = 's32[1]{0}', space=sflag, size = 0x4, scoped, tag = 'scoped memory for net3_forward.1']
    %33 = vsyncpa [#allocation9], 0
    %34 = vsyncpa [#allocation11], 0
    %35 = vsyncpa [#allocation14], 0
    %36 = vsyncpa [#allocation17], 0
    %37 = vsyncpa [#allocation20], 0
    %38 = vsyncpa [#allocation23], 0
    %39 = vsyncpa [#allocation26], 0
    %40 = vsyncpa [#allocation29], 0
    %41 = vsyncpa [#allocation32], 0
    // Predicated region
    $region2: #{net3_forward.1} parent=1 // pred_check
      _
    $region3: #{net3_forward.1} parent=1 // pred_check_branch
      %43 = sbr.rel (0) target = $region5
    $region4: #{net3_forward.1} parent=1 // pred_region
      _
    $region5: #{net3_forward.1} parent=1 // pred_fallthru
      _
    // Predicated region
    $region6: #{net3_forward.1} parent=1 // pred_check
      _
    $region7: #{net3_forward.1} parent=1 // pred_check_branch
      %45 = sbr.rel (0) target = $region9
    $region8: #{net3_forward.1} parent=1 // pred_region
      _
    $region9: #{net3_forward.1} parent=1 // pred_fallthru
      _
    // Predicated region
    $region10: #{net3_forward.1} parent=1 // pred_check
      _
    $region11: #{net3_forward.1} parent=1 // pred_check_branch
      %47 = sbr.rel (0) target = $region13
    $region12: #{net3_forward.1} parent=1 // pred_region
      _
    $region13: #{net3_forward.1} parent=1 // pred_fallthru
      _
    // Predicated region
    $region14: #{net3_forward.1} parent=1 // pred_check
      _
    $region15: #{net3_forward.1} parent=1 // pred_check_branch
      %49 = sbr.rel (0) target = $region17
    $region16: #{net3_forward.1} parent=1 // pred_region
      _
    $region17: #{net3_forward.1} parent=1 // pred_fallthru
      _
    // Predicated region
    $region18: #{net3_forward.1} parent=1 // pred_check
      _
    $region19: #{net3_forward.1} parent=1 // pred_check_branch
      %51 = sbr.rel (0) target = $region21
    $region20: #{net3_forward.1} parent=1 // pred_region
      _
    $region21: #{net3_forward.1} parent=1 // pred_fallthru
      _
    // Predicated region
    $region22: #{net3_forward.1} parent=1 // pred_check
      _
    $region23: #{net3_forward.1} parent=1 // pred_check_branch
      %53 = sbr.rel (0) target = $region25
    $region24: #{net3_forward.1} parent=1 // pred_region
      _
    $region25: #{net3_forward.1} parent=1 // pred_fallthru
      _
    // Predicated region
    $region26: #{net3_forward.1} parent=1 // pred_check
      _
    $region27: #{net3_forward.1} parent=1 // pred_check_branch
      %55 = sbr.rel (0) target = $region29
    $region28: #{net3_forward.1} parent=1 // pred_region
      %s57 = ssub.s32 2048, 2048
      %58 = vsyncadd [#allocation9], %s57
      %s59 = sshll.u32 [#allocation8], 4
      %s60 = int_to_ptr.vmem [resolvable:$true] %s59
      %65 = dma.hbm_to_vmem [thread:$0]  %s6, 2048, %s60, [#allocation9], 256, 256, 16
    $region29: #{net3_forward.1} parent=1 // pred_fallthru
      _
    // Predicated region
    $region30: #{net3_forward.1} parent=1 // pred_check
      _
    $region31: #{net3_forward.1} parent=1 // pred_check_branch
      %67 = sbr.rel (0) target = $region33
    $region32: #{net3_forward.1} parent=1 // pred_region
      %s69 = ssub.s32 4096, 4096
      %70 = vsyncadd [#allocation11], %s69
      %s71 = sshll.u32 [#allocation10], 4
      %s72 = int_to_ptr.vmem [resolvable:$true] %s71
      %77 = dma.hbm_to_vmem [thread:$0]  %s7, 4096, %s72, [#allocation11], 256, 256, 16
    $region33: #{net3_forward.1} parent=1 // pred_fallthru
      _
    // Predicated region
    $region34: #{net3_forward.1} parent=1 // pred_check
      _
    $region35: #{net3_forward.1} parent=1 // pred_check_branch
      %79 = sbr.rel (0) target = $region37
    $region36: #{net3_forward.1} parent=1 // pred_region
      %s81 = ssub.s32 64, 64
      %82 = vsyncadd [#allocation11], %s81
      %s84 = sshll.u32 [#allocation12], 4
      %s85 = int_to_ptr.vmem [resolvable:$true] %s84
      %87 = dma.hbm_to_vmem [thread:$0]  %s8, 64, %s85, [#allocation11]
    $region37: #{net3_forward.1} parent=1 // pred_fallthru
      _
    // Predicated region
    $region38: #{net3_forward.1} parent=1 // pred_check
      _
    $region39: #{net3_forward.1} parent=1 // pred_check_branch
      %89 = sbr.rel (0) target = $region41
    $region40: #{net3_forward.1} parent=1 // pred_region
      %s91 = ssub.s32 2048, 2048
      %92 = vsyncadd [#allocation14], %s91
      %s93 = sshll.u32 [#allocation13], 4
      %s94 = int_to_ptr.vmem [resolvable:$true] %s93
      %99 = dma.hbm_to_vmem [thread:$0]  %s9, 2048, %s94, [#allocation14], 128, 128, 8
    $region41: #{net3_forward.1} parent=1 // pred_fallthru
      _
    // Predicated region
    $region42: #{net3_forward.1} parent=1 // pred_check
      _
    $region43: #{net3_forward.1} parent=1 // pred_check_branch
      %101 = sbr.rel (0) target = $region45
    $region44: #{net3_forward.1} parent=1 // pred_region
      %s103 = ssub.s32 64, 64
      %104 = vsyncadd [#allocation14], %s103
      %s106 = sshll.u32 [#allocation15], 4
      %s107 = int_to_ptr.vmem [resolvable:$true] %s106
      %109 = dma.hbm_to_vmem [thread:$0]  %s10, 64, %s107, [#allocation14]
    $region45: #{net3_forward.1} parent=1 // pred_fallthru
      _
    // Predicated region
    $region46: #{net3_forward.1} parent=1 // pred_check
      _
    $region47: #{net3_forward.1} parent=1 // pred_check_branch
      %111 = sbr.rel (0) target = $region49
    $region48: #{net3_forward.1} parent=1 // pred_region
      %s113 = ssub.s32 2048, 2048
      %114 = vsyncadd [#allocation17], %s113
      %s115 = sshll.u32 [#allocation16], 4
      %s116 = int_to_ptr.vmem [resolvable:$true] %s115
      %121 = dma.hbm_to_vmem [thread:$0]  %s11, 2048, %s116, [#allocation17], 128, 128, 8
    $region49: #{net3_forward.1} parent=1 // pred_fallthru
      _
    // Predicated region
    $region50: #{net3_forward.1} parent=1 // pred_check
      _
    $region51: #{net3_forward.1} parent=1 // pred_check_branch
      %123 = sbr.rel (0) target = $region53
    $region52: #{net3_forward.1} parent=1 // pred_region
      %s125 = ssub.s32 64, 64
      %126 = vsyncadd [#allocation17], %s125
      %s128 = sshll.u32 [#allocation18], 4
      %s129 = int_to_ptr.vmem [resolvable:$true] %s128
      %131 = dma.hbm_to_vmem [thread:$0]  %s12, 64, %s129, [#allocation17]
    $region53: #{net3_forward.1} parent=1 // pred_fallthru
      _
    // Predicated region
    $region54: #{net3_forward.1} parent=1 // pred_check
      _
    $region55: #{net3_forward.1} parent=1 // pred_check_branch
      %133 = sbr.rel (0) target = $region57
    $region56: #{net3_forward.1} parent=1 // pred_region
      %s135 = ssub.s32 2048, 2048
      %136 = vsyncadd [#allocation20], %s135
      %s137 = sshll.u32 [#allocation19], 4
      %s138 = int_to_ptr.vmem [resolvable:$true] %s137
      %143 = dma.hbm_to_vmem [thread:$0]  %s13, 2048, %s138, [#allocation20], 128, 128, 8
    $region57: #{net3_forward.1} parent=1 // pred_fallthru
      _
    // Predicated region
    $region58: #{net3_forward.1} parent=1 // pred_check
      _
    $region59: #{net3_forward.1} parent=1 // pred_check_branch
      %145 = sbr.rel (0) target = $region61
    $region60: #{net3_forward.1} parent=1 // pred_region
      %s147 = ssub.s32 64, 64
      %148 = vsyncadd [#allocation20], %s147
      %s150 = sshll.u32 [#allocation21], 4
      %s151 = int_to_ptr.vmem [resolvable:$true] %s150
      %153 = dma.hbm_to_vmem [thread:$0]  %s14, 64, %s151, [#allocation20]
    $region61: #{net3_forward.1} parent=1 // pred_fallthru
      _
    // Predicated region
    $region62: #{net3_forward.1} parent=1 // pred_check
      _
    $region63: #{net3_forward.1} parent=1 // pred_check_branch
      %155 = sbr.rel (0) target = $region65
    $region64: #{net3_forward.1} parent=1 // pred_region
      %s157 = ssub.s32 512, 512
      %158 = vsyncadd [#allocation23], %s157
      %s159 = sshll.u32 [#allocation22], 4
      %s160 = int_to_ptr.vmem [resolvable:$true] %s159
      %165 = dma.hbm_to_vmem [thread:$0]  %s15, 512, %s160, [#allocation23], 64, 64, 4
    $region65: #{net3_forward.1} parent=1 // pred_fallthru
      _
    // Predicated region
    $region66: #{net3_forward.1} parent=1 // pred_check
      _
    $region67: #{net3_forward.1} parent=1 // pred_check_branch
      %167 = sbr.rel (0) target = $region69
    $region68: #{net3_forward.1} parent=1 // pred_region
      %s169 = ssub.s32 16, 16
      %170 = vsyncadd [#allocation23], %s169
      %s172 = sshll.u32 [#allocation24], 4
      %s173 = int_to_ptr.vmem [resolvable:$true] %s172
      %175 = dma.hbm_to_vmem [thread:$0]  %s16, 16, %s173, [#allocation23]
    $region69: #{net3_forward.1} parent=1 // pred_fallthru
      _
    // Predicated region
    $region70: #{net3_forward.1} parent=1 // pred_check
      _
    $region71: #{net3_forward.1} parent=1 // pred_check_branch
      %177 = sbr.rel (0) target = $region73
    $region72: #{net3_forward.1} parent=1 // pred_region
      %s179 = ssub.s32 512, 512
      %180 = vsyncadd [#allocation26], %s179
      %s181 = sshll.u32 [#allocation25], 4
      %s182 = int_to_ptr.vmem [resolvable:$true] %s181
      %187 = dma.hbm_to_vmem [thread:$0]  %s17, 512, %s182, [#allocation26], 64, 64, 4
    $region73: #{net3_forward.1} parent=1 // pred_fallthru
      _
    // Predicated region
    $region74: #{net3_forward.1} parent=1 // pred_check
      _
    $region75: #{net3_forward.1} parent=1 // pred_check_branch
      %189 = sbr.rel (0) target = $region77
    $region76: #{net3_forward.1} parent=1 // pred_region
      %s191 = ssub.s32 16, 16
      %192 = vsyncadd [#allocation26], %s191
      %s194 = sshll.u32 [#allocation27], 4
      %s195 = int_to_ptr.vmem [resolvable:$true] %s194
      %197 = dma.hbm_to_vmem [thread:$0]  %s18, 16, %s195, [#allocation26]
    $region77: #{net3_forward.1} parent=1 // pred_fallthru
      _
    // Predicated region
    $region78: #{net3_forward.1} parent=1 // pred_check
      _
    $region79: #{net3_forward.1} parent=1 // pred_check_branch
      %199 = sbr.rel (0) target = $region81
    $region80: #{net3_forward.1} parent=1 // pred_region
      %s201 = ssub.s32 128, 128
      %202 = vsyncadd [#allocation29], %s201
      %s204 = sshll.u32 [#allocation28], 4
      %s205 = int_to_ptr.vmem [resolvable:$true] %s204
      %207 = dma.hbm_to_vmem [thread:$0]  %s19, 128, %s205, [#allocation29]
    $region81: #{net3_forward.1} parent=1 // pred_fallthru
      _
    // Predicated region
    $region82: #{net3_forward.1} parent=1 // pred_check
      _
    $region83: #{net3_forward.1} parent=1 // pred_check_branch
      %209 = sbr.rel (0) target = $region85
    $region84: #{net3_forward.1} parent=1 // pred_region
      %s211 = ssub.s32 256, 256
      %212 = vsyncadd [#allocation29], %s211
      %s214 = sshll.u32 [#allocation30], 4
      %s215 = int_to_ptr.vmem [resolvable:$true] %s214
      %217 = dma.hbm_to_vmem [thread:$0]  %s20, 256, %s215, [#allocation29]
    $region85: #{net3_forward.1} parent=1 // pred_fallthru
      _
    // Predicated region
    $region86: #{net3_forward.1} parent=1 // pred_check
      _
    $region87: #{net3_forward.1} parent=1 // pred_check_branch
      %219 = sbr.rel (0) target = $region89
    $region88: #{net3_forward.1} parent=1 // pred_region
      _
    $region89: #{net3_forward.1} parent=1 // pred_fallthru
      _
    // Predicated region
    $region90: #{net3_forward.1} parent=1 // pred_check
      _
    $region91: #{net3_forward.1} parent=1 // pred_check_branch
      %221 = sbr.rel (0) target = $region93
    $region92: #{net3_forward.1} parent=1 // pred_region
      %s223 = ssub.s32 16, 16
      %224 = vsyncadd [#allocation32], %s223
      %s226 = sshll.u32 [#allocation31], 4
      %s227 = int_to_ptr.vmem [resolvable:$true] %s226
      %229 = dma.hbm_to_vmem [thread:$0]  %s22, 16, %s227, [#allocation32]
    $region93: #{net3_forward.1} parent=1 // pred_fallthru
      _
    // Predicated region
    $region94: #{net3_forward.1} parent=1 // pred_check
      _
    $region95: #{net3_forward.1} parent=1 // pred_check_branch
      %231 = sbr.rel (0) target = $region97
    $region96: #{net3_forward.1} parent=1 // pred_region
      %232 = dma.done [#allocation9], 2048
    $region97: #{net3_forward.1} parent=1 // pred_fallthru
      _
    // Predicated region
    $region98: #{net3_forward.1} parent=1 // pred_check
      _
    $region99: #{net3_forward.1} parent=1 // pred_check_branch
      %234 = sbr.rel (0) target = $region101
    $region100: #{net3_forward.1} parent=1 // pred_region
      %235 = dma.done [#allocation11], 4096
    $region101: #{net3_forward.1} parent=1 // pred_fallthru
      _
    // Predicated region
    $region102: #{net3_forward.1} parent=1 // pred_check
      _
    $region103: #{net3_forward.1} parent=1 // pred_check_branch
      %237 = sbr.rel (0) target = $region105
    $region104: #{net3_forward.1} parent=1 // pred_region
      %238 = dma.done [#allocation11], 64
    $region105: #{net3_forward.1} parent=1 // pred_fallthru
      _
    // Predicated region
    $region106: #{net3_forward.1} parent=1 // pred_check
      _
    $region107: #{net3_forward.1} parent=1 // pred_check_branch
      %240 = sbr.rel (0) target = $region109
    $region108: #{net3_forward.1} parent=1 // pred_region
      %241 = dma.done [#allocation14], 2048
    $region109: #{net3_forward.1} parent=1 // pred_fallthru
      _
    // Predicated region
    $region110: #{net3_forward.1} parent=1 // pred_check
      _
    $region111: #{net3_forward.1} parent=1 // pred_check_branch
      %243 = sbr.rel (0) target = $region113
    $region112: #{net3_forward.1} parent=1 // pred_region
      %244 = dma.done [#allocation14], 64
    $region113: #{net3_forward.1} parent=1 // pred_fallthru
      _
    // Predicated region
    $region114: #{net3_forward.1} parent=1 // pred_check
      _
    $region115: #{net3_forward.1} parent=1 // pred_check_branch
      %246 = sbr.rel (0) target = $region117
    $region116: #{net3_forward.1} parent=1 // pred_region
      %247 = dma.done [#allocation17], 2048
    $region117: #{net3_forward.1} parent=1 // pred_fallthru
      _
    // Predicated region
    $region118: #{net3_forward.1} parent=1 // pred_check
      _
    $region119: #{net3_forward.1} parent=1 // pred_check_branch
      %249 = sbr.rel (0) target = $region121
    $region120: #{net3_forward.1} parent=1 // pred_region
      %250 = dma.done [#allocation17], 64
    $region121: #{net3_forward.1} parent=1 // pred_fallthru
      _
    // Predicated region
    $region122: #{net3_forward.1} parent=1 // pred_check
      _
    $region123: #{net3_forward.1} parent=1 // pred_check_branch
      %252 = sbr.rel (0) target = $region125
    $region124: #{net3_forward.1} parent=1 // pred_region
      %253 = dma.done [#allocation20], 2048
    $region125: #{net3_forward.1} parent=1 // pred_fallthru
      _
    // Predicated region
    $region126: #{net3_forward.1} parent=1 // pred_check
      _
    $region127: #{net3_forward.1} parent=1 // pred_check_branch
      %255 = sbr.rel (0) target = $region129
    $region128: #{net3_forward.1} parent=1 // pred_region
      %256 = dma.done [#allocation20], 64
    $region129: #{net3_forward.1} parent=1 // pred_fallthru
      _
    // Predicated region
    $region130: #{net3_forward.1} parent=1 // pred_check
      _
    $region131: #{net3_forward.1} parent=1 // pred_check_branch
      %258 = sbr.rel (0) target = $region133
    $region132: #{net3_forward.1} parent=1 // pred_region
      %259 = dma.done [#allocation23], 512
    $region133: #{net3_forward.1} parent=1 // pred_fallthru
      _
    // Predicated region
    $region134: #{net3_forward.1} parent=1 // pred_check
      _
    $region135: #{net3_forward.1} parent=1 // pred_check_branch
      %261 = sbr.rel (0) target = $region137
    $region136: #{net3_forward.1} parent=1 // pred_region
      %262 = dma.done [#allocation23], 16
    $region137: #{net3_forward.1} parent=1 // pred_fallthru
      _
    // Predicated region
    $region138: #{net3_forward.1} parent=1 // pred_check
      _
    $region139: #{net3_forward.1} parent=1 // pred_check_branch
      %264 = sbr.rel (0) target = $region141
    $region140: #{net3_forward.1} parent=1 // pred_region
      %265 = dma.done [#allocation26], 512
    $region141: #{net3_forward.1} parent=1 // pred_fallthru
      _
    // Predicated region
    $region142: #{net3_forward.1} parent=1 // pred_check
      _
    $region143: #{net3_forward.1} parent=1 // pred_check_branch
      %267 = sbr.rel (0) target = $region145
    $region144: #{net3_forward.1} parent=1 // pred_region
      %268 = dma.done [#allocation26], 16
    $region145: #{net3_forward.1} parent=1 // pred_fallthru
      _
    // Predicated region
    $region146: #{net3_forward.1} parent=1 // pred_check
      _
    $region147: #{net3_forward.1} parent=1 // pred_check_branch
      %270 = sbr.rel (0) target = $region149
    $region148: #{net3_forward.1} parent=1 // pred_region
      %271 = dma.done [#allocation29], 128
    $region149: #{net3_forward.1} parent=1 // pred_fallthru
      _
    // Predicated region
    $region150: #{net3_forward.1} parent=1 // pred_check
      _
    $region151: #{net3_forward.1} parent=1 // pred_check_branch
      %273 = sbr.rel (0) target = $region153
    $region152: #{net3_forward.1} parent=1 // pred_region
      %274 = dma.done [#allocation29], 256
    $region153: #{net3_forward.1} parent=1 // pred_fallthru
      _
    // Predicated region
    $region154: #{net3_forward.1} parent=1 // pred_check
      _
    $region155: #{net3_forward.1} parent=1 // pred_check_branch
      %276 = sbr.rel (0) target = $region157
    $region156: #{net3_forward.1} parent=1 // pred_region
      %277 = dma.done [#allocation32], 16
    $region157: #{net3_forward.1} parent=1 // pred_fallthru
      _
    // Predicated region
    $region158: #{net3_forward.1} parent=1 // pred_check
      _
    $region159: #{net3_forward.1} parent=1 // pred_check_branch
      %280 = sbr.rel target = $region161
    $region160: #{net3_forward.1} parent=1 // pred_region
      %281 = sst [smem:[#allocation35]] [#allocation34]
      %282 = sst [smem:[#allocation36]] [#allocation33]
    $region161: #{net3_forward.1} parent=1 // pred_fallthru
      _
    %284 = shalt.err (0)
    %s286 = sshll.u32 [#allocation2], 4
    %s287 = int_to_ptr.vmem [resolvable:$true] %s286
    %289 = dma.hbm_to_vmem [thread:$0]  %s23, 8192, %s287, [#allocation7]
    %s290 = scalar_lea.sflag [#allocation7], 1
    // Predicated region
    $region162: #{net3_forward.1} parent=1 // pred_check
      _
    $region163: #{net3_forward.1} parent=1 // pred_check_branch
      %292 = sbr.rel target = $region165
    $region164: #{net3_forward.1} parent=1 // pred_region
      %293 = sst [smem:[#allocation35]] [#allocation38]
      %294 = sst [smem:[#allocation36]] [#allocation37]
    $region165: #{net3_forward.1} parent=1 // pred_fallthru
      _
    %296 = shalt.err (0)
    %s298 = sshll.u32 [#allocation3], 4
    %s299 = int_to_ptr.vmem [resolvable:$true] %s298
    %301 = dma.hbm_to_vmem [thread:$0]  %s24, 8192, %s299, %s290
    %s302 = scalar_lea.sflag [#allocation7], 2
    %p304 = scmp.lt.u32.totalorder 1024, 8
    %p305 = pneg %p304
    // Predicated region
    $region166: #{net3_forward.1} parent=1 // pred_check
      _
    $region167: #{net3_forward.1} parent=1 // pred_check_branch
      %307 = sbr.rel (%p304) target = $region169
    $region168: #{net3_forward.1} parent=1 // pred_region
      %s323 = sand.u32 1024, 7
      %p324 = scmp.eq.s32.totalorder %s323, 0
      // Predicated region
      $region181: #{net3_forward.1} parent=168 // pred_check
        %p325 = pneg %p324
      $region182: #{net3_forward.1} parent=168 // pred_check_branch
        %327 = sbr.rel (%p325) target = $region184
      $region183: #{net3_forward.1} parent=168 // pred_region
        loop: start=0, step=1, limit=1
        $region185: #{net3_forward.1} parent=183 // loop_pre_header
          _
        $region186: #{net3_forward.1} parent=183 // loop_header
          %s329 = sphi 0, %s333
          %p330 = scmp.ge.s32.totalorder %s329, 1
          %s334 = sphi %s25, %s25
          %s335 = sphi [#allocation4], [#allocation4]
        $region187: #{net3_forward.1} parent=183 // loop_header_branch
          %332 = sbr.rel (%p330) target = $region191
        $region188: #{net3_forward.1} parent=183 // loop_body
          %v336 = vld [vmem:[%s334] sm:$0xff]
          %337 = vst [vmem:[%s335] sm:$0xff] %v336
          %v338 = vld [vmem:[%s334 + $0x8] sm:$0xff]
          %339 = vst [vmem:[%s335 + $0x8] sm:$0xff] %v338
          %v340 = vld [vmem:[%s334 + $0x10] sm:$0xff]
          %341 = vst [vmem:[%s335 + $0x10] sm:$0xff] %v340
          %v342 = vld [vmem:[%s334 + $0x18] sm:$0xff]
          %343 = vst [vmem:[%s335 + $0x18] sm:$0xff] %v342
          %v344 = vld [vmem:[%s334 + $0x20] sm:$0xff]
          %345 = vst [vmem:[%s335 + $0x20] sm:$0xff] %v344
          %v346 = vld [vmem:[%s334 + $0x28] sm:$0xff]
          %347 = vst [vmem:[%s335 + $0x28] sm:$0xff] %v346
          %v348 = vld [vmem:[%s334 + $0x30] sm:$0xff]
          %349 = vst [vmem:[%s335 + $0x30] sm:$0xff] %v348
          %v350 = vld [vmem:[%s334 + $0x38] sm:$0xff]
          %351 = vst [vmem:[%s335 + $0x38] sm:$0xff] %v350
          %v352 = vld [vmem:[%s334 + $0x40] sm:$0xff]
          %353 = vst [vmem:[%s335 + $0x40] sm:$0xff] %v352
          %v354 = vld [vmem:[%s334 + $0x48] sm:$0xff]
          %355 = vst [vmem:[%s335 + $0x48] sm:$0xff] %v354
          %v356 = vld [vmem:[%s334 + $0x50] sm:$0xff]
          %357 = vst [vmem:[%s335 + $0x50] sm:$0xff] %v356
          %v358 = vld [vmem:[%s334 + $0x58] sm:$0xff]
          %359 = vst [vmem:[%s335 + $0x58] sm:$0xff] %v358
          %v360 = vld [vmem:[%s334 + $0x60] sm:$0xff]
          %361 = vst [vmem:[%s335 + $0x60] sm:$0xff] %v360
          %v362 = vld [vmem:[%s334 + $0x68] sm:$0xff]
          %363 = vst [vmem:[%s335 + $0x68] sm:$0xff] %v362
          %v364 = vld [vmem:[%s334 + $0x70] sm:$0xff]
          %365 = vst [vmem:[%s335 + $0x70] sm:$0xff] %v364
          %v366 = vld [vmem:[%s334 + $0x78] sm:$0xff]
          %367 = vst [vmem:[%s335 + $0x78] sm:$0xff] %v366
          %v368 = vld [vmem:[%s334 + $0x80] sm:$0xff]
          %369 = vst [vmem:[%s335 + $0x80] sm:$0xff] %v368
          %v370 = vld [vmem:[%s334 + $0x88] sm:$0xff]
          %371 = vst [vmem:[%s335 + $0x88] sm:$0xff] %v370
          %v372 = vld [vmem:[%s334 + $0x90] sm:$0xff]
          %373 = vst [vmem:[%s335 + $0x90] sm:$0xff] %v372
          %v374 = vld [vmem:[%s334 + $0x98] sm:$0xff]
          %375 = vst [vmem:[%s335 + $0x98] sm:$0xff] %v374
          %v376 = vld [vmem:[%s334 + $0xa0] sm:$0xff]
          %377 = vst [vmem:[%s335 + $0xa0] sm:$0xff] %v376
          %v378 = vld [vmem:[%s334 + $0xa8] sm:$0xff]
          %379 = vst [vmem:[%s335 + $0xa8] sm:$0xff] %v378
          %v380 = vld [vmem:[%s334 + $0xb0] sm:$0xff]
          %381 = vst [vmem:[%s335 + $0xb0] sm:$0xff] %v380
          %v382 = vld [vmem:[%s334 + $0xb8] sm:$0xff]
          %383 = vst [vmem:[%s335 + $0xb8] sm:$0xff] %v382
          %v384 = vld [vmem:[%s334 + $0xc0] sm:$0xff]
          %385 = vst [vmem:[%s335 + $0xc0] sm:$0xff] %v384
          %v386 = vld [vmem:[%s334 + $0xc8] sm:$0xff]
          %387 = vst [vmem:[%s335 + $0xc8] sm:$0xff] %v386
          %v388 = vld [vmem:[%s334 + $0xd0] sm:$0xff]
          %389 = vst [vmem:[%s335 + $0xd0] sm:$0xff] %v388
          %v390 = vld [vmem:[%s334 + $0xd8] sm:$0xff]
          %391 = vst [vmem:[%s335 + $0xd8] sm:$0xff] %v390
          %v392 = vld [vmem:[%s334 + $0xe0] sm:$0xff]
          %393 = vst [vmem:[%s335 + $0xe0] sm:$0xff] %v392
          %v394 = vld [vmem:[%s334 + $0xe8] sm:$0xff]
          %395 = vst [vmem:[%s335 + $0xe8] sm:$0xff] %v394
          %v396 = vld [vmem:[%s334 + $0xf0] sm:$0xff]
          %397 = vst [vmem:[%s335 + $0xf0] sm:$0xff] %v396
          %v398 = vld [vmem:[%s334 + $0xf8] sm:$0xff]
          %399 = vst [vmem:[%s335 + $0xf8] sm:$0xff] %v398
          %v400 = vld [vmem:[%s334 + $0x100] sm:$0xff]
          %401 = vst [vmem:[%s335 + $0x100] sm:$0xff] %v400
          %v402 = vld [vmem:[%s334 + $0x108] sm:$0xff]
          %403 = vst [vmem:[%s335 + $0x108] sm:$0xff] %v402
          %v404 = vld [vmem:[%s334 + $0x110] sm:$0xff]
          %405 = vst [vmem:[%s335 + $0x110] sm:$0xff] %v404
          %v406 = vld [vmem:[%s334 + $0x118] sm:$0xff]
          %407 = vst [vmem:[%s335 + $0x118] sm:$0xff] %v406
          %v408 = vld [vmem:[%s334 + $0x120] sm:$0xff]
          %409 = vst [vmem:[%s335 + $0x120] sm:$0xff] %v408
          %v410 = vld [vmem:[%s334 + $0x128] sm:$0xff]
          %411 = vst [vmem:[%s335 + $0x128] sm:$0xff] %v410
          %v412 = vld [vmem:[%s334 + $0x130] sm:$0xff]
          %413 = vst [vmem:[%s335 + $0x130] sm:$0xff] %v412
          %v414 = vld [vmem:[%s334 + $0x138] sm:$0xff]
          %415 = vst [vmem:[%s335 + $0x138] sm:$0xff] %v414
          %v416 = vld [vmem:[%s334 + $0x140] sm:$0xff]
          %417 = vst [vmem:[%s335 + $0x140] sm:$0xff] %v416
          %v418 = vld [vmem:[%s334 + $0x148] sm:$0xff]
          %419 = vst [vmem:[%s335 + $0x148] sm:$0xff] %v418
          %v420 = vld [vmem:[%s334 + $0x150] sm:$0xff]
          %421 = vst [vmem:[%s335 + $0x150] sm:$0xff] %v420
          %v422 = vld [vmem:[%s334 + $0x158] sm:$0xff]
          %423 = vst [vmem:[%s335 + $0x158] sm:$0xff] %v422
          %v424 = vld [vmem:[%s334 + $0x160] sm:$0xff]
          %425 = vst [vmem:[%s335 + $0x160] sm:$0xff] %v424
          %v426 = vld [vmem:[%s334 + $0x168] sm:$0xff]
          %427 = vst [vmem:[%s335 + $0x168] sm:$0xff] %v426
          %v428 = vld [vmem:[%s334 + $0x170] sm:$0xff]
          %429 = vst [vmem:[%s335 + $0x170] sm:$0xff] %v428
          %v430 = vld [vmem:[%s334 + $0x178] sm:$0xff]
          %431 = vst [vmem:[%s335 + $0x178] sm:$0xff] %v430
          %v432 = vld [vmem:[%s334 + $0x180] sm:$0xff]
          %433 = vst [vmem:[%s335 + $0x180] sm:$0xff] %v432
          %v434 = vld [vmem:[%s334 + $0x188] sm:$0xff]
          %435 = vst [vmem:[%s335 + $0x188] sm:$0xff] %v434
          %v436 = vld [vmem:[%s334 + $0x190] sm:$0xff]
          %437 = vst [vmem:[%s335 + $0x190] sm:$0xff] %v436
          %v438 = vld [vmem:[%s334 + $0x198] sm:$0xff]
          %439 = vst [vmem:[%s335 + $0x198] sm:$0xff] %v438
          %v440 = vld [vmem:[%s334 + $0x1a0] sm:$0xff]
          %441 = vst [vmem:[%s335 + $0x1a0] sm:$0xff] %v440
          %v442 = vld [vmem:[%s334 + $0x1a8] sm:$0xff]
          %443 = vst [vmem:[%s335 + $0x1a8] sm:$0xff] %v442
          %v444 = vld [vmem:[%s334 + $0x1b0] sm:$0xff]
          %445 = vst [vmem:[%s335 + $0x1b0] sm:$0xff] %v444
          %v446 = vld [vmem:[%s334 + $0x1b8] sm:$0xff]
          %447 = vst [vmem:[%s335 + $0x1b8] sm:$0xff] %v446
          %v448 = vld [vmem:[%s334 + $0x1c0] sm:$0xff]
          %449 = vst [vmem:[%s335 + $0x1c0] sm:$0xff] %v448
          %v450 = vld [vmem:[%s334 + $0x1c8] sm:$0xff]
          %451 = vst [vmem:[%s335 + $0x1c8] sm:$0xff] %v450
          %v452 = vld [vmem:[%s334 + $0x1d0] sm:$0xff]
          %453 = vst [vmem:[%s335 + $0x1d0] sm:$0xff] %v452
          %v454 = vld [vmem:[%s334 + $0x1d8] sm:$0xff]
          %455 = vst [vmem:[%s335 + $0x1d8] sm:$0xff] %v454
          %v456 = vld [vmem:[%s334 + $0x1e0] sm:$0xff]
          %457 = vst [vmem:[%s335 + $0x1e0] sm:$0xff] %v456
          %v458 = vld [vmem:[%s334 + $0x1e8] sm:$0xff]
          %459 = vst [vmem:[%s335 + $0x1e8] sm:$0xff] %v458
          %v460 = vld [vmem:[%s334 + $0x1f0] sm:$0xff]
          %461 = vst [vmem:[%s335 + $0x1f0] sm:$0xff] %v460
          %v462 = vld [vmem:[%s334 + $0x1f8] sm:$0xff]
          %463 = vst [vmem:[%s335 + $0x1f8] sm:$0xff] %v462
          %v464 = vld [vmem:[%s334 + $0x200] sm:$0xff]
          %465 = vst [vmem:[%s335 + $0x200] sm:$0xff] %v464
          %v466 = vld [vmem:[%s334 + $0x208] sm:$0xff]
          %467 = vst [vmem:[%s335 + $0x208] sm:$0xff] %v466
          %v468 = vld [vmem:[%s334 + $0x210] sm:$0xff]
          %469 = vst [vmem:[%s335 + $0x210] sm:$0xff] %v468
          %v470 = vld [vmem:[%s334 + $0x218] sm:$0xff]
          %471 = vst [vmem:[%s335 + $0x218] sm:$0xff] %v470
          %v472 = vld [vmem:[%s334 + $0x220] sm:$0xff]
          %473 = vst [vmem:[%s335 + $0x220] sm:$0xff] %v472
          %v474 = vld [vmem:[%s334 + $0x228] sm:$0xff]
          %475 = vst [vmem:[%s335 + $0x228] sm:$0xff] %v474
          %v476 = vld [vmem:[%s334 + $0x230] sm:$0xff]
          %477 = vst [vmem:[%s335 + $0x230] sm:$0xff] %v476
          %v478 = vld [vmem:[%s334 + $0x238] sm:$0xff]
          %479 = vst [vmem:[%s335 + $0x238] sm:$0xff] %v478
          %v480 = vld [vmem:[%s334 + $0x240] sm:$0xff]
          %481 = vst [vmem:[%s335 + $0x240] sm:$0xff] %v480
          %v482 = vld [vmem:[%s334 + $0x248] sm:$0xff]
          %483 = vst [vmem:[%s335 + $0x248] sm:$0xff] %v482
          %v484 = vld [vmem:[%s334 + $0x250] sm:$0xff]
          %485 = vst [vmem:[%s335 + $0x250] sm:$0xff] %v484
          %v486 = vld [vmem:[%s334 + $0x258] sm:$0xff]
          %487 = vst [vmem:[%s335 + $0x258] sm:$0xff] %v486
          %v488 = vld [vmem:[%s334 + $0x260] sm:$0xff]
          %489 = vst [vmem:[%s335 + $0x260] sm:$0xff] %v488
          %v490 = vld [vmem:[%s334 + $0x268] sm:$0xff]
          %491 = vst [vmem:[%s335 + $0x268] sm:$0xff] %v490
          %v492 = vld [vmem:[%s334 + $0x270] sm:$0xff]
          %493 = vst [vmem:[%s335 + $0x270] sm:$0xff] %v492
          %v494 = vld [vmem:[%s334 + $0x278] sm:$0xff]
          %495 = vst [vmem:[%s335 + $0x278] sm:$0xff] %v494
          %v496 = vld [vmem:[%s334 + $0x280] sm:$0xff]
          %497 = vst [vmem:[%s335 + $0x280] sm:$0xff] %v496
          %v498 = vld [vmem:[%s334 + $0x288] sm:$0xff]
          %499 = vst [vmem:[%s335 + $0x288] sm:$0xff] %v498
          %v500 = vld [vmem:[%s334 + $0x290] sm:$0xff]
          %501 = vst [vmem:[%s335 + $0x290] sm:$0xff] %v500
          %v502 = vld [vmem:[%s334 + $0x298] sm:$0xff]
          %503 = vst [vmem:[%s335 + $0x298] sm:$0xff] %v502
          %v504 = vld [vmem:[%s334 + $0x2a0] sm:$0xff]
          %505 = vst [vmem:[%s335 + $0x2a0] sm:$0xff] %v504
          %v506 = vld [vmem:[%s334 + $0x2a8] sm:$0xff]
          %507 = vst [vmem:[%s335 + $0x2a8] sm:$0xff] %v506
          %v508 = vld [vmem:[%s334 + $0x2b0] sm:$0xff]
          %509 = vst [vmem:[%s335 + $0x2b0] sm:$0xff] %v508
          %v510 = vld [vmem:[%s334 + $0x2b8] sm:$0xff]
          %511 = vst [vmem:[%s335 + $0x2b8] sm:$0xff] %v510
          %v512 = vld [vmem:[%s334 + $0x2c0] sm:$0xff]
          %513 = vst [vmem:[%s335 + $0x2c0] sm:$0xff] %v512
          %v514 = vld [vmem:[%s334 + $0x2c8] sm:$0xff]
          %515 = vst [vmem:[%s335 + $0x2c8] sm:$0xff] %v514
          %v516 = vld [vmem:[%s334 + $0x2d0] sm:$0xff]
          %517 = vst [vmem:[%s335 + $0x2d0] sm:$0xff] %v516
          %v518 = vld [vmem:[%s334 + $0x2d8] sm:$0xff]
          %519 = vst [vmem:[%s335 + $0x2d8] sm:$0xff] %v518
          %v520 = vld [vmem:[%s334 + $0x2e0] sm:$0xff]
          %521 = vst [vmem:[%s335 + $0x2e0] sm:$0xff] %v520
          %v522 = vld [vmem:[%s334 + $0x2e8] sm:$0xff]
          %523 = vst [vmem:[%s335 + $0x2e8] sm:$0xff] %v522
          %v524 = vld [vmem:[%s334 + $0x2f0] sm:$0xff]
          %525 = vst [vmem:[%s335 + $0x2f0] sm:$0xff] %v524
          %v526 = vld [vmem:[%s334 + $0x2f8] sm:$0xff]
          %527 = vst [vmem:[%s335 + $0x2f8] sm:$0xff] %v526
          %v528 = vld [vmem:[%s334 + $0x300] sm:$0xff]
          %529 = vst [vmem:[%s335 + $0x300] sm:$0xff] %v528
          %v530 = vld [vmem:[%s334 + $0x308] sm:$0xff]
          %531 = vst [vmem:[%s335 + $0x308] sm:$0xff] %v530
          %v532 = vld [vmem:[%s334 + $0x310] sm:$0xff]
          %533 = vst [vmem:[%s335 + $0x310] sm:$0xff] %v532
          %v534 = vld [vmem:[%s334 + $0x318] sm:$0xff]
          %535 = vst [vmem:[%s335 + $0x318] sm:$0xff] %v534
          %v536 = vld [vmem:[%s334 + $0x320] sm:$0xff]
          %537 = vst [vmem:[%s335 + $0x320] sm:$0xff] %v536
          %v538 = vld [vmem:[%s334 + $0x328] sm:$0xff]
          %539 = vst [vmem:[%s335 + $0x328] sm:$0xff] %v538
          %v540 = vld [vmem:[%s334 + $0x330] sm:$0xff]
          %541 = vst [vmem:[%s335 + $0x330] sm:$0xff] %v540
          %v542 = vld [vmem:[%s334 + $0x338] sm:$0xff]
          %543 = vst [vmem:[%s335 + $0x338] sm:$0xff] %v542
          %v544 = vld [vmem:[%s334 + $0x340] sm:$0xff]
          %545 = vst [vmem:[%s335 + $0x340] sm:$0xff] %v544
          %v546 = vld [vmem:[%s334 + $0x348] sm:$0xff]
          %547 = vst [vmem:[%s335 + $0x348] sm:$0xff] %v546
          %v548 = vld [vmem:[%s334 + $0x350] sm:$0xff]
          %549 = vst [vmem:[%s335 + $0x350] sm:$0xff] %v548
          %v550 = vld [vmem:[%s334 + $0x358] sm:$0xff]
          %551 = vst [vmem:[%s335 + $0x358] sm:$0xff] %v550
          %v552 = vld [vmem:[%s334 + $0x360] sm:$0xff]
          %553 = vst [vmem:[%s335 + $0x360] sm:$0xff] %v552
          %v554 = vld [vmem:[%s334 + $0x368] sm:$0xff]
          %555 = vst [vmem:[%s335 + $0x368] sm:$0xff] %v554
          %v556 = vld [vmem:[%s334 + $0x370] sm:$0xff]
          %557 = vst [vmem:[%s335 + $0x370] sm:$0xff] %v556
          %v558 = vld [vmem:[%s334 + $0x378] sm:$0xff]
          %559 = vst [vmem:[%s335 + $0x378] sm:$0xff] %v558
          %v560 = vld [vmem:[%s334 + $0x380] sm:$0xff]
          %561 = vst [vmem:[%s335 + $0x380] sm:$0xff] %v560
          %v562 = vld [vmem:[%s334 + $0x388] sm:$0xff]
          %563 = vst [vmem:[%s335 + $0x388] sm:$0xff] %v562
          %v564 = vld [vmem:[%s334 + $0x390] sm:$0xff]
          %565 = vst [vmem:[%s335 + $0x390] sm:$0xff] %v564
          %v566 = vld [vmem:[%s334 + $0x398] sm:$0xff]
          %567 = vst [vmem:[%s335 + $0x398] sm:$0xff] %v566
          %v568 = vld [vmem:[%s334 + $0x3a0] sm:$0xff]
          %569 = vst [vmem:[%s335 + $0x3a0] sm:$0xff] %v568
          %v570 = vld [vmem:[%s334 + $0x3a8] sm:$0xff]
          %571 = vst [vmem:[%s335 + $0x3a8] sm:$0xff] %v570
          %v572 = vld [vmem:[%s334 + $0x3b0] sm:$0xff]
          %573 = vst [vmem:[%s335 + $0x3b0] sm:$0xff] %v572
          %v574 = vld [vmem:[%s334 + $0x3b8] sm:$0xff]
          %575 = vst [vmem:[%s335 + $0x3b8] sm:$0xff] %v574
          %v576 = vld [vmem:[%s334 + $0x3c0] sm:$0xff]
          %577 = vst [vmem:[%s335 + $0x3c0] sm:$0xff] %v576
          %v578 = vld [vmem:[%s334 + $0x3c8] sm:$0xff]
          %579 = vst [vmem:[%s335 + $0x3c8] sm:$0xff] %v578
          %v580 = vld [vmem:[%s334 + $0x3d0] sm:$0xff]
          %581 = vst [vmem:[%s335 + $0x3d0] sm:$0xff] %v580
          %v582 = vld [vmem:[%s334 + $0x3d8] sm:$0xff]
          %583 = vst [vmem:[%s335 + $0x3d8] sm:$0xff] %v582
          %v584 = vld [vmem:[%s334 + $0x3e0] sm:$0xff]
          %585 = vst [vmem:[%s335 + $0x3e0] sm:$0xff] %v584
          %v586 = vld [vmem:[%s334 + $0x3e8] sm:$0xff]
          %587 = vst [vmem:[%s335 + $0x3e8] sm:$0xff] %v586
          %v588 = vld [vmem:[%s334 + $0x3f0] sm:$0xff]
          %589 = vst [vmem:[%s335 + $0x3f0] sm:$0xff] %v588
          %v590 = vld [vmem:[%s334 + $0x3f8] sm:$0xff]
          %591 = vst [vmem:[%s335 + $0x3f8] sm:$0xff] %v590
        $region189: #{net3_forward.1} parent=183 // loop_footer
          %s333 = sadd.s32 1, %s329
        $region190: #{net3_forward.1} parent=183 // loop_footer_branch
          %328 = sbr.rel target = $region186
        $region191: #{net3_forward.1} parent=183 // loop_exit
          _
      $region184: #{net3_forward.1} parent=168 // pred_fallthru
        _
      %p592 = pneg %p324
      // Predicated region
      $region192: #{net3_forward.1} parent=168 // pred_check
        _
      $region193: #{net3_forward.1} parent=168 // pred_check_branch
        %594 = sbr.rel (%p324) target = $region195
      $region194: #{net3_forward.1} parent=168 // pred_region
        %s595 = sand.u32 1024, 7
      $region195: #{net3_forward.1} parent=168 // pred_fallthru
        _
    $region169: #{net3_forward.1} parent=1 // pred_fallthru
      _
    // Predicated region
    $region170: #{net3_forward.1} parent=1 // pred_check
      %p308 = pneg %p304
    $region171: #{net3_forward.1} parent=1 // pred_check_branch
      %310 = sbr.rel (%p308) target = $region173
    $region172: #{net3_forward.1} parent=1 // pred_region
      %s311 = sshll.u32 1, 1024
      %s312 = ssub.s32 %s311, 1
      loop: start=0, step=1, limit=1
      $region174: #{net3_forward.1} parent=172 // loop_pre_header
        _
      $region175: #{net3_forward.1} parent=172 // loop_header
        %s314 = sphi 0, %s318
        %p315 = scmp.ge.s32.totalorder %s314, 1
        %s319 = sphi %s25, %s25
        %s320 = sphi [#allocation4], [#allocation4]
      $region176: #{net3_forward.1} parent=172 // loop_header_branch
        %317 = sbr.rel (%p315) target = $region180
      $region177: #{net3_forward.1} parent=172 // loop_body
        %v321 = vld [vmem:[%s319] sm:%s312]
        %322 = vst [vmem:[%s320] sm:%s312] %v321
      $region178: #{net3_forward.1} parent=172 // loop_footer
        %s318 = sadd.s32 1, %s314
      $region179: #{net3_forward.1} parent=172 // loop_footer_branch
        %313 = sbr.rel target = $region175
      $region180: #{net3_forward.1} parent=172 // loop_exit
        _
    $region173: #{net3_forward.1} parent=1 // pred_fallthru
      _
    // Predicated region
    $region196: #{net3_forward.1} parent=1 // pred_check
      _
    $region197: #{net3_forward.1} parent=1 // pred_check_branch
      %598 = sbr.rel (0) target = $region199
    $region198: #{net3_forward.1} parent=1 // pred_region
      %599 = vsyncadd %s302, 16384
    $region199: #{net3_forward.1} parent=1 // pred_fallthru
      _
    %s600 = scalar_lea.sflag [#allocation7], 3
    // Predicated region
    $region200: #{net3_forward.1} parent=1 // pred_check
      _
    $region201: #{net3_forward.1} parent=1 // pred_check_branch
      %602 = sbr.rel target = $region203
    $region202: #{net3_forward.1} parent=1 // pred_region
      %603 = sst [smem:[#allocation35]] [#allocation41]
      %604 = sst [smem:[#allocation36]] [#allocation40]
    $region203: #{net3_forward.1} parent=1 // pred_fallthru
      _
    %606 = shalt.err (0)
    %s608 = sshll.u32 [#allocation5], 4
    %s609 = int_to_ptr.vmem [resolvable:$true] %s608
    %611 = dma.hbm_to_vmem [thread:$0]  %s26, 8192, %s609, %s600
    %s612 = scalar_lea.sflag [#allocation7], 4
    // Predicated region
    $region204: #{net3_forward.1} parent=1 // pred_check
      _
    $region205: #{net3_forward.1} parent=1 // pred_check_branch
      %614 = sbr.rel target = $region207
    $region206: #{net3_forward.1} parent=1 // pred_region
      %615 = sst [smem:[#allocation35]] [#allocation43]
      %616 = sst [smem:[#allocation36]] [#allocation42]
    $region207: #{net3_forward.1} parent=1 // pred_fallthru
      _
    %618 = shalt.err (0)
    %s620 = sshll.u32 [#allocation6], 4
    %s621 = int_to_ptr.vmem [resolvable:$true] %s620
    %623 = dma.hbm_to_vmem [thread:$0]  %s27, 2048, %s621, %s612
    %v624 = vld [vmem:[%s0] sm:$0xff]
    %v625 = vld [vmem:[%s0 + $0x8] sm:$0xff]
    %v626 = vld [vmem:[%s0 + $0x10] sm:$0xff]
    %v627 = vld [vmem:[%s0 + $0x18] sm:$0xff]
    %v628 = vld [vmem:[%s0 + $0x20] sm:$0xff]
    %v629 = vld [vmem:[%s0 + $0x28] sm:$0xff]
    %v630 = vld [vmem:[%s0 + $0x30] sm:$0xff]
    %v631 = vld [vmem:[%s0 + $0x38] sm:$0xff]
    %v632 = vld [vmem:[#allocation8] sm:$0xff]
    %v633 = vld [vmem:[#allocation8 + $0x8] sm:$0xff]
    %v634 = vld [vmem:[#allocation8 + $0x10] sm:$0xff]
    %v635 = vld [vmem:[#allocation8 + $0x18] sm:$0xff]
    %v636 = vld [vmem:[#allocation8 + $0x20] sm:$0xff]
    %v637 = vld [vmem:[#allocation8 + $0x28] sm:$0xff]
    %v638 = vld [vmem:[#allocation8 + $0x30] sm:$0xff]
    %v639 = vld [vmem:[#allocation8 + $0x38] sm:$0xff]
    %v640 = vld [vmem:[#allocation8 + $0x40] sm:$0xff]
    %v641 = vld [vmem:[#allocation8 + $0x48] sm:$0xff]
    %v642 = vld [vmem:[#allocation8 + $0x50] sm:$0xff]
    %v643 = vld [vmem:[#allocation8 + $0x58] sm:$0xff]
    %v644 = vld [vmem:[#allocation8 + $0x60] sm:$0xff]
    %v645 = vld [vmem:[#allocation8 + $0x68] sm:$0xff]
    %v646 = vld [vmem:[#allocation8 + $0x70] sm:$0xff]
    %v647 = vld [vmem:[#allocation8 + $0x78] sm:$0xff]
    %v648 = vpack.c.bf16 %v625, %v624
    %v649 = vpack.c.bf16 %v627, %v626
    %v650 = vpack.c.bf16 %v629, %v628
    %v651 = vpack.c.bf16 %v631, %v630
    %v652 = vld [vmem:[#allocation12] sm:$0xf]
    %v654 = vlaneseq
    %v655 = vshrl.u32 %v654, 7
    %v656 = vsub.s32 0, %v655
    %v657 = vrot.slane %v652, %v656
    %v658 = vlaneseq
    %v659 = vshrl.u32 %v658, 7
    %v660 = vsub.s32 1, %v659
    %v661 = vrot.slane %v652, %v660
    %v662 = vlaneseq
    %v663 = vshrl.u32 %v662, 7
    %v664 = vsub.s32 2, %v663
    %v665 = vrot.slane %v652, %v664
    %v666 = vlaneseq
    %v667 = vshrl.u32 %v666, 7
    %v668 = vsub.s32 3, %v667
    %v669 = vrot.slane %v652, %v668
    %v690 = vunpack.c.l.b16 %v632
    %v691 = vunpack.c.h.b16 %v632
    %v692 = vunpack.c.l.b16 %v633
    %v693 = vunpack.c.h.b16 %v633
    %v694 = vunpack.c.l.b16 %v634
    %v695 = vunpack.c.h.b16 %v634
    %v696 = vunpack.c.l.b16 %v635
    %v697 = vunpack.c.h.b16 %v635
    %v698 = vunpack.c.l.b16 %v636
    %v699 = vunpack.c.h.b16 %v636
    %v700 = vunpack.c.l.b16 %v637
    %v701 = vunpack.c.h.b16 %v637
    %v702 = vunpack.c.l.b16 %v638
    %v703 = vunpack.c.h.b16 %v638
    %v704 = vunpack.c.l.b16 %v639
    %v705 = vunpack.c.h.b16 %v639
    %v706 = vunpack.c.l.b16 %v640
    %v707 = vunpack.c.h.b16 %v640
    %v708 = vunpack.c.l.b16 %v641
    %v709 = vunpack.c.h.b16 %v641
    %v710 = vunpack.c.l.b16 %v642
    %v711 = vunpack.c.h.b16 %v642
    %v712 = vunpack.c.l.b16 %v643
    %v713 = vunpack.c.h.b16 %v643
    %v714 = vunpack.c.l.b16 %v644
    %v715 = vunpack.c.h.b16 %v644
    %v716 = vunpack.c.l.b16 %v645
    %v717 = vunpack.c.h.b16 %v645
    %v718 = vunpack.c.l.b16 %v646
    %v719 = vunpack.c.h.b16 %v646
    %v720 = vunpack.c.l.b16 %v647
    %v721 = vunpack.c.h.b16 %v647
    %v722 = vpack.c.b16 %v694, %v690
    %v723 = vpack.c.b16 %v695, %v691
    %v724 = vpack.c.b16 %v696, %v692
    %v725 = vpack.c.b16 %v697, %v693
    %v726 = vpack.c.b16 %v702, %v698
    %v727 = vpack.c.b16 %v703, %v699
    %v728 = vpack.c.b16 %v704, %v700
    %v729 = vpack.c.b16 %v705, %v701
    %v730 = vpack.c.b16 %v710, %v706
    %v731 = vpack.c.b16 %v711, %v707
    %v732 = vpack.c.b16 %v712, %v708
    %v733 = vpack.c.b16 %v713, %v709
    %v734 = vpack.c.b16 %v718, %v714
    %v735 = vpack.c.b16 %v719, %v715
    %v736 = vpack.c.b16 %v720, %v716
    %v737 = vpack.c.b16 %v721, %v717
    %vm754 = vcmask 523264
    %v756 = vsel %vm754, %v648, 0
    %v759 = vsel %vm754, %v649, 0
    %v762 = vsel %vm754, %v650, 0
    %v765 = vsel %vm754, %v651, 0
    %767 = vmatprep.subr.bf16.mxu0 0
    %768 = vmatpush1.bf16.msra.mxu0 0
    %769 = vmatprep.subr.bf16.mxu0 0
    %770 = vmatpush1.bf16.msra.mxu0 0
    %771 = vmatprep.subr.bf16.mxu0 0
    %772 = vmatpush1.bf16.msra.mxu0 0
    %773 = vmatprep.subr.bf16.mxu0 0
    %774 = vmatpush1.bf16.msra.mxu0 0
    %775 = vmatprep.subr.bf16.mxu0 %v735
    %776 = vmatpush1.bf16.msra.mxu0 %v734
    %777 = vmatprep.subr.bf16.mxu0 %v731
    %778 = vmatpush1.bf16.msra.mxu0 %v730
    %779 = vmatprep.subr.bf16.mxu0 %v727
    %780 = vmatpush1.bf16.msra.mxu0 %v726
    %781 = vmatprep.subr.bf16.mxu0 %v723
    %782 = vmatpush1.bf16.msra.mxu0 %v722
    %783 = vmatprep.subr.bf16.mxu0 0
    %784 = vmatpush2.bf16.msra.mxu0 0
    %785 = vmatprep.subr.bf16.mxu0 0
    %786 = vmatpush2.bf16.msra.mxu0 0
    %787 = vmatprep.subr.bf16.mxu0 0
    %788 = vmatpush2.bf16.msra.mxu0 0
    %789 = vmatprep.subr.bf16.mxu0 0
    %790 = vmatpush2.bf16.msra.mxu0 0
    %791 = vmatprep.subr.bf16.mxu0 0
    %792 = vmatpush2.bf16.msra.mxu0 0
    %793 = vmatprep.subr.bf16.mxu0 0
    %794 = vmatpush2.bf16.msra.mxu0 0
    %795 = vmatprep.subr.bf16.mxu0 0
    %796 = vmatpush2.bf16.msra.mxu0 0
    %797 = vmatprep.subr.bf16.mxu0 0
    %798 = vmatpush2.bf16.msra.mxu0 0
    %799 = vmatprep.mubr.bf16.mxu0 0
    %800 = vmatmul.mubr.bf16.gmra.mxu0 %v756
    %v801 = vpop.f32.mrf.mxu0
    %v802 = vadd.f32 %v657, %v801
    %v803 = vpop.f32.mrf.mxu0
    %v804 = vadd.f32 %v661, %v803
    %v805 = vpop.f32.mrf.mxu0
    %v806 = vadd.f32 %v657, %v805
    %v807 = vpop.f32.mrf.mxu0
    %v808 = vadd.f32 %v661, %v807
    %809 = vmatprep.mubr.bf16.mxu0 0
    %810 = vmatmul.mubr.bf16.gmra.mxu0 %v759
    %v811 = vpop.f32.mrf.mxu0
    %v812 = vadd.f32 %v657, %v811
    %v813 = vpop.f32.mrf.mxu0
    %v814 = vadd.f32 %v661, %v813
    %v815 = vpop.f32.mrf.mxu0
    %v816 = vadd.f32 %v657, %v815
    %v817 = vpop.f32.mrf.mxu0
    %v818 = vadd.f32 %v661, %v817
    %819 = vmatprep.mubr.bf16.mxu0 0
    %820 = vmatmul.mubr.bf16.gmra.mxu0 %v762
    %v821 = vpop.f32.mrf.mxu0
    %v822 = vadd.f32 %v657, %v821
    %v823 = vpop.f32.mrf.mxu0
    %v824 = vadd.f32 %v661, %v823
    %v825 = vpop.f32.mrf.mxu0
    %v826 = vadd.f32 %v657, %v825
    %v827 = vpop.f32.mrf.mxu0
    %v828 = vadd.f32 %v661, %v827
    %829 = vmatprep.mubr.bf16.mxu0 0
    %830 = vmatmul.mubr.bf16.gmra.mxu0 %v765
    %v831 = vpop.f32.mrf.mxu0
    %v832 = vadd.f32 %v657, %v831
    %v833 = vpop.f32.mrf.mxu0
    %v834 = vadd.f32 %v661, %v833
    %v835 = vpop.f32.mrf.mxu0
    %v836 = vadd.f32 %v657, %v835
    %v837 = vpop.f32.mrf.mxu0
    %v838 = vadd.f32 %v661, %v837
    %839 = vdwg.mxu0
    %840 = vmatprep.subr.bf16.mxu0 0
    %841 = vmatpush1.bf16.msra.mxu0 0
    %842 = vmatprep.subr.bf16.mxu0 0
    %843 = vmatpush1.bf16.msra.mxu0 0
    %844 = vmatprep.subr.bf16.mxu0 0
    %845 = vmatpush1.bf16.msra.mxu0 0
    %846 = vmatprep.subr.bf16.mxu0 0
    %847 = vmatpush1.bf16.msra.mxu0 0
    %848 = vmatprep.subr.bf16.mxu0 %v737
    %849 = vmatpush1.bf16.msra.mxu0 %v736
    %850 = vmatprep.subr.bf16.mxu0 %v733
    %851 = vmatpush1.bf16.msra.mxu0 %v732
    %852 = vmatprep.subr.bf16.mxu0 %v729
    %853 = vmatpush1.bf16.msra.mxu0 %v728
    %854 = vmatprep.subr.bf16.mxu0 %v725
    %855 = vmatpush1.bf16.msra.mxu0 %v724
    %856 = vmatprep.subr.bf16.mxu0 0
    %857 = vmatpush2.bf16.msra.mxu0 0
    %858 = vmatprep.subr.bf16.mxu0 0
    %859 = vmatpush2.bf16.msra.mxu0 0
    %860 = vmatprep.subr.bf16.mxu0 0
    %861 = vmatpush2.bf16.msra.mxu0 0
    %862 = vmatprep.subr.bf16.mxu0 0
    %863 = vmatpush2.bf16.msra.mxu0 0
    %864 = vmatprep.subr.bf16.mxu0 0
    %865 = vmatpush2.bf16.msra.mxu0 0
    %866 = vmatprep.subr.bf16.mxu0 0
    %867 = vmatpush2.bf16.msra.mxu0 0
    %868 = vmatprep.subr.bf16.mxu0 0
    %869 = vmatpush2.bf16.msra.mxu0 0
    %870 = vmatprep.subr.bf16.mxu0 0
    %871 = vmatpush2.bf16.msra.mxu0 0
    %872 = vmatprep.mubr.bf16.mxu0 0
    %873 = vmatmul.mubr.bf16.gmra.mxu0 %v756
    %v874 = vpop.f32.mrf.mxu0
    %v875 = vadd.f32 %v665, %v874
    %v876 = vpop.f32.mrf.mxu0
    %v877 = vadd.f32 %v669, %v876
    %v878 = vpop.f32.mrf.mxu0
    %v879 = vadd.f32 %v665, %v878
    %v880 = vpop.f32.mrf.mxu0
    %v881 = vadd.f32 %v669, %v880
    %882 = vmatprep.mubr.bf16.mxu0 0
    %883 = vmatmul.mubr.bf16.gmra.mxu0 %v759
    %v884 = vpop.f32.mrf.mxu0
    %v885 = vadd.f32 %v665, %v884
    %v886 = vpop.f32.mrf.mxu0
    %v887 = vadd.f32 %v669, %v886
    %v888 = vpop.f32.mrf.mxu0
    %v889 = vadd.f32 %v665, %v888
    %v890 = vpop.f32.mrf.mxu0
    %v891 = vadd.f32 %v669, %v890
    %892 = vmatprep.mubr.bf16.mxu0 0
    %893 = vmatmul.mubr.bf16.gmra.mxu0 %v762
    %v894 = vpop.f32.mrf.mxu0
    %v895 = vadd.f32 %v665, %v894
    %v896 = vpop.f32.mrf.mxu0
    %v897 = vadd.f32 %v669, %v896
    %v898 = vpop.f32.mrf.mxu0
    %v899 = vadd.f32 %v665, %v898
    %v900 = vpop.f32.mrf.mxu0
    %v901 = vadd.f32 %v669, %v900
    %902 = vmatprep.mubr.bf16.mxu0 0
    %903 = vmatmul.mubr.bf16.gmra.mxu0 %v765
    %v904 = vpop.f32.mrf.mxu0
    %v905 = vadd.f32 %v665, %v904
    %v906 = vpop.f32.mrf.mxu0
    %v907 = vadd.f32 %v669, %v906
    %v908 = vpop.f32.mrf.mxu0
    %v909 = vadd.f32 %v665, %v908
    %v910 = vpop.f32.mrf.mxu0
    %v911 = vadd.f32 %v669, %v910
    %912 = vdwg.mxu0
    %v913 = vld [vmem:[#allocation10] sm:$0xff]
    %v914 = vld [vmem:[#allocation10 + $0x8] sm:$0xff]
    %v915 = vld [vmem:[#allocation10 + $0x10] sm:$0xff]
    %v916 = vld [vmem:[#allocation10 + $0x18] sm:$0xff]
    %v917 = vld [vmem:[#allocation10 + $0x20] sm:$0xff]
    %v918 = vld [vmem:[#allocation10 + $0x28] sm:$0xff]
    %v919 = vld [vmem:[#allocation10 + $0x30] sm:$0xff]
    %v920 = vld [vmem:[#allocation10 + $0x38] sm:$0xff]
    %v921 = vld [vmem:[#allocation10 + $0x40] sm:$0xff]
    %v922 = vld [vmem:[#allocation10 + $0x48] sm:$0xff]
    %v923 = vld [vmem:[#allocation10 + $0x50] sm:$0xff]
    %v924 = vld [vmem:[#allocation10 + $0x58] sm:$0xff]
    %v925 = vld [vmem:[#allocation10 + $0x60] sm:$0xff]
    %v926 = vld [vmem:[#allocation10 + $0x68] sm:$0xff]
    %v927 = vld [vmem:[#allocation10 + $0x70] sm:$0xff]
    %v928 = vld [vmem:[#allocation10 + $0x78] sm:$0xff]
    %v929 = vld [vmem:[#allocation10 + $0x80] sm:$0xff]
    %v930 = vld [vmem:[#allocation10 + $0x88] sm:$0xff]
    %v931 = vld [vmem:[#allocation10 + $0x90] sm:$0xff]
    %v932 = vld [vmem:[#allocation10 + $0x98] sm:$0xff]
    %v933 = vld [vmem:[#allocation10 + $0xa0] sm:$0xff]
    %v934 = vld [vmem:[#allocation10 + $0xa8] sm:$0xff]
    %v935 = vld [vmem:[#allocation10 + $0xb0] sm:$0xff]
    %v936 = vld [vmem:[#allocation10 + $0xb8] sm:$0xff]
    %v937 = vld [vmem:[#allocation10 + $0xc0] sm:$0xff]
    %v938 = vld [vmem:[#allocation10 + $0xc8] sm:$0xff]
    %v939 = vld [vmem:[#allocation10 + $0xd0] sm:$0xff]
    %v940 = vld [vmem:[#allocation10 + $0xd8] sm:$0xff]
    %v941 = vld [vmem:[#allocation10 + $0xe0] sm:$0xff]
    %v942 = vld [vmem:[#allocation10 + $0xe8] sm:$0xff]
    %v943 = vld [vmem:[#allocation10 + $0xf0] sm:$0xff]
    %v944 = vld [vmem:[#allocation10 + $0xf8] sm:$0xff]
    %v977 = vunpack.c.l.b16 %v913
    %v978 = vunpack.c.h.b16 %v913
    %v979 = vunpack.c.l.b16 %v914
    %v980 = vunpack.c.h.b16 %v914
    %v981 = vunpack.c.l.b16 %v915
    %v982 = vunpack.c.h.b16 %v915
    %v983 = vunpack.c.l.b16 %v916
    %v984 = vunpack.c.h.b16 %v916
    %v985 = vunpack.c.l.b16 %v917
    %v986 = vunpack.c.h.b16 %v917
    %v987 = vunpack.c.l.b16 %v918
    %v988 = vunpack.c.h.b16 %v918
    %v989 = vunpack.c.l.b16 %v919
    %v990 = vunpack.c.h.b16 %v919
    %v991 = vunpack.c.l.b16 %v920
    %v992 = vunpack.c.h.b16 %v920
    %v993 = vunpack.c.l.b16 %v921
    %v994 = vunpack.c.h.b16 %v921
    %v995 = vunpack.c.l.b16 %v922
    %v996 = vunpack.c.h.b16 %v922
    %v997 = vunpack.c.l.b16 %v923
    %v998 = vunpack.c.h.b16 %v923
    %v999 = vunpack.c.l.b16 %v924
    %v1000 = vunpack.c.h.b16 %v924
    %v1001 = vunpack.c.l.b16 %v925
    %v1002 = vunpack.c.h.b16 %v925
    %v1003 = vunpack.c.l.b16 %v926
    %v1004 = vunpack.c.h.b16 %v926
    %v1005 = vunpack.c.l.b16 %v927
    %v1006 = vunpack.c.h.b16 %v927
    %v1007 = vunpack.c.l.b16 %v928
    %v1008 = vunpack.c.h.b16 %v928
    %v1009 = vunpack.c.l.b16 %v929
    %v1010 = vunpack.c.h.b16 %v929
    %v1011 = vunpack.c.l.b16 %v930
    %v1012 = vunpack.c.h.b16 %v930
    %v1013 = vunpack.c.l.b16 %v931
    %v1014 = vunpack.c.h.b16 %v931
    %v1015 = vunpack.c.l.b16 %v932
    %v1016 = vunpack.c.h.b16 %v932
    %v1017 = vunpack.c.l.b16 %v933
    %v1018 = vunpack.c.h.b16 %v933
    %v1019 = vunpack.c.l.b16 %v934
    %v1020 = vunpack.c.h.b16 %v934
    %v1021 = vunpack.c.l.b16 %v935
    %v1022 = vunpack.c.h.b16 %v935
    %v1023 = vunpack.c.l.b16 %v936
    %v1024 = vunpack.c.h.b16 %v936
    %v1025 = vunpack.c.l.b16 %v937
    %v1026 = vunpack.c.h.b16 %v937
    %v1027 = vunpack.c.l.b16 %v938
    %v1028 = vunpack.c.h.b16 %v938
    %v1029 = vunpack.c.l.b16 %v939
    %v1030 = vunpack.c.h.b16 %v939
    %v1031 = vunpack.c.l.b16 %v940
    %v1032 = vunpack.c.h.b16 %v940
    %v1033 = vunpack.c.l.b16 %v941
    %v1034 = vunpack.c.h.b16 %v941
    %v1035 = vunpack.c.l.b16 %v942
    %v1036 = vunpack.c.h.b16 %v942
    %v1037 = vunpack.c.l.b16 %v943
    %v1038 = vunpack.c.h.b16 %v943
    %v1039 = vunpack.c.l.b16 %v944
    %v1040 = vunpack.c.h.b16 %v944
    %v1041 = vpack.c.b16 %v981, %v977
    %v1042 = vpack.c.b16 %v982, %v978
    %v1043 = vpack.c.b16 %v983, %v979
    %v1044 = vpack.c.b16 %v984, %v980
    %v1045 = vpack.c.b16 %v989, %v985
    %v1046 = vpack.c.b16 %v990, %v986
    %v1047 = vpack.c.b16 %v991, %v987
    %v1048 = vpack.c.b16 %v992, %v988
    %v1049 = vpack.c.b16 %v997, %v993
    %v1050 = vpack.c.b16 %v998, %v994
    %v1051 = vpack.c.b16 %v999, %v995
    %v1052 = vpack.c.b16 %v1000, %v996
    %v1053 = vpack.c.b16 %v1005, %v1001
    %v1054 = vpack.c.b16 %v1006, %v1002
    %v1055 = vpack.c.b16 %v1007, %v1003
    %v1056 = vpack.c.b16 %v1008, %v1004
    %v1057 = vpack.c.b16 %v1013, %v1009
    %v1058 = vpack.c.b16 %v1014, %v1010
    %v1059 = vpack.c.b16 %v1015, %v1011
    %v1060 = vpack.c.b16 %v1016, %v1012
    %v1061 = vpack.c.b16 %v1021, %v1017
    %v1062 = vpack.c.b16 %v1022, %v1018
    %v1063 = vpack.c.b16 %v1023, %v1019
    %v1064 = vpack.c.b16 %v1024, %v1020
    %v1065 = vpack.c.b16 %v1029, %v1025
    %v1066 = vpack.c.b16 %v1030, %v1026
    %v1067 = vpack.c.b16 %v1031, %v1027
    %v1068 = vpack.c.b16 %v1032, %v1028
    %v1069 = vpack.c.b16 %v1037, %v1033
    %v1070 = vpack.c.b16 %v1038, %v1034
    %v1071 = vpack.c.b16 %v1039, %v1035
    %v1072 = vpack.c.b16 %v1040, %v1036
    %1105 = vmatprep.subr.bf16.mxu0 %v1070
    %1106 = vmatpush1.bf16.msra.mxu0 %v1069
    %1107 = vmatprep.subr.bf16.mxu0 %v1066
    %1108 = vmatpush1.bf16.msra.mxu0 %v1065
    %1109 = vmatprep.subr.bf16.mxu0 %v1062
    %1110 = vmatpush1.bf16.msra.mxu0 %v1061
    %1111 = vmatprep.subr.bf16.mxu0 %v1058
    %1112 = vmatpush1.bf16.msra.mxu0 %v1057
    %1113 = vmatprep.subr.bf16.mxu0 %v1054
    %1114 = vmatpush1.bf16.msra.mxu0 %v1053
    %1115 = vmatprep.subr.bf16.mxu0 %v1050
    %1116 = vmatpush1.bf16.msra.mxu0 %v1049
    %1117 = vmatprep.subr.bf16.mxu0 %v1046
    %1118 = vmatpush1.bf16.msra.mxu0 %v1045
    %1119 = vmatprep.subr.bf16.mxu0 %v1042
    %1120 = vmatpush1.bf16.msra.mxu0 %v1041
    %1121 = vmatprep.subr.bf16.mxu0 0
    %1122 = vmatpush2.bf16.msra.mxu0 0
    %1123 = vmatprep.subr.bf16.mxu0 0
    %1124 = vmatpush2.bf16.msra.mxu0 0
    %1125 = vmatprep.subr.bf16.mxu0 0
    %1126 = vmatpush2.bf16.msra.mxu0 0
    %1127 = vmatprep.subr.bf16.mxu0 0
    %1128 = vmatpush2.bf16.msra.mxu0 0
    %1129 = vmatprep.subr.bf16.mxu0 0
    %1130 = vmatpush2.bf16.msra.mxu0 0
    %1131 = vmatprep.subr.bf16.mxu0 0
    %1132 = vmatpush2.bf16.msra.mxu0 0
    %1133 = vmatprep.subr.bf16.mxu0 0
    %1134 = vmatpush2.bf16.msra.mxu0 0
    %1135 = vmatprep.subr.bf16.mxu0 0
    %1136 = vmatpush2.bf16.msra.mxu0 0
    %1137 = vmatprep.mubr.bf16.mxu0 0
    %1138 = vmatmul.mubr.bf16.gmra.mxu0 0
    %v1139 = vpop.f32.mrf.mxu0
    %v1140 = vadd.f32 0.0, %v1139
    %v1141 = vpop.f32.mrf.mxu0
    %v1142 = vadd.f32 0.0, %v1141
    %v1143 = vpop.f32.mrf.mxu0
    %v1144 = vpop.f32.mrf.mxu0
    %1145 = vdwg.mxu0
    %1146 = vmatprep.subr.bf16.mxu0 %v1072
    %1147 = vmatpush1.bf16.msra.mxu0 %v1071
    %1148 = vmatprep.subr.bf16.mxu0 %v1068
    %1149 = vmatpush1.bf16.msra.mxu0 %v1067
    %1150 = vmatprep.subr.bf16.mxu0 %v1064
    %1151 = vmatpush1.bf16.msra.mxu0 %v1063
    %1152 = vmatprep.subr.bf16.mxu0 %v1060
    %1153 = vmatpush1.bf16.msra.mxu0 %v1059
    %1154 = vmatprep.subr.bf16.mxu0 %v1056
    %1155 = vmatpush1.bf16.msra.mxu0 %v1055
    %1156 = vmatprep.subr.bf16.mxu0 %v1052
    %1157 = vmatpush1.bf16.msra.mxu0 %v1051
    %1158 = vmatprep.subr.bf16.mxu0 %v1048
    %1159 = vmatpush1.bf16.msra.mxu0 %v1047
    %1160 = vmatprep.subr.bf16.mxu0 %v1044
    %1161 = vmatpush1.bf16.msra.mxu0 %v1043
    %1162 = vmatprep.subr.bf16.mxu0 0
    %1163 = vmatpush2.bf16.msra.mxu0 0
    %1164 = vmatprep.subr.bf16.mxu0 0
    %1165 = vmatpush2.bf16.msra.mxu0 0
    %1166 = vmatprep.subr.bf16.mxu0 0
    %1167 = vmatpush2.bf16.msra.mxu0 0
    %1168 = vmatprep.subr.bf16.mxu0 0
    %1169 = vmatpush2.bf16.msra.mxu0 0
    %1170 = vmatprep.subr.bf16.mxu0 0
    %1171 = vmatpush2.bf16.msra.mxu0 0
    %1172 = vmatprep.subr.bf16.mxu0 0
    %1173 = vmatpush2.bf16.msra.mxu0 0
    %1174 = vmatprep.subr.bf16.mxu0 0
    %1175 = vmatpush2.bf16.msra.mxu0 0
    %1176 = vmatprep.subr.bf16.mxu0 0
    %1177 = vmatpush2.bf16.msra.mxu0 0
    %1178 = vmatprep.mubr.bf16.mxu0 0
    %1179 = vmatmul.mubr.bf16.gmra.mxu0 0
    %v1180 = vpop.f32.mrf.mxu0
    %v1181 = vadd.f32 0.0, %v1180
    %v1182 = vpop.f32.mrf.mxu0
    %v1183 = vadd.f32 0.0, %v1182
    %v1184 = vpop.f32.mrf.mxu0
    %v1185 = vpop.f32.mrf.mxu0
    %1186 = vdwg.mxu0
    %v1187 = vadd.f32 %v802, %v1140
    %v1188 = vadd.f32 %v804, %v1142
    %v1189 = vadd.f32 %v875, %v1181
    %v1190 = vadd.f32 %v877, %v1183
    %v1191 = vxor.u32 %v1187, 2147483648
    %v1192 = vmul.f32 %v1191, 1.442695
    %v1193 = vpow.pop %v1192
    %v1194 = vadd.f32 %v1193, 1.0
    %v1195 = vrcp.pop %v1194
    %v1196 = vmul.f32 1.0, %v1195
    %v1197 = vxor.u32 %v1188, 2147483648
    %v1198 = vmul.f32 %v1197, 1.442695
    %v1199 = vpow.pop %v1198
    %v1200 = vadd.f32 %v1199, 1.0
    %v1201 = vrcp.pop %v1200
    %v1202 = vmul.f32 1.0, %v1201
    %v1203 = vtanh.pop %v1189
    %v1204 = vxor.u32 %v1190, 2147483648
    %v1205 = vmul.f32 %v1204, 1.442695
    %v1206 = vpow.pop %v1205
    %v1207 = vadd.f32 %v1206, 1.0
    %v1208 = vrcp.pop %v1207
    %v1209 = vmul.f32 1.0, %v1208
    %v1210 = vmul.f32 %v1202, 0.0
    %v1211 = vmul.f32 %v1196, %v1203
    %v1212 = vadd.f32 %v1210, %v1211
    %v1213 = vtanh.pop %v1212
    %v1214 = vmul.f32 %v1209, %v1213
    %v1215 = vpack.c.bf16 %v1214, %v1214
    %1216 = vmatprep.subr.bf16.mxu0 %v1070
    %1217 = vmatpush1.bf16.msra.mxu0 %v1069
    %1218 = vmatprep.subr.bf16.mxu0 %v1066
    %1219 = vmatpush1.bf16.msra.mxu0 %v1065
    %1220 = vmatprep.subr.bf16.mxu0 %v1062
    %1221 = vmatpush1.bf16.msra.mxu0 %v1061
    %1222 = vmatprep.subr.bf16.mxu0 %v1058
    %1223 = vmatpush1.bf16.msra.mxu0 %v1057
    %1224 = vmatprep.subr.bf16.mxu0 %v1054
    %1225 = vmatpush1.bf16.msra.mxu0 %v1053
    %1226 = vmatprep.subr.bf16.mxu0 %v1050
    %1227 = vmatpush1.bf16.msra.mxu0 %v1049
    %1228 = vmatprep.subr.bf16.mxu0 %v1046
    %1229 = vmatpush1.bf16.msra.mxu0 %v1045
    %1230 = vmatprep.subr.bf16.mxu0 %v1042
    %1231 = vmatpush1.bf16.msra.mxu0 %v1041
    %1232 = vmatprep.subr.bf16.mxu0 0
    %1233 = vmatpush2.bf16.msra.mxu0 0
    %1234 = vmatprep.subr.bf16.mxu0 0
    %1235 = vmatpush2.bf16.msra.mxu0 0
    %1236 = vmatprep.subr.bf16.mxu0 0
    %1237 = vmatpush2.bf16.msra.mxu0 0
    %1238 = vmatprep.subr.bf16.mxu0 0
    %1239 = vmatpush2.bf16.msra.mxu0 0
    %1240 = vmatprep.subr.bf16.mxu0 0
    %1241 = vmatpush2.bf16.msra.mxu0 0
    %1242 = vmatprep.subr.bf16.mxu0 0
    %1243 = vmatpush2.bf16.msra.mxu0 0
    %1244 = vmatprep.subr.bf16.mxu0 0
    %1245 = vmatpush2.bf16.msra.mxu0 0
    %1246 = vmatprep.subr.bf16.mxu0 0
    %1247 = vmatpush2.bf16.msra.mxu0 0
    %1248 = vmatprep.mubr.bf16.mxu0 0
    %1249 = vmatmul.mubr.bf16.gmra.mxu0 %v1215
    %v1250 = vpop.f32.mrf.mxu0
    %v1251 = vadd.f32 0.0, %v1250
    %v1252 = vpop.f32.mrf.mxu0
    %v1253 = vadd.f32 0.0, %v1252
    %v1254 = vpop.f32.mrf.mxu0
    %v1255 = vpop.f32.mrf.mxu0
    %1256 = vdwg.mxu0
    %1257 = vmatprep.subr.bf16.mxu0 %v1072
    %1258 = vmatpush1.bf16.msra.mxu0 %v1071
    %1259 = vmatprep.subr.bf16.mxu0 %v1068
    %1260 = vmatpush1.bf16.msra.mxu0 %v1067
    %1261 = vmatprep.subr.bf16.mxu0 %v1064
    %1262 = vmatpush1.bf16.msra.mxu0 %v1063
    %1263 = vmatprep.subr.bf16.mxu0 %v1060
    %1264 = vmatpush1.bf16.msra.mxu0 %v1059
    %1265 = vmatprep.subr.bf16.mxu0 %v1056
    %1266 = vmatpush1.bf16.msra.mxu0 %v1055
    %1267 = vmatprep.subr.bf16.mxu0 %v1052
    %1268 = vmatpush1.bf16.msra.mxu0 %v1051
    %1269 = vmatprep.subr.bf16.mxu0 %v1048
    %1270 = vmatpush1.bf16.msra.mxu0 %v1047
    %1271 = vmatprep.subr.bf16.mxu0 %v1044
    %1272 = vmatpush1.bf16.msra.mxu0 %v1043
    %1273 = vmatprep.subr.bf16.mxu0 0
    %1274 = vmatpush2.bf16.msra.mxu0 0
    %1275 = vmatprep.subr.bf16.mxu0 0
    %1276 = vmatpush2.bf16.msra.mxu0 0
    %1277 = vmatprep.subr.bf16.mxu0 0
    %1278 = vmatpush2.bf16.msra.mxu0 0
    %1279 = vmatprep.subr.bf16.mxu0 0
    %1280 = vmatpush2.bf16.msra.mxu0 0
    %1281 = vmatprep.subr.bf16.mxu0 0
    %1282 = vmatpush2.bf16.msra.mxu0 0
    %1283 = vmatprep.subr.bf16.mxu0 0
    %1284 = vmatpush2.bf16.msra.mxu0 0
    %1285 = vmatprep.subr.bf16.mxu0 0
    %1286 = vmatpush2.bf16.msra.mxu0 0
    %1287 = vmatprep.subr.bf16.mxu0 0
    %1288 = vmatpush2.bf16.msra.mxu0 0
    %1289 = vmatprep.mubr.bf16.mxu0 0
    %1290 = vmatmul.mubr.bf16.gmra.mxu0 %v1215
    %v1291 = vpop.f32.mrf.mxu0
    %v1292 = vadd.f32 0.0, %v1291
    %v1293 = vpop.f32.mrf.mxu0
    %v1294 = vadd.f32 0.0, %v1293
    %v1295 = vpop.f32.mrf.mxu0
    %v1296 = vpop.f32.mrf.mxu0
    %1297 = vdwg.mxu0
    %v1298 = vadd.f32 %v806, %v1251
    %v1299 = vadd.f32 %v808, %v1253
    %v1300 = vadd.f32 %v879, %v1292
    %v1301 = vadd.f32 %v881, %v1294
    %v1302 = vxor.u32 %v1298, 2147483648
    %v1303 = vmul.f32 %v1302, 1.442695
    %v1304 = vpow.pop %v1303
    %v1305 = vadd.f32 %v1304, 1.0
    %v1306 = vrcp.pop %v1305
    %v1307 = vmul.f32 1.0, %v1306
    %v1308 = vxor.u32 %v1299, 2147483648
    %v1309 = vmul.f32 %v1308, 1.442695
    %v1310 = vpow.pop %v1309
    %v1311 = vadd.f32 %v1310, 1.0
    %v1312 = vrcp.pop %v1311
    %v1313 = vmul.f32 1.0, %v1312
    %v1314 = vtanh.pop %v1300
    %v1315 = vxor.u32 %v1301, 2147483648
    %v1316 = vmul.f32 %v1315, 1.442695
    %v1317 = vpow.pop %v1316
    %v1318 = vadd.f32 %v1317, 1.0
    %v1319 = vrcp.pop %v1318
    %v1320 = vmul.f32 1.0, %v1319
    %v1321 = vmul.f32 %v1313, %v1212
    %v1322 = vmul.f32 %v1307, %v1314
    %v1323 = vadd.f32 %v1321, %v1322
    %v1324 = vtanh.pop %v1323
    %v1325 = vmul.f32 %v1320, %v1324
    %v1326 = vpack.c.bf16 %v1325, %v1325
    %1327 = vmatprep.subr.bf16.mxu0 %v1070
    %1328 = vmatpush1.bf16.msra.mxu0 %v1069
    %1329 = vmatprep.subr.bf16.mxu0 %v1066
    %1330 = vmatpush1.bf16.msra.mxu0 %v1065
    %1331 = vmatprep.subr.bf16.mxu0 %v1062
    %1332 = vmatpush1.bf16.msra.mxu0 %v1061
    %1333 = vmatprep.subr.bf16.mxu0 %v1058
    %1334 = vmatpush1.bf16.msra.mxu0 %v1057
    %1335 = vmatprep.subr.bf16.mxu0 %v1054
    %1336 = vmatpush1.bf16.msra.mxu0 %v1053
    %1337 = vmatprep.subr.bf16.mxu0 %v1050
    %1338 = vmatpush1.bf16.msra.mxu0 %v1049
    %1339 = vmatprep.subr.bf16.mxu0 %v1046
    %1340 = vmatpush1.bf16.msra.mxu0 %v1045
    %1341 = vmatprep.subr.bf16.mxu0 %v1042
    %1342 = vmatpush1.bf16.msra.mxu0 %v1041
    %1343 = vmatprep.subr.bf16.mxu0 0
    %1344 = vmatpush2.bf16.msra.mxu0 0
    %1345 = vmatprep.subr.bf16.mxu0 0
    %1346 = vmatpush2.bf16.msra.mxu0 0
    %1347 = vmatprep.subr.bf16.mxu0 0
    %1348 = vmatpush2.bf16.msra.mxu0 0
    %1349 = vmatprep.subr.bf16.mxu0 0
    %1350 = vmatpush2.bf16.msra.mxu0 0
    %1351 = vmatprep.subr.bf16.mxu0 0
    %1352 = vmatpush2.bf16.msra.mxu0 0
    %1353 = vmatprep.subr.bf16.mxu0 0
    %1354 = vmatpush2.bf16.msra.mxu0 0
    %1355 = vmatprep.subr.bf16.mxu0 0
    %1356 = vmatpush2.bf16.msra.mxu0 0
    %1357 = vmatprep.subr.bf16.mxu0 0
    %1358 = vmatpush2.bf16.msra.mxu0 0
    %1359 = vmatprep.mubr.bf16.mxu0 0
    %1360 = vmatmul.mubr.bf16.gmra.mxu0 %v1326
    %v1361 = vpop.f32.mrf.mxu0
    %v1362 = vadd.f32 0.0, %v1361
    %v1363 = vpop.f32.mrf.mxu0
    %v1364 = vadd.f32 0.0, %v1363
    %v1365 = vpop.f32.mrf.mxu0
    %v1366 = vpop.f32.mrf.mxu0
    %1367 = vdwg.mxu0
    %1368 = vmatprep.subr.bf16.mxu0 %v1072
    %1369 = vmatpush1.bf16.msra.mxu0 %v1071
    %1370 = vmatprep.subr.bf16.mxu0 %v1068
    %1371 = vmatpush1.bf16.msra.mxu0 %v1067
    %1372 = vmatprep.subr.bf16.mxu0 %v1064
    %1373 = vmatpush1.bf16.msra.mxu0 %v1063
    %1374 = vmatprep.subr.bf16.mxu0 %v1060
    %1375 = vmatpush1.bf16.msra.mxu0 %v1059
    %1376 = vmatprep.subr.bf16.mxu0 %v1056
    %1377 = vmatpush1.bf16.msra.mxu0 %v1055
    %1378 = vmatprep.subr.bf16.mxu0 %v1052
    %1379 = vmatpush1.bf16.msra.mxu0 %v1051
    %1380 = vmatprep.subr.bf16.mxu0 %v1048
    %1381 = vmatpush1.bf16.msra.mxu0 %v1047
    %1382 = vmatprep.subr.bf16.mxu0 %v1044
    %1383 = vmatpush1.bf16.msra.mxu0 %v1043
    %1384 = vmatprep.subr.bf16.mxu0 0
    %1385 = vmatpush2.bf16.msra.mxu0 0
    %1386 = vmatprep.subr.bf16.mxu0 0
    %1387 = vmatpush2.bf16.msra.mxu0 0
    %1388 = vmatprep.subr.bf16.mxu0 0
    %1389 = vmatpush2.bf16.msra.mxu0 0
    %1390 = vmatprep.subr.bf16.mxu0 0
    %1391 = vmatpush2.bf16.msra.mxu0 0
    %1392 = vmatprep.subr.bf16.mxu0 0
    %1393 = vmatpush2.bf16.msra.mxu0 0
    %1394 = vmatprep.subr.bf16.mxu0 0
    %1395 = vmatpush2.bf16.msra.mxu0 0
    %1396 = vmatprep.subr.bf16.mxu0 0
    %1397 = vmatpush2.bf16.msra.mxu0 0
    %1398 = vmatprep.subr.bf16.mxu0 0
    %1399 = vmatpush2.bf16.msra.mxu0 0
    %1400 = vmatprep.mubr.bf16.mxu0 0
    %1401 = vmatmul.mubr.bf16.gmra.mxu0 %v1326
    %v1402 = vpop.f32.mrf.mxu0
    %v1403 = vadd.f32 0.0, %v1402
    %v1404 = vpop.f32.mrf.mxu0
    %v1405 = vadd.f32 0.0, %v1404
    %v1406 = vpop.f32.mrf.mxu0
    %v1407 = vpop.f32.mrf.mxu0
    %1408 = vdwg.mxu0
    %v1409 = vadd.f32 %v812, %v1362
    %v1410 = vadd.f32 %v814, %v1364
    %v1411 = vadd.f32 %v885, %v1403
    %v1412 = vadd.f32 %v887, %v1405
    %v1413 = vxor.u32 %v1409, 2147483648
    %v1414 = vmul.f32 %v1413, 1.442695
    %v1415 = vpow.pop %v1414
    %v1416 = vadd.f32 %v1415, 1.0
    %v1417 = vrcp.pop %v1416
    %v1418 = vmul.f32 1.0, %v1417
    %v1419 = vxor.u32 %v1410, 2147483648
    %v1420 = vmul.f32 %v1419, 1.442695
    %v1421 = vpow.pop %v1420
    %v1422 = vadd.f32 %v1421, 1.0
    %v1423 = vrcp.pop %v1422
    %v1424 = vmul.f32 1.0, %v1423
    %v1425 = vtanh.pop %v1411
    %v1426 = vxor.u32 %v1412, 2147483648
    %v1427 = vmul.f32 %v1426, 1.442695
    %v1428 = vpow.pop %v1427
    %v1429 = vadd.f32 %v1428, 1.0
    %v1430 = vrcp.pop %v1429
    %v1431 = vmul.f32 1.0, %v1430
    %v1432 = vmul.f32 %v1424, %v1323
    %v1433 = vmul.f32 %v1418, %v1425
    %v1434 = vadd.f32 %v1432, %v1433
    %v1435 = vtanh.pop %v1434
    %v1436 = vmul.f32 %v1431, %v1435
    %v1437 = vpack.c.bf16 %v1436, %v1436
    %1438 = vmatprep.subr.bf16.mxu0 %v1070
    %1439 = vmatpush1.bf16.msra.mxu0 %v1069
    %1440 = vmatprep.subr.bf16.mxu0 %v1066
    %1441 = vmatpush1.bf16.msra.mxu0 %v1065
    %1442 = vmatprep.subr.bf16.mxu0 %v1062
    %1443 = vmatpush1.bf16.msra.mxu0 %v1061
    %1444 = vmatprep.subr.bf16.mxu0 %v1058
    %1445 = vmatpush1.bf16.msra.mxu0 %v1057
    %1446 = vmatprep.subr.bf16.mxu0 %v1054
    %1447 = vmatpush1.bf16.msra.mxu0 %v1053
    %1448 = vmatprep.subr.bf16.mxu0 %v1050
    %1449 = vmatpush1.bf16.msra.mxu0 %v1049
    %1450 = vmatprep.subr.bf16.mxu0 %v1046
    %1451 = vmatpush1.bf16.msra.mxu0 %v1045
    %1452 = vmatprep.subr.bf16.mxu0 %v1042
    %1453 = vmatpush1.bf16.msra.mxu0 %v1041
    %1454 = vmatprep.subr.bf16.mxu0 0
    %1455 = vmatpush2.bf16.msra.mxu0 0
    %1456 = vmatprep.subr.bf16.mxu0 0
    %1457 = vmatpush2.bf16.msra.mxu0 0
    %1458 = vmatprep.subr.bf16.mxu0 0
    %1459 = vmatpush2.bf16.msra.mxu0 0
    %1460 = vmatprep.subr.bf16.mxu0 0
    %1461 = vmatpush2.bf16.msra.mxu0 0
    %1462 = vmatprep.subr.bf16.mxu0 0
    %1463 = vmatpush2.bf16.msra.mxu0 0
    %1464 = vmatprep.subr.bf16.mxu0 0
    %1465 = vmatpush2.bf16.msra.mxu0 0
    %1466 = vmatprep.subr.bf16.mxu0 0
    %1467 = vmatpush2.bf16.msra.mxu0 0
    %1468 = vmatprep.subr.bf16.mxu0 0
    %1469 = vmatpush2.bf16.msra.mxu0 0
    %1470 = vmatprep.mubr.bf16.mxu0 0
    %1471 = vmatmul.mubr.bf16.gmra.mxu0 %v1437
    %v1472 = vpop.f32.mrf.mxu0
    %v1473 = vadd.f32 0.0, %v1472
    %v1474 = vpop.f32.mrf.mxu0
    %v1475 = vadd.f32 0.0, %v1474
    %v1476 = vpop.f32.mrf.mxu0
    %v1477 = vpop.f32.mrf.mxu0
    %1478 = vdwg.mxu0
    %1479 = vmatprep.subr.bf16.mxu0 %v1072
    %1480 = vmatpush1.bf16.msra.mxu0 %v1071
    %1481 = vmatprep.subr.bf16.mxu0 %v1068
    %1482 = vmatpush1.bf16.msra.mxu0 %v1067
    %1483 = vmatprep.subr.bf16.mxu0 %v1064
    %1484 = vmatpush1.bf16.msra.mxu0 %v1063
    %1485 = vmatprep.subr.bf16.mxu0 %v1060
    %1486 = vmatpush1.bf16.msra.mxu0 %v1059
    %1487 = vmatprep.subr.bf16.mxu0 %v1056
    %1488 = vmatpush1.bf16.msra.mxu0 %v1055
    %1489 = vmatprep.subr.bf16.mxu0 %v1052
    %1490 = vmatpush1.bf16.msra.mxu0 %v1051
    %1491 = vmatprep.subr.bf16.mxu0 %v1048
    %1492 = vmatpush1.bf16.msra.mxu0 %v1047
    %1493 = vmatprep.subr.bf16.mxu0 %v1044
    %1494 = vmatpush1.bf16.msra.mxu0 %v1043
    %1495 = vmatprep.subr.bf16.mxu0 0
    %1496 = vmatpush2.bf16.msra.mxu0 0
    %1497 = vmatprep.subr.bf16.mxu0 0
    %1498 = vmatpush2.bf16.msra.mxu0 0
    %1499 = vmatprep.subr.bf16.mxu0 0
    %1500 = vmatpush2.bf16.msra.mxu0 0
    %1501 = vmatprep.subr.bf16.mxu0 0
    %1502 = vmatpush2.bf16.msra.mxu0 0
    %1503 = vmatprep.subr.bf16.mxu0 0
    %1504 = vmatpush2.bf16.msra.mxu0 0
    %1505 = vmatprep.subr.bf16.mxu0 0
    %1506 = vmatpush2.bf16.msra.mxu0 0
    %1507 = vmatprep.subr.bf16.mxu0 0
    %1508 = vmatpush2.bf16.msra.mxu0 0
    %1509 = vmatprep.subr.bf16.mxu0 0
    %1510 = vmatpush2.bf16.msra.mxu0 0
    %1511 = vmatprep.mubr.bf16.mxu0 0
    %1512 = vmatmul.mubr.bf16.gmra.mxu0 %v1437
    %v1513 = vpop.f32.mrf.mxu0
    %v1514 = vadd.f32 0.0, %v1513
    %v1515 = vpop.f32.mrf.mxu0
    %v1516 = vadd.f32 0.0, %v1515
    %v1517 = vpop.f32.mrf.mxu0
    %v1518 = vpop.f32.mrf.mxu0
    %1519 = vdwg.mxu0
    %v1520 = vadd.f32 %v816, %v1473
    %v1521 = vadd.f32 %v818, %v1475
    %v1522 = vadd.f32 %v889, %v1514
    %v1523 = vadd.f32 %v891, %v1516
    %v1524 = vxor.u32 %v1520, 2147483648
    %v1525 = vmul.f32 %v1524, 1.442695
    %v1526 = vpow.pop %v1525
    %v1527 = vadd.f32 %v1526, 1.0
    %v1528 = vrcp.pop %v1527
    %v1529 = vmul.f32 1.0, %v1528
    %v1530 = vxor.u32 %v1521, 2147483648
    %v1531 = vmul.f32 %v1530, 1.442695
    %v1532 = vpow.pop %v1531
    %v1533 = vadd.f32 %v1532, 1.0
    %v1534 = vrcp.pop %v1533
    %v1535 = vmul.f32 1.0, %v1534
    %v1536 = vtanh.pop %v1522
    %v1537 = vxor.u32 %v1523, 2147483648
    %v1538 = vmul.f32 %v1537, 1.442695
    %v1539 = vpow.pop %v1538
    %v1540 = vadd.f32 %v1539, 1.0
    %v1541 = vrcp.pop %v1540
    %v1542 = vmul.f32 1.0, %v1541
    %v1543 = vmul.f32 %v1535, %v1434
    %v1544 = vmul.f32 %v1529, %v1536
    %v1545 = vadd.f32 %v1543, %v1544
    %v1546 = vtanh.pop %v1545
    %v1547 = vmul.f32 %v1542, %v1546
    %v1548 = vpack.c.bf16 %v1547, %v1547
    %1549 = vmatprep.subr.bf16.mxu0 %v1070
    %1550 = vmatpush1.bf16.msra.mxu0 %v1069
    %1551 = vmatprep.subr.bf16.mxu0 %v1066
    %1552 = vmatpush1.bf16.msra.mxu0 %v1065
    %1553 = vmatprep.subr.bf16.mxu0 %v1062
    %1554 = vmatpush1.bf16.msra.mxu0 %v1061
    %1555 = vmatprep.subr.bf16.mxu0 %v1058
    %1556 = vmatpush1.bf16.msra.mxu0 %v1057
    %1557 = vmatprep.subr.bf16.mxu0 %v1054
    %1558 = vmatpush1.bf16.msra.mxu0 %v1053
    %1559 = vmatprep.subr.bf16.mxu0 %v1050
    %1560 = vmatpush1.bf16.msra.mxu0 %v1049
    %1561 = vmatprep.subr.bf16.mxu0 %v1046
    %1562 = vmatpush1.bf16.msra.mxu0 %v1045
    %1563 = vmatprep.subr.bf16.mxu0 %v1042
    %1564 = vmatpush1.bf16.msra.mxu0 %v1041
    %1565 = vmatprep.subr.bf16.mxu0 0
    %1566 = vmatpush2.bf16.msra.mxu0 0
    %1567 = vmatprep.subr.bf16.mxu0 0
    %1568 = vmatpush2.bf16.msra.mxu0 0
    %1569 = vmatprep.subr.bf16.mxu0 0
    %1570 = vmatpush2.bf16.msra.mxu0 0
    %1571 = vmatprep.subr.bf16.mxu0 0
    %1572 = vmatpush2.bf16.msra.mxu0 0
    %1573 = vmatprep.subr.bf16.mxu0 0
    %1574 = vmatpush2.bf16.msra.mxu0 0
    %1575 = vmatprep.subr.bf16.mxu0 0
    %1576 = vmatpush2.bf16.msra.mxu0 0
    %1577 = vmatprep.subr.bf16.mxu0 0
    %1578 = vmatpush2.bf16.msra.mxu0 0
    %1579 = vmatprep.subr.bf16.mxu0 0
    %1580 = vmatpush2.bf16.msra.mxu0 0
    %1581 = vmatprep.mubr.bf16.mxu0 0
    %1582 = vmatmul.mubr.bf16.gmra.mxu0 %v1548
    %v1583 = vpop.f32.mrf.mxu0
    %v1584 = vadd.f32 0.0, %v1583
    %v1585 = vpop.f32.mrf.mxu0
    %v1586 = vadd.f32 0.0, %v1585
    %v1587 = vpop.f32.mrf.mxu0
    %v1588 = vpop.f32.mrf.mxu0
    %1589 = vdwg.mxu0
    %1590 = vmatprep.subr.bf16.mxu0 %v1072
    %1591 = vmatpush1.bf16.msra.mxu0 %v1071
    %1592 = vmatprep.subr.bf16.mxu0 %v1068
    %1593 = vmatpush1.bf16.msra.mxu0 %v1067
    %1594 = vmatprep.subr.bf16.mxu0 %v1064
    %1595 = vmatpush1.bf16.msra.mxu0 %v1063
    %1596 = vmatprep.subr.bf16.mxu0 %v1060
    %1597 = vmatpush1.bf16.msra.mxu0 %v1059
    %1598 = vmatprep.subr.bf16.mxu0 %v1056
    %1599 = vmatpush1.bf16.msra.mxu0 %v1055
    %1600 = vmatprep.subr.bf16.mxu0 %v1052
    %1601 = vmatpush1.bf16.msra.mxu0 %v1051
    %1602 = vmatprep.subr.bf16.mxu0 %v1048
    %1603 = vmatpush1.bf16.msra.mxu0 %v1047
    %1604 = vmatprep.subr.bf16.mxu0 %v1044
    %1605 = vmatpush1.bf16.msra.mxu0 %v1043
    %1606 = vmatprep.subr.bf16.mxu0 0
    %1607 = vmatpush2.bf16.msra.mxu0 0
    %1608 = vmatprep.subr.bf16.mxu0 0
    %1609 = vmatpush2.bf16.msra.mxu0 0
    %1610 = vmatprep.subr.bf16.mxu0 0
    %1611 = vmatpush2.bf16.msra.mxu0 0
    %1612 = vmatprep.subr.bf16.mxu0 0
    %1613 = vmatpush2.bf16.msra.mxu0 0
    %1614 = vmatprep.subr.bf16.mxu0 0
    %1615 = vmatpush2.bf16.msra.mxu0 0
    %1616 = vmatprep.subr.bf16.mxu0 0
    %1617 = vmatpush2.bf16.msra.mxu0 0
    %1618 = vmatprep.subr.bf16.mxu0 0
    %1619 = vmatpush2.bf16.msra.mxu0 0
    %1620 = vmatprep.subr.bf16.mxu0 0
    %1621 = vmatpush2.bf16.msra.mxu0 0
    %1622 = vmatprep.mubr.bf16.mxu0 0
    %1623 = vmatmul.mubr.bf16.gmra.mxu0 %v1548
    %v1624 = vpop.f32.mrf.mxu0
    %v1625 = vadd.f32 0.0, %v1624
    %v1626 = vpop.f32.mrf.mxu0
    %v1627 = vadd.f32 0.0, %v1626
    %v1628 = vpop.f32.mrf.mxu0
    %v1629 = vpop.f32.mrf.mxu0
    %1630 = vdwg.mxu0
    %v1631 = vadd.f32 %v822, %v1584
    %v1632 = vadd.f32 %v824, %v1586
    %v1633 = vadd.f32 %v895, %v1625
    %v1634 = vadd.f32 %v897, %v1627
    %v1635 = vxor.u32 %v1631, 2147483648
    %v1636 = vmul.f32 %v1635, 1.442695
    %v1637 = vpow.pop %v1636
    %v1638 = vadd.f32 %v1637, 1.0
    %v1639 = vrcp.pop %v1638
    %v1640 = vmul.f32 1.0, %v1639
    %v1641 = vxor.u32 %v1632, 2147483648
    %v1642 = vmul.f32 %v1641, 1.442695
    %v1643 = vpow.pop %v1642
    %v1644 = vadd.f32 %v1643, 1.0
    %v1645 = vrcp.pop %v1644
    %v1646 = vmul.f32 1.0, %v1645
    %v1647 = vtanh.pop %v1633
    %v1648 = vxor.u32 %v1634, 2147483648
    %v1649 = vmul.f32 %v1648, 1.442695
    %v1650 = vpow.pop %v1649
    %v1651 = vadd.f32 %v1650, 1.0
    %v1652 = vrcp.pop %v1651
    %v1653 = vmul.f32 1.0, %v1652
    %v1654 = vmul.f32 %v1646, %v1545
    %v1655 = vmul.f32 %v1640, %v1647
    %v1656 = vadd.f32 %v1654, %v1655
    %v1657 = vtanh.pop %v1656
    %v1658 = vmul.f32 %v1653, %v1657
    %v1659 = vpack.c.bf16 %v1658, %v1658
    %1660 = vmatprep.subr.bf16.mxu0 %v1070
    %1661 = vmatpush1.bf16.msra.mxu0 %v1069
    %1662 = vmatprep.subr.bf16.mxu0 %v1066
    %1663 = vmatpush1.bf16.msra.mxu0 %v1065
    %1664 = vmatprep.subr.bf16.mxu0 %v1062
    %1665 = vmatpush1.bf16.msra.mxu0 %v1061
    %1666 = vmatprep.subr.bf16.mxu0 %v1058
    %1667 = vmatpush1.bf16.msra.mxu0 %v1057
    %1668 = vmatprep.subr.bf16.mxu0 %v1054
    %1669 = vmatpush1.bf16.msra.mxu0 %v1053
    %1670 = vmatprep.subr.bf16.mxu0 %v1050
    %1671 = vmatpush1.bf16.msra.mxu0 %v1049
    %1672 = vmatprep.subr.bf16.mxu0 %v1046
    %1673 = vmatpush1.bf16.msra.mxu0 %v1045
    %1674 = vmatprep.subr.bf16.mxu0 %v1042
    %1675 = vmatpush1.bf16.msra.mxu0 %v1041
    %1676 = vmatprep.subr.bf16.mxu0 0
    %1677 = vmatpush2.bf16.msra.mxu0 0
    %1678 = vmatprep.subr.bf16.mxu0 0
    %1679 = vmatpush2.bf16.msra.mxu0 0
    %1680 = vmatprep.subr.bf16.mxu0 0
    %1681 = vmatpush2.bf16.msra.mxu0 0
    %1682 = vmatprep.subr.bf16.mxu0 0
    %1683 = vmatpush2.bf16.msra.mxu0 0
    %1684 = vmatprep.subr.bf16.mxu0 0
    %1685 = vmatpush2.bf16.msra.mxu0 0
    %1686 = vmatprep.subr.bf16.mxu0 0
    %1687 = vmatpush2.bf16.msra.mxu0 0
    %1688 = vmatprep.subr.bf16.mxu0 0
    %1689 = vmatpush2.bf16.msra.mxu0 0
    %1690 = vmatprep.subr.bf16.mxu0 0
    %1691 = vmatpush2.bf16.msra.mxu0 0
    %1692 = vmatprep.mubr.bf16.mxu0 0
    %1693 = vmatmul.mubr.bf16.gmra.mxu0 %v1659
    %v1694 = vpop.f32.mrf.mxu0
    %v1695 = vadd.f32 0.0, %v1694
    %v1696 = vpop.f32.mrf.mxu0
    %v1697 = vadd.f32 0.0, %v1696
    %v1698 = vpop.f32.mrf.mxu0
    %v1699 = vpop.f32.mrf.mxu0
    %1700 = vdwg.mxu0
    %1701 = vmatprep.subr.bf16.mxu0 %v1072
    %1702 = vmatpush1.bf16.msra.mxu0 %v1071
    %1703 = vmatprep.subr.bf16.mxu0 %v1068
    %1704 = vmatpush1.bf16.msra.mxu0 %v1067
    %1705 = vmatprep.subr.bf16.mxu0 %v1064
    %1706 = vmatpush1.bf16.msra.mxu0 %v1063
    %1707 = vmatprep.subr.bf16.mxu0 %v1060
    %1708 = vmatpush1.bf16.msra.mxu0 %v1059
    %1709 = vmatprep.subr.bf16.mxu0 %v1056
    %1710 = vmatpush1.bf16.msra.mxu0 %v1055
    %1711 = vmatprep.subr.bf16.mxu0 %v1052
    %1712 = vmatpush1.bf16.msra.mxu0 %v1051
    %1713 = vmatprep.subr.bf16.mxu0 %v1048
    %1714 = vmatpush1.bf16.msra.mxu0 %v1047
    %1715 = vmatprep.subr.bf16.mxu0 %v1044
    %1716 = vmatpush1.bf16.msra.mxu0 %v1043
    %1717 = vmatprep.subr.bf16.mxu0 0
    %1718 = vmatpush2.bf16.msra.mxu0 0
    %1719 = vmatprep.subr.bf16.mxu0 0
    %1720 = vmatpush2.bf16.msra.mxu0 0
    %1721 = vmatprep.subr.bf16.mxu0 0
    %1722 = vmatpush2.bf16.msra.mxu0 0
    %1723 = vmatprep.subr.bf16.mxu0 0
    %1724 = vmatpush2.bf16.msra.mxu0 0
    %1725 = vmatprep.subr.bf16.mxu0 0
    %1726 = vmatpush2.bf16.msra.mxu0 0
    %1727 = vmatprep.subr.bf16.mxu0 0
    %1728 = vmatpush2.bf16.msra.mxu0 0
    %1729 = vmatprep.subr.bf16.mxu0 0
    %1730 = vmatpush2.bf16.msra.mxu0 0
    %1731 = vmatprep.subr.bf16.mxu0 0
    %1732 = vmatpush2.bf16.msra.mxu0 0
    %1733 = vmatprep.mubr.bf16.mxu0 0
    %1734 = vmatmul.mubr.bf16.gmra.mxu0 %v1659
    %v1735 = vpop.f32.mrf.mxu0
    %v1736 = vadd.f32 0.0, %v1735
    %v1737 = vpop.f32.mrf.mxu0
    %v1738 = vadd.f32 0.0, %v1737
    %v1739 = vpop.f32.mrf.mxu0
    %v1740 = vpop.f32.mrf.mxu0
    %1741 = vdwg.mxu0
    %v1742 = vadd.f32 %v826, %v1695
    %v1743 = vadd.f32 %v828, %v1697
    %v1744 = vadd.f32 %v899, %v1736
    %v1745 = vadd.f32 %v901, %v1738
    %v1746 = vxor.u32 %v1742, 2147483648
    %v1747 = vmul.f32 %v1746, 1.442695
    %v1748 = vpow.pop %v1747
    %v1749 = vadd.f32 %v1748, 1.0
    %v1750 = vrcp.pop %v1749
    %v1751 = vmul.f32 1.0, %v1750
    %v1752 = vxor.u32 %v1743, 2147483648
    %v1753 = vmul.f32 %v1752, 1.442695
    %v1754 = vpow.pop %v1753
    %v1755 = vadd.f32 %v1754, 1.0
    %v1756 = vrcp.pop %v1755
    %v1757 = vmul.f32 1.0, %v1756
    %v1758 = vtanh.pop %v1744
    %v1759 = vxor.u32 %v1745, 2147483648
    %v1760 = vmul.f32 %v1759, 1.442695
    %v1761 = vpow.pop %v1760
    %v1762 = vadd.f32 %v1761, 1.0
    %v1763 = vrcp.pop %v1762
    %v1764 = vmul.f32 1.0, %v1763
    %v1765 = vmul.f32 %v1757, %v1656
    %v1766 = vmul.f32 %v1751, %v1758
    %v1767 = vadd.f32 %v1765, %v1766
    %v1768 = vtanh.pop %v1767
    %v1769 = vmul.f32 %v1764, %v1768
    %v1770 = vpack.c.bf16 %v1769, %v1769
    %1771 = vmatprep.subr.bf16.mxu0 %v1070
    %1772 = vmatpush1.bf16.msra.mxu0 %v1069
    %1773 = vmatprep.subr.bf16.mxu0 %v1066
    %1774 = vmatpush1.bf16.msra.mxu0 %v1065
    %1775 = vmatprep.subr.bf16.mxu0 %v1062
    %1776 = vmatpush1.bf16.msra.mxu0 %v1061
    %1777 = vmatprep.subr.bf16.mxu0 %v1058
    %1778 = vmatpush1.bf16.msra.mxu0 %v1057
    %1779 = vmatprep.subr.bf16.mxu0 %v1054
    %1780 = vmatpush1.bf16.msra.mxu0 %v1053
    %1781 = vmatprep.subr.bf16.mxu0 %v1050
    %1782 = vmatpush1.bf16.msra.mxu0 %v1049
    %1783 = vmatprep.subr.bf16.mxu0 %v1046
    %1784 = vmatpush1.bf16.msra.mxu0 %v1045
    %1785 = vmatprep.subr.bf16.mxu0 %v1042
    %1786 = vmatpush1.bf16.msra.mxu0 %v1041
    %1787 = vmatprep.subr.bf16.mxu0 0
    %1788 = vmatpush2.bf16.msra.mxu0 0
    %1789 = vmatprep.subr.bf16.mxu0 0
    %1790 = vmatpush2.bf16.msra.mxu0 0
    %1791 = vmatprep.subr.bf16.mxu0 0
    %1792 = vmatpush2.bf16.msra.mxu0 0
    %1793 = vmatprep.subr.bf16.mxu0 0
    %1794 = vmatpush2.bf16.msra.mxu0 0
    %1795 = vmatprep.subr.bf16.mxu0 0
    %1796 = vmatpush2.bf16.msra.mxu0 0
    %1797 = vmatprep.subr.bf16.mxu0 0
    %1798 = vmatpush2.bf16.msra.mxu0 0
    %1799 = vmatprep.subr.bf16.mxu0 0
    %1800 = vmatpush2.bf16.msra.mxu0 0
    %1801 = vmatprep.subr.bf16.mxu0 0
    %1802 = vmatpush2.bf16.msra.mxu0 0
    %1803 = vmatprep.mubr.bf16.mxu0 0
    %1804 = vmatmul.mubr.bf16.gmra.mxu0 %v1770
    %v1805 = vpop.f32.mrf.mxu0
    %v1806 = vadd.f32 0.0, %v1805
    %v1807 = vpop.f32.mrf.mxu0
    %v1808 = vadd.f32 0.0, %v1807
    %v1809 = vpop.f32.mrf.mxu0
    %v1810 = vpop.f32.mrf.mxu0
    %1811 = vdwg.mxu0
    %1812 = vmatprep.subr.bf16.mxu0 %v1072
    %1813 = vmatpush1.bf16.msra.mxu0 %v1071
    %1814 = vmatprep.subr.bf16.mxu0 %v1068
    %1815 = vmatpush1.bf16.msra.mxu0 %v1067
    %1816 = vmatprep.subr.bf16.mxu0 %v1064
    %1817 = vmatpush1.bf16.msra.mxu0 %v1063
    %1818 = vmatprep.subr.bf16.mxu0 %v1060
    %1819 = vmatpush1.bf16.msra.mxu0 %v1059
    %1820 = vmatprep.subr.bf16.mxu0 %v1056
    %1821 = vmatpush1.bf16.msra.mxu0 %v1055
    %1822 = vmatprep.subr.bf16.mxu0 %v1052
    %1823 = vmatpush1.bf16.msra.mxu0 %v1051
    %1824 = vmatprep.subr.bf16.mxu0 %v1048
    %1825 = vmatpush1.bf16.msra.mxu0 %v1047
    %1826 = vmatprep.subr.bf16.mxu0 %v1044
    %1827 = vmatpush1.bf16.msra.mxu0 %v1043
    %1828 = vmatprep.subr.bf16.mxu0 0
    %1829 = vmatpush2.bf16.msra.mxu0 0
    %1830 = vmatprep.subr.bf16.mxu0 0
    %1831 = vmatpush2.bf16.msra.mxu0 0
    %1832 = vmatprep.subr.bf16.mxu0 0
    %1833 = vmatpush2.bf16.msra.mxu0 0
    %1834 = vmatprep.subr.bf16.mxu0 0
    %1835 = vmatpush2.bf16.msra.mxu0 0
    %1836 = vmatprep.subr.bf16.mxu0 0
    %1837 = vmatpush2.bf16.msra.mxu0 0
    %1838 = vmatprep.subr.bf16.mxu0 0
    %1839 = vmatpush2.bf16.msra.mxu0 0
    %1840 = vmatprep.subr.bf16.mxu0 0
    %1841 = vmatpush2.bf16.msra.mxu0 0
    %1842 = vmatprep.subr.bf16.mxu0 0
    %1843 = vmatpush2.bf16.msra.mxu0 0
    %1844 = vmatprep.mubr.bf16.mxu0 0
    %1845 = vmatmul.mubr.bf16.gmra.mxu0 %v1770
    %v1846 = vpop.f32.mrf.mxu0
    %v1847 = vadd.f32 0.0, %v1846
    %v1848 = vpop.f32.mrf.mxu0
    %v1849 = vadd.f32 0.0, %v1848
    %v1850 = vpop.f32.mrf.mxu0
    %v1851 = vpop.f32.mrf.mxu0
    %1852 = vdwg.mxu0
    %v1853 = vadd.f32 %v832, %v1806
    %v1854 = vadd.f32 %v834, %v1808
    %v1855 = vadd.f32 %v905, %v1847
    %v1856 = vadd.f32 %v907, %v1849
    %v1857 = vxor.u32 %v1853, 2147483648
    %v1858 = vmul.f32 %v1857, 1.442695
    %v1859 = vpow.pop %v1858
    %v1860 = vadd.f32 %v1859, 1.0
    %v1861 = vrcp.pop %v1860
    %v1862 = vmul.f32 1.0, %v1861
    %v1863 = vxor.u32 %v1854, 2147483648
    %v1864 = vmul.f32 %v1863, 1.442695
    %v1865 = vpow.pop %v1864
    %v1866 = vadd.f32 %v1865, 1.0
    %v1867 = vrcp.pop %v1866
    %v1868 = vmul.f32 1.0, %v1867
    %v1869 = vtanh.pop %v1855
    %v1870 = vxor.u32 %v1856, 2147483648
    %v1871 = vmul.f32 %v1870, 1.442695
    %v1872 = vpow.pop %v1871
    %v1873 = vadd.f32 %v1872, 1.0
    %v1874 = vrcp.pop %v1873
    %v1875 = vmul.f32 1.0, %v1874
    %v1876 = vmul.f32 %v1868, %v1767
    %v1877 = vmul.f32 %v1862, %v1869
    %v1878 = vadd.f32 %v1876, %v1877
    %v1879 = vtanh.pop %v1878
    %v1880 = vmul.f32 %v1875, %v1879
    %v1881 = vpack.c.bf16 %v1880, %v1880
    %1882 = vmatprep.subr.bf16.mxu0 %v1070
    %1883 = vmatpush1.bf16.msra.mxu0 %v1069
    %1884 = vmatprep.subr.bf16.mxu0 %v1066
    %1885 = vmatpush1.bf16.msra.mxu0 %v1065
    %1886 = vmatprep.subr.bf16.mxu0 %v1062
    %1887 = vmatpush1.bf16.msra.mxu0 %v1061
    %1888 = vmatprep.subr.bf16.mxu0 %v1058
    %1889 = vmatpush1.bf16.msra.mxu0 %v1057
    %1890 = vmatprep.subr.bf16.mxu0 %v1054
    %1891 = vmatpush1.bf16.msra.mxu0 %v1053
    %1892 = vmatprep.subr.bf16.mxu0 %v1050
    %1893 = vmatpush1.bf16.msra.mxu0 %v1049
    %1894 = vmatprep.subr.bf16.mxu0 %v1046
    %1895 = vmatpush1.bf16.msra.mxu0 %v1045
    %1896 = vmatprep.subr.bf16.mxu0 %v1042
    %1897 = vmatpush1.bf16.msra.mxu0 %v1041
    %1898 = vmatprep.subr.bf16.mxu0 0
    %1899 = vmatpush2.bf16.msra.mxu0 0
    %1900 = vmatprep.subr.bf16.mxu0 0
    %1901 = vmatpush2.bf16.msra.mxu0 0
    %1902 = vmatprep.subr.bf16.mxu0 0
    %1903 = vmatpush2.bf16.msra.mxu0 0
    %1904 = vmatprep.subr.bf16.mxu0 0
    %1905 = vmatpush2.bf16.msra.mxu0 0
    %1906 = vmatprep.subr.bf16.mxu0 0
    %1907 = vmatpush2.bf16.msra.mxu0 0
    %1908 = vmatprep.subr.bf16.mxu0 0
    %1909 = vmatpush2.bf16.msra.mxu0 0
    %1910 = vmatprep.subr.bf16.mxu0 0
    %1911 = vmatpush2.bf16.msra.mxu0 0
    %1912 = vmatprep.subr.bf16.mxu0 0
    %1913 = vmatpush2.bf16.msra.mxu0 0
    %1914 = vmatprep.mubr.bf16.mxu0 0
    %1915 = vmatmul.mubr.bf16.gmra.mxu0 %v1881
    %v1916 = vpop.f32.mrf.mxu0
    %v1917 = vadd.f32 0.0, %v1916
    %v1918 = vpop.f32.mrf.mxu0
    %v1919 = vadd.f32 0.0, %v1918
    %v1920 = vpop.f32.mrf.mxu0
    %v1921 = vpop.f32.mrf.mxu0
    %1922 = vdwg.mxu0
    %1923 = vmatprep.subr.bf16.mxu0 %v1072
    %1924 = vmatpush1.bf16.msra.mxu0 %v1071
    %1925 = vmatprep.subr.bf16.mxu0 %v1068
    %1926 = vmatpush1.bf16.msra.mxu0 %v1067
    %1927 = vmatprep.subr.bf16.mxu0 %v1064
    %1928 = vmatpush1.bf16.msra.mxu0 %v1063
    %1929 = vmatprep.subr.bf16.mxu0 %v1060
    %1930 = vmatpush1.bf16.msra.mxu0 %v1059
    %1931 = vmatprep.subr.bf16.mxu0 %v1056
    %1932 = vmatpush1.bf16.msra.mxu0 %v1055
    %1933 = vmatprep.subr.bf16.mxu0 %v1052
    %1934 = vmatpush1.bf16.msra.mxu0 %v1051
    %1935 = vmatprep.subr.bf16.mxu0 %v1048
    %1936 = vmatpush1.bf16.msra.mxu0 %v1047
    %1937 = vmatprep.subr.bf16.mxu0 %v1044
    %1938 = vmatpush1.bf16.msra.mxu0 %v1043
    %1939 = vmatprep.subr.bf16.mxu0 0
    %1940 = vmatpush2.bf16.msra.mxu0 0
    %1941 = vmatprep.subr.bf16.mxu0 0
    %1942 = vmatpush2.bf16.msra.mxu0 0
    %1943 = vmatprep.subr.bf16.mxu0 0
    %1944 = vmatpush2.bf16.msra.mxu0 0
    %1945 = vmatprep.subr.bf16.mxu0 0
    %1946 = vmatpush2.bf16.msra.mxu0 0
    %1947 = vmatprep.subr.bf16.mxu0 0
    %1948 = vmatpush2.bf16.msra.mxu0 0
    %1949 = vmatprep.subr.bf16.mxu0 0
    %1950 = vmatpush2.bf16.msra.mxu0 0
    %1951 = vmatprep.subr.bf16.mxu0 0
    %1952 = vmatpush2.bf16.msra.mxu0 0
    %1953 = vmatprep.subr.bf16.mxu0 0
    %1954 = vmatpush2.bf16.msra.mxu0 0
    %1955 = vmatprep.mubr.bf16.mxu0 0
    %1956 = vmatmul.mubr.bf16.gmra.mxu0 %v1881
    %v1957 = vpop.f32.mrf.mxu0
    %v1958 = vadd.f32 0.0, %v1957
    %v1959 = vpop.f32.mrf.mxu0
    %v1960 = vadd.f32 0.0, %v1959
    %v1961 = vpop.f32.mrf.mxu0
    %v1962 = vpop.f32.mrf.mxu0
    %1963 = vdwg.mxu0
    %v1964 = vadd.f32 %v836, %v1917
    %v1965 = vadd.f32 %v838, %v1919
    %v1966 = vadd.f32 %v909, %v1958
    %v1967 = vadd.f32 %v911, %v1960
    %v1968 = vxor.u32 %v1964, 2147483648
    %v1969 = vmul.f32 %v1968, 1.442695
    %v1970 = vpow.pop %v1969
    %v1971 = vadd.f32 %v1970, 1.0
    %v1972 = vrcp.pop %v1971
    %v1973 = vmul.f32 1.0, %v1972
    %v1974 = vxor.u32 %v1965, 2147483648
    %v1975 = vmul.f32 %v1974, 1.442695
    %v1976 = vpow.pop %v1975
    %v1977 = vadd.f32 %v1976, 1.0
    %v1978 = vrcp.pop %v1977
    %v1979 = vmul.f32 1.0, %v1978
    %v1980 = vtanh.pop %v1966
    %v1981 = vxor.u32 %v1967, 2147483648
    %v1982 = vmul.f32 %v1981, 1.442695
    %v1983 = vpow.pop %v1982
    %v1984 = vadd.f32 %v1983, 1.0
    %v1985 = vrcp.pop %v1984
    %v1986 = vmul.f32 1.0, %v1985
    %v1987 = vmul.f32 %v1979, %v1878
    %v1988 = vmul.f32 %v1973, %v1980
    %v1989 = vadd.f32 %v1987, %v1988
    %v1990 = vtanh.pop %v1989
    %v1991 = vmul.f32 %v1986, %v1990
    %v1992 = vld [vmem:[%s3] sm:$0xff]
    %v1993 = vld [vmem:[%s3 + $0x8] sm:$0xff]
    %v1994 = vld [vmem:[%s3 + $0x10] sm:$0xff]
    %v1995 = vld [vmem:[%s3 + $0x18] sm:$0xff]
    %v1996 = vld [vmem:[%s3 + $0x20] sm:$0xff]
    %v1997 = vld [vmem:[%s3 + $0x28] sm:$0xff]
    %v1998 = vld [vmem:[%s3 + $0x30] sm:$0xff]
    %v1999 = vld [vmem:[%s3 + $0x38] sm:$0xff]
    %v2000 = vld [vmem:[#allocation13] sm:$0xff]
    %v2001 = vld [vmem:[#allocation13 + $0x8] sm:$0xff]
    %v2002 = vld [vmem:[#allocation13 + $0x10] sm:$0xff]
    %v2003 = vld [vmem:[#allocation13 + $0x18] sm:$0xff]
    %v2004 = vld [vmem:[#allocation13 + $0x20] sm:$0xff]
    %v2005 = vld [vmem:[#allocation13 + $0x28] sm:$0xff]
    %v2006 = vld [vmem:[#allocation13 + $0x30] sm:$0xff]
    %v2007 = vld [vmem:[#allocation13 + $0x38] sm:$0xff]
    %v2008 = vld [vmem:[#allocation13 + $0x40] sm:$0xff]
    %v2009 = vld [vmem:[#allocation13 + $0x48] sm:$0xff]
    %v2010 = vld [vmem:[#allocation13 + $0x50] sm:$0xff]
    %v2011 = vld [vmem:[#allocation13 + $0x58] sm:$0xff]
    %v2012 = vld [vmem:[#allocation13 + $0x60] sm:$0xff]
    %v2013 = vld [vmem:[#allocation13 + $0x68] sm:$0xff]
    %v2014 = vld [vmem:[#allocation13 + $0x70] sm:$0xff]
    %v2015 = vld [vmem:[#allocation13 + $0x78] sm:$0xff]
    %v2016 = vld [vmem:[#allocation15] sm:$0x7]
    %v2017 = vpack.c.bf16 %v1325, %v1214
    %v2018 = vpack.c.bf16 %v1547, %v1436
    %v2019 = vpack.c.bf16 %v1769, %v1658
    %v2020 = vpack.c.bf16 %v1991, %v1880
    %v2021 = vlaneseq
    %v2022 = vshrl.u32 %v2021, 7
    %v2023 = vsub.s32 0, %v2022
    %v2024 = vrot.slane %v2016, %v2023
    %v2041 = vunpack.c.l.b16 %v2000
    %v2042 = vunpack.c.l.b16 %v2001
    %v2043 = vunpack.c.l.b16 %v2002
    %v2044 = vunpack.c.l.b16 %v2003
    %v2045 = vunpack.c.l.b16 %v2004
    %v2046 = vunpack.c.l.b16 %v2005
    %v2047 = vunpack.c.l.b16 %v2006
    %v2048 = vunpack.c.l.b16 %v2007
    %v2049 = vunpack.c.l.b16 %v2008
    %v2050 = vunpack.c.l.b16 %v2009
    %v2051 = vunpack.c.l.b16 %v2010
    %v2052 = vunpack.c.l.b16 %v2011
    %v2053 = vunpack.c.l.b16 %v2012
    %v2054 = vunpack.c.l.b16 %v2013
    %v2055 = vunpack.c.l.b16 %v2014
    %v2056 = vunpack.c.l.b16 %v2015
    %v2057 = vpack.c.b16 %v2042, %v2041
    %v2058 = vpack.c.b16 %v2044, %v2043
    %v2059 = vpack.c.b16 %v2046, %v2045
    %v2060 = vpack.c.b16 %v2048, %v2047
    %v2061 = vpack.c.b16 %v2050, %v2049
    %v2062 = vpack.c.b16 %v2052, %v2051
    %v2063 = vpack.c.b16 %v2054, %v2053
    %v2064 = vpack.c.b16 %v2056, %v2055
    %2073 = vmatprep.subr.bf16.mxu0 0
    %2074 = vmatpush1.bf16.msra.mxu0 %v2064
    %2075 = vmatprep.subr.bf16.mxu0 0
    %2076 = vmatpush1.bf16.msra.mxu0 %v2063
    %2077 = vmatprep.subr.bf16.mxu0 0
    %2078 = vmatpush1.bf16.msra.mxu0 %v2062
    %2079 = vmatprep.subr.bf16.mxu0 0
    %2080 = vmatpush1.bf16.msra.mxu0 %v2061
    %2081 = vmatprep.subr.bf16.mxu0 0
    %2082 = vmatpush1.bf16.msra.mxu0 %v2060
    %2083 = vmatprep.subr.bf16.mxu0 0
    %2084 = vmatpush1.bf16.msra.mxu0 %v2059
    %2085 = vmatprep.subr.bf16.mxu0 0
    %2086 = vmatpush1.bf16.msra.mxu0 %v2058
    %2087 = vmatprep.subr.bf16.mxu0 0
    %2088 = vmatpush1.bf16.msra.mxu0 %v2057
    %2089 = vmatprep.subr.bf16.mxu0 0
    %2090 = vmatpush2.bf16.msra.mxu0 0
    %2091 = vmatprep.subr.bf16.mxu0 0
    %2092 = vmatpush2.bf16.msra.mxu0 0
    %2093 = vmatprep.subr.bf16.mxu0 0
    %2094 = vmatpush2.bf16.msra.mxu0 0
    %2095 = vmatprep.subr.bf16.mxu0 0
    %2096 = vmatpush2.bf16.msra.mxu0 0
    %2097 = vmatprep.subr.bf16.mxu0 0
    %2098 = vmatpush2.bf16.msra.mxu0 0
    %2099 = vmatprep.subr.bf16.mxu0 0
    %2100 = vmatpush2.bf16.msra.mxu0 0
    %2101 = vmatprep.subr.bf16.mxu0 0
    %2102 = vmatpush2.bf16.msra.mxu0 0
    %2103 = vmatprep.subr.bf16.mxu0 0
    %2104 = vmatpush2.bf16.msra.mxu0 0
    %2105 = vmatprep.mubr.bf16.mxu0 0
    %2106 = vmatmul.mubr.bf16.gmra.mxu0 %v2017
    %v2107 = vpop.f32.mrf.mxu0
    %v2108 = vadd.f32 %v2024, %v2107
    %v2109 = vpop.f32.mrf.mxu0
    %v2110 = vpop.f32.mrf.mxu0
    %v2111 = vadd.f32 %v2024, %v2110
    %v2112 = vpop.f32.mrf.mxu0
    %2113 = vmatprep.mubr.bf16.mxu0 0
    %2114 = vmatmul.mubr.bf16.gmra.mxu0 %v2018
    %v2115 = vpop.f32.mrf.mxu0
    %v2116 = vadd.f32 %v2024, %v2115
    %v2117 = vpop.f32.mrf.mxu0
    %v2118 = vpop.f32.mrf.mxu0
    %v2119 = vadd.f32 %v2024, %v2118
    %v2120 = vpop.f32.mrf.mxu0
    %2121 = vmatprep.mubr.bf16.mxu0 0
    %2122 = vmatmul.mubr.bf16.gmra.mxu0 %v2019
    %v2123 = vpop.f32.mrf.mxu0
    %v2124 = vadd.f32 %v2024, %v2123
    %v2125 = vpop.f32.mrf.mxu0
    %v2126 = vpop.f32.mrf.mxu0
    %v2127 = vadd.f32 %v2024, %v2126
    %v2128 = vpop.f32.mrf.mxu0
    %2129 = vmatprep.mubr.bf16.mxu0 0
    %2130 = vmatmul.mubr.bf16.gmra.mxu0 %v2020
    %v2131 = vpop.f32.mrf.mxu0
    %v2132 = vadd.f32 %v2024, %v2131
    %v2133 = vpop.f32.mrf.mxu0
    %v2134 = vpop.f32.mrf.mxu0
    %v2135 = vadd.f32 %v2024, %v2134
    %v2136 = vpop.f32.mrf.mxu0
    %2137 = vdwg.mxu0
    %v2138 = vmax.f32 %v2108, 0.0
    %v2139 = vmax.f32 %v2111, 0.0
    %v2140 = vmax.f32 %v2116, 0.0
    %v2141 = vmax.f32 %v2119, 0.0
    %v2142 = vmax.f32 %v2124, 0.0
    %v2143 = vmax.f32 %v2127, 0.0
    %v2144 = vmax.f32 %v2132, 0.0
    %v2145 = vmax.f32 %v2135, 0.0
    %v2146 = vlaneseq
    %v2147 = vshrl.u32 %v2146, 7
    %v2148 = vsub.s32 1, %v2147
    %v2149 = vrot.slane %v2016, %v2148
    %v2150 = vmul.f32 %v2138, %v2149
    %v2151 = vmul.f32 %v2139, %v2149
    %v2152 = vmul.f32 %v2140, %v2149
    %v2153 = vmul.f32 %v2141, %v2149
    %v2154 = vmul.f32 %v2142, %v2149
    %v2155 = vmul.f32 %v2143, %v2149
    %v2156 = vmul.f32 %v2144, %v2149
    %v2157 = vmul.f32 %v2145, %v2149
    %2158 = vadd.xlane.f32.xlu0 %v2150
    %v2159 = vpop.xlane.xlu0 %2158
    %2160 = vadd.xlane.f32.xlu0 %v2151
    %v2161 = vpop.xlane.xlu0 %2160
    %2162 = vadd.xlane.f32.xlu0 %v2152
    %v2163 = vpop.xlane.xlu0 %2162
    %2164 = vadd.xlane.f32.xlu0 %v2153
    %v2165 = vpop.xlane.xlu0 %2164
    %2166 = vadd.xlane.f32.xlu0 %v2154
    %v2167 = vpop.xlane.xlu0 %2166
    %2168 = vadd.xlane.f32.xlu0 %v2155
    %v2169 = vpop.xlane.xlu0 %2168
    %2170 = vadd.xlane.f32.xlu0 %v2156
    %v2171 = vpop.xlane.xlu0 %2170
    %2172 = vadd.xlane.f32.xlu0 %v2157
    %v2173 = vpop.xlane.xlu0 %2172
    %v2174 = vadd.f32 %v2159, %v1992
    %v2175 = vadd.f32 %v2161, %v1993
    %v2176 = vadd.f32 %v2163, %v1994
    %v2177 = vadd.f32 %v2165, %v1995
    %v2178 = vadd.f32 %v2167, %v1996
    %v2179 = vadd.f32 %v2169, %v1997
    %v2180 = vadd.f32 %v2171, %v1998
    %v2181 = vadd.f32 %v2173, %v1999
    %v2182 = vmax.f32 %v2174, %v2175
    %v2183 = vmax.f32 %v2182, %v2176
    %v2184 = vmax.f32 %v2183, %v2177
    %v2185 = vmax.f32 %v2184, %v2178
    %v2186 = vmax.f32 %v2185, %v2179
    %v2187 = vmax.f32 %v2186, %v2180
    %v2188 = vmax.f32 %v2187, %v2181
    %v2189 = vsub.f32 %v2174, %v2188
    %v2190 = vmul.f32 %v2189, 1.442695
    %v2191 = vpow.pop %v2190
    %v2192 = vsub.f32 %v2175, %v2188
    %v2193 = vmul.f32 %v2192, 1.442695
    %v2194 = vpow.pop %v2193
    %v2195 = vsub.f32 %v2176, %v2188
    %v2196 = vmul.f32 %v2195, 1.442695
    %v2197 = vpow.pop %v2196
    %v2198 = vsub.f32 %v2177, %v2188
    %v2199 = vmul.f32 %v2198, 1.442695
    %v2200 = vpow.pop %v2199
    %v2201 = vsub.f32 %v2178, %v2188
    %v2202 = vmul.f32 %v2201, 1.442695
    %v2203 = vpow.pop %v2202
    %v2204 = vsub.f32 %v2179, %v2188
    %v2205 = vmul.f32 %v2204, 1.442695
    %v2206 = vpow.pop %v2205
    %v2207 = vsub.f32 %v2180, %v2188
    %v2208 = vmul.f32 %v2207, 1.442695
    %v2209 = vpow.pop %v2208
    %v2210 = vsub.f32 %v2181, %v2188
    %v2211 = vmul.f32 %v2210, 1.442695
    %v2212 = vpow.pop %v2211
    %v2213 = vadd.f32 %v2191, %v2194
    %v2214 = vadd.f32 %v2213, %v2197
    %v2215 = vadd.f32 %v2214, %v2200
    %v2216 = vadd.f32 %v2215, %v2203
    %v2217 = vadd.f32 %v2216, %v2206
    %v2218 = vadd.f32 %v2217, %v2209
    %v2219 = vadd.f32 %v2218, %v2212
    %v2220 = vrcp.pop %v2219
    %v2221 = vmul.f32 %v2191, %v2220
    %2223 = vset.pattern.permute.xlu0 0
    %2224 = vperm.xlu0 %2223, %v2221
    %v2225 = vpop.permute.xlu0 %2224
    %v2227 = vmul.f32 %v2225, %v1214
    %v2228 = vmul.f32 %v2194, %v2220
    %2230 = vset.pattern.permute.xlu0 0
    %2231 = vperm.xlu0 %2230, %v2228
    %v2232 = vpop.permute.xlu0 %2231
    %v2234 = vmul.f32 %v2232, %v1325
    %v2235 = vadd.f32 %v2227, %v2234
    %v2236 = vmul.f32 %v2197, %v2220
    %2238 = vset.pattern.permute.xlu0 0
    %2239 = vperm.xlu0 %2238, %v2236
    %v2240 = vpop.permute.xlu0 %2239
    %v2242 = vmul.f32 %v2240, %v1436
    %v2243 = vadd.f32 %v2235, %v2242
    %v2244 = vmul.f32 %v2200, %v2220
    %2246 = vset.pattern.permute.xlu0 0
    %2247 = vperm.xlu0 %2246, %v2244
    %v2248 = vpop.permute.xlu0 %2247
    %v2250 = vmul.f32 %v2248, %v1547
    %v2251 = vadd.f32 %v2243, %v2250
    %v2252 = vmul.f32 %v2203, %v2220
    %2254 = vset.pattern.permute.xlu0 0
    %2255 = vperm.xlu0 %2254, %v2252
    %v2256 = vpop.permute.xlu0 %2255
    %v2258 = vmul.f32 %v2256, %v1658
    %v2259 = vadd.f32 %v2251, %v2258
    %v2260 = vmul.f32 %v2206, %v2220
    %2262 = vset.pattern.permute.xlu0 0
    %2263 = vperm.xlu0 %2262, %v2260
    %v2264 = vpop.permute.xlu0 %2263
    %v2266 = vmul.f32 %v2264, %v1769
    %v2267 = vadd.f32 %v2259, %v2266
    %v2268 = vmul.f32 %v2209, %v2220
    %2270 = vset.pattern.permute.xlu0 0
    %2271 = vperm.xlu0 %2270, %v2268
    %v2272 = vpop.permute.xlu0 %2271
    %v2274 = vmul.f32 %v2272, %v1880
    %v2275 = vadd.f32 %v2267, %v2274
    %v2276 = vmul.f32 %v2212, %v2220
    %2278 = vset.pattern.permute.xlu0 0
    %2279 = vperm.xlu0 %2278, %v2276
    %v2280 = vpop.permute.xlu0 %2279
    %v2282 = vmul.f32 %v2280, %v1991
    %v2283 = vadd.f32 %v2275, %v2282
    %v2284 = vpack.c.bf16 %v2283, %v2283
    %v2285 = vlaneseq
    %v2286 = vshrl.u32 %v2285, 7
    %v2287 = vsub.s32 2, %v2286
    %v2288 = vrot.slane %v2016, %v2287
    %v2289 = vunpack.c.h.b16 %v2000
    %v2290 = vunpack.c.h.b16 %v2001
    %v2291 = vunpack.c.h.b16 %v2002
    %v2292 = vunpack.c.h.b16 %v2003
    %v2293 = vunpack.c.h.b16 %v2004
    %v2294 = vunpack.c.h.b16 %v2005
    %v2295 = vunpack.c.h.b16 %v2006
    %v2296 = vunpack.c.h.b16 %v2007
    %v2297 = vunpack.c.h.b16 %v2008
    %v2298 = vunpack.c.h.b16 %v2009
    %v2299 = vunpack.c.h.b16 %v2010
    %v2300 = vunpack.c.h.b16 %v2011
    %v2301 = vunpack.c.h.b16 %v2012
    %v2302 = vunpack.c.h.b16 %v2013
    %v2303 = vunpack.c.h.b16 %v2014
    %v2304 = vunpack.c.h.b16 %v2015
    %v2305 = vpack.c.b16 %v2290, %v2289
    %v2306 = vpack.c.b16 %v2292, %v2291
    %v2307 = vpack.c.b16 %v2294, %v2293
    %v2308 = vpack.c.b16 %v2296, %v2295
    %v2309 = vpack.c.b16 %v2298, %v2297
    %v2310 = vpack.c.b16 %v2300, %v2299
    %v2311 = vpack.c.b16 %v2302, %v2301
    %v2312 = vpack.c.b16 %v2304, %v2303
    %2321 = vmatprep.subr.bf16.mxu0 0
    %2322 = vmatpush1.bf16.msra.mxu0 %v2312
    %2323 = vmatprep.subr.bf16.mxu0 0
    %2324 = vmatpush1.bf16.msra.mxu0 %v2311
    %2325 = vmatprep.subr.bf16.mxu0 0
    %2326 = vmatpush1.bf16.msra.mxu0 %v2310
    %2327 = vmatprep.subr.bf16.mxu0 0
    %2328 = vmatpush1.bf16.msra.mxu0 %v2309
    %2329 = vmatprep.subr.bf16.mxu0 0
    %2330 = vmatpush1.bf16.msra.mxu0 %v2308
    %2331 = vmatprep.subr.bf16.mxu0 0
    %2332 = vmatpush1.bf16.msra.mxu0 %v2307
    %2333 = vmatprep.subr.bf16.mxu0 0
    %2334 = vmatpush1.bf16.msra.mxu0 %v2306
    %2335 = vmatprep.subr.bf16.mxu0 0
    %2336 = vmatpush1.bf16.msra.mxu0 %v2305
    %2337 = vmatprep.subr.bf16.mxu0 0
    %2338 = vmatpush2.bf16.msra.mxu0 0
    %2339 = vmatprep.subr.bf16.mxu0 0
    %2340 = vmatpush2.bf16.msra.mxu0 0
    %2341 = vmatprep.subr.bf16.mxu0 0
    %2342 = vmatpush2.bf16.msra.mxu0 0
    %2343 = vmatprep.subr.bf16.mxu0 0
    %2344 = vmatpush2.bf16.msra.mxu0 0
    %2345 = vmatprep.subr.bf16.mxu0 0
    %2346 = vmatpush2.bf16.msra.mxu0 0
    %2347 = vmatprep.subr.bf16.mxu0 0
    %2348 = vmatpush2.bf16.msra.mxu0 0
    %2349 = vmatprep.subr.bf16.mxu0 0
    %2350 = vmatpush2.bf16.msra.mxu0 0
    %2351 = vmatprep.subr.bf16.mxu0 0
    %2352 = vmatpush2.bf16.msra.mxu0 0
    %2353 = vmatprep.mubr.bf16.mxu0 0
    %2354 = vmatmul.mubr.bf16.gmra.mxu0 %v2284
    %v2355 = vpop.f32.mrf.mxu0
    %v2356 = vadd.f32 %v2288, %v2355
    %v2357 = vpop.f32.mrf.mxu0
    %v2358 = vpop.f32.mrf.mxu0
    %v2359 = vpop.f32.mrf.mxu0
    %2360 = vdwg.mxu0
    %v2361 = vld [vmem:[%s1] sm:$0xff]
    %v2362 = vld [vmem:[%s1 + $0x8] sm:$0xff]
    %v2363 = vld [vmem:[%s1 + $0x10] sm:$0xff]
    %v2364 = vld [vmem:[%s1 + $0x18] sm:$0xff]
    %v2365 = vld [vmem:[%s1 + $0x20] sm:$0xff]
    %v2366 = vld [vmem:[%s1 + $0x28] sm:$0xff]
    %v2367 = vld [vmem:[%s1 + $0x30] sm:$0xff]
    %v2368 = vld [vmem:[%s1 + $0x38] sm:$0xff]
    %v2369 = vld [vmem:[#allocation22] sm:$0xf]
    %v2370 = vld [vmem:[#allocation22 + $0x4] sm:$0xf]
    %v2371 = vld [vmem:[#allocation22 + $0x8] sm:$0xf]
    %v2372 = vld [vmem:[#allocation22 + $0xc] sm:$0xf]
    %v2373 = vld [vmem:[#allocation22 + $0x10] sm:$0xf]
    %v2374 = vld [vmem:[#allocation22 + $0x14] sm:$0xf]
    %v2375 = vld [vmem:[#allocation22 + $0x18] sm:$0xf]
    %v2376 = vld [vmem:[#allocation22 + $0x1c] sm:$0xf]
    %v2377 = vpack.c.bf16 %v2362, %v2361
    %v2378 = vpack.c.bf16 %v2364, %v2363
    %v2379 = vpack.c.bf16 %v2366, %v2365
    %v2380 = vpack.c.bf16 %v2368, %v2367
    %v2381 = vld [vmem:[#allocation24] sm:$0x1]
    %v2383 = vlaneseq
    %v2384 = vshrl.u32 %v2383, 7
    %v2385 = vsub.s32 0, %v2384
    %v2386 = vrot.slane %v2381, %v2385
    %v2396 = vunpack.c.l.b16 %v2369
    %v2397 = vunpack.c.l.b16 %v2370
    %v2398 = vunpack.c.l.b16 %v2371
    %v2399 = vunpack.c.l.b16 %v2372
    %v2400 = vunpack.c.l.b16 %v2373
    %v2401 = vunpack.c.l.b16 %v2374
    %v2402 = vunpack.c.l.b16 %v2375
    %v2403 = vunpack.c.l.b16 %v2376
    %v2404 = vpack.c.b16 %v2397, %v2396
    %v2405 = vpack.c.b16 %v2399, %v2398
    %v2406 = vpack.c.b16 %v2401, %v2400
    %v2407 = vpack.c.b16 %v2403, %v2402
    %v2413 = vsel %vm754, %v2377, 0
    %v2416 = vsel %vm754, %v2378, 0
    %v2419 = vsel %vm754, %v2379, 0
    %v2422 = vsel %vm754, %v2380, 0
    %2424 = vmatprep.subr.bf16.mxu0 0
    %2425 = vmatpush1.bf16.msra.mxu0 0
    %2426 = vmatprep.subr.bf16.mxu0 0
    %2427 = vmatpush1.bf16.msra.mxu0 0
    %2428 = vmatprep.subr.bf16.mxu0 0
    %2429 = vmatpush1.bf16.msra.mxu0 0
    %2430 = vmatprep.subr.bf16.mxu0 0
    %2431 = vmatpush1.bf16.msra.mxu0 0
    %2432 = vmatprep.subr.bf16.mxu0 0
    %2433 = vmatpush1.bf16.msra.mxu0 %v2407
    %2434 = vmatprep.subr.bf16.mxu0 0
    %2435 = vmatpush1.bf16.msra.mxu0 %v2406
    %2436 = vmatprep.subr.bf16.mxu0 0
    %2437 = vmatpush1.bf16.msra.mxu0 %v2405
    %2438 = vmatprep.subr.bf16.mxu0 0
    %2439 = vmatpush1.bf16.msra.mxu0 %v2404
    %2440 = vmatprep.subr.bf16.mxu0 0
    %2441 = vmatpush2.bf16.msra.mxu0 0
    %2442 = vmatprep.subr.bf16.mxu0 0
    %2443 = vmatpush2.bf16.msra.mxu0 0
    %2444 = vmatprep.subr.bf16.mxu0 0
    %2445 = vmatpush2.bf16.msra.mxu0 0
    %2446 = vmatprep.subr.bf16.mxu0 0
    %2447 = vmatpush2.bf16.msra.mxu0 0
    %2448 = vmatprep.subr.bf16.mxu0 0
    %2449 = vmatpush2.bf16.msra.mxu0 0
    %2450 = vmatprep.subr.bf16.mxu0 0
    %2451 = vmatpush2.bf16.msra.mxu0 0
    %2452 = vmatprep.subr.bf16.mxu0 0
    %2453 = vmatpush2.bf16.msra.mxu0 0
    %2454 = vmatprep.subr.bf16.mxu0 0
    %2455 = vmatpush2.bf16.msra.mxu0 0
    %2456 = vmatprep.mubr.bf16.mxu0 0
    %2457 = vmatmul.mubr.bf16.gmra.mxu0 %v2413
    %v2458 = vpop.f32.mrf.mxu0
    %v2459 = vadd.f32 %v2386, %v2458
    %v2460 = vpop.f32.mrf.mxu0
    %v2461 = vpop.f32.mrf.mxu0
    %v2462 = vadd.f32 %v2386, %v2461
    %v2463 = vpop.f32.mrf.mxu0
    %2464 = vmatprep.mubr.bf16.mxu0 0
    %2465 = vmatmul.mubr.bf16.gmra.mxu0 %v2416
    %v2466 = vpop.f32.mrf.mxu0
    %v2467 = vadd.f32 %v2386, %v2466
    %v2468 = vpop.f32.mrf.mxu0
    %v2469 = vpop.f32.mrf.mxu0
    %v2470 = vadd.f32 %v2386, %v2469
    %v2471 = vpop.f32.mrf.mxu0
    %2472 = vmatprep.mubr.bf16.mxu0 0
    %2473 = vmatmul.mubr.bf16.gmra.mxu0 %v2419
    %v2474 = vpop.f32.mrf.mxu0
    %v2475 = vadd.f32 %v2386, %v2474
    %v2476 = vpop.f32.mrf.mxu0
    %v2477 = vpop.f32.mrf.mxu0
    %v2478 = vadd.f32 %v2386, %v2477
    %v2479 = vpop.f32.mrf.mxu0
    %2480 = vmatprep.mubr.bf16.mxu0 0
    %2481 = vmatmul.mubr.bf16.gmra.mxu0 %v2422
    %v2482 = vpop.f32.mrf.mxu0
    %v2483 = vadd.f32 %v2386, %v2482
    %v2484 = vpop.f32.mrf.mxu0
    %v2485 = vpop.f32.mrf.mxu0
    %v2486 = vadd.f32 %v2386, %v2485
    %v2487 = vpop.f32.mrf.mxu0
    %2488 = vdwg.mxu0
    %v2489 = vld [vmem:[%s4] sm:$0xff]
    %v2490 = vld [vmem:[%s4 + $0x8] sm:$0xff]
    %v2491 = vld [vmem:[%s4 + $0x10] sm:$0xff]
    %v2492 = vld [vmem:[%s4 + $0x18] sm:$0xff]
    %v2493 = vld [vmem:[%s4 + $0x20] sm:$0xff]
    %v2494 = vld [vmem:[%s4 + $0x28] sm:$0xff]
    %v2495 = vld [vmem:[%s4 + $0x30] sm:$0xff]
    %v2496 = vld [vmem:[%s4 + $0x38] sm:$0xff]
    %v2497 = vld [vmem:[#allocation16] sm:$0xff]
    %v2498 = vld [vmem:[#allocation16 + $0x8] sm:$0xff]
    %v2499 = vld [vmem:[#allocation16 + $0x10] sm:$0xff]
    %v2500 = vld [vmem:[#allocation16 + $0x18] sm:$0xff]
    %v2501 = vld [vmem:[#allocation16 + $0x20] sm:$0xff]
    %v2502 = vld [vmem:[#allocation16 + $0x28] sm:$0xff]
    %v2503 = vld [vmem:[#allocation16 + $0x30] sm:$0xff]
    %v2504 = vld [vmem:[#allocation16 + $0x38] sm:$0xff]
    %v2505 = vld [vmem:[#allocation16 + $0x40] sm:$0xff]
    %v2506 = vld [vmem:[#allocation16 + $0x48] sm:$0xff]
    %v2507 = vld [vmem:[#allocation16 + $0x50] sm:$0xff]
    %v2508 = vld [vmem:[#allocation16 + $0x58] sm:$0xff]
    %v2509 = vld [vmem:[#allocation16 + $0x60] sm:$0xff]
    %v2510 = vld [vmem:[#allocation16 + $0x68] sm:$0xff]
    %v2511 = vld [vmem:[#allocation16 + $0x70] sm:$0xff]
    %v2512 = vld [vmem:[#allocation16 + $0x78] sm:$0xff]
    %v2513 = vld [vmem:[#allocation18] sm:$0x7]
    %v2514 = vpack.c.bf16 %v2462, %v2459
    %v2515 = vpack.c.bf16 %v2470, %v2467
    %v2516 = vpack.c.bf16 %v2478, %v2475
    %v2517 = vpack.c.bf16 %v2486, %v2483
    %v2518 = vlaneseq
    %v2519 = vshrl.u32 %v2518, 7
    %v2520 = vsub.s32 0, %v2519
    %v2521 = vrot.slane %v2513, %v2520
    %v2538 = vunpack.c.l.b16 %v2497
    %v2539 = vunpack.c.l.b16 %v2498
    %v2540 = vunpack.c.l.b16 %v2499
    %v2541 = vunpack.c.l.b16 %v2500
    %v2542 = vunpack.c.l.b16 %v2501
    %v2543 = vunpack.c.l.b16 %v2502
    %v2544 = vunpack.c.l.b16 %v2503
    %v2545 = vunpack.c.l.b16 %v2504
    %v2546 = vunpack.c.l.b16 %v2505
    %v2547 = vunpack.c.l.b16 %v2506
    %v2548 = vunpack.c.l.b16 %v2507
    %v2549 = vunpack.c.l.b16 %v2508
    %v2550 = vunpack.c.l.b16 %v2509
    %v2551 = vunpack.c.l.b16 %v2510
    %v2552 = vunpack.c.l.b16 %v2511
    %v2553 = vunpack.c.l.b16 %v2512
    %v2554 = vpack.c.b16 %v2539, %v2538
    %v2555 = vpack.c.b16 %v2541, %v2540
    %v2556 = vpack.c.b16 %v2543, %v2542
    %v2557 = vpack.c.b16 %v2545, %v2544
    %v2558 = vpack.c.b16 %v2547, %v2546
    %v2559 = vpack.c.b16 %v2549, %v2548
    %v2560 = vpack.c.b16 %v2551, %v2550
    %v2561 = vpack.c.b16 %v2553, %v2552
    %2570 = vmatprep.subr.bf16.mxu0 0
    %2571 = vmatpush1.bf16.msra.mxu0 %v2561
    %2572 = vmatprep.subr.bf16.mxu0 0
    %2573 = vmatpush1.bf16.msra.mxu0 %v2560
    %2574 = vmatprep.subr.bf16.mxu0 0
    %2575 = vmatpush1.bf16.msra.mxu0 %v2559
    %2576 = vmatprep.subr.bf16.mxu0 0
    %2577 = vmatpush1.bf16.msra.mxu0 %v2558
    %2578 = vmatprep.subr.bf16.mxu0 0
    %2579 = vmatpush1.bf16.msra.mxu0 %v2557
    %2580 = vmatprep.subr.bf16.mxu0 0
    %2581 = vmatpush1.bf16.msra.mxu0 %v2556
    %2582 = vmatprep.subr.bf16.mxu0 0
    %2583 = vmatpush1.bf16.msra.mxu0 %v2555
    %2584 = vmatprep.subr.bf16.mxu0 0
    %2585 = vmatpush1.bf16.msra.mxu0 %v2554
    %2586 = vmatprep.subr.bf16.mxu0 0
    %2587 = vmatpush2.bf16.msra.mxu0 0
    %2588 = vmatprep.subr.bf16.mxu0 0
    %2589 = vmatpush2.bf16.msra.mxu0 0
    %2590 = vmatprep.subr.bf16.mxu0 0
    %2591 = vmatpush2.bf16.msra.mxu0 0
    %2592 = vmatprep.subr.bf16.mxu0 0
    %2593 = vmatpush2.bf16.msra.mxu0 0
    %2594 = vmatprep.subr.bf16.mxu0 0
    %2595 = vmatpush2.bf16.msra.mxu0 0
    %2596 = vmatprep.subr.bf16.mxu0 0
    %2597 = vmatpush2.bf16.msra.mxu0 0
    %2598 = vmatprep.subr.bf16.mxu0 0
    %2599 = vmatpush2.bf16.msra.mxu0 0
    %2600 = vmatprep.subr.bf16.mxu0 0
    %2601 = vmatpush2.bf16.msra.mxu0 0
    %2602 = vmatprep.mubr.bf16.mxu0 0
    %2603 = vmatmul.mubr.bf16.gmra.mxu0 %v2514
    %v2604 = vpop.f32.mrf.mxu0
    %v2605 = vadd.f32 %v2521, %v2604
    %v2606 = vpop.f32.mrf.mxu0
    %v2607 = vpop.f32.mrf.mxu0
    %v2608 = vadd.f32 %v2521, %v2607
    %v2609 = vpop.f32.mrf.mxu0
    %2610 = vmatprep.mubr.bf16.mxu0 0
    %2611 = vmatmul.mubr.bf16.gmra.mxu0 %v2515
    %v2612 = vpop.f32.mrf.mxu0
    %v2613 = vadd.f32 %v2521, %v2612
    %v2614 = vpop.f32.mrf.mxu0
    %v2615 = vpop.f32.mrf.mxu0
    %v2616 = vadd.f32 %v2521, %v2615
    %v2617 = vpop.f32.mrf.mxu0
    %2618 = vmatprep.mubr.bf16.mxu0 0
    %2619 = vmatmul.mubr.bf16.gmra.mxu0 %v2516
    %v2620 = vpop.f32.mrf.mxu0
    %v2621 = vadd.f32 %v2521, %v2620
    %v2622 = vpop.f32.mrf.mxu0
    %v2623 = vpop.f32.mrf.mxu0
    %v2624 = vadd.f32 %v2521, %v2623
    %v2625 = vpop.f32.mrf.mxu0
    %2626 = vmatprep.mubr.bf16.mxu0 0
    %2627 = vmatmul.mubr.bf16.gmra.mxu0 %v2517
    %v2628 = vpop.f32.mrf.mxu0
    %v2629 = vadd.f32 %v2521, %v2628
    %v2630 = vpop.f32.mrf.mxu0
    %v2631 = vpop.f32.mrf.mxu0
    %v2632 = vadd.f32 %v2521, %v2631
    %v2633 = vpop.f32.mrf.mxu0
    %2634 = vdwg.mxu0
    %v2635 = vmax.f32 %v2605, 0.0
    %v2636 = vmax.f32 %v2608, 0.0
    %v2637 = vmax.f32 %v2613, 0.0
    %v2638 = vmax.f32 %v2616, 0.0
    %v2639 = vmax.f32 %v2621, 0.0
    %v2640 = vmax.f32 %v2624, 0.0
    %v2641 = vmax.f32 %v2629, 0.0
    %v2642 = vmax.f32 %v2632, 0.0
    %v2643 = vlaneseq
    %v2644 = vshrl.u32 %v2643, 7
    %v2645 = vsub.s32 1, %v2644
    %v2646 = vrot.slane %v2513, %v2645
    %v2647 = vmul.f32 %v2635, %v2646
    %v2648 = vmul.f32 %v2636, %v2646
    %v2649 = vmul.f32 %v2637, %v2646
    %v2650 = vmul.f32 %v2638, %v2646
    %v2651 = vmul.f32 %v2639, %v2646
    %v2652 = vmul.f32 %v2640, %v2646
    %v2653 = vmul.f32 %v2641, %v2646
    %v2654 = vmul.f32 %v2642, %v2646
    %2655 = vadd.xlane.f32.xlu0 %v2647
    %v2656 = vpop.xlane.xlu0 %2655
    %2657 = vadd.xlane.f32.xlu0 %v2648
    %v2658 = vpop.xlane.xlu0 %2657
    %2659 = vadd.xlane.f32.xlu0 %v2649
    %v2660 = vpop.xlane.xlu0 %2659
    %2661 = vadd.xlane.f32.xlu0 %v2650
    %v2662 = vpop.xlane.xlu0 %2661
    %2663 = vadd.xlane.f32.xlu0 %v2651
    %v2664 = vpop.xlane.xlu0 %2663
    %2665 = vadd.xlane.f32.xlu0 %v2652
    %v2666 = vpop.xlane.xlu0 %2665
    %2667 = vadd.xlane.f32.xlu0 %v2653
    %v2668 = vpop.xlane.xlu0 %2667
    %2669 = vadd.xlane.f32.xlu0 %v2654
    %v2670 = vpop.xlane.xlu0 %2669
    %v2671 = vadd.f32 %v2656, %v2489
    %v2672 = vadd.f32 %v2658, %v2490
    %v2673 = vadd.f32 %v2660, %v2491
    %v2674 = vadd.f32 %v2662, %v2492
    %v2675 = vadd.f32 %v2664, %v2493
    %v2676 = vadd.f32 %v2666, %v2494
    %v2677 = vadd.f32 %v2668, %v2495
    %v2678 = vadd.f32 %v2670, %v2496
    %v2679 = vmax.f32 %v2671, %v2672
    %v2680 = vmax.f32 %v2679, %v2673
    %v2681 = vmax.f32 %v2680, %v2674
    %v2682 = vmax.f32 %v2681, %v2675
    %v2683 = vmax.f32 %v2682, %v2676
    %v2684 = vmax.f32 %v2683, %v2677
    %v2685 = vmax.f32 %v2684, %v2678
    %v2686 = vsub.f32 %v2671, %v2685
    %v2687 = vmul.f32 %v2686, 1.442695
    %v2688 = vpow.pop %v2687
    %v2689 = vsub.f32 %v2672, %v2685
    %v2690 = vmul.f32 %v2689, 1.442695
    %v2691 = vpow.pop %v2690
    %v2692 = vsub.f32 %v2673, %v2685
    %v2693 = vmul.f32 %v2692, 1.442695
    %v2694 = vpow.pop %v2693
    %v2695 = vsub.f32 %v2674, %v2685
    %v2696 = vmul.f32 %v2695, 1.442695
    %v2697 = vpow.pop %v2696
    %v2698 = vsub.f32 %v2675, %v2685
    %v2699 = vmul.f32 %v2698, 1.442695
    %v2700 = vpow.pop %v2699
    %v2701 = vsub.f32 %v2676, %v2685
    %v2702 = vmul.f32 %v2701, 1.442695
    %v2703 = vpow.pop %v2702
    %v2704 = vsub.f32 %v2677, %v2685
    %v2705 = vmul.f32 %v2704, 1.442695
    %v2706 = vpow.pop %v2705
    %v2707 = vsub.f32 %v2678, %v2685
    %v2708 = vmul.f32 %v2707, 1.442695
    %v2709 = vpow.pop %v2708
    %v2710 = vadd.f32 %v2688, %v2691
    %v2711 = vadd.f32 %v2710, %v2694
    %v2712 = vadd.f32 %v2711, %v2697
    %v2713 = vadd.f32 %v2712, %v2700
    %v2714 = vadd.f32 %v2713, %v2703
    %v2715 = vadd.f32 %v2714, %v2706
    %v2716 = vadd.f32 %v2715, %v2709
    %v2717 = vrcp.pop %v2716
    %v2718 = vmul.f32 %v2688, %v2717
    %2720 = vset.pattern.permute.xlu0 0
    %2721 = vperm.xlu0 %2720, %v2718
    %v2722 = vpop.permute.xlu0 %2721
    %v2724 = vmul.f32 %v2722, %v2459
    %v2725 = vmul.f32 %v2691, %v2717
    %2727 = vset.pattern.permute.xlu0 0
    %2728 = vperm.xlu0 %2727, %v2725
    %v2729 = vpop.permute.xlu0 %2728
    %v2731 = vmul.f32 %v2729, %v2462
    %v2732 = vadd.f32 %v2724, %v2731
    %v2733 = vmul.f32 %v2694, %v2717
    %2735 = vset.pattern.permute.xlu0 0
    %2736 = vperm.xlu0 %2735, %v2733
    %v2737 = vpop.permute.xlu0 %2736
    %v2739 = vmul.f32 %v2737, %v2467
    %v2740 = vadd.f32 %v2732, %v2739
    %v2741 = vmul.f32 %v2697, %v2717
    %2743 = vset.pattern.permute.xlu0 0
    %2744 = vperm.xlu0 %2743, %v2741
    %v2745 = vpop.permute.xlu0 %2744
    %v2747 = vmul.f32 %v2745, %v2470
    %v2748 = vadd.f32 %v2740, %v2747
    %v2749 = vmul.f32 %v2700, %v2717
    %2751 = vset.pattern.permute.xlu0 0
    %2752 = vperm.xlu0 %2751, %v2749
    %v2753 = vpop.permute.xlu0 %2752
    %v2755 = vmul.f32 %v2753, %v2475
    %v2756 = vadd.f32 %v2748, %v2755
    %v2757 = vmul.f32 %v2703, %v2717
    %2759 = vset.pattern.permute.xlu0 0
    %2760 = vperm.xlu0 %2759, %v2757
    %v2761 = vpop.permute.xlu0 %2760
    %v2763 = vmul.f32 %v2761, %v2478
    %v2764 = vadd.f32 %v2756, %v2763
    %v2765 = vmul.f32 %v2706, %v2717
    %2767 = vset.pattern.permute.xlu0 0
    %2768 = vperm.xlu0 %2767, %v2765
    %v2769 = vpop.permute.xlu0 %2768
    %v2771 = vmul.f32 %v2769, %v2483
    %v2772 = vadd.f32 %v2764, %v2771
    %v2773 = vmul.f32 %v2709, %v2717
    %2775 = vset.pattern.permute.xlu0 0
    %2776 = vperm.xlu0 %2775, %v2773
    %v2777 = vpop.permute.xlu0 %2776
    %v2779 = vmul.f32 %v2777, %v2486
    %v2780 = vadd.f32 %v2772, %v2779
    %v2781 = vpack.c.bf16 %v2780, %v2780
    %v2782 = vlaneseq
    %v2783 = vshrl.u32 %v2782, 7
    %v2784 = vsub.s32 2, %v2783
    %v2785 = vrot.slane %v2513, %v2784
    %v2786 = vunpack.c.h.b16 %v2497
    %v2787 = vunpack.c.h.b16 %v2498
    %v2788 = vunpack.c.h.b16 %v2499
    %v2789 = vunpack.c.h.b16 %v2500
    %v2790 = vunpack.c.h.b16 %v2501
    %v2791 = vunpack.c.h.b16 %v2502
    %v2792 = vunpack.c.h.b16 %v2503
    %v2793 = vunpack.c.h.b16 %v2504
    %v2794 = vunpack.c.h.b16 %v2505
    %v2795 = vunpack.c.h.b16 %v2506
    %v2796 = vunpack.c.h.b16 %v2507
    %v2797 = vunpack.c.h.b16 %v2508
    %v2798 = vunpack.c.h.b16 %v2509
    %v2799 = vunpack.c.h.b16 %v2510
    %v2800 = vunpack.c.h.b16 %v2511
    %v2801 = vunpack.c.h.b16 %v2512
    %v2802 = vpack.c.b16 %v2787, %v2786
    %v2803 = vpack.c.b16 %v2789, %v2788
    %v2804 = vpack.c.b16 %v2791, %v2790
    %v2805 = vpack.c.b16 %v2793, %v2792
    %v2806 = vpack.c.b16 %v2795, %v2794
    %v2807 = vpack.c.b16 %v2797, %v2796
    %v2808 = vpack.c.b16 %v2799, %v2798
    %v2809 = vpack.c.b16 %v2801, %v2800
    %2818 = vmatprep.subr.bf16.mxu0 0
    %2819 = vmatpush1.bf16.msra.mxu0 %v2809
    %2820 = vmatprep.subr.bf16.mxu0 0
    %2821 = vmatpush1.bf16.msra.mxu0 %v2808
    %2822 = vmatprep.subr.bf16.mxu0 0
    %2823 = vmatpush1.bf16.msra.mxu0 %v2807
    %2824 = vmatprep.subr.bf16.mxu0 0
    %2825 = vmatpush1.bf16.msra.mxu0 %v2806
    %2826 = vmatprep.subr.bf16.mxu0 0
    %2827 = vmatpush1.bf16.msra.mxu0 %v2805
    %2828 = vmatprep.subr.bf16.mxu0 0
    %2829 = vmatpush1.bf16.msra.mxu0 %v2804
    %2830 = vmatprep.subr.bf16.mxu0 0
    %2831 = vmatpush1.bf16.msra.mxu0 %v2803
    %2832 = vmatprep.subr.bf16.mxu0 0
    %2833 = vmatpush1.bf16.msra.mxu0 %v2802
    %2834 = vmatprep.subr.bf16.mxu0 0
    %2835 = vmatpush2.bf16.msra.mxu0 0
    %2836 = vmatprep.subr.bf16.mxu0 0
    %2837 = vmatpush2.bf16.msra.mxu0 0
    %2838 = vmatprep.subr.bf16.mxu0 0
    %2839 = vmatpush2.bf16.msra.mxu0 0
    %2840 = vmatprep.subr.bf16.mxu0 0
    %2841 = vmatpush2.bf16.msra.mxu0 0
    %2842 = vmatprep.subr.bf16.mxu0 0
    %2843 = vmatpush2.bf16.msra.mxu0 0
    %2844 = vmatprep.subr.bf16.mxu0 0
    %2845 = vmatpush2.bf16.msra.mxu0 0
    %2846 = vmatprep.subr.bf16.mxu0 0
    %2847 = vmatpush2.bf16.msra.mxu0 0
    %2848 = vmatprep.subr.bf16.mxu0 0
    %2849 = vmatpush2.bf16.msra.mxu0 0
    %2850 = vmatprep.mubr.bf16.mxu0 0
    %2851 = vmatmul.mubr.bf16.gmra.mxu0 %v2781
    %v2852 = vpop.f32.mrf.mxu0
    %v2853 = vadd.f32 %v2785, %v2852
    %v2854 = vpop.f32.mrf.mxu0
    %v2855 = vpop.f32.mrf.mxu0
    %v2856 = vpop.f32.mrf.mxu0
    %2857 = vdwg.mxu0
    %v2858 = vld [vmem:[%s2] sm:$0xff]
    %v2859 = vld [vmem:[%s2 + $0x8] sm:$0xff]
    %v2860 = vld [vmem:[%s2 + $0x10] sm:$0xff]
    %v2861 = vld [vmem:[%s2 + $0x18] sm:$0xff]
    %v2862 = vld [vmem:[#allocation25] sm:$0xf]
    %v2863 = vld [vmem:[#allocation25 + $0x4] sm:$0xf]
    %v2864 = vld [vmem:[#allocation25 + $0x8] sm:$0xf]
    %v2865 = vld [vmem:[#allocation25 + $0xc] sm:$0xf]
    %v2866 = vld [vmem:[#allocation25 + $0x10] sm:$0xf]
    %v2867 = vld [vmem:[#allocation25 + $0x14] sm:$0xf]
    %v2868 = vld [vmem:[#allocation25 + $0x18] sm:$0xf]
    %v2869 = vld [vmem:[#allocation25 + $0x1c] sm:$0xf]
    %v2870 = vpack.c.bf16 %v2859, %v2858
    %v2871 = vpack.c.bf16 %v2861, %v2860
    %v2872 = vld [vmem:[#allocation27] sm:$0x1]
    %v2874 = vlaneseq
    %v2875 = vshrl.u32 %v2874, 7
    %v2876 = vsub.s32 0, %v2875
    %v2877 = vrot.slane %v2872, %v2876
    %v2887 = vunpack.c.l.b16 %v2862
    %v2888 = vunpack.c.l.b16 %v2863
    %v2889 = vunpack.c.l.b16 %v2864
    %v2890 = vunpack.c.l.b16 %v2865
    %v2891 = vunpack.c.l.b16 %v2866
    %v2892 = vunpack.c.l.b16 %v2867
    %v2893 = vunpack.c.l.b16 %v2868
    %v2894 = vunpack.c.l.b16 %v2869
    %v2895 = vpack.c.b16 %v2888, %v2887
    %v2896 = vpack.c.b16 %v2890, %v2889
    %v2897 = vpack.c.b16 %v2892, %v2891
    %v2898 = vpack.c.b16 %v2894, %v2893
    %v2904 = vsel %vm754, %v2870, 0
    %v2907 = vsel %vm754, %v2871, 0
    %2909 = vmatprep.subr.bf16.mxu0 0
    %2910 = vmatpush1.bf16.msra.mxu0 0
    %2911 = vmatprep.subr.bf16.mxu0 0
    %2912 = vmatpush1.bf16.msra.mxu0 0
    %2913 = vmatprep.subr.bf16.mxu0 0
    %2914 = vmatpush1.bf16.msra.mxu0 0
    %2915 = vmatprep.subr.bf16.mxu0 0
    %2916 = vmatpush1.bf16.msra.mxu0 0
    %2917 = vmatprep.subr.bf16.mxu0 0
    %2918 = vmatpush1.bf16.msra.mxu0 %v2898
    %2919 = vmatprep.subr.bf16.mxu0 0
    %2920 = vmatpush1.bf16.msra.mxu0 %v2897
    %2921 = vmatprep.subr.bf16.mxu0 0
    %2922 = vmatpush1.bf16.msra.mxu0 %v2896
    %2923 = vmatprep.subr.bf16.mxu0 0
    %2924 = vmatpush1.bf16.msra.mxu0 %v2895
    %2925 = vmatprep.subr.bf16.mxu0 0
    %2926 = vmatpush2.bf16.msra.mxu0 0
    %2927 = vmatprep.subr.bf16.mxu0 0
    %2928 = vmatpush2.bf16.msra.mxu0 0
    %2929 = vmatprep.subr.bf16.mxu0 0
    %2930 = vmatpush2.bf16.msra.mxu0 0
    %2931 = vmatprep.subr.bf16.mxu0 0
    %2932 = vmatpush2.bf16.msra.mxu0 0
    %2933 = vmatprep.subr.bf16.mxu0 0
    %2934 = vmatpush2.bf16.msra.mxu0 0
    %2935 = vmatprep.subr.bf16.mxu0 0
    %2936 = vmatpush2.bf16.msra.mxu0 0
    %2937 = vmatprep.subr.bf16.mxu0 0
    %2938 = vmatpush2.bf16.msra.mxu0 0
    %2939 = vmatprep.subr.bf16.mxu0 0
    %2940 = vmatpush2.bf16.msra.mxu0 0
    %2941 = vmatprep.mubr.bf16.mxu0 0
    %2942 = vmatmul.mubr.bf16.gmra.mxu0 %v2904
    %v2943 = vpop.f32.mrf.mxu0
    %v2944 = vadd.f32 %v2877, %v2943
    %v2945 = vpop.f32.mrf.mxu0
    %v2946 = vpop.f32.mrf.mxu0
    %v2947 = vadd.f32 %v2877, %v2946
    %v2948 = vpop.f32.mrf.mxu0
    %2949 = vmatprep.mubr.bf16.mxu0 0
    %2950 = vmatmul.mubr.bf16.gmra.mxu0 %v2907
    %v2951 = vpop.f32.mrf.mxu0
    %v2952 = vadd.f32 %v2877, %v2951
    %v2953 = vpop.f32.mrf.mxu0
    %v2954 = vpop.f32.mrf.mxu0
    %v2955 = vadd.f32 %v2877, %v2954
    %v2956 = vpop.f32.mrf.mxu0
    %2957 = vdwg.mxu0
    %v2958 = vld [vmem:[%s5] sm:$0xff]
    %v2959 = vld [vmem:[%s5 + $0x8] sm:$0xff]
    %v2960 = vld [vmem:[%s5 + $0x10] sm:$0xff]
    %v2961 = vld [vmem:[%s5 + $0x18] sm:$0xff]
    %v2962 = vld [vmem:[#allocation19] sm:$0xff]
    %v2963 = vld [vmem:[#allocation19 + $0x8] sm:$0xff]
    %v2964 = vld [vmem:[#allocation19 + $0x10] sm:$0xff]
    %v2965 = vld [vmem:[#allocation19 + $0x18] sm:$0xff]
    %v2966 = vld [vmem:[#allocation19 + $0x20] sm:$0xff]
    %v2967 = vld [vmem:[#allocation19 + $0x28] sm:$0xff]
    %v2968 = vld [vmem:[#allocation19 + $0x30] sm:$0xff]
    %v2969 = vld [vmem:[#allocation19 + $0x38] sm:$0xff]
    %v2970 = vld [vmem:[#allocation19 + $0x40] sm:$0xff]
    %v2971 = vld [vmem:[#allocation19 + $0x48] sm:$0xff]
    %v2972 = vld [vmem:[#allocation19 + $0x50] sm:$0xff]
    %v2973 = vld [vmem:[#allocation19 + $0x58] sm:$0xff]
    %v2974 = vld [vmem:[#allocation19 + $0x60] sm:$0xff]
    %v2975 = vld [vmem:[#allocation19 + $0x68] sm:$0xff]
    %v2976 = vld [vmem:[#allocation19 + $0x70] sm:$0xff]
    %v2977 = vld [vmem:[#allocation19 + $0x78] sm:$0xff]
    %v2978 = vld [vmem:[#allocation21] sm:$0x7]
    %v2979 = vpack.c.bf16 %v2947, %v2944
    %v2980 = vpack.c.bf16 %v2955, %v2952
    %v2981 = vlaneseq
    %v2982 = vshrl.u32 %v2981, 7
    %v2983 = vsub.s32 0, %v2982
    %v2984 = vrot.slane %v2978, %v2983
    %v3001 = vunpack.c.l.b16 %v2962
    %v3002 = vunpack.c.l.b16 %v2963
    %v3003 = vunpack.c.l.b16 %v2964
    %v3004 = vunpack.c.l.b16 %v2965
    %v3005 = vunpack.c.l.b16 %v2966
    %v3006 = vunpack.c.l.b16 %v2967
    %v3007 = vunpack.c.l.b16 %v2968
    %v3008 = vunpack.c.l.b16 %v2969
    %v3009 = vunpack.c.l.b16 %v2970
    %v3010 = vunpack.c.l.b16 %v2971
    %v3011 = vunpack.c.l.b16 %v2972
    %v3012 = vunpack.c.l.b16 %v2973
    %v3013 = vunpack.c.l.b16 %v2974
    %v3014 = vunpack.c.l.b16 %v2975
    %v3015 = vunpack.c.l.b16 %v2976
    %v3016 = vunpack.c.l.b16 %v2977
    %v3017 = vpack.c.b16 %v3002, %v3001
    %v3018 = vpack.c.b16 %v3004, %v3003
    %v3019 = vpack.c.b16 %v3006, %v3005
    %v3020 = vpack.c.b16 %v3008, %v3007
    %v3021 = vpack.c.b16 %v3010, %v3009
    %v3022 = vpack.c.b16 %v3012, %v3011
    %v3023 = vpack.c.b16 %v3014, %v3013
    %v3024 = vpack.c.b16 %v3016, %v3015
    %3033 = vmatprep.subr.bf16.mxu0 0
    %3034 = vmatpush1.bf16.msra.mxu0 %v3024
    %3035 = vmatprep.subr.bf16.mxu0 0
    %3036 = vmatpush1.bf16.msra.mxu0 %v3023
    %3037 = vmatprep.subr.bf16.mxu0 0
    %3038 = vmatpush1.bf16.msra.mxu0 %v3022
    %3039 = vmatprep.subr.bf16.mxu0 0
    %3040 = vmatpush1.bf16.msra.mxu0 %v3021
    %3041 = vmatprep.subr.bf16.mxu0 0
    %3042 = vmatpush1.bf16.msra.mxu0 %v3020
    %3043 = vmatprep.subr.bf16.mxu0 0
    %3044 = vmatpush1.bf16.msra.mxu0 %v3019
    %3045 = vmatprep.subr.bf16.mxu0 0
    %3046 = vmatpush1.bf16.msra.mxu0 %v3018
    %3047 = vmatprep.subr.bf16.mxu0 0
    %3048 = vmatpush1.bf16.msra.mxu0 %v3017
    %3049 = vmatprep.subr.bf16.mxu0 0
    %3050 = vmatpush2.bf16.msra.mxu0 0
    %3051 = vmatprep.subr.bf16.mxu0 0
    %3052 = vmatpush2.bf16.msra.mxu0 0
    %3053 = vmatprep.subr.bf16.mxu0 0
    %3054 = vmatpush2.bf16.msra.mxu0 0
    %3055 = vmatprep.subr.bf16.mxu0 0
    %3056 = vmatpush2.bf16.msra.mxu0 0
    %3057 = vmatprep.subr.bf16.mxu0 0
    %3058 = vmatpush2.bf16.msra.mxu0 0
    %3059 = vmatprep.subr.bf16.mxu0 0
    %3060 = vmatpush2.bf16.msra.mxu0 0
    %3061 = vmatprep.subr.bf16.mxu0 0
    %3062 = vmatpush2.bf16.msra.mxu0 0
    %3063 = vmatprep.subr.bf16.mxu0 0
    %3064 = vmatpush2.bf16.msra.mxu0 0
    %3065 = vmatprep.mubr.bf16.mxu0 0
    %3066 = vmatmul.mubr.bf16.gmra.mxu0 %v2979
    %v3067 = vpop.f32.mrf.mxu0
    %v3068 = vadd.f32 %v2984, %v3067
    %v3069 = vpop.f32.mrf.mxu0
    %v3070 = vpop.f32.mrf.mxu0
    %v3071 = vadd.f32 %v2984, %v3070
    %v3072 = vpop.f32.mrf.mxu0
    %3073 = vmatprep.mubr.bf16.mxu0 0
    %3074 = vmatmul.mubr.bf16.gmra.mxu0 %v2980
    %v3075 = vpop.f32.mrf.mxu0
    %v3076 = vadd.f32 %v2984, %v3075
    %v3077 = vpop.f32.mrf.mxu0
    %v3078 = vpop.f32.mrf.mxu0
    %v3079 = vadd.f32 %v2984, %v3078
    %v3080 = vpop.f32.mrf.mxu0
    %3081 = vdwg.mxu0
    %v3082 = vmax.f32 %v3068, 0.0
    %v3083 = vmax.f32 %v3071, 0.0
    %v3084 = vmax.f32 %v3076, 0.0
    %v3085 = vmax.f32 %v3079, 0.0
    %v3086 = vlaneseq
    %v3087 = vshrl.u32 %v3086, 7
    %v3088 = vsub.s32 1, %v3087
    %v3089 = vrot.slane %v2978, %v3088
    %v3090 = vmul.f32 %v3082, %v3089
    %v3091 = vmul.f32 %v3083, %v3089
    %v3092 = vmul.f32 %v3084, %v3089
    %v3093 = vmul.f32 %v3085, %v3089
    %3094 = vadd.xlane.f32.xlu0 %v3090
    %v3095 = vpop.xlane.xlu0 %3094
    %3096 = vadd.xlane.f32.xlu0 %v3091
    %v3097 = vpop.xlane.xlu0 %3096
    %3098 = vadd.xlane.f32.xlu0 %v3092
    %v3099 = vpop.xlane.xlu0 %3098
    %3100 = vadd.xlane.f32.xlu0 %v3093
    %v3101 = vpop.xlane.xlu0 %3100
    %v3102 = vadd.f32 %v3095, %v2958
    %v3103 = vadd.f32 %v3097, %v2959
    %v3104 = vadd.f32 %v3099, %v2960
    %v3105 = vadd.f32 %v3101, %v2961
    %v3106 = vmax.f32 %v3102, %v3103
    %v3107 = vmax.f32 %v3106, %v3104
    %v3108 = vmax.f32 %v3107, %v3105
    %v3109 = vsub.f32 %v3102, %v3108
    %v3110 = vmul.f32 %v3109, 1.442695
    %v3111 = vpow.pop %v3110
    %v3112 = vsub.f32 %v3103, %v3108
    %v3113 = vmul.f32 %v3112, 1.442695
    %v3114 = vpow.pop %v3113
    %v3115 = vsub.f32 %v3104, %v3108
    %v3116 = vmul.f32 %v3115, 1.442695
    %v3117 = vpow.pop %v3116
    %v3118 = vsub.f32 %v3105, %v3108
    %v3119 = vmul.f32 %v3118, 1.442695
    %v3120 = vpow.pop %v3119
    %v3121 = vadd.f32 %v3111, %v3114
    %v3122 = vadd.f32 %v3121, %v3117
    %v3123 = vadd.f32 %v3122, %v3120
    %v3124 = vrcp.pop %v3123
    %v3125 = vmul.f32 %v3111, %v3124
    %3127 = vset.pattern.permute.xlu0 0
    %3128 = vperm.xlu0 %3127, %v3125
    %v3129 = vpop.permute.xlu0 %3128
    %v3131 = vmul.f32 %v3129, %v2944
    %v3132 = vmul.f32 %v3114, %v3124
    %3134 = vset.pattern.permute.xlu0 0
    %3135 = vperm.xlu0 %3134, %v3132
    %v3136 = vpop.permute.xlu0 %3135
    %v3138 = vmul.f32 %v3136, %v2947
    %v3139 = vadd.f32 %v3131, %v3138
    %v3140 = vmul.f32 %v3117, %v3124
    %3142 = vset.pattern.permute.xlu0 0
    %3143 = vperm.xlu0 %3142, %v3140
    %v3144 = vpop.permute.xlu0 %3143
    %v3146 = vmul.f32 %v3144, %v2952
    %v3147 = vadd.f32 %v3139, %v3146
    %v3148 = vmul.f32 %v3120, %v3124
    %3150 = vset.pattern.permute.xlu0 0
    %3151 = vperm.xlu0 %3150, %v3148
    %v3152 = vpop.permute.xlu0 %3151
    %v3154 = vmul.f32 %v3152, %v2955
    %v3155 = vadd.f32 %v3147, %v3154
    %v3156 = vpack.c.bf16 %v3155, %v3155
    %v3157 = vlaneseq
    %v3158 = vshrl.u32 %v3157, 7
    %v3159 = vsub.s32 2, %v3158
    %v3160 = vrot.slane %v2978, %v3159
    %v3161 = vunpack.c.h.b16 %v2962
    %v3162 = vunpack.c.h.b16 %v2963
    %v3163 = vunpack.c.h.b16 %v2964
    %v3164 = vunpack.c.h.b16 %v2965
    %v3165 = vunpack.c.h.b16 %v2966
    %v3166 = vunpack.c.h.b16 %v2967
    %v3167 = vunpack.c.h.b16 %v2968
    %v3168 = vunpack.c.h.b16 %v2969
    %v3169 = vunpack.c.h.b16 %v2970
    %v3170 = vunpack.c.h.b16 %v2971
    %v3171 = vunpack.c.h.b16 %v2972
    %v3172 = vunpack.c.h.b16 %v2973
    %v3173 = vunpack.c.h.b16 %v2974
    %v3174 = vunpack.c.h.b16 %v2975
    %v3175 = vunpack.c.h.b16 %v2976
    %v3176 = vunpack.c.h.b16 %v2977
    %v3177 = vpack.c.b16 %v3162, %v3161
    %v3178 = vpack.c.b16 %v3164, %v3163
    %v3179 = vpack.c.b16 %v3166, %v3165
    %v3180 = vpack.c.b16 %v3168, %v3167
    %v3181 = vpack.c.b16 %v3170, %v3169
    %v3182 = vpack.c.b16 %v3172, %v3171
    %v3183 = vpack.c.b16 %v3174, %v3173
    %v3184 = vpack.c.b16 %v3176, %v3175
    %3193 = vmatprep.subr.bf16.mxu0 0
    %3194 = vmatpush1.bf16.msra.mxu0 %v3184
    %3195 = vmatprep.subr.bf16.mxu0 0
    %3196 = vmatpush1.bf16.msra.mxu0 %v3183
    %3197 = vmatprep.subr.bf16.mxu0 0
    %3198 = vmatpush1.bf16.msra.mxu0 %v3182
    %3199 = vmatprep.subr.bf16.mxu0 0
    %3200 = vmatpush1.bf16.msra.mxu0 %v3181
    %3201 = vmatprep.subr.bf16.mxu0 0
    %3202 = vmatpush1.bf16.msra.mxu0 %v3180
    %3203 = vmatprep.subr.bf16.mxu0 0
    %3204 = vmatpush1.bf16.msra.mxu0 %v3179
    %3205 = vmatprep.subr.bf16.mxu0 0
    %3206 = vmatpush1.bf16.msra.mxu0 %v3178
    %3207 = vmatprep.subr.bf16.mxu0 0
    %3208 = vmatpush1.bf16.msra.mxu0 %v3177
    %3209 = vmatprep.subr.bf16.mxu0 0
    %3210 = vmatpush2.bf16.msra.mxu0 0
    %3211 = vmatprep.subr.bf16.mxu0 0
    %3212 = vmatpush2.bf16.msra.mxu0 0
    %3213 = vmatprep.subr.bf16.mxu0 0
    %3214 = vmatpush2.bf16.msra.mxu0 0
    %3215 = vmatprep.subr.bf16.mxu0 0
    %3216 = vmatpush2.bf16.msra.mxu0 0
    %3217 = vmatprep.subr.bf16.mxu0 0
    %3218 = vmatpush2.bf16.msra.mxu0 0
    %3219 = vmatprep.subr.bf16.mxu0 0
    %3220 = vmatpush2.bf16.msra.mxu0 0
    %3221 = vmatprep.subr.bf16.mxu0 0
    %3222 = vmatpush2.bf16.msra.mxu0 0
    %3223 = vmatprep.subr.bf16.mxu0 0
    %3224 = vmatpush2.bf16.msra.mxu0 0
    %3225 = vmatprep.mubr.bf16.mxu0 0
    %3226 = vmatmul.mubr.bf16.gmra.mxu0 %v3156
    %v3227 = vpop.f32.mrf.mxu0
    %v3228 = vadd.f32 %v3160, %v3227
    %v3229 = vpop.f32.mrf.mxu0
    %v3230 = vpop.f32.mrf.mxu0
    %v3231 = vpop.f32.mrf.mxu0
    %3232 = vdwg.mxu0
    %s3233 = smul.u32 4, 16
    %s3234 = smul.u32 %s3233, 8
    %s3235 = sshll.u32 %s3234, 4
    %3236 = dma.done [#allocation7], %s3235
    %s3237 = smul.u32 4, 32
    %s3238 = smul.u32 %s3237, 4
    %s3239 = sshll.u32 %s3238, 4
    %3240 = dma.done %s290, %s3239
    %s3241 = smul.u32 %s3237, 8
    %s3242 = sshll.u32 %s3241, 4
    %3243 = dma.done %s302, %s3242
    %s3244 = sshll.u32 %s3238, 4
    %3245 = dma.done %s600, %s3244
    %s3246 = smul.u32 %s3237, 1
    %s3247 = sshll.u32 %s3246, 4
    %3248 = dma.done %s612, %s3247
    %v3249 = vld [vmem:[#allocation28] sm:$0x1]
    %v3250 = vld [vmem:[#allocation28 + $0x1] sm:$0x1]
    %v3251 = vld [vmem:[#allocation28 + $0x2] sm:$0x1]
    %v3252 = vld [vmem:[#allocation28 + $0x3] sm:$0x1]
    %v3253 = vld [vmem:[#allocation28 + $0x4] sm:$0x1]
    %v3254 = vadd.f32 %v2356, %v2853
    %v3255 = vadd.f32 %v3254, %v3228
    %3256 = vadd.xlane.f32.xlu0 %v3255
    %v3257 = vpop.xlane.xlu0 %3256
    %v3258 = vrcp.pop 128.0
    %v3259 = vmul.f32 %v3257, %v3258
    %v3260 = vsub.f32 %v3255, %v3259
    %v3261 = vmul.f32 %v3260, %v3260
    %3262 = vadd.xlane.f32.xlu0 %v3261
    %v3263 = vpop.xlane.xlu0 %3262
    %v3264 = vmul.f32 %v3263, %v3258
    %v3265 = vadd.f32 %v3264, 1e-06
    %v3266 = vrsqrt.pop %v3265
    %v3267 = vmul.f32 %v3260, %v3266
    %v3268 = vlaneseq
    %v3269 = vshrl.u32 %v3268, 7
    %v3270 = vsub.s32 0, %v3269
    %v3271 = vrot.slane %v3249, %v3270
    %v3272 = vmul.f32 %v3267, %v3271
    %v3273 = vlaneseq
    %v3274 = vshrl.u32 %v3273, 7
    %v3275 = vsub.s32 0, %v3274
    %v3276 = vrot.slane %v3250, %v3275
    %v3277 = vadd.f32 %v3272, %v3276
    %v3278 = vld [vmem:[#allocation2] sm:$0xff]
    %v3279 = vld [vmem:[#allocation2 + $0x8] sm:$0xff]
    %v3280 = vld [vmem:[#allocation2 + $0x10] sm:$0xff]
    %v3281 = vld [vmem:[#allocation2 + $0x18] sm:$0xff]
    %v3282 = vld [vmem:[#allocation2 + $0x20] sm:$0xff]
    %v3283 = vld [vmem:[#allocation2 + $0x28] sm:$0xff]
    %v3284 = vld [vmem:[#allocation2 + $0x30] sm:$0xff]
    %v3285 = vld [vmem:[#allocation2 + $0x38] sm:$0xff]
    %v3286 = vld [vmem:[#allocation2 + $0x40] sm:$0xff]
    %v3287 = vld [vmem:[#allocation2 + $0x48] sm:$0xff]
    %v3288 = vld [vmem:[#allocation2 + $0x50] sm:$0xff]
    %v3289 = vld [vmem:[#allocation2 + $0x58] sm:$0xff]
    %v3290 = vld [vmem:[#allocation2 + $0x60] sm:$0xff]
    %v3291 = vld [vmem:[#allocation2 + $0x68] sm:$0xff]
    %v3292 = vld [vmem:[#allocation2 + $0x70] sm:$0xff]
    %v3293 = vld [vmem:[#allocation2 + $0x78] sm:$0xff]
    %v3294 = vld [vmem:[#allocation2 + $0x80] sm:$0xff]
    %v3295 = vld [vmem:[#allocation2 + $0x88] sm:$0xff]
    %v3296 = vld [vmem:[#allocation2 + $0x90] sm:$0xff]
    %v3297 = vld [vmem:[#allocation2 + $0x98] sm:$0xff]
    %v3298 = vld [vmem:[#allocation2 + $0xa0] sm:$0xff]
    %v3299 = vld [vmem:[#allocation2 + $0xa8] sm:$0xff]
    %v3300 = vld [vmem:[#allocation2 + $0xb0] sm:$0xff]
    %v3301 = vld [vmem:[#allocation2 + $0xb8] sm:$0xff]
    %v3302 = vld [vmem:[#allocation2 + $0xc0] sm:$0xff]
    %v3303 = vld [vmem:[#allocation2 + $0xc8] sm:$0xff]
    %v3304 = vld [vmem:[#allocation2 + $0xd0] sm:$0xff]
    %v3305 = vld [vmem:[#allocation2 + $0xd8] sm:$0xff]
    %v3306 = vld [vmem:[#allocation2 + $0xe0] sm:$0xff]
    %v3307 = vld [vmem:[#allocation2 + $0xe8] sm:$0xff]
    %v3308 = vld [vmem:[#allocation2 + $0xf0] sm:$0xff]
    %v3309 = vld [vmem:[#allocation2 + $0xf8] sm:$0xff]
    %v3310 = vld [vmem:[#allocation2 + $0x100] sm:$0xff]
    %v3311 = vld [vmem:[#allocation2 + $0x108] sm:$0xff]
    %v3312 = vld [vmem:[#allocation2 + $0x110] sm:$0xff]
    %v3313 = vld [vmem:[#allocation2 + $0x118] sm:$0xff]
    %v3314 = vld [vmem:[#allocation2 + $0x120] sm:$0xff]
    %v3315 = vld [vmem:[#allocation2 + $0x128] sm:$0xff]
    %v3316 = vld [vmem:[#allocation2 + $0x130] sm:$0xff]
    %v3317 = vld [vmem:[#allocation2 + $0x138] sm:$0xff]
    %v3318 = vld [vmem:[#allocation2 + $0x140] sm:$0xff]
    %v3319 = vld [vmem:[#allocation2 + $0x148] sm:$0xff]
    %v3320 = vld [vmem:[#allocation2 + $0x150] sm:$0xff]
    %v3321 = vld [vmem:[#allocation2 + $0x158] sm:$0xff]
    %v3322 = vld [vmem:[#allocation2 + $0x160] sm:$0xff]
    %v3323 = vld [vmem:[#allocation2 + $0x168] sm:$0xff]
    %v3324 = vld [vmem:[#allocation2 + $0x170] sm:$0xff]
    %v3325 = vld [vmem:[#allocation2 + $0x178] sm:$0xff]
    %v3326 = vld [vmem:[#allocation2 + $0x180] sm:$0xff]
    %v3327 = vld [vmem:[#allocation2 + $0x188] sm:$0xff]
    %v3328 = vld [vmem:[#allocation2 + $0x190] sm:$0xff]
    %v3329 = vld [vmem:[#allocation2 + $0x198] sm:$0xff]
    %v3330 = vld [vmem:[#allocation2 + $0x1a0] sm:$0xff]
    %v3331 = vld [vmem:[#allocation2 + $0x1a8] sm:$0xff]
    %v3332 = vld [vmem:[#allocation2 + $0x1b0] sm:$0xff]
    %v3333 = vld [vmem:[#allocation2 + $0x1b8] sm:$0xff]
    %v3334 = vld [vmem:[#allocation2 + $0x1c0] sm:$0xff]
    %v3335 = vld [vmem:[#allocation2 + $0x1c8] sm:$0xff]
    %v3336 = vld [vmem:[#allocation2 + $0x1d0] sm:$0xff]
    %v3337 = vld [vmem:[#allocation2 + $0x1d8] sm:$0xff]
    %v3338 = vld [vmem:[#allocation2 + $0x1e0] sm:$0xff]
    %v3339 = vld [vmem:[#allocation2 + $0x1e8] sm:$0xff]
    %v3340 = vld [vmem:[#allocation2 + $0x1f0] sm:$0xff]
    %v3341 = vld [vmem:[#allocation2 + $0x1f8] sm:$0xff]
    %v3342 = vpack.c.bf16 %v2853, %v2356
    %v3343 = vpack.c.bf16 %v3228, %v3228
    %v3344 = vld [vmem:[#allocation30] ss:$2 sm:$0xff]
    %v3346 = vlaneseq
    %v3347 = vshrl.u32 %v3346, 7
    %v3348 = vsub.s32 0, %v3347
    %v3349 = vrot.slane %v3344, %v3348
    %v3350 = vlaneseq
    %v3351 = vshrl.u32 %v3350, 7
    %v3352 = vsub.s32 1, %v3351
    %v3353 = vrot.slane %v3344, %v3352
    %v3354 = vlaneseq
    %v3355 = vshrl.u32 %v3354, 7
    %v3356 = vsub.s32 2, %v3355
    %v3357 = vrot.slane %v3344, %v3356
    %v3358 = vlaneseq
    %v3359 = vshrl.u32 %v3358, 7
    %v3360 = vsub.s32 3, %v3359
    %v3361 = vrot.slane %v3344, %v3360
    %v3362 = vlaneseq
    %v3363 = vshrl.u32 %v3362, 7
    %v3364 = vsub.s32 4, %v3363
    %v3365 = vrot.slane %v3344, %v3364
    %v3366 = vlaneseq
    %v3367 = vshrl.u32 %v3366, 7
    %v3368 = vsub.s32 5, %v3367
    %v3369 = vrot.slane %v3344, %v3368
    %v3370 = vlaneseq
    %v3371 = vshrl.u32 %v3370, 7
    %v3372 = vsub.s32 6, %v3371
    %v3373 = vrot.slane %v3344, %v3372
    %v3374 = vlaneseq
    %v3375 = vshrl.u32 %v3374, 7
    %v3376 = vsub.s32 7, %v3375
    %v3377 = vrot.slane %v3344, %v3376
    %v3450 = vunpack.c.l.b16 %v3278
    %v3451 = vunpack.c.h.b16 %v3278
    %v3452 = vunpack.c.l.b16 %v3279
    %v3453 = vunpack.c.h.b16 %v3279
    %v3454 = vunpack.c.l.b16 %v3280
    %v3455 = vunpack.c.h.b16 %v3280
    %v3456 = vunpack.c.l.b16 %v3281
    %v3457 = vunpack.c.h.b16 %v3281
    %v3458 = vunpack.c.l.b16 %v3282
    %v3459 = vunpack.c.h.b16 %v3282
    %v3460 = vunpack.c.l.b16 %v3283
    %v3461 = vunpack.c.h.b16 %v3283
    %v3462 = vunpack.c.l.b16 %v3284
    %v3463 = vunpack.c.h.b16 %v3284
    %v3464 = vunpack.c.l.b16 %v3285
    %v3465 = vunpack.c.h.b16 %v3285
    %v3466 = vunpack.c.l.b16 %v3286
    %v3467 = vunpack.c.h.b16 %v3286
    %v3468 = vunpack.c.l.b16 %v3287
    %v3469 = vunpack.c.h.b16 %v3287
    %v3470 = vunpack.c.l.b16 %v3288
    %v3471 = vunpack.c.h.b16 %v3288
    %v3472 = vunpack.c.l.b16 %v3289
    %v3473 = vunpack.c.h.b16 %v3289
    %v3474 = vunpack.c.l.b16 %v3290
    %v3475 = vunpack.c.h.b16 %v3290
    %v3476 = vunpack.c.l.b16 %v3291
    %v3477 = vunpack.c.h.b16 %v3291
    %v3478 = vunpack.c.l.b16 %v3292
    %v3479 = vunpack.c.h.b16 %v3292
    %v3480 = vunpack.c.l.b16 %v3293
    %v3481 = vunpack.c.h.b16 %v3293
    %v3482 = vunpack.c.l.b16 %v3294
    %v3483 = vunpack.c.h.b16 %v3294
    %v3484 = vunpack.c.l.b16 %v3295
    %v3485 = vunpack.c.h.b16 %v3295
    %v3486 = vunpack.c.l.b16 %v3296
    %v3487 = vunpack.c.h.b16 %v3296
    %v3488 = vunpack.c.l.b16 %v3297
    %v3489 = vunpack.c.h.b16 %v3297
    %v3490 = vunpack.c.l.b16 %v3298
    %v3491 = vunpack.c.h.b16 %v3298
    %v3492 = vunpack.c.l.b16 %v3299
    %v3493 = vunpack.c.h.b16 %v3299
    %v3494 = vunpack.c.l.b16 %v3300
    %v3495 = vunpack.c.h.b16 %v3300
    %v3496 = vunpack.c.l.b16 %v3301
    %v3497 = vunpack.c.h.b16 %v3301
    %v3498 = vunpack.c.l.b16 %v3302
    %v3499 = vunpack.c.h.b16 %v3302
    %v3500 = vunpack.c.l.b16 %v3303
    %v3501 = vunpack.c.h.b16 %v3303
    %v3502 = vunpack.c.l.b16 %v3304
    %v3503 = vunpack.c.h.b16 %v3304
    %v3504 = vunpack.c.l.b16 %v3305
    %v3505 = vunpack.c.h.b16 %v3305
    %v3506 = vunpack.c.l.b16 %v3306
    %v3507 = vunpack.c.h.b16 %v3306
    %v3508 = vunpack.c.l.b16 %v3307
    %v3509 = vunpack.c.h.b16 %v3307
    %v3510 = vunpack.c.l.b16 %v3308
    %v3511 = vunpack.c.h.b16 %v3308
    %v3512 = vunpack.c.l.b16 %v3309
    %v3513 = vunpack.c.h.b16 %v3309
    %v3514 = vunpack.c.l.b16 %v3310
    %v3515 = vunpack.c.h.b16 %v3310
    %v3516 = vunpack.c.l.b16 %v3311
    %v3517 = vunpack.c.h.b16 %v3311
    %v3518 = vunpack.c.l.b16 %v3312
    %v3519 = vunpack.c.h.b16 %v3312
    %v3520 = vunpack.c.l.b16 %v3313
    %v3521 = vunpack.c.h.b16 %v3313
    %v3522 = vunpack.c.l.b16 %v3314
    %v3523 = vunpack.c.h.b16 %v3314
    %v3524 = vunpack.c.l.b16 %v3315
    %v3525 = vunpack.c.h.b16 %v3315
    %v3526 = vunpack.c.l.b16 %v3316
    %v3527 = vunpack.c.h.b16 %v3316
    %v3528 = vunpack.c.l.b16 %v3317
    %v3529 = vunpack.c.h.b16 %v3317
    %v3530 = vunpack.c.l.b16 %v3318
    %v3531 = vunpack.c.h.b16 %v3318
    %v3532 = vunpack.c.l.b16 %v3319
    %v3533 = vunpack.c.h.b16 %v3319
    %v3534 = vunpack.c.l.b16 %v3320
    %v3535 = vunpack.c.h.b16 %v3320
    %v3536 = vunpack.c.l.b16 %v3321
    %v3537 = vunpack.c.h.b16 %v3321
    %v3538 = vunpack.c.l.b16 %v3322
    %v3539 = vunpack.c.h.b16 %v3322
    %v3540 = vunpack.c.l.b16 %v3323
    %v3541 = vunpack.c.h.b16 %v3323
    %v3542 = vunpack.c.l.b16 %v3324
    %v3543 = vunpack.c.h.b16 %v3324
    %v3544 = vunpack.c.l.b16 %v3325
    %v3545 = vunpack.c.h.b16 %v3325
    %v3546 = vunpack.c.l.b16 %v3326
    %v3547 = vunpack.c.h.b16 %v3326
    %v3548 = vunpack.c.l.b16 %v3327
    %v3549 = vunpack.c.h.b16 %v3327
    %v3550 = vunpack.c.l.b16 %v3328
    %v3551 = vunpack.c.h.b16 %v3328
    %v3552 = vunpack.c.l.b16 %v3329
    %v3553 = vunpack.c.h.b16 %v3329
    %v3554 = vunpack.c.l.b16 %v3330
    %v3555 = vunpack.c.h.b16 %v3330
    %v3556 = vunpack.c.l.b16 %v3331
    %v3557 = vunpack.c.h.b16 %v3331
    %v3558 = vunpack.c.l.b16 %v3332
    %v3559 = vunpack.c.h.b16 %v3332
    %v3560 = vunpack.c.l.b16 %v3333
    %v3561 = vunpack.c.h.b16 %v3333
    %v3562 = vunpack.c.l.b16 %v3334
    %v3563 = vunpack.c.h.b16 %v3334
    %v3564 = vunpack.c.l.b16 %v3335
    %v3565 = vunpack.c.h.b16 %v3335
    %v3566 = vunpack.c.l.b16 %v3336
    %v3567 = vunpack.c.h.b16 %v3336
    %v3568 = vunpack.c.l.b16 %v3337
    %v3569 = vunpack.c.h.b16 %v3337
    %v3570 = vunpack.c.l.b16 %v3338
    %v3571 = vunpack.c.h.b16 %v3338
    %v3572 = vunpack.c.l.b16 %v3339
    %v3573 = vunpack.c.h.b16 %v3339
    %v3574 = vunpack.c.l.b16 %v3340
    %v3575 = vunpack.c.h.b16 %v3340
    %v3576 = vunpack.c.l.b16 %v3341
    %v3577 = vunpack.c.h.b16 %v3341
    %v3578 = vpack.c.b16 %v3458, %v3450
    %v3579 = vpack.c.b16 %v3459, %v3451
    %v3580 = vpack.c.b16 %v3460, %v3452
    %v3581 = vpack.c.b16 %v3461, %v3453
    %v3582 = vpack.c.b16 %v3462, %v3454
    %v3583 = vpack.c.b16 %v3463, %v3455
    %v3584 = vpack.c.b16 %v3464, %v3456
    %v3585 = vpack.c.b16 %v3465, %v3457
    %v3586 = vpack.c.b16 %v3474, %v3466
    %v3587 = vpack.c.b16 %v3475, %v3467
    %v3588 = vpack.c.b16 %v3476, %v3468
    %v3589 = vpack.c.b16 %v3477, %v3469
    %v3590 = vpack.c.b16 %v3478, %v3470
    %v3591 = vpack.c.b16 %v3479, %v3471
    %v3592 = vpack.c.b16 %v3480, %v3472
    %v3593 = vpack.c.b16 %v3481, %v3473
    %v3594 = vpack.c.b16 %v3490, %v3482
    %v3595 = vpack.c.b16 %v3491, %v3483
    %v3596 = vpack.c.b16 %v3492, %v3484
    %v3597 = vpack.c.b16 %v3493, %v3485
    %v3598 = vpack.c.b16 %v3494, %v3486
    %v3599 = vpack.c.b16 %v3495, %v3487
    %v3600 = vpack.c.b16 %v3496, %v3488
    %v3601 = vpack.c.b16 %v3497, %v3489
    %v3602 = vpack.c.b16 %v3506, %v3498
    %v3603 = vpack.c.b16 %v3507, %v3499
    %v3604 = vpack.c.b16 %v3508, %v3500
    %v3605 = vpack.c.b16 %v3509, %v3501
    %v3606 = vpack.c.b16 %v3510, %v3502
    %v3607 = vpack.c.b16 %v3511, %v3503
    %v3608 = vpack.c.b16 %v3512, %v3504
    %v3609 = vpack.c.b16 %v3513, %v3505
    %v3610 = vpack.c.b16 %v3522, %v3514
    %v3611 = vpack.c.b16 %v3523, %v3515
    %v3612 = vpack.c.b16 %v3524, %v3516
    %v3613 = vpack.c.b16 %v3525, %v3517
    %v3614 = vpack.c.b16 %v3526, %v3518
    %v3615 = vpack.c.b16 %v3527, %v3519
    %v3616 = vpack.c.b16 %v3528, %v3520
    %v3617 = vpack.c.b16 %v3529, %v3521
    %v3618 = vpack.c.b16 %v3538, %v3530
    %v3619 = vpack.c.b16 %v3539, %v3531
    %v3620 = vpack.c.b16 %v3540, %v3532
    %v3621 = vpack.c.b16 %v3541, %v3533
    %v3622 = vpack.c.b16 %v3542, %v3534
    %v3623 = vpack.c.b16 %v3543, %v3535
    %v3624 = vpack.c.b16 %v3544, %v3536
    %v3625 = vpack.c.b16 %v3545, %v3537
    %v3626 = vpack.c.b16 %v3554, %v3546
    %v3627 = vpack.c.b16 %v3555, %v3547
    %v3628 = vpack.c.b16 %v3556, %v3548
    %v3629 = vpack.c.b16 %v3557, %v3549
    %v3630 = vpack.c.b16 %v3558, %v3550
    %v3631 = vpack.c.b16 %v3559, %v3551
    %v3632 = vpack.c.b16 %v3560, %v3552
    %v3633 = vpack.c.b16 %v3561, %v3553
    %v3634 = vpack.c.b16 %v3570, %v3562
    %v3635 = vpack.c.b16 %v3571, %v3563
    %v3636 = vpack.c.b16 %v3572, %v3564
    %v3637 = vpack.c.b16 %v3573, %v3565
    %v3638 = vpack.c.b16 %v3574, %v3566
    %v3639 = vpack.c.b16 %v3575, %v3567
    %v3640 = vpack.c.b16 %v3576, %v3568
    %v3641 = vpack.c.b16 %v3577, %v3569
    %3706 = vmatprep.subr.bf16.mxu0 %v3635
    %3707 = vmatpush1.bf16.msra.mxu0 %v3634
    %3708 = vmatprep.subr.bf16.mxu0 %v3627
    %3709 = vmatpush1.bf16.msra.mxu0 %v3626
    %3710 = vmatprep.subr.bf16.mxu0 %v3619
    %3711 = vmatpush1.bf16.msra.mxu0 %v3618
    %3712 = vmatprep.subr.bf16.mxu0 %v3611
    %3713 = vmatpush1.bf16.msra.mxu0 %v3610
    %3714 = vmatprep.subr.bf16.mxu0 %v3603
    %3715 = vmatpush1.bf16.msra.mxu0 %v3602
    %3716 = vmatprep.subr.bf16.mxu0 %v3595
    %3717 = vmatpush1.bf16.msra.mxu0 %v3594
    %3718 = vmatprep.subr.bf16.mxu0 %v3587
    %3719 = vmatpush1.bf16.msra.mxu0 %v3586
    %3720 = vmatprep.subr.bf16.mxu0 %v3579
    %3721 = vmatpush1.bf16.msra.mxu0 %v3578
    %3722 = vmatprep.subr.bf16.mxu0 0
    %3723 = vmatpush2.bf16.msra.mxu0 0
    %3724 = vmatprep.subr.bf16.mxu0 0
    %3725 = vmatpush2.bf16.msra.mxu0 0
    %3726 = vmatprep.subr.bf16.mxu0 0
    %3727 = vmatpush2.bf16.msra.mxu0 0
    %3728 = vmatprep.subr.bf16.mxu0 0
    %3729 = vmatpush2.bf16.msra.mxu0 0
    %3730 = vmatprep.subr.bf16.mxu0 0
    %3731 = vmatpush2.bf16.msra.mxu0 0
    %3732 = vmatprep.subr.bf16.mxu0 0
    %3733 = vmatpush2.bf16.msra.mxu0 0
    %3734 = vmatprep.subr.bf16.mxu0 0
    %3735 = vmatpush2.bf16.msra.mxu0 0
    %3736 = vmatprep.subr.bf16.mxu0 0
    %3737 = vmatpush2.bf16.msra.mxu0 0
    %3738 = vmatprep.mubr.bf16.mxu0 0
    %3739 = vmatmul.mubr.bf16.gmra.mxu0 %v3342
    %v3740 = vpop.f32.mrf.mxu0
    %v3741 = vadd.f32 %v3349, %v3740
    %v3742 = vpop.f32.mrf.mxu0
    %v3743 = vadd.f32 %v3353, %v3742
    %v3744 = vpop.f32.mrf.mxu0
    %v3745 = vadd.f32 %v3349, %v3744
    %v3746 = vpop.f32.mrf.mxu0
    %v3747 = vadd.f32 %v3353, %v3746
    %3748 = vmatprep.mubr.bf16.mxu0 0
    %3749 = vmatmul.mubr.bf16.gmra.mxu0 %v3343
    %v3750 = vpop.f32.mrf.mxu0
    %v3751 = vadd.f32 %v3349, %v3750
    %v3752 = vpop.f32.mrf.mxu0
    %v3753 = vadd.f32 %v3353, %v3752
    %v3754 = vpop.f32.mrf.mxu0
    %v3755 = vpop.f32.mrf.mxu0
    %3756 = vdwg.mxu0
    %3757 = vmatprep.subr.bf16.mxu0 %v3637
    %3758 = vmatpush1.bf16.msra.mxu0 %v3636
    %3759 = vmatprep.subr.bf16.mxu0 %v3629
    %3760 = vmatpush1.bf16.msra.mxu0 %v3628
    %3761 = vmatprep.subr.bf16.mxu0 %v3621
    %3762 = vmatpush1.bf16.msra.mxu0 %v3620
    %3763 = vmatprep.subr.bf16.mxu0 %v3613
    %3764 = vmatpush1.bf16.msra.mxu0 %v3612
    %3765 = vmatprep.subr.bf16.mxu0 %v3605
    %3766 = vmatpush1.bf16.msra.mxu0 %v3604
    %3767 = vmatprep.subr.bf16.mxu0 %v3597
    %3768 = vmatpush1.bf16.msra.mxu0 %v3596
    %3769 = vmatprep.subr.bf16.mxu0 %v3589
    %3770 = vmatpush1.bf16.msra.mxu0 %v3588
    %3771 = vmatprep.subr.bf16.mxu0 %v3581
    %3772 = vmatpush1.bf16.msra.mxu0 %v3580
    %3773 = vmatprep.subr.bf16.mxu0 0
    %3774 = vmatpush2.bf16.msra.mxu0 0
    %3775 = vmatprep.subr.bf16.mxu0 0
    %3776 = vmatpush2.bf16.msra.mxu0 0
    %3777 = vmatprep.subr.bf16.mxu0 0
    %3778 = vmatpush2.bf16.msra.mxu0 0
    %3779 = vmatprep.subr.bf16.mxu0 0
    %3780 = vmatpush2.bf16.msra.mxu0 0
    %3781 = vmatprep.subr.bf16.mxu0 0
    %3782 = vmatpush2.bf16.msra.mxu0 0
    %3783 = vmatprep.subr.bf16.mxu0 0
    %3784 = vmatpush2.bf16.msra.mxu0 0
    %3785 = vmatprep.subr.bf16.mxu0 0
    %3786 = vmatpush2.bf16.msra.mxu0 0
    %3787 = vmatprep.subr.bf16.mxu0 0
    %3788 = vmatpush2.bf16.msra.mxu0 0
    %3789 = vmatprep.mubr.bf16.mxu0 0
    %3790 = vmatmul.mubr.bf16.gmra.mxu0 %v3342
    %v3791 = vpop.f32.mrf.mxu0
    %v3792 = vadd.f32 %v3357, %v3791
    %v3793 = vpop.f32.mrf.mxu0
    %v3794 = vadd.f32 %v3361, %v3793
    %v3795 = vpop.f32.mrf.mxu0
    %v3796 = vadd.f32 %v3357, %v3795
    %v3797 = vpop.f32.mrf.mxu0
    %v3798 = vadd.f32 %v3361, %v3797
    %3799 = vmatprep.mubr.bf16.mxu0 0
    %3800 = vmatmul.mubr.bf16.gmra.mxu0 %v3343
    %v3801 = vpop.f32.mrf.mxu0
    %v3802 = vadd.f32 %v3357, %v3801
    %v3803 = vpop.f32.mrf.mxu0
    %v3804 = vadd.f32 %v3361, %v3803
    %v3805 = vpop.f32.mrf.mxu0
    %v3806 = vpop.f32.mrf.mxu0
    %3807 = vdwg.mxu0
    %3808 = vmatprep.subr.bf16.mxu0 %v3639
    %3809 = vmatpush1.bf16.msra.mxu0 %v3638
    %3810 = vmatprep.subr.bf16.mxu0 %v3631
    %3811 = vmatpush1.bf16.msra.mxu0 %v3630
    %3812 = vmatprep.subr.bf16.mxu0 %v3623
    %3813 = vmatpush1.bf16.msra.mxu0 %v3622
    %3814 = vmatprep.subr.bf16.mxu0 %v3615
    %3815 = vmatpush1.bf16.msra.mxu0 %v3614
    %3816 = vmatprep.subr.bf16.mxu0 %v3607
    %3817 = vmatpush1.bf16.msra.mxu0 %v3606
    %3818 = vmatprep.subr.bf16.mxu0 %v3599
    %3819 = vmatpush1.bf16.msra.mxu0 %v3598
    %3820 = vmatprep.subr.bf16.mxu0 %v3591
    %3821 = vmatpush1.bf16.msra.mxu0 %v3590
    %3822 = vmatprep.subr.bf16.mxu0 %v3583
    %3823 = vmatpush1.bf16.msra.mxu0 %v3582
    %3824 = vmatprep.subr.bf16.mxu0 0
    %3825 = vmatpush2.bf16.msra.mxu0 0
    %3826 = vmatprep.subr.bf16.mxu0 0
    %3827 = vmatpush2.bf16.msra.mxu0 0
    %3828 = vmatprep.subr.bf16.mxu0 0
    %3829 = vmatpush2.bf16.msra.mxu0 0
    %3830 = vmatprep.subr.bf16.mxu0 0
    %3831 = vmatpush2.bf16.msra.mxu0 0
    %3832 = vmatprep.subr.bf16.mxu0 0
    %3833 = vmatpush2.bf16.msra.mxu0 0
    %3834 = vmatprep.subr.bf16.mxu0 0
    %3835 = vmatpush2.bf16.msra.mxu0 0
    %3836 = vmatprep.subr.bf16.mxu0 0
    %3837 = vmatpush2.bf16.msra.mxu0 0
    %3838 = vmatprep.subr.bf16.mxu0 0
    %3839 = vmatpush2.bf16.msra.mxu0 0
    %3840 = vmatprep.mubr.bf16.mxu0 0
    %3841 = vmatmul.mubr.bf16.gmra.mxu0 %v3342
    %v3842 = vpop.f32.mrf.mxu0
    %v3843 = vadd.f32 %v3365, %v3842
    %v3844 = vpop.f32.mrf.mxu0
    %v3845 = vadd.f32 %v3369, %v3844
    %v3846 = vpop.f32.mrf.mxu0
    %v3847 = vadd.f32 %v3365, %v3846
    %v3848 = vpop.f32.mrf.mxu0
    %v3849 = vadd.f32 %v3369, %v3848
    %3850 = vmatprep.mubr.bf16.mxu0 0
    %3851 = vmatmul.mubr.bf16.gmra.mxu0 %v3343
    %v3852 = vpop.f32.mrf.mxu0
    %v3853 = vadd.f32 %v3365, %v3852
    %v3854 = vpop.f32.mrf.mxu0
    %v3855 = vadd.f32 %v3369, %v3854
    %v3856 = vpop.f32.mrf.mxu0
    %v3857 = vpop.f32.mrf.mxu0
    %3858 = vdwg.mxu0
    %3859 = vmatprep.subr.bf16.mxu0 %v3641
    %3860 = vmatpush1.bf16.msra.mxu0 %v3640
    %3861 = vmatprep.subr.bf16.mxu0 %v3633
    %3862 = vmatpush1.bf16.msra.mxu0 %v3632
    %3863 = vmatprep.subr.bf16.mxu0 %v3625
    %3864 = vmatpush1.bf16.msra.mxu0 %v3624
    %3865 = vmatprep.subr.bf16.mxu0 %v3617
    %3866 = vmatpush1.bf16.msra.mxu0 %v3616
    %3867 = vmatprep.subr.bf16.mxu0 %v3609
    %3868 = vmatpush1.bf16.msra.mxu0 %v3608
    %3869 = vmatprep.subr.bf16.mxu0 %v3601
    %3870 = vmatpush1.bf16.msra.mxu0 %v3600
    %3871 = vmatprep.subr.bf16.mxu0 %v3593
    %3872 = vmatpush1.bf16.msra.mxu0 %v3592
    %3873 = vmatprep.subr.bf16.mxu0 %v3585
    %3874 = vmatpush1.bf16.msra.mxu0 %v3584
    %3875 = vmatprep.subr.bf16.mxu0 0
    %3876 = vmatpush2.bf16.msra.mxu0 0
    %3877 = vmatprep.subr.bf16.mxu0 0
    %3878 = vmatpush2.bf16.msra.mxu0 0
    %3879 = vmatprep.subr.bf16.mxu0 0
    %3880 = vmatpush2.bf16.msra.mxu0 0
    %3881 = vmatprep.subr.bf16.mxu0 0
    %3882 = vmatpush2.bf16.msra.mxu0 0
    %3883 = vmatprep.subr.bf16.mxu0 0
    %3884 = vmatpush2.bf16.msra.mxu0 0
    %3885 = vmatprep.subr.bf16.mxu0 0
    %3886 = vmatpush2.bf16.msra.mxu0 0
    %3887 = vmatprep.subr.bf16.mxu0 0
    %3888 = vmatpush2.bf16.msra.mxu0 0
    %3889 = vmatprep.subr.bf16.mxu0 0
    %3890 = vmatpush2.bf16.msra.mxu0 0
    %3891 = vmatprep.mubr.bf16.mxu0 0
    %3892 = vmatmul.mubr.bf16.gmra.mxu0 %v3342
    %v3893 = vpop.f32.mrf.mxu0
    %v3894 = vadd.f32 %v3373, %v3893
    %v3895 = vpop.f32.mrf.mxu0
    %v3896 = vadd.f32 %v3377, %v3895
    %v3897 = vpop.f32.mrf.mxu0
    %v3898 = vadd.f32 %v3373, %v3897
    %v3899 = vpop.f32.mrf.mxu0
    %v3900 = vadd.f32 %v3377, %v3899
    %3901 = vmatprep.mubr.bf16.mxu0 0
    %3902 = vmatmul.mubr.bf16.gmra.mxu0 %v3343
    %v3903 = vpop.f32.mrf.mxu0
    %v3904 = vadd.f32 %v3373, %v3903
    %v3905 = vpop.f32.mrf.mxu0
    %v3906 = vadd.f32 %v3377, %v3905
    %v3907 = vpop.f32.mrf.mxu0
    %v3908 = vpop.f32.mrf.mxu0
    %3909 = vdwg.mxu0
    %v3910 = vld [vmem:[#allocation3] sm:$0xff]
    %v3911 = vld [vmem:[#allocation3 + $0x8] sm:$0xff]
    %v3912 = vld [vmem:[#allocation3 + $0x10] sm:$0xff]
    %v3913 = vld [vmem:[#allocation3 + $0x18] sm:$0xff]
    %v3914 = vld [vmem:[#allocation3 + $0x20] sm:$0xff]
    %v3915 = vld [vmem:[#allocation3 + $0x28] sm:$0xff]
    %v3916 = vld [vmem:[#allocation3 + $0x30] sm:$0xff]
    %v3917 = vld [vmem:[#allocation3 + $0x38] sm:$0xff]
    %v3918 = vld [vmem:[#allocation3 + $0x40] sm:$0xff]
    %v3919 = vld [vmem:[#allocation3 + $0x48] sm:$0xff]
    %v3920 = vld [vmem:[#allocation3 + $0x50] sm:$0xff]
    %v3921 = vld [vmem:[#allocation3 + $0x58] sm:$0xff]
    %v3922 = vld [vmem:[#allocation3 + $0x60] sm:$0xff]
    %v3923 = vld [vmem:[#allocation3 + $0x68] sm:$0xff]
    %v3924 = vld [vmem:[#allocation3 + $0x70] sm:$0xff]
    %v3925 = vld [vmem:[#allocation3 + $0x78] sm:$0xff]
    %v3926 = vld [vmem:[#allocation3 + $0x80] sm:$0xff]
    %v3927 = vld [vmem:[#allocation3 + $0x88] sm:$0xff]
    %v3928 = vld [vmem:[#allocation3 + $0x90] sm:$0xff]
    %v3929 = vld [vmem:[#allocation3 + $0x98] sm:$0xff]
    %v3930 = vld [vmem:[#allocation3 + $0xa0] sm:$0xff]
    %v3931 = vld [vmem:[#allocation3 + $0xa8] sm:$0xff]
    %v3932 = vld [vmem:[#allocation3 + $0xb0] sm:$0xff]
    %v3933 = vld [vmem:[#allocation3 + $0xb8] sm:$0xff]
    %v3934 = vld [vmem:[#allocation3 + $0xc0] sm:$0xff]
    %v3935 = vld [vmem:[#allocation3 + $0xc8] sm:$0xff]
    %v3936 = vld [vmem:[#allocation3 + $0xd0] sm:$0xff]
    %v3937 = vld [vmem:[#allocation3 + $0xd8] sm:$0xff]
    %v3938 = vld [vmem:[#allocation3 + $0xe0] sm:$0xff]
    %v3939 = vld [vmem:[#allocation3 + $0xe8] sm:$0xff]
    %v3940 = vld [vmem:[#allocation3 + $0xf0] sm:$0xff]
    %v3941 = vld [vmem:[#allocation3 + $0xf8] sm:$0xff]
    %v3942 = vld [vmem:[#allocation3 + $0x100] sm:$0xff]
    %v3943 = vld [vmem:[#allocation3 + $0x108] sm:$0xff]
    %v3944 = vld [vmem:[#allocation3 + $0x110] sm:$0xff]
    %v3945 = vld [vmem:[#allocation3 + $0x118] sm:$0xff]
    %v3946 = vld [vmem:[#allocation3 + $0x120] sm:$0xff]
    %v3947 = vld [vmem:[#allocation3 + $0x128] sm:$0xff]
    %v3948 = vld [vmem:[#allocation3 + $0x130] sm:$0xff]
    %v3949 = vld [vmem:[#allocation3 + $0x138] sm:$0xff]
    %v3950 = vld [vmem:[#allocation3 + $0x140] sm:$0xff]
    %v3951 = vld [vmem:[#allocation3 + $0x148] sm:$0xff]
    %v3952 = vld [vmem:[#allocation3 + $0x150] sm:$0xff]
    %v3953 = vld [vmem:[#allocation3 + $0x158] sm:$0xff]
    %v3954 = vld [vmem:[#allocation3 + $0x160] sm:$0xff]
    %v3955 = vld [vmem:[#allocation3 + $0x168] sm:$0xff]
    %v3956 = vld [vmem:[#allocation3 + $0x170] sm:$0xff]
    %v3957 = vld [vmem:[#allocation3 + $0x178] sm:$0xff]
    %v3958 = vld [vmem:[#allocation3 + $0x180] sm:$0xff]
    %v3959 = vld [vmem:[#allocation3 + $0x188] sm:$0xff]
    %v3960 = vld [vmem:[#allocation3 + $0x190] sm:$0xff]
    %v3961 = vld [vmem:[#allocation3 + $0x198] sm:$0xff]
    %v3962 = vld [vmem:[#allocation3 + $0x1a0] sm:$0xff]
    %v3963 = vld [vmem:[#allocation3 + $0x1a8] sm:$0xff]
    %v3964 = vld [vmem:[#allocation3 + $0x1b0] sm:$0xff]
    %v3965 = vld [vmem:[#allocation3 + $0x1b8] sm:$0xff]
    %v3966 = vld [vmem:[#allocation3 + $0x1c0] sm:$0xff]
    %v3967 = vld [vmem:[#allocation3 + $0x1c8] sm:$0xff]
    %v3968 = vld [vmem:[#allocation3 + $0x1d0] sm:$0xff]
    %v3969 = vld [vmem:[#allocation3 + $0x1d8] sm:$0xff]
    %v3970 = vld [vmem:[#allocation3 + $0x1e0] sm:$0xff]
    %v3971 = vld [vmem:[#allocation3 + $0x1e8] sm:$0xff]
    %v3972 = vld [vmem:[#allocation3 + $0x1f0] sm:$0xff]
    %v3973 = vld [vmem:[#allocation3 + $0x1f8] sm:$0xff]
    %v4006 = vunpack.c.l.b16 %v3910
    %v4007 = vunpack.c.h.b16 %v3910
    %v4008 = vunpack.c.l.b16 %v3911
    %v4009 = vunpack.c.h.b16 %v3911
    %v4010 = vunpack.c.l.b16 %v3912
    %v4011 = vunpack.c.h.b16 %v3912
    %v4012 = vunpack.c.l.b16 %v3913
    %v4013 = vunpack.c.h.b16 %v3913
    %v4014 = vunpack.c.l.b16 %v3914
    %v4015 = vunpack.c.h.b16 %v3914
    %v4016 = vunpack.c.l.b16 %v3915
    %v4017 = vunpack.c.h.b16 %v3915
    %v4018 = vunpack.c.l.b16 %v3916
    %v4019 = vunpack.c.h.b16 %v3916
    %v4020 = vunpack.c.l.b16 %v3917
    %v4021 = vunpack.c.h.b16 %v3917
    %v4022 = vunpack.c.l.b16 %v3918
    %v4023 = vunpack.c.h.b16 %v3918
    %v4024 = vunpack.c.l.b16 %v3919
    %v4025 = vunpack.c.h.b16 %v3919
    %v4026 = vunpack.c.l.b16 %v3920
    %v4027 = vunpack.c.h.b16 %v3920
    %v4028 = vunpack.c.l.b16 %v3921
    %v4029 = vunpack.c.h.b16 %v3921
    %v4030 = vunpack.c.l.b16 %v3922
    %v4031 = vunpack.c.h.b16 %v3922
    %v4032 = vunpack.c.l.b16 %v3923
    %v4033 = vunpack.c.h.b16 %v3923
    %v4034 = vunpack.c.l.b16 %v3924
    %v4035 = vunpack.c.h.b16 %v3924
    %v4036 = vunpack.c.l.b16 %v3925
    %v4037 = vunpack.c.h.b16 %v3925
    %v4038 = vunpack.c.l.b16 %v3926
    %v4039 = vunpack.c.h.b16 %v3926
    %v4040 = vunpack.c.l.b16 %v3927
    %v4041 = vunpack.c.h.b16 %v3927
    %v4042 = vunpack.c.l.b16 %v3928
    %v4043 = vunpack.c.h.b16 %v3928
    %v4044 = vunpack.c.l.b16 %v3929
    %v4045 = vunpack.c.h.b16 %v3929
    %v4046 = vunpack.c.l.b16 %v3930
    %v4047 = vunpack.c.h.b16 %v3930
    %v4048 = vunpack.c.l.b16 %v3931
    %v4049 = vunpack.c.h.b16 %v3931
    %v4050 = vunpack.c.l.b16 %v3932
    %v4051 = vunpack.c.h.b16 %v3932
    %v4052 = vunpack.c.l.b16 %v3933
    %v4053 = vunpack.c.h.b16 %v3933
    %v4054 = vunpack.c.l.b16 %v3934
    %v4055 = vunpack.c.h.b16 %v3934
    %v4056 = vunpack.c.l.b16 %v3935
    %v4057 = vunpack.c.h.b16 %v3935
    %v4058 = vunpack.c.l.b16 %v3936
    %v4059 = vunpack.c.h.b16 %v3936
    %v4060 = vunpack.c.l.b16 %v3937
    %v4061 = vunpack.c.h.b16 %v3937
    %v4062 = vunpack.c.l.b16 %v3938
    %v4063 = vunpack.c.h.b16 %v3938
    %v4064 = vunpack.c.l.b16 %v3939
    %v4065 = vunpack.c.h.b16 %v3939
    %v4066 = vunpack.c.l.b16 %v3940
    %v4067 = vunpack.c.h.b16 %v3940
    %v4068 = vunpack.c.l.b16 %v3941
    %v4069 = vunpack.c.h.b16 %v3941
    %v4070 = vpack.c.b16 %v4010, %v4006
    %v4071 = vpack.c.b16 %v4011, %v4007
    %v4072 = vpack.c.b16 %v4012, %v4008
    %v4073 = vpack.c.b16 %v4013, %v4009
    %v4074 = vpack.c.b16 %v4018, %v4014
    %v4075 = vpack.c.b16 %v4019, %v4015
    %v4076 = vpack.c.b16 %v4020, %v4016
    %v4077 = vpack.c.b16 %v4021, %v4017
    %v4078 = vpack.c.b16 %v4026, %v4022
    %v4079 = vpack.c.b16 %v4027, %v4023
    %v4080 = vpack.c.b16 %v4028, %v4024
    %v4081 = vpack.c.b16 %v4029, %v4025
    %v4082 = vpack.c.b16 %v4034, %v4030
    %v4083 = vpack.c.b16 %v4035, %v4031
    %v4084 = vpack.c.b16 %v4036, %v4032
    %v4085 = vpack.c.b16 %v4037, %v4033
    %v4086 = vpack.c.b16 %v4042, %v4038
    %v4087 = vpack.c.b16 %v4043, %v4039
    %v4088 = vpack.c.b16 %v4044, %v4040
    %v4089 = vpack.c.b16 %v4045, %v4041
    %v4090 = vpack.c.b16 %v4050, %v4046
    %v4091 = vpack.c.b16 %v4051, %v4047
    %v4092 = vpack.c.b16 %v4052, %v4048
    %v4093 = vpack.c.b16 %v4053, %v4049
    %v4094 = vpack.c.b16 %v4058, %v4054
    %v4095 = vpack.c.b16 %v4059, %v4055
    %v4096 = vpack.c.b16 %v4060, %v4056
    %v4097 = vpack.c.b16 %v4061, %v4057
    %v4098 = vpack.c.b16 %v4066, %v4062
    %v4099 = vpack.c.b16 %v4067, %v4063
    %v4100 = vpack.c.b16 %v4068, %v4064
    %v4101 = vpack.c.b16 %v4069, %v4065
    %4134 = vmatprep.subr.bf16.mxu0 %v4099
    %4135 = vmatpush1.bf16.msra.mxu0 %v4098
    %4136 = vmatprep.subr.bf16.mxu0 %v4095
    %4137 = vmatpush1.bf16.msra.mxu0 %v4094
    %4138 = vmatprep.subr.bf16.mxu0 %v4091
    %4139 = vmatpush1.bf16.msra.mxu0 %v4090
    %4140 = vmatprep.subr.bf16.mxu0 %v4087
    %4141 = vmatpush1.bf16.msra.mxu0 %v4086
    %4142 = vmatprep.subr.bf16.mxu0 %v4083
    %4143 = vmatpush1.bf16.msra.mxu0 %v4082
    %4144 = vmatprep.subr.bf16.mxu0 %v4079
    %4145 = vmatpush1.bf16.msra.mxu0 %v4078
    %4146 = vmatprep.subr.bf16.mxu0 %v4075
    %4147 = vmatpush1.bf16.msra.mxu0 %v4074
    %4148 = vmatprep.subr.bf16.mxu0 %v4071
    %4149 = vmatpush1.bf16.msra.mxu0 %v4070
    %4150 = vmatprep.subr.bf16.mxu0 0
    %4151 = vmatpush2.bf16.msra.mxu0 0
    %4152 = vmatprep.subr.bf16.mxu0 0
    %4153 = vmatpush2.bf16.msra.mxu0 0
    %4154 = vmatprep.subr.bf16.mxu0 0
    %4155 = vmatpush2.bf16.msra.mxu0 0
    %4156 = vmatprep.subr.bf16.mxu0 0
    %4157 = vmatpush2.bf16.msra.mxu0 0
    %4158 = vmatprep.subr.bf16.mxu0 0
    %4159 = vmatpush2.bf16.msra.mxu0 0
    %4160 = vmatprep.subr.bf16.mxu0 0
    %4161 = vmatpush2.bf16.msra.mxu0 0
    %4162 = vmatprep.subr.bf16.mxu0 0
    %4163 = vmatpush2.bf16.msra.mxu0 0
    %4164 = vmatprep.subr.bf16.mxu0 0
    %4165 = vmatpush2.bf16.msra.mxu0 0
    %4166 = vmatprep.mubr.bf16.mxu0 0
    %4167 = vmatmul.mubr.bf16.gmra.mxu0 0
    %v4168 = vpop.f32.mrf.mxu0
    %v4169 = vadd.f32 0.0, %v4168
    %v4170 = vpop.f32.mrf.mxu0
    %v4171 = vadd.f32 0.0, %v4170
    %v4172 = vpop.f32.mrf.mxu0
    %v4173 = vpop.f32.mrf.mxu0
    %4174 = vdwg.mxu0
    %4175 = vmatprep.subr.bf16.mxu0 %v4101
    %4176 = vmatpush1.bf16.msra.mxu0 %v4100
    %4177 = vmatprep.subr.bf16.mxu0 %v4097
    %4178 = vmatpush1.bf16.msra.mxu0 %v4096
    %4179 = vmatprep.subr.bf16.mxu0 %v4093
    %4180 = vmatpush1.bf16.msra.mxu0 %v4092
    %4181 = vmatprep.subr.bf16.mxu0 %v4089
    %4182 = vmatpush1.bf16.msra.mxu0 %v4088
    %4183 = vmatprep.subr.bf16.mxu0 %v4085
    %4184 = vmatpush1.bf16.msra.mxu0 %v4084
    %4185 = vmatprep.subr.bf16.mxu0 %v4081
    %4186 = vmatpush1.bf16.msra.mxu0 %v4080
    %4187 = vmatprep.subr.bf16.mxu0 %v4077
    %4188 = vmatpush1.bf16.msra.mxu0 %v4076
    %4189 = vmatprep.subr.bf16.mxu0 %v4073
    %4190 = vmatpush1.bf16.msra.mxu0 %v4072
    %4191 = vmatprep.subr.bf16.mxu0 0
    %4192 = vmatpush2.bf16.msra.mxu0 0
    %4193 = vmatprep.subr.bf16.mxu0 0
    %4194 = vmatpush2.bf16.msra.mxu0 0
    %4195 = vmatprep.subr.bf16.mxu0 0
    %4196 = vmatpush2.bf16.msra.mxu0 0
    %4197 = vmatprep.subr.bf16.mxu0 0
    %4198 = vmatpush2.bf16.msra.mxu0 0
    %4199 = vmatprep.subr.bf16.mxu0 0
    %4200 = vmatpush2.bf16.msra.mxu0 0
    %4201 = vmatprep.subr.bf16.mxu0 0
    %4202 = vmatpush2.bf16.msra.mxu0 0
    %4203 = vmatprep.subr.bf16.mxu0 0
    %4204 = vmatpush2.bf16.msra.mxu0 0
    %4205 = vmatprep.subr.bf16.mxu0 0
    %4206 = vmatpush2.bf16.msra.mxu0 0
    %4207 = vmatprep.mubr.bf16.mxu0 0
    %4208 = vmatmul.mubr.bf16.gmra.mxu0 0
    %v4209 = vpop.f32.mrf.mxu0
    %v4210 = vadd.f32 0.0, %v4209
    %v4211 = vpop.f32.mrf.mxu0
    %v4212 = vadd.f32 0.0, %v4211
    %v4213 = vpop.f32.mrf.mxu0
    %v4214 = vpop.f32.mrf.mxu0
    %4215 = vdwg.mxu0
    %v4216 = vadd.f32 %v3741, %v4169
    %v4217 = vadd.f32 %v3743, %v4171
    %v4218 = vadd.f32 %v3792, %v4210
    %v4219 = vadd.f32 %v3794, %v4212
    %v4220 = vxor.u32 %v4216, 2147483648
    %v4221 = vmul.f32 %v4220, 1.442695
    %v4222 = vpow.pop %v4221
    %v4223 = vadd.f32 %v4222, 1.0
    %v4224 = vrcp.pop %v4223
    %v4225 = vmul.f32 1.0, %v4224
    %v4226 = vxor.u32 %v4217, 2147483648
    %v4227 = vmul.f32 %v4226, 1.442695
    %v4228 = vpow.pop %v4227
    %v4229 = vadd.f32 %v4228, 1.0
    %v4230 = vrcp.pop %v4229
    %v4231 = vmul.f32 1.0, %v4230
    %v4232 = vtanh.pop %v4218
    %v4233 = vxor.u32 %v4219, 2147483648
    %v4234 = vmul.f32 %v4233, 1.442695
    %v4235 = vpow.pop %v4234
    %v4236 = vadd.f32 %v4235, 1.0
    %v4237 = vrcp.pop %v4236
    %v4238 = vmul.f32 1.0, %v4237
    %v4239 = vmul.f32 %v4231, 0.0
    %v4240 = vmul.f32 %v4225, %v4232
    %v4241 = vadd.f32 %v4239, %v4240
    %v4242 = vtanh.pop %v4241
    %v4243 = vmul.f32 %v4238, %v4242
    %v4244 = vpack.c.bf16 %v4243, %v4243
    %4245 = vmatprep.subr.bf16.mxu0 %v4099
    %4246 = vmatpush1.bf16.msra.mxu0 %v4098
    %4247 = vmatprep.subr.bf16.mxu0 %v4095
    %4248 = vmatpush1.bf16.msra.mxu0 %v4094
    %4249 = vmatprep.subr.bf16.mxu0 %v4091
    %4250 = vmatpush1.bf16.msra.mxu0 %v4090
    %4251 = vmatprep.subr.bf16.mxu0 %v4087
    %4252 = vmatpush1.bf16.msra.mxu0 %v4086
    %4253 = vmatprep.subr.bf16.mxu0 %v4083
    %4254 = vmatpush1.bf16.msra.mxu0 %v4082
    %4255 = vmatprep.subr.bf16.mxu0 %v4079
    %4256 = vmatpush1.bf16.msra.mxu0 %v4078
    %4257 = vmatprep.subr.bf16.mxu0 %v4075
    %4258 = vmatpush1.bf16.msra.mxu0 %v4074
    %4259 = vmatprep.subr.bf16.mxu0 %v4071
    %4260 = vmatpush1.bf16.msra.mxu0 %v4070
    %4261 = vmatprep.subr.bf16.mxu0 0
    %4262 = vmatpush2.bf16.msra.mxu0 0
    %4263 = vmatprep.subr.bf16.mxu0 0
    %4264 = vmatpush2.bf16.msra.mxu0 0
    %4265 = vmatprep.subr.bf16.mxu0 0
    %4266 = vmatpush2.bf16.msra.mxu0 0
    %4267 = vmatprep.subr.bf16.mxu0 0
    %4268 = vmatpush2.bf16.msra.mxu0 0
    %4269 = vmatprep.subr.bf16.mxu0 0
    %4270 = vmatpush2.bf16.msra.mxu0 0
    %4271 = vmatprep.subr.bf16.mxu0 0
    %4272 = vmatpush2.bf16.msra.mxu0 0
    %4273 = vmatprep.subr.bf16.mxu0 0
    %4274 = vmatpush2.bf16.msra.mxu0 0
    %4275 = vmatprep.subr.bf16.mxu0 0
    %4276 = vmatpush2.bf16.msra.mxu0 0
    %4277 = vmatprep.mubr.bf16.mxu0 0
    %4278 = vmatmul.mubr.bf16.gmra.mxu0 %v4244
    %v4279 = vpop.f32.mrf.mxu0
    %v4280 = vadd.f32 0.0, %v4279
    %v4281 = vpop.f32.mrf.mxu0
    %v4282 = vadd.f32 0.0, %v4281
    %v4283 = vpop.f32.mrf.mxu0
    %v4284 = vpop.f32.mrf.mxu0
    %4285 = vdwg.mxu0
    %4286 = vmatprep.subr.bf16.mxu0 %v4101
    %4287 = vmatpush1.bf16.msra.mxu0 %v4100
    %4288 = vmatprep.subr.bf16.mxu0 %v4097
    %4289 = vmatpush1.bf16.msra.mxu0 %v4096
    %4290 = vmatprep.subr.bf16.mxu0 %v4093
    %4291 = vmatpush1.bf16.msra.mxu0 %v4092
    %4292 = vmatprep.subr.bf16.mxu0 %v4089
    %4293 = vmatpush1.bf16.msra.mxu0 %v4088
    %4294 = vmatprep.subr.bf16.mxu0 %v4085
    %4295 = vmatpush1.bf16.msra.mxu0 %v4084
    %4296 = vmatprep.subr.bf16.mxu0 %v4081
    %4297 = vmatpush1.bf16.msra.mxu0 %v4080
    %4298 = vmatprep.subr.bf16.mxu0 %v4077
    %4299 = vmatpush1.bf16.msra.mxu0 %v4076
    %4300 = vmatprep.subr.bf16.mxu0 %v4073
    %4301 = vmatpush1.bf16.msra.mxu0 %v4072
    %4302 = vmatprep.subr.bf16.mxu0 0
    %4303 = vmatpush2.bf16.msra.mxu0 0
    %4304 = vmatprep.subr.bf16.mxu0 0
    %4305 = vmatpush2.bf16.msra.mxu0 0
    %4306 = vmatprep.subr.bf16.mxu0 0
    %4307 = vmatpush2.bf16.msra.mxu0 0
    %4308 = vmatprep.subr.bf16.mxu0 0
    %4309 = vmatpush2.bf16.msra.mxu0 0
    %4310 = vmatprep.subr.bf16.mxu0 0
    %4311 = vmatpush2.bf16.msra.mxu0 0
    %4312 = vmatprep.subr.bf16.mxu0 0
    %4313 = vmatpush2.bf16.msra.mxu0 0
    %4314 = vmatprep.subr.bf16.mxu0 0
    %4315 = vmatpush2.bf16.msra.mxu0 0
    %4316 = vmatprep.subr.bf16.mxu0 0
    %4317 = vmatpush2.bf16.msra.mxu0 0
    %4318 = vmatprep.mubr.bf16.mxu0 0
    %4319 = vmatmul.mubr.bf16.gmra.mxu0 %v4244
    %v4320 = vpop.f32.mrf.mxu0
    %v4321 = vadd.f32 0.0, %v4320
    %v4322 = vpop.f32.mrf.mxu0
    %v4323 = vadd.f32 0.0, %v4322
    %v4324 = vpop.f32.mrf.mxu0
    %v4325 = vpop.f32.mrf.mxu0
    %4326 = vdwg.mxu0
    %v4327 = vadd.f32 %v3745, %v4280
    %v4328 = vadd.f32 %v3747, %v4282
    %v4329 = vadd.f32 %v3796, %v4321
    %v4330 = vadd.f32 %v3798, %v4323
    %v4331 = vxor.u32 %v4327, 2147483648
    %v4332 = vmul.f32 %v4331, 1.442695
    %v4333 = vpow.pop %v4332
    %v4334 = vadd.f32 %v4333, 1.0
    %v4335 = vrcp.pop %v4334
    %v4336 = vmul.f32 1.0, %v4335
    %v4337 = vxor.u32 %v4328, 2147483648
    %v4338 = vmul.f32 %v4337, 1.442695
    %v4339 = vpow.pop %v4338
    %v4340 = vadd.f32 %v4339, 1.0
    %v4341 = vrcp.pop %v4340
    %v4342 = vmul.f32 1.0, %v4341
    %v4343 = vtanh.pop %v4329
    %v4344 = vxor.u32 %v4330, 2147483648
    %v4345 = vmul.f32 %v4344, 1.442695
    %v4346 = vpow.pop %v4345
    %v4347 = vadd.f32 %v4346, 1.0
    %v4348 = vrcp.pop %v4347
    %v4349 = vmul.f32 1.0, %v4348
    %v4350 = vmul.f32 %v4342, %v4241
    %v4351 = vmul.f32 %v4336, %v4343
    %v4352 = vadd.f32 %v4350, %v4351
    %v4353 = vtanh.pop %v4352
    %v4354 = vmul.f32 %v4349, %v4353
    %v4355 = vpack.c.bf16 %v4354, %v4354
    %4356 = vmatprep.subr.bf16.mxu0 %v4099
    %4357 = vmatpush1.bf16.msra.mxu0 %v4098
    %4358 = vmatprep.subr.bf16.mxu0 %v4095
    %4359 = vmatpush1.bf16.msra.mxu0 %v4094
    %4360 = vmatprep.subr.bf16.mxu0 %v4091
    %4361 = vmatpush1.bf16.msra.mxu0 %v4090
    %4362 = vmatprep.subr.bf16.mxu0 %v4087
    %4363 = vmatpush1.bf16.msra.mxu0 %v4086
    %4364 = vmatprep.subr.bf16.mxu0 %v4083
    %4365 = vmatpush1.bf16.msra.mxu0 %v4082
    %4366 = vmatprep.subr.bf16.mxu0 %v4079
    %4367 = vmatpush1.bf16.msra.mxu0 %v4078
    %4368 = vmatprep.subr.bf16.mxu0 %v4075
    %4369 = vmatpush1.bf16.msra.mxu0 %v4074
    %4370 = vmatprep.subr.bf16.mxu0 %v4071
    %4371 = vmatpush1.bf16.msra.mxu0 %v4070
    %4372 = vmatprep.subr.bf16.mxu0 0
    %4373 = vmatpush2.bf16.msra.mxu0 0
    %4374 = vmatprep.subr.bf16.mxu0 0
    %4375 = vmatpush2.bf16.msra.mxu0 0
    %4376 = vmatprep.subr.bf16.mxu0 0
    %4377 = vmatpush2.bf16.msra.mxu0 0
    %4378 = vmatprep.subr.bf16.mxu0 0
    %4379 = vmatpush2.bf16.msra.mxu0 0
    %4380 = vmatprep.subr.bf16.mxu0 0
    %4381 = vmatpush2.bf16.msra.mxu0 0
    %4382 = vmatprep.subr.bf16.mxu0 0
    %4383 = vmatpush2.bf16.msra.mxu0 0
    %4384 = vmatprep.subr.bf16.mxu0 0
    %4385 = vmatpush2.bf16.msra.mxu0 0
    %4386 = vmatprep.subr.bf16.mxu0 0
    %4387 = vmatpush2.bf16.msra.mxu0 0
    %4388 = vmatprep.mubr.bf16.mxu0 0
    %4389 = vmatmul.mubr.bf16.gmra.mxu0 %v4355
    %v4390 = vpop.f32.mrf.mxu0
    %v4391 = vadd.f32 0.0, %v4390
    %v4392 = vpop.f32.mrf.mxu0
    %v4393 = vadd.f32 0.0, %v4392
    %v4394 = vpop.f32.mrf.mxu0
    %v4395 = vpop.f32.mrf.mxu0
    %4396 = vdwg.mxu0
    %4397 = vmatprep.subr.bf16.mxu0 %v4101
    %4398 = vmatpush1.bf16.msra.mxu0 %v4100
    %4399 = vmatprep.subr.bf16.mxu0 %v4097
    %4400 = vmatpush1.bf16.msra.mxu0 %v4096
    %4401 = vmatprep.subr.bf16.mxu0 %v4093
    %4402 = vmatpush1.bf16.msra.mxu0 %v4092
    %4403 = vmatprep.subr.bf16.mxu0 %v4089
    %4404 = vmatpush1.bf16.msra.mxu0 %v4088
    %4405 = vmatprep.subr.bf16.mxu0 %v4085
    %4406 = vmatpush1.bf16.msra.mxu0 %v4084
    %4407 = vmatprep.subr.bf16.mxu0 %v4081
    %4408 = vmatpush1.bf16.msra.mxu0 %v4080
    %4409 = vmatprep.subr.bf16.mxu0 %v4077
    %4410 = vmatpush1.bf16.msra.mxu0 %v4076
    %4411 = vmatprep.subr.bf16.mxu0 %v4073
    %4412 = vmatpush1.bf16.msra.mxu0 %v4072
    %4413 = vmatprep.subr.bf16.mxu0 0
    %4414 = vmatpush2.bf16.msra.mxu0 0
    %4415 = vmatprep.subr.bf16.mxu0 0
    %4416 = vmatpush2.bf16.msra.mxu0 0
    %4417 = vmatprep.subr.bf16.mxu0 0
    %4418 = vmatpush2.bf16.msra.mxu0 0
    %4419 = vmatprep.subr.bf16.mxu0 0
    %4420 = vmatpush2.bf16.msra.mxu0 0
    %4421 = vmatprep.subr.bf16.mxu0 0
    %4422 = vmatpush2.bf16.msra.mxu0 0
    %4423 = vmatprep.subr.bf16.mxu0 0
    %4424 = vmatpush2.bf16.msra.mxu0 0
    %4425 = vmatprep.subr.bf16.mxu0 0
    %4426 = vmatpush2.bf16.msra.mxu0 0
    %4427 = vmatprep.subr.bf16.mxu0 0
    %4428 = vmatpush2.bf16.msra.mxu0 0
    %4429 = vmatprep.mubr.bf16.mxu0 0
    %4430 = vmatmul.mubr.bf16.gmra.mxu0 %v4355
    %v4431 = vpop.f32.mrf.mxu0
    %v4432 = vadd.f32 0.0, %v4431
    %v4433 = vpop.f32.mrf.mxu0
    %v4434 = vadd.f32 0.0, %v4433
    %v4435 = vpop.f32.mrf.mxu0
    %v4436 = vpop.f32.mrf.mxu0
    %4437 = vdwg.mxu0
    %v4438 = vadd.f32 %v3751, %v4391
    %v4439 = vadd.f32 %v3753, %v4393
    %v4440 = vadd.f32 %v3802, %v4432
    %v4441 = vadd.f32 %v3804, %v4434
    %v4442 = vxor.u32 %v4438, 2147483648
    %v4443 = vmul.f32 %v4442, 1.442695
    %v4444 = vpow.pop %v4443
    %v4445 = vadd.f32 %v4444, 1.0
    %v4446 = vrcp.pop %v4445
    %v4447 = vmul.f32 1.0, %v4446
    %v4448 = vxor.u32 %v4439, 2147483648
    %v4449 = vmul.f32 %v4448, 1.442695
    %v4450 = vpow.pop %v4449
    %v4451 = vadd.f32 %v4450, 1.0
    %v4452 = vrcp.pop %v4451
    %v4453 = vmul.f32 1.0, %v4452
    %v4454 = vtanh.pop %v4440
    %v4455 = vxor.u32 %v4441, 2147483648
    %v4456 = vmul.f32 %v4455, 1.442695
    %v4457 = vpow.pop %v4456
    %v4458 = vadd.f32 %v4457, 1.0
    %v4459 = vrcp.pop %v4458
    %v4460 = vmul.f32 1.0, %v4459
    %v4461 = vmul.f32 %v4453, %v4352
    %v4462 = vmul.f32 %v4447, %v4454
    %v4463 = vadd.f32 %v4461, %v4462
    %v4464 = vtanh.pop %v4463
    %v4465 = vmul.f32 %v4460, %v4464
    %v4498 = vunpack.c.l.b16 %v3942
    %v4499 = vunpack.c.h.b16 %v3942
    %v4500 = vunpack.c.l.b16 %v3943
    %v4501 = vunpack.c.h.b16 %v3943
    %v4502 = vunpack.c.l.b16 %v3944
    %v4503 = vunpack.c.h.b16 %v3944
    %v4504 = vunpack.c.l.b16 %v3945
    %v4505 = vunpack.c.h.b16 %v3945
    %v4506 = vunpack.c.l.b16 %v3946
    %v4507 = vunpack.c.h.b16 %v3946
    %v4508 = vunpack.c.l.b16 %v3947
    %v4509 = vunpack.c.h.b16 %v3947
    %v4510 = vunpack.c.l.b16 %v3948
    %v4511 = vunpack.c.h.b16 %v3948
    %v4512 = vunpack.c.l.b16 %v3949
    %v4513 = vunpack.c.h.b16 %v3949
    %v4514 = vunpack.c.l.b16 %v3950
    %v4515 = vunpack.c.h.b16 %v3950
    %v4516 = vunpack.c.l.b16 %v3951
    %v4517 = vunpack.c.h.b16 %v3951
    %v4518 = vunpack.c.l.b16 %v3952
    %v4519 = vunpack.c.h.b16 %v3952
    %v4520 = vunpack.c.l.b16 %v3953
    %v4521 = vunpack.c.h.b16 %v3953
    %v4522 = vunpack.c.l.b16 %v3954
    %v4523 = vunpack.c.h.b16 %v3954
    %v4524 = vunpack.c.l.b16 %v3955
    %v4525 = vunpack.c.h.b16 %v3955
    %v4526 = vunpack.c.l.b16 %v3956
    %v4527 = vunpack.c.h.b16 %v3956
    %v4528 = vunpack.c.l.b16 %v3957
    %v4529 = vunpack.c.h.b16 %v3957
    %v4530 = vunpack.c.l.b16 %v3958
    %v4531 = vunpack.c.h.b16 %v3958
    %v4532 = vunpack.c.l.b16 %v3959
    %v4533 = vunpack.c.h.b16 %v3959
    %v4534 = vunpack.c.l.b16 %v3960
    %v4535 = vunpack.c.h.b16 %v3960
    %v4536 = vunpack.c.l.b16 %v3961
    %v4537 = vunpack.c.h.b16 %v3961
    %v4538 = vunpack.c.l.b16 %v3962
    %v4539 = vunpack.c.h.b16 %v3962
    %v4540 = vunpack.c.l.b16 %v3963
    %v4541 = vunpack.c.h.b16 %v3963
    %v4542 = vunpack.c.l.b16 %v3964
    %v4543 = vunpack.c.h.b16 %v3964
    %v4544 = vunpack.c.l.b16 %v3965
    %v4545 = vunpack.c.h.b16 %v3965
    %v4546 = vunpack.c.l.b16 %v3966
    %v4547 = vunpack.c.h.b16 %v3966
    %v4548 = vunpack.c.l.b16 %v3967
    %v4549 = vunpack.c.h.b16 %v3967
    %v4550 = vunpack.c.l.b16 %v3968
    %v4551 = vunpack.c.h.b16 %v3968
    %v4552 = vunpack.c.l.b16 %v3969
    %v4553 = vunpack.c.h.b16 %v3969
    %v4554 = vunpack.c.l.b16 %v3970
    %v4555 = vunpack.c.h.b16 %v3970
    %v4556 = vunpack.c.l.b16 %v3971
    %v4557 = vunpack.c.h.b16 %v3971
    %v4558 = vunpack.c.l.b16 %v3972
    %v4559 = vunpack.c.h.b16 %v3972
    %v4560 = vunpack.c.l.b16 %v3973
    %v4561 = vunpack.c.h.b16 %v3973
    %v4562 = vpack.c.b16 %v4502, %v4498
    %v4563 = vpack.c.b16 %v4503, %v4499
    %v4564 = vpack.c.b16 %v4504, %v4500
    %v4565 = vpack.c.b16 %v4505, %v4501
    %v4566 = vpack.c.b16 %v4510, %v4506
    %v4567 = vpack.c.b16 %v4511, %v4507
    %v4568 = vpack.c.b16 %v4512, %v4508
    %v4569 = vpack.c.b16 %v4513, %v4509
    %v4570 = vpack.c.b16 %v4518, %v4514
    %v4571 = vpack.c.b16 %v4519, %v4515
    %v4572 = vpack.c.b16 %v4520, %v4516
    %v4573 = vpack.c.b16 %v4521, %v4517
    %v4574 = vpack.c.b16 %v4526, %v4522
    %v4575 = vpack.c.b16 %v4527, %v4523
    %v4576 = vpack.c.b16 %v4528, %v4524
    %v4577 = vpack.c.b16 %v4529, %v4525
    %v4578 = vpack.c.b16 %v4534, %v4530
    %v4579 = vpack.c.b16 %v4535, %v4531
    %v4580 = vpack.c.b16 %v4536, %v4532
    %v4581 = vpack.c.b16 %v4537, %v4533
    %v4582 = vpack.c.b16 %v4542, %v4538
    %v4583 = vpack.c.b16 %v4543, %v4539
    %v4584 = vpack.c.b16 %v4544, %v4540
    %v4585 = vpack.c.b16 %v4545, %v4541
    %v4586 = vpack.c.b16 %v4550, %v4546
    %v4587 = vpack.c.b16 %v4551, %v4547
    %v4588 = vpack.c.b16 %v4552, %v4548
    %v4589 = vpack.c.b16 %v4553, %v4549
    %v4590 = vpack.c.b16 %v4558, %v4554
    %v4591 = vpack.c.b16 %v4559, %v4555
    %v4592 = vpack.c.b16 %v4560, %v4556
    %v4593 = vpack.c.b16 %v4561, %v4557
    %4626 = vmatprep.subr.bf16.mxu0 %v4591
    %4627 = vmatpush1.bf16.msra.mxu0 %v4590
    %4628 = vmatprep.subr.bf16.mxu0 %v4587
    %4629 = vmatpush1.bf16.msra.mxu0 %v4586
    %4630 = vmatprep.subr.bf16.mxu0 %v4583
    %4631 = vmatpush1.bf16.msra.mxu0 %v4582
    %4632 = vmatprep.subr.bf16.mxu0 %v4579
    %4633 = vmatpush1.bf16.msra.mxu0 %v4578
    %4634 = vmatprep.subr.bf16.mxu0 %v4575
    %4635 = vmatpush1.bf16.msra.mxu0 %v4574
    %4636 = vmatprep.subr.bf16.mxu0 %v4571
    %4637 = vmatpush1.bf16.msra.mxu0 %v4570
    %4638 = vmatprep.subr.bf16.mxu0 %v4567
    %4639 = vmatpush1.bf16.msra.mxu0 %v4566
    %4640 = vmatprep.subr.bf16.mxu0 %v4563
    %4641 = vmatpush1.bf16.msra.mxu0 %v4562
    %4642 = vmatprep.subr.bf16.mxu0 0
    %4643 = vmatpush2.bf16.msra.mxu0 0
    %4644 = vmatprep.subr.bf16.mxu0 0
    %4645 = vmatpush2.bf16.msra.mxu0 0
    %4646 = vmatprep.subr.bf16.mxu0 0
    %4647 = vmatpush2.bf16.msra.mxu0 0
    %4648 = vmatprep.subr.bf16.mxu0 0
    %4649 = vmatpush2.bf16.msra.mxu0 0
    %4650 = vmatprep.subr.bf16.mxu0 0
    %4651 = vmatpush2.bf16.msra.mxu0 0
    %4652 = vmatprep.subr.bf16.mxu0 0
    %4653 = vmatpush2.bf16.msra.mxu0 0
    %4654 = vmatprep.subr.bf16.mxu0 0
    %4655 = vmatpush2.bf16.msra.mxu0 0
    %4656 = vmatprep.subr.bf16.mxu0 0
    %4657 = vmatpush2.bf16.msra.mxu0 0
    %4658 = vmatprep.mubr.bf16.mxu0 0
    %4659 = vmatmul.mubr.bf16.gmra.mxu0 0
    %v4660 = vpop.f32.mrf.mxu0
    %v4661 = vadd.f32 0.0, %v4660
    %v4662 = vpop.f32.mrf.mxu0
    %v4663 = vadd.f32 0.0, %v4662
    %v4664 = vpop.f32.mrf.mxu0
    %v4665 = vpop.f32.mrf.mxu0
    %4666 = vdwg.mxu0
    %4667 = vmatprep.subr.bf16.mxu0 %v4593
    %4668 = vmatpush1.bf16.msra.mxu0 %v4592
    %4669 = vmatprep.subr.bf16.mxu0 %v4589
    %4670 = vmatpush1.bf16.msra.mxu0 %v4588
    %4671 = vmatprep.subr.bf16.mxu0 %v4585
    %4672 = vmatpush1.bf16.msra.mxu0 %v4584
    %4673 = vmatprep.subr.bf16.mxu0 %v4581
    %4674 = vmatpush1.bf16.msra.mxu0 %v4580
    %4675 = vmatprep.subr.bf16.mxu0 %v4577
    %4676 = vmatpush1.bf16.msra.mxu0 %v4576
    %4677 = vmatprep.subr.bf16.mxu0 %v4573
    %4678 = vmatpush1.bf16.msra.mxu0 %v4572
    %4679 = vmatprep.subr.bf16.mxu0 %v4569
    %4680 = vmatpush1.bf16.msra.mxu0 %v4568
    %4681 = vmatprep.subr.bf16.mxu0 %v4565
    %4682 = vmatpush1.bf16.msra.mxu0 %v4564
    %4683 = vmatprep.subr.bf16.mxu0 0
    %4684 = vmatpush2.bf16.msra.mxu0 0
    %4685 = vmatprep.subr.bf16.mxu0 0
    %4686 = vmatpush2.bf16.msra.mxu0 0
    %4687 = vmatprep.subr.bf16.mxu0 0
    %4688 = vmatpush2.bf16.msra.mxu0 0
    %4689 = vmatprep.subr.bf16.mxu0 0
    %4690 = vmatpush2.bf16.msra.mxu0 0
    %4691 = vmatprep.subr.bf16.mxu0 0
    %4692 = vmatpush2.bf16.msra.mxu0 0
    %4693 = vmatprep.subr.bf16.mxu0 0
    %4694 = vmatpush2.bf16.msra.mxu0 0
    %4695 = vmatprep.subr.bf16.mxu0 0
    %4696 = vmatpush2.bf16.msra.mxu0 0
    %4697 = vmatprep.subr.bf16.mxu0 0
    %4698 = vmatpush2.bf16.msra.mxu0 0
    %4699 = vmatprep.mubr.bf16.mxu0 0
    %4700 = vmatmul.mubr.bf16.gmra.mxu0 0
    %v4701 = vpop.f32.mrf.mxu0
    %v4702 = vadd.f32 0.0, %v4701
    %v4703 = vpop.f32.mrf.mxu0
    %v4704 = vadd.f32 0.0, %v4703
    %v4705 = vpop.f32.mrf.mxu0
    %v4706 = vpop.f32.mrf.mxu0
    %4707 = vdwg.mxu0
    %v4708 = vadd.f32 %v3853, %v4661
    %v4709 = vadd.f32 %v3855, %v4663
    %v4710 = vadd.f32 %v3904, %v4702
    %v4711 = vadd.f32 %v3906, %v4704
    %v4712 = vxor.u32 %v4708, 2147483648
    %v4713 = vmul.f32 %v4712, 1.442695
    %v4714 = vpow.pop %v4713
    %v4715 = vadd.f32 %v4714, 1.0
    %v4716 = vrcp.pop %v4715
    %v4717 = vmul.f32 1.0, %v4716
    %v4718 = vxor.u32 %v4709, 2147483648
    %v4719 = vmul.f32 %v4718, 1.442695
    %v4720 = vpow.pop %v4719
    %v4721 = vadd.f32 %v4720, 1.0
    %v4722 = vrcp.pop %v4721
    %v4723 = vmul.f32 1.0, %v4722
    %v4724 = vtanh.pop %v4710
    %v4725 = vxor.u32 %v4711, 2147483648
    %v4726 = vmul.f32 %v4725, 1.442695
    %v4727 = vpow.pop %v4726
    %v4728 = vadd.f32 %v4727, 1.0
    %v4729 = vrcp.pop %v4728
    %v4730 = vmul.f32 1.0, %v4729
    %v4731 = vmul.f32 %v4723, 0.0
    %v4732 = vmul.f32 %v4717, %v4724
    %v4733 = vadd.f32 %v4731, %v4732
    %v4734 = vtanh.pop %v4733
    %v4735 = vmul.f32 %v4730, %v4734
    %v4736 = vpack.c.bf16 %v4735, %v4735
    %4737 = vmatprep.subr.bf16.mxu0 %v4591
    %4738 = vmatpush1.bf16.msra.mxu0 %v4590
    %4739 = vmatprep.subr.bf16.mxu0 %v4587
    %4740 = vmatpush1.bf16.msra.mxu0 %v4586
    %4741 = vmatprep.subr.bf16.mxu0 %v4583
    %4742 = vmatpush1.bf16.msra.mxu0 %v4582
    %4743 = vmatprep.subr.bf16.mxu0 %v4579
    %4744 = vmatpush1.bf16.msra.mxu0 %v4578
    %4745 = vmatprep.subr.bf16.mxu0 %v4575
    %4746 = vmatpush1.bf16.msra.mxu0 %v4574
    %4747 = vmatprep.subr.bf16.mxu0 %v4571
    %4748 = vmatpush1.bf16.msra.mxu0 %v4570
    %4749 = vmatprep.subr.bf16.mxu0 %v4567
    %4750 = vmatpush1.bf16.msra.mxu0 %v4566
    %4751 = vmatprep.subr.bf16.mxu0 %v4563
    %4752 = vmatpush1.bf16.msra.mxu0 %v4562
    %4753 = vmatprep.subr.bf16.mxu0 0
    %4754 = vmatpush2.bf16.msra.mxu0 0
    %4755 = vmatprep.subr.bf16.mxu0 0
    %4756 = vmatpush2.bf16.msra.mxu0 0
    %4757 = vmatprep.subr.bf16.mxu0 0
    %4758 = vmatpush2.bf16.msra.mxu0 0
    %4759 = vmatprep.subr.bf16.mxu0 0
    %4760 = vmatpush2.bf16.msra.mxu0 0
    %4761 = vmatprep.subr.bf16.mxu0 0
    %4762 = vmatpush2.bf16.msra.mxu0 0
    %4763 = vmatprep.subr.bf16.mxu0 0
    %4764 = vmatpush2.bf16.msra.mxu0 0
    %4765 = vmatprep.subr.bf16.mxu0 0
    %4766 = vmatpush2.bf16.msra.mxu0 0
    %4767 = vmatprep.subr.bf16.mxu0 0
    %4768 = vmatpush2.bf16.msra.mxu0 0
    %4769 = vmatprep.mubr.bf16.mxu0 0
    %4770 = vmatmul.mubr.bf16.gmra.mxu0 %v4736
    %v4771 = vpop.f32.mrf.mxu0
    %v4772 = vadd.f32 0.0, %v4771
    %v4773 = vpop.f32.mrf.mxu0
    %v4774 = vadd.f32 0.0, %v4773
    %v4775 = vpop.f32.mrf.mxu0
    %v4776 = vpop.f32.mrf.mxu0
    %4777 = vdwg.mxu0
    %4778 = vmatprep.subr.bf16.mxu0 %v4593
    %4779 = vmatpush1.bf16.msra.mxu0 %v4592
    %4780 = vmatprep.subr.bf16.mxu0 %v4589
    %4781 = vmatpush1.bf16.msra.mxu0 %v4588
    %4782 = vmatprep.subr.bf16.mxu0 %v4585
    %4783 = vmatpush1.bf16.msra.mxu0 %v4584
    %4784 = vmatprep.subr.bf16.mxu0 %v4581
    %4785 = vmatpush1.bf16.msra.mxu0 %v4580
    %4786 = vmatprep.subr.bf16.mxu0 %v4577
    %4787 = vmatpush1.bf16.msra.mxu0 %v4576
    %4788 = vmatprep.subr.bf16.mxu0 %v4573
    %4789 = vmatpush1.bf16.msra.mxu0 %v4572
    %4790 = vmatprep.subr.bf16.mxu0 %v4569
    %4791 = vmatpush1.bf16.msra.mxu0 %v4568
    %4792 = vmatprep.subr.bf16.mxu0 %v4565
    %4793 = vmatpush1.bf16.msra.mxu0 %v4564
    %4794 = vmatprep.subr.bf16.mxu0 0
    %4795 = vmatpush2.bf16.msra.mxu0 0
    %4796 = vmatprep.subr.bf16.mxu0 0
    %4797 = vmatpush2.bf16.msra.mxu0 0
    %4798 = vmatprep.subr.bf16.mxu0 0
    %4799 = vmatpush2.bf16.msra.mxu0 0
    %4800 = vmatprep.subr.bf16.mxu0 0
    %4801 = vmatpush2.bf16.msra.mxu0 0
    %4802 = vmatprep.subr.bf16.mxu0 0
    %4803 = vmatpush2.bf16.msra.mxu0 0
    %4804 = vmatprep.subr.bf16.mxu0 0
    %4805 = vmatpush2.bf16.msra.mxu0 0
    %4806 = vmatprep.subr.bf16.mxu0 0
    %4807 = vmatpush2.bf16.msra.mxu0 0
    %4808 = vmatprep.subr.bf16.mxu0 0
    %4809 = vmatpush2.bf16.msra.mxu0 0
    %4810 = vmatprep.mubr.bf16.mxu0 0
    %4811 = vmatmul.mubr.bf16.gmra.mxu0 %v4736
    %v4812 = vpop.f32.mrf.mxu0
    %v4813 = vadd.f32 0.0, %v4812
    %v4814 = vpop.f32.mrf.mxu0
    %v4815 = vadd.f32 0.0, %v4814
    %v4816 = vpop.f32.mrf.mxu0
    %v4817 = vpop.f32.mrf.mxu0
    %4818 = vdwg.mxu0
    %v4819 = vadd.f32 %v3847, %v4772
    %v4820 = vadd.f32 %v3849, %v4774
    %v4821 = vadd.f32 %v3898, %v4813
    %v4822 = vadd.f32 %v3900, %v4815
    %v4823 = vxor.u32 %v4819, 2147483648
    %v4824 = vmul.f32 %v4823, 1.442695
    %v4825 = vpow.pop %v4824
    %v4826 = vadd.f32 %v4825, 1.0
    %v4827 = vrcp.pop %v4826
    %v4828 = vmul.f32 1.0, %v4827
    %v4829 = vxor.u32 %v4820, 2147483648
    %v4830 = vmul.f32 %v4829, 1.442695
    %v4831 = vpow.pop %v4830
    %v4832 = vadd.f32 %v4831, 1.0
    %v4833 = vrcp.pop %v4832
    %v4834 = vmul.f32 1.0, %v4833
    %v4835 = vtanh.pop %v4821
    %v4836 = vxor.u32 %v4822, 2147483648
    %v4837 = vmul.f32 %v4836, 1.442695
    %v4838 = vpow.pop %v4837
    %v4839 = vadd.f32 %v4838, 1.0
    %v4840 = vrcp.pop %v4839
    %v4841 = vmul.f32 1.0, %v4840
    %v4842 = vmul.f32 %v4834, %v4733
    %v4843 = vmul.f32 %v4828, %v4835
    %v4844 = vadd.f32 %v4842, %v4843
    %v4845 = vtanh.pop %v4844
    %v4846 = vmul.f32 %v4841, %v4845
    %v4847 = vpack.c.bf16 %v4846, %v4846
    %4848 = vmatprep.subr.bf16.mxu0 %v4591
    %4849 = vmatpush1.bf16.msra.mxu0 %v4590
    %4850 = vmatprep.subr.bf16.mxu0 %v4587
    %4851 = vmatpush1.bf16.msra.mxu0 %v4586
    %4852 = vmatprep.subr.bf16.mxu0 %v4583
    %4853 = vmatpush1.bf16.msra.mxu0 %v4582
    %4854 = vmatprep.subr.bf16.mxu0 %v4579
    %4855 = vmatpush1.bf16.msra.mxu0 %v4578
    %4856 = vmatprep.subr.bf16.mxu0 %v4575
    %4857 = vmatpush1.bf16.msra.mxu0 %v4574
    %4858 = vmatprep.subr.bf16.mxu0 %v4571
    %4859 = vmatpush1.bf16.msra.mxu0 %v4570
    %4860 = vmatprep.subr.bf16.mxu0 %v4567
    %4861 = vmatpush1.bf16.msra.mxu0 %v4566
    %4862 = vmatprep.subr.bf16.mxu0 %v4563
    %4863 = vmatpush1.bf16.msra.mxu0 %v4562
    %4864 = vmatprep.subr.bf16.mxu0 0
    %4865 = vmatpush2.bf16.msra.mxu0 0
    %4866 = vmatprep.subr.bf16.mxu0 0
    %4867 = vmatpush2.bf16.msra.mxu0 0
    %4868 = vmatprep.subr.bf16.mxu0 0
    %4869 = vmatpush2.bf16.msra.mxu0 0
    %4870 = vmatprep.subr.bf16.mxu0 0
    %4871 = vmatpush2.bf16.msra.mxu0 0
    %4872 = vmatprep.subr.bf16.mxu0 0
    %4873 = vmatpush2.bf16.msra.mxu0 0
    %4874 = vmatprep.subr.bf16.mxu0 0
    %4875 = vmatpush2.bf16.msra.mxu0 0
    %4876 = vmatprep.subr.bf16.mxu0 0
    %4877 = vmatpush2.bf16.msra.mxu0 0
    %4878 = vmatprep.subr.bf16.mxu0 0
    %4879 = vmatpush2.bf16.msra.mxu0 0
    %4880 = vmatprep.mubr.bf16.mxu0 0
    %4881 = vmatmul.mubr.bf16.gmra.mxu0 %v4847
    %v4882 = vpop.f32.mrf.mxu0
    %v4883 = vadd.f32 0.0, %v4882
    %v4884 = vpop.f32.mrf.mxu0
    %v4885 = vadd.f32 0.0, %v4884
    %v4886 = vpop.f32.mrf.mxu0
    %v4887 = vpop.f32.mrf.mxu0
    %4888 = vdwg.mxu0
    %4889 = vmatprep.subr.bf16.mxu0 %v4593
    %4890 = vmatpush1.bf16.msra.mxu0 %v4592
    %4891 = vmatprep.subr.bf16.mxu0 %v4589
    %4892 = vmatpush1.bf16.msra.mxu0 %v4588
    %4893 = vmatprep.subr.bf16.mxu0 %v4585
    %4894 = vmatpush1.bf16.msra.mxu0 %v4584
    %4895 = vmatprep.subr.bf16.mxu0 %v4581
    %4896 = vmatpush1.bf16.msra.mxu0 %v4580
    %4897 = vmatprep.subr.bf16.mxu0 %v4577
    %4898 = vmatpush1.bf16.msra.mxu0 %v4576
    %4899 = vmatprep.subr.bf16.mxu0 %v4573
    %4900 = vmatpush1.bf16.msra.mxu0 %v4572
    %4901 = vmatprep.subr.bf16.mxu0 %v4569
    %4902 = vmatpush1.bf16.msra.mxu0 %v4568
    %4903 = vmatprep.subr.bf16.mxu0 %v4565
    %4904 = vmatpush1.bf16.msra.mxu0 %v4564
    %4905 = vmatprep.subr.bf16.mxu0 0
    %4906 = vmatpush2.bf16.msra.mxu0 0
    %4907 = vmatprep.subr.bf16.mxu0 0
    %4908 = vmatpush2.bf16.msra.mxu0 0
    %4909 = vmatprep.subr.bf16.mxu0 0
    %4910 = vmatpush2.bf16.msra.mxu0 0
    %4911 = vmatprep.subr.bf16.mxu0 0
    %4912 = vmatpush2.bf16.msra.mxu0 0
    %4913 = vmatprep.subr.bf16.mxu0 0
    %4914 = vmatpush2.bf16.msra.mxu0 0
    %4915 = vmatprep.subr.bf16.mxu0 0
    %4916 = vmatpush2.bf16.msra.mxu0 0
    %4917 = vmatprep.subr.bf16.mxu0 0
    %4918 = vmatpush2.bf16.msra.mxu0 0
    %4919 = vmatprep.subr.bf16.mxu0 0
    %4920 = vmatpush2.bf16.msra.mxu0 0
    %4921 = vmatprep.mubr.bf16.mxu0 0
    %4922 = vmatmul.mubr.bf16.gmra.mxu0 %v4847
    %v4923 = vpop.f32.mrf.mxu0
    %v4924 = vadd.f32 0.0, %v4923
    %v4925 = vpop.f32.mrf.mxu0
    %v4926 = vadd.f32 0.0, %v4925
    %v4927 = vpop.f32.mrf.mxu0
    %v4928 = vpop.f32.mrf.mxu0
    %4929 = vdwg.mxu0
    %v4930 = vadd.f32 %v3843, %v4883
    %v4931 = vadd.f32 %v3845, %v4885
    %v4932 = vadd.f32 %v3894, %v4924
    %v4933 = vadd.f32 %v3896, %v4926
    %v4934 = vxor.u32 %v4930, 2147483648
    %v4935 = vmul.f32 %v4934, 1.442695
    %v4936 = vpow.pop %v4935
    %v4937 = vadd.f32 %v4936, 1.0
    %v4938 = vrcp.pop %v4937
    %v4939 = vmul.f32 1.0, %v4938
    %v4940 = vxor.u32 %v4931, 2147483648
    %v4941 = vmul.f32 %v4940, 1.442695
    %v4942 = vpow.pop %v4941
    %v4943 = vadd.f32 %v4942, 1.0
    %v4944 = vrcp.pop %v4943
    %v4945 = vmul.f32 1.0, %v4944
    %v4946 = vtanh.pop %v4932
    %v4947 = vxor.u32 %v4933, 2147483648
    %v4948 = vmul.f32 %v4947, 1.442695
    %v4949 = vpow.pop %v4948
    %v4950 = vadd.f32 %v4949, 1.0
    %v4951 = vrcp.pop %v4950
    %v4952 = vmul.f32 1.0, %v4951
    %v4953 = vmul.f32 %v4945, %v4844
    %v4954 = vmul.f32 %v4939, %v4946
    %v4955 = vadd.f32 %v4953, %v4954
    %v4956 = vtanh.pop %v4955
    %v4957 = vmul.f32 %v4952, %v4956
    %v4958 = vld [vmem:[#allocation4] sm:$0xff]
    %v4959 = vld [vmem:[#allocation4 + $0x8] sm:$0xff]
    %v4960 = vld [vmem:[#allocation4 + $0x10] sm:$0xff]
    %v4961 = vld [vmem:[#allocation4 + $0x18] sm:$0xff]
    %v4962 = vld [vmem:[#allocation4 + $0x20] sm:$0xff]
    %v4963 = vld [vmem:[#allocation4 + $0x28] sm:$0xff]
    %v4964 = vld [vmem:[#allocation4 + $0x30] sm:$0xff]
    %v4965 = vld [vmem:[#allocation4 + $0x38] sm:$0xff]
    %v4966 = vld [vmem:[#allocation4 + $0x40] sm:$0xff]
    %v4967 = vld [vmem:[#allocation4 + $0x48] sm:$0xff]
    %v4968 = vld [vmem:[#allocation4 + $0x50] sm:$0xff]
    %v4969 = vld [vmem:[#allocation4 + $0x58] sm:$0xff]
    %v4970 = vld [vmem:[#allocation4 + $0x60] sm:$0xff]
    %v4971 = vld [vmem:[#allocation4 + $0x68] sm:$0xff]
    %v4972 = vld [vmem:[#allocation4 + $0x70] sm:$0xff]
    %v4973 = vld [vmem:[#allocation4 + $0x78] sm:$0xff]
    %v4974 = vld [vmem:[#allocation4 + $0x80] sm:$0xff]
    %v4975 = vld [vmem:[#allocation4 + $0x88] sm:$0xff]
    %v4976 = vld [vmem:[#allocation4 + $0x90] sm:$0xff]
    %v4977 = vld [vmem:[#allocation4 + $0x98] sm:$0xff]
    %v4978 = vld [vmem:[#allocation4 + $0xa0] sm:$0xff]
    %v4979 = vld [vmem:[#allocation4 + $0xa8] sm:$0xff]
    %v4980 = vld [vmem:[#allocation4 + $0xb0] sm:$0xff]
    %v4981 = vld [vmem:[#allocation4 + $0xb8] sm:$0xff]
    %v4982 = vld [vmem:[#allocation4 + $0xc0] sm:$0xff]
    %v4983 = vld [vmem:[#allocation4 + $0xc8] sm:$0xff]
    %v4984 = vld [vmem:[#allocation4 + $0xd0] sm:$0xff]
    %v4985 = vld [vmem:[#allocation4 + $0xd8] sm:$0xff]
    %v4986 = vld [vmem:[#allocation4 + $0xe0] sm:$0xff]
    %v4987 = vld [vmem:[#allocation4 + $0xe8] sm:$0xff]
    %v4988 = vld [vmem:[#allocation4 + $0xf0] sm:$0xff]
    %v4989 = vld [vmem:[#allocation4 + $0xf8] sm:$0xff]
    %v4990 = vld [vmem:[#allocation4 + $0x100] sm:$0xff]
    %v4991 = vld [vmem:[#allocation4 + $0x108] sm:$0xff]
    %v4992 = vld [vmem:[#allocation4 + $0x110] sm:$0xff]
    %v4993 = vld [vmem:[#allocation4 + $0x118] sm:$0xff]
    %v4994 = vld [vmem:[#allocation4 + $0x120] sm:$0xff]
    %v4995 = vld [vmem:[#allocation4 + $0x128] sm:$0xff]
    %v4996 = vld [vmem:[#allocation4 + $0x130] sm:$0xff]
    %v4997 = vld [vmem:[#allocation4 + $0x138] sm:$0xff]
    %v4998 = vld [vmem:[#allocation4 + $0x140] sm:$0xff]
    %v4999 = vld [vmem:[#allocation4 + $0x148] sm:$0xff]
    %v5000 = vld [vmem:[#allocation4 + $0x150] sm:$0xff]
    %v5001 = vld [vmem:[#allocation4 + $0x158] sm:$0xff]
    %v5002 = vld [vmem:[#allocation4 + $0x160] sm:$0xff]
    %v5003 = vld [vmem:[#allocation4 + $0x168] sm:$0xff]
    %v5004 = vld [vmem:[#allocation4 + $0x170] sm:$0xff]
    %v5005 = vld [vmem:[#allocation4 + $0x178] sm:$0xff]
    %v5006 = vld [vmem:[#allocation4 + $0x180] sm:$0xff]
    %v5007 = vld [vmem:[#allocation4 + $0x188] sm:$0xff]
    %v5008 = vld [vmem:[#allocation4 + $0x190] sm:$0xff]
    %v5009 = vld [vmem:[#allocation4 + $0x198] sm:$0xff]
    %v5010 = vld [vmem:[#allocation4 + $0x1a0] sm:$0xff]
    %v5011 = vld [vmem:[#allocation4 + $0x1a8] sm:$0xff]
    %v5012 = vld [vmem:[#allocation4 + $0x1b0] sm:$0xff]
    %v5013 = vld [vmem:[#allocation4 + $0x1b8] sm:$0xff]
    %v5014 = vld [vmem:[#allocation4 + $0x1c0] sm:$0xff]
    %v5015 = vld [vmem:[#allocation4 + $0x1c8] sm:$0xff]
    %v5016 = vld [vmem:[#allocation4 + $0x1d0] sm:$0xff]
    %v5017 = vld [vmem:[#allocation4 + $0x1d8] sm:$0xff]
    %v5018 = vld [vmem:[#allocation4 + $0x1e0] sm:$0xff]
    %v5019 = vld [vmem:[#allocation4 + $0x1e8] sm:$0xff]
    %v5020 = vld [vmem:[#allocation4 + $0x1f0] sm:$0xff]
    %v5021 = vld [vmem:[#allocation4 + $0x1f8] sm:$0xff]
    %v5022 = vld [vmem:[#allocation4 + $0x200] sm:$0xff]
    %v5023 = vld [vmem:[#allocation4 + $0x208] sm:$0xff]
    %v5024 = vld [vmem:[#allocation4 + $0x210] sm:$0xff]
    %v5025 = vld [vmem:[#allocation4 + $0x218] sm:$0xff]
    %v5026 = vld [vmem:[#allocation4 + $0x220] sm:$0xff]
    %v5027 = vld [vmem:[#allocation4 + $0x228] sm:$0xff]
    %v5028 = vld [vmem:[#allocation4 + $0x230] sm:$0xff]
    %v5029 = vld [vmem:[#allocation4 + $0x238] sm:$0xff]
    %v5030 = vld [vmem:[#allocation4 + $0x240] sm:$0xff]
    %v5031 = vld [vmem:[#allocation4 + $0x248] sm:$0xff]
    %v5032 = vld [vmem:[#allocation4 + $0x250] sm:$0xff]
    %v5033 = vld [vmem:[#allocation4 + $0x258] sm:$0xff]
    %v5034 = vld [vmem:[#allocation4 + $0x260] sm:$0xff]
    %v5035 = vld [vmem:[#allocation4 + $0x268] sm:$0xff]
    %v5036 = vld [vmem:[#allocation4 + $0x270] sm:$0xff]
    %v5037 = vld [vmem:[#allocation4 + $0x278] sm:$0xff]
    %v5038 = vld [vmem:[#allocation4 + $0x280] sm:$0xff]
    %v5039 = vld [vmem:[#allocation4 + $0x288] sm:$0xff]
    %v5040 = vld [vmem:[#allocation4 + $0x290] sm:$0xff]
    %v5041 = vld [vmem:[#allocation4 + $0x298] sm:$0xff]
    %v5042 = vld [vmem:[#allocation4 + $0x2a0] sm:$0xff]
    %v5043 = vld [vmem:[#allocation4 + $0x2a8] sm:$0xff]
    %v5044 = vld [vmem:[#allocation4 + $0x2b0] sm:$0xff]
    %v5045 = vld [vmem:[#allocation4 + $0x2b8] sm:$0xff]
    %v5046 = vld [vmem:[#allocation4 + $0x2c0] sm:$0xff]
    %v5047 = vld [vmem:[#allocation4 + $0x2c8] sm:$0xff]
    %v5048 = vld [vmem:[#allocation4 + $0x2d0] sm:$0xff]
    %v5049 = vld [vmem:[#allocation4 + $0x2d8] sm:$0xff]
    %v5050 = vld [vmem:[#allocation4 + $0x2e0] sm:$0xff]
    %v5051 = vld [vmem:[#allocation4 + $0x2e8] sm:$0xff]
    %v5052 = vld [vmem:[#allocation4 + $0x2f0] sm:$0xff]
    %v5053 = vld [vmem:[#allocation4 + $0x2f8] sm:$0xff]
    %v5054 = vld [vmem:[#allocation4 + $0x300] sm:$0xff]
    %v5055 = vld [vmem:[#allocation4 + $0x308] sm:$0xff]
    %v5056 = vld [vmem:[#allocation4 + $0x310] sm:$0xff]
    %v5057 = vld [vmem:[#allocation4 + $0x318] sm:$0xff]
    %v5058 = vld [vmem:[#allocation4 + $0x320] sm:$0xff]
    %v5059 = vld [vmem:[#allocation4 + $0x328] sm:$0xff]
    %v5060 = vld [vmem:[#allocation4 + $0x330] sm:$0xff]
    %v5061 = vld [vmem:[#allocation4 + $0x338] sm:$0xff]
    %v5062 = vld [vmem:[#allocation4 + $0x340] sm:$0xff]
    %v5063 = vld [vmem:[#allocation4 + $0x348] sm:$0xff]
    %v5064 = vld [vmem:[#allocation4 + $0x350] sm:$0xff]
    %v5065 = vld [vmem:[#allocation4 + $0x358] sm:$0xff]
    %v5066 = vld [vmem:[#allocation4 + $0x360] sm:$0xff]
    %v5067 = vld [vmem:[#allocation4 + $0x368] sm:$0xff]
    %v5068 = vld [vmem:[#allocation4 + $0x370] sm:$0xff]
    %v5069 = vld [vmem:[#allocation4 + $0x378] sm:$0xff]
    %v5070 = vld [vmem:[#allocation4 + $0x380] sm:$0xff]
    %v5071 = vld [vmem:[#allocation4 + $0x388] sm:$0xff]
    %v5072 = vld [vmem:[#allocation4 + $0x390] sm:$0xff]
    %v5073 = vld [vmem:[#allocation4 + $0x398] sm:$0xff]
    %v5074 = vld [vmem:[#allocation4 + $0x3a0] sm:$0xff]
    %v5075 = vld [vmem:[#allocation4 + $0x3a8] sm:$0xff]
    %v5076 = vld [vmem:[#allocation4 + $0x3b0] sm:$0xff]
    %v5077 = vld [vmem:[#allocation4 + $0x3b8] sm:$0xff]
    %v5078 = vld [vmem:[#allocation4 + $0x3c0] sm:$0xff]
    %v5079 = vld [vmem:[#allocation4 + $0x3c8] sm:$0xff]
    %v5080 = vld [vmem:[#allocation4 + $0x3d0] sm:$0xff]
    %v5081 = vld [vmem:[#allocation4 + $0x3d8] sm:$0xff]
    %v5082 = vld [vmem:[#allocation4 + $0x3e0] sm:$0xff]
    %v5083 = vld [vmem:[#allocation4 + $0x3e8] sm:$0xff]
    %v5084 = vld [vmem:[#allocation4 + $0x3f0] sm:$0xff]
    %v5085 = vld [vmem:[#allocation4 + $0x3f8] sm:$0xff]
    %v5086 = vpack.c.bf16 %v4354, %v4243
    %v5087 = vpack.c.bf16 %v4846, %v4957
    %v5088 = vpack.c.bf16 %v4465, %v4465
    %s5089 = scalar_lea.vmem [#allocation30], 1
    %v5090 = vld [vmem:[%s5089] ss:$2 sm:$0xff]
    %v5092 = vlaneseq
    %v5093 = vshrl.u32 %v5092, 7
    %v5094 = vsub.s32 0, %v5093
    %v5095 = vrot.slane %v5090, %v5094
    %v5096 = vlaneseq
    %v5097 = vshrl.u32 %v5096, 7
    %v5098 = vsub.s32 1, %v5097
    %v5099 = vrot.slane %v5090, %v5098
    %v5100 = vlaneseq
    %v5101 = vshrl.u32 %v5100, 7
    %v5102 = vsub.s32 2, %v5101
    %v5103 = vrot.slane %v5090, %v5102
    %v5104 = vlaneseq
    %v5105 = vshrl.u32 %v5104, 7
    %v5106 = vsub.s32 3, %v5105
    %v5107 = vrot.slane %v5090, %v5106
    %v5108 = vlaneseq
    %v5109 = vshrl.u32 %v5108, 7
    %v5110 = vsub.s32 4, %v5109
    %v5111 = vrot.slane %v5090, %v5110
    %v5112 = vlaneseq
    %v5113 = vshrl.u32 %v5112, 7
    %v5114 = vsub.s32 5, %v5113
    %v5115 = vrot.slane %v5090, %v5114
    %v5116 = vlaneseq
    %v5117 = vshrl.u32 %v5116, 7
    %v5118 = vsub.s32 6, %v5117
    %v5119 = vrot.slane %v5090, %v5118
    %v5120 = vlaneseq
    %v5121 = vshrl.u32 %v5120, 7
    %v5122 = vsub.s32 7, %v5121
    %v5123 = vrot.slane %v5090, %v5122
    %v5260 = vunpack.c.l.b16 %v4958
    %v5261 = vunpack.c.h.b16 %v4958
    %v5262 = vunpack.c.l.b16 %v4959
    %v5263 = vunpack.c.h.b16 %v4959
    %v5264 = vunpack.c.l.b16 %v4960
    %v5265 = vunpack.c.h.b16 %v4960
    %v5266 = vunpack.c.l.b16 %v4961
    %v5267 = vunpack.c.h.b16 %v4961
    %v5268 = vunpack.c.l.b16 %v4962
    %v5269 = vunpack.c.h.b16 %v4962
    %v5270 = vunpack.c.l.b16 %v4963
    %v5271 = vunpack.c.h.b16 %v4963
    %v5272 = vunpack.c.l.b16 %v4964
    %v5273 = vunpack.c.h.b16 %v4964
    %v5274 = vunpack.c.l.b16 %v4965
    %v5275 = vunpack.c.h.b16 %v4965
    %v5276 = vunpack.c.l.b16 %v4966
    %v5277 = vunpack.c.h.b16 %v4966
    %v5278 = vunpack.c.l.b16 %v4967
    %v5279 = vunpack.c.h.b16 %v4967
    %v5280 = vunpack.c.l.b16 %v4968
    %v5281 = vunpack.c.h.b16 %v4968
    %v5282 = vunpack.c.l.b16 %v4969
    %v5283 = vunpack.c.h.b16 %v4969
    %v5284 = vunpack.c.l.b16 %v4970
    %v5285 = vunpack.c.h.b16 %v4970
    %v5286 = vunpack.c.l.b16 %v4971
    %v5287 = vunpack.c.h.b16 %v4971
    %v5288 = vunpack.c.l.b16 %v4972
    %v5289 = vunpack.c.h.b16 %v4972
    %v5290 = vunpack.c.l.b16 %v4973
    %v5291 = vunpack.c.h.b16 %v4973
    %v5292 = vunpack.c.l.b16 %v4974
    %v5293 = vunpack.c.h.b16 %v4974
    %v5294 = vunpack.c.l.b16 %v4975
    %v5295 = vunpack.c.h.b16 %v4975
    %v5296 = vunpack.c.l.b16 %v4976
    %v5297 = vunpack.c.h.b16 %v4976
    %v5298 = vunpack.c.l.b16 %v4977
    %v5299 = vunpack.c.h.b16 %v4977
    %v5300 = vunpack.c.l.b16 %v4978
    %v5301 = vunpack.c.h.b16 %v4978
    %v5302 = vunpack.c.l.b16 %v4979
    %v5303 = vunpack.c.h.b16 %v4979
    %v5304 = vunpack.c.l.b16 %v4980
    %v5305 = vunpack.c.h.b16 %v4980
    %v5306 = vunpack.c.l.b16 %v4981
    %v5307 = vunpack.c.h.b16 %v4981
    %v5308 = vunpack.c.l.b16 %v4982
    %v5309 = vunpack.c.h.b16 %v4982
    %v5310 = vunpack.c.l.b16 %v4983
    %v5311 = vunpack.c.h.b16 %v4983
    %v5312 = vunpack.c.l.b16 %v4984
    %v5313 = vunpack.c.h.b16 %v4984
    %v5314 = vunpack.c.l.b16 %v4985
    %v5315 = vunpack.c.h.b16 %v4985
    %v5316 = vunpack.c.l.b16 %v4986
    %v5317 = vunpack.c.h.b16 %v4986
    %v5318 = vunpack.c.l.b16 %v4987
    %v5319 = vunpack.c.h.b16 %v4987
    %v5320 = vunpack.c.l.b16 %v4988
    %v5321 = vunpack.c.h.b16 %v4988
    %v5322 = vunpack.c.l.b16 %v4989
    %v5323 = vunpack.c.h.b16 %v4989
    %v5324 = vunpack.c.l.b16 %v4990
    %v5325 = vunpack.c.h.b16 %v4990
    %v5326 = vunpack.c.l.b16 %v4991
    %v5327 = vunpack.c.h.b16 %v4991
    %v5328 = vunpack.c.l.b16 %v4992
    %v5329 = vunpack.c.h.b16 %v4992
    %v5330 = vunpack.c.l.b16 %v4993
    %v5331 = vunpack.c.h.b16 %v4993
    %v5332 = vunpack.c.l.b16 %v4994
    %v5333 = vunpack.c.h.b16 %v4994
    %v5334 = vunpack.c.l.b16 %v4995
    %v5335 = vunpack.c.h.b16 %v4995
    %v5336 = vunpack.c.l.b16 %v4996
    %v5337 = vunpack.c.h.b16 %v4996
    %v5338 = vunpack.c.l.b16 %v4997
    %v5339 = vunpack.c.h.b16 %v4997
    %v5340 = vunpack.c.l.b16 %v4998
    %v5341 = vunpack.c.h.b16 %v4998
    %v5342 = vunpack.c.l.b16 %v4999
    %v5343 = vunpack.c.h.b16 %v4999
    %v5344 = vunpack.c.l.b16 %v5000
    %v5345 = vunpack.c.h.b16 %v5000
    %v5346 = vunpack.c.l.b16 %v5001
    %v5347 = vunpack.c.h.b16 %v5001
    %v5348 = vunpack.c.l.b16 %v5002
    %v5349 = vunpack.c.h.b16 %v5002
    %v5350 = vunpack.c.l.b16 %v5003
    %v5351 = vunpack.c.h.b16 %v5003
    %v5352 = vunpack.c.l.b16 %v5004
    %v5353 = vunpack.c.h.b16 %v5004
    %v5354 = vunpack.c.l.b16 %v5005
    %v5355 = vunpack.c.h.b16 %v5005
    %v5356 = vunpack.c.l.b16 %v5006
    %v5357 = vunpack.c.h.b16 %v5006
    %v5358 = vunpack.c.l.b16 %v5007
    %v5359 = vunpack.c.h.b16 %v5007
    %v5360 = vunpack.c.l.b16 %v5008
    %v5361 = vunpack.c.h.b16 %v5008
    %v5362 = vunpack.c.l.b16 %v5009
    %v5363 = vunpack.c.h.b16 %v5009
    %v5364 = vunpack.c.l.b16 %v5010
    %v5365 = vunpack.c.h.b16 %v5010
    %v5366 = vunpack.c.l.b16 %v5011
    %v5367 = vunpack.c.h.b16 %v5011
    %v5368 = vunpack.c.l.b16 %v5012
    %v5369 = vunpack.c.h.b16 %v5012
    %v5370 = vunpack.c.l.b16 %v5013
    %v5371 = vunpack.c.h.b16 %v5013
    %v5372 = vunpack.c.l.b16 %v5014
    %v5373 = vunpack.c.h.b16 %v5014
    %v5374 = vunpack.c.l.b16 %v5015
    %v5375 = vunpack.c.h.b16 %v5015
    %v5376 = vunpack.c.l.b16 %v5016
    %v5377 = vunpack.c.h.b16 %v5016
    %v5378 = vunpack.c.l.b16 %v5017
    %v5379 = vunpack.c.h.b16 %v5017
    %v5380 = vunpack.c.l.b16 %v5018
    %v5381 = vunpack.c.h.b16 %v5018
    %v5382 = vunpack.c.l.b16 %v5019
    %v5383 = vunpack.c.h.b16 %v5019
    %v5384 = vunpack.c.l.b16 %v5020
    %v5385 = vunpack.c.h.b16 %v5020
    %v5386 = vunpack.c.l.b16 %v5021
    %v5387 = vunpack.c.h.b16 %v5021
    %v5388 = vunpack.c.l.b16 %v5022
    %v5389 = vunpack.c.h.b16 %v5022
    %v5390 = vunpack.c.l.b16 %v5023
    %v5391 = vunpack.c.h.b16 %v5023
    %v5392 = vunpack.c.l.b16 %v5024
    %v5393 = vunpack.c.h.b16 %v5024
    %v5394 = vunpack.c.l.b16 %v5025
    %v5395 = vunpack.c.h.b16 %v5025
    %v5396 = vunpack.c.l.b16 %v5026
    %v5397 = vunpack.c.h.b16 %v5026
    %v5398 = vunpack.c.l.b16 %v5027
    %v5399 = vunpack.c.h.b16 %v5027
    %v5400 = vunpack.c.l.b16 %v5028
    %v5401 = vunpack.c.h.b16 %v5028
    %v5402 = vunpack.c.l.b16 %v5029
    %v5403 = vunpack.c.h.b16 %v5029
    %v5404 = vunpack.c.l.b16 %v5030
    %v5405 = vunpack.c.h.b16 %v5030
    %v5406 = vunpack.c.l.b16 %v5031
    %v5407 = vunpack.c.h.b16 %v5031
    %v5408 = vunpack.c.l.b16 %v5032
    %v5409 = vunpack.c.h.b16 %v5032
    %v5410 = vunpack.c.l.b16 %v5033
    %v5411 = vunpack.c.h.b16 %v5033
    %v5412 = vunpack.c.l.b16 %v5034
    %v5413 = vunpack.c.h.b16 %v5034
    %v5414 = vunpack.c.l.b16 %v5035
    %v5415 = vunpack.c.h.b16 %v5035
    %v5416 = vunpack.c.l.b16 %v5036
    %v5417 = vunpack.c.h.b16 %v5036
    %v5418 = vunpack.c.l.b16 %v5037
    %v5419 = vunpack.c.h.b16 %v5037
    %v5420 = vunpack.c.l.b16 %v5038
    %v5421 = vunpack.c.h.b16 %v5038
    %v5422 = vunpack.c.l.b16 %v5039
    %v5423 = vunpack.c.h.b16 %v5039
    %v5424 = vunpack.c.l.b16 %v5040
    %v5425 = vunpack.c.h.b16 %v5040
    %v5426 = vunpack.c.l.b16 %v5041
    %v5427 = vunpack.c.h.b16 %v5041
    %v5428 = vunpack.c.l.b16 %v5042
    %v5429 = vunpack.c.h.b16 %v5042
    %v5430 = vunpack.c.l.b16 %v5043
    %v5431 = vunpack.c.h.b16 %v5043
    %v5432 = vunpack.c.l.b16 %v5044
    %v5433 = vunpack.c.h.b16 %v5044
    %v5434 = vunpack.c.l.b16 %v5045
    %v5435 = vunpack.c.h.b16 %v5045
    %v5436 = vunpack.c.l.b16 %v5046
    %v5437 = vunpack.c.h.b16 %v5046
    %v5438 = vunpack.c.l.b16 %v5047
    %v5439 = vunpack.c.h.b16 %v5047
    %v5440 = vunpack.c.l.b16 %v5048
    %v5441 = vunpack.c.h.b16 %v5048
    %v5442 = vunpack.c.l.b16 %v5049
    %v5443 = vunpack.c.h.b16 %v5049
    %v5444 = vunpack.c.l.b16 %v5050
    %v5445 = vunpack.c.h.b16 %v5050
    %v5446 = vunpack.c.l.b16 %v5051
    %v5447 = vunpack.c.h.b16 %v5051
    %v5448 = vunpack.c.l.b16 %v5052
    %v5449 = vunpack.c.h.b16 %v5052
    %v5450 = vunpack.c.l.b16 %v5053
    %v5451 = vunpack.c.h.b16 %v5053
    %v5452 = vunpack.c.l.b16 %v5054
    %v5453 = vunpack.c.h.b16 %v5054
    %v5454 = vunpack.c.l.b16 %v5055
    %v5455 = vunpack.c.h.b16 %v5055
    %v5456 = vunpack.c.l.b16 %v5056
    %v5457 = vunpack.c.h.b16 %v5056
    %v5458 = vunpack.c.l.b16 %v5057
    %v5459 = vunpack.c.h.b16 %v5057
    %v5460 = vunpack.c.l.b16 %v5058
    %v5461 = vunpack.c.h.b16 %v5058
    %v5462 = vunpack.c.l.b16 %v5059
    %v5463 = vunpack.c.h.b16 %v5059
    %v5464 = vunpack.c.l.b16 %v5060
    %v5465 = vunpack.c.h.b16 %v5060
    %v5466 = vunpack.c.l.b16 %v5061
    %v5467 = vunpack.c.h.b16 %v5061
    %v5468 = vunpack.c.l.b16 %v5062
    %v5469 = vunpack.c.h.b16 %v5062
    %v5470 = vunpack.c.l.b16 %v5063
    %v5471 = vunpack.c.h.b16 %v5063
    %v5472 = vunpack.c.l.b16 %v5064
    %v5473 = vunpack.c.h.b16 %v5064
    %v5474 = vunpack.c.l.b16 %v5065
    %v5475 = vunpack.c.h.b16 %v5065
    %v5476 = vunpack.c.l.b16 %v5066
    %v5477 = vunpack.c.h.b16 %v5066
    %v5478 = vunpack.c.l.b16 %v5067
    %v5479 = vunpack.c.h.b16 %v5067
    %v5480 = vunpack.c.l.b16 %v5068
    %v5481 = vunpack.c.h.b16 %v5068
    %v5482 = vunpack.c.l.b16 %v5069
    %v5483 = vunpack.c.h.b16 %v5069
    %v5484 = vunpack.c.l.b16 %v5070
    %v5485 = vunpack.c.h.b16 %v5070
    %v5486 = vunpack.c.l.b16 %v5071
    %v5487 = vunpack.c.h.b16 %v5071
    %v5488 = vunpack.c.l.b16 %v5072
    %v5489 = vunpack.c.h.b16 %v5072
    %v5490 = vunpack.c.l.b16 %v5073
    %v5491 = vunpack.c.h.b16 %v5073
    %v5492 = vunpack.c.l.b16 %v5074
    %v5493 = vunpack.c.h.b16 %v5074
    %v5494 = vunpack.c.l.b16 %v5075
    %v5495 = vunpack.c.h.b16 %v5075
    %v5496 = vunpack.c.l.b16 %v5076
    %v5497 = vunpack.c.h.b16 %v5076
    %v5498 = vunpack.c.l.b16 %v5077
    %v5499 = vunpack.c.h.b16 %v5077
    %v5500 = vunpack.c.l.b16 %v5078
    %v5501 = vunpack.c.h.b16 %v5078
    %v5502 = vunpack.c.l.b16 %v5079
    %v5503 = vunpack.c.h.b16 %v5079
    %v5504 = vunpack.c.l.b16 %v5080
    %v5505 = vunpack.c.h.b16 %v5080
    %v5506 = vunpack.c.l.b16 %v5081
    %v5507 = vunpack.c.h.b16 %v5081
    %v5508 = vunpack.c.l.b16 %v5082
    %v5509 = vunpack.c.h.b16 %v5082
    %v5510 = vunpack.c.l.b16 %v5083
    %v5511 = vunpack.c.h.b16 %v5083
    %v5512 = vunpack.c.l.b16 %v5084
    %v5513 = vunpack.c.h.b16 %v5084
    %v5514 = vunpack.c.l.b16 %v5085
    %v5515 = vunpack.c.h.b16 %v5085
    %v5516 = vpack.c.b16 %v5268, %v5260
    %v5517 = vpack.c.b16 %v5269, %v5261
    %v5518 = vpack.c.b16 %v5270, %v5262
    %v5519 = vpack.c.b16 %v5271, %v5263
    %v5520 = vpack.c.b16 %v5272, %v5264
    %v5521 = vpack.c.b16 %v5273, %v5265
    %v5522 = vpack.c.b16 %v5274, %v5266
    %v5523 = vpack.c.b16 %v5275, %v5267
    %v5524 = vpack.c.b16 %v5284, %v5276
    %v5525 = vpack.c.b16 %v5285, %v5277
    %v5526 = vpack.c.b16 %v5286, %v5278
    %v5527 = vpack.c.b16 %v5287, %v5279
    %v5528 = vpack.c.b16 %v5288, %v5280
    %v5529 = vpack.c.b16 %v5289, %v5281
    %v5530 = vpack.c.b16 %v5290, %v5282
    %v5531 = vpack.c.b16 %v5291, %v5283
    %v5532 = vpack.c.b16 %v5300, %v5292
    %v5533 = vpack.c.b16 %v5301, %v5293
    %v5534 = vpack.c.b16 %v5302, %v5294
    %v5535 = vpack.c.b16 %v5303, %v5295
    %v5536 = vpack.c.b16 %v5304, %v5296
    %v5537 = vpack.c.b16 %v5305, %v5297
    %v5538 = vpack.c.b16 %v5306, %v5298
    %v5539 = vpack.c.b16 %v5307, %v5299
    %v5540 = vpack.c.b16 %v5316, %v5308
    %v5541 = vpack.c.b16 %v5317, %v5309
    %v5542 = vpack.c.b16 %v5318, %v5310
    %v5543 = vpack.c.b16 %v5319, %v5311
    %v5544 = vpack.c.b16 %v5320, %v5312
    %v5545 = vpack.c.b16 %v5321, %v5313
    %v5546 = vpack.c.b16 %v5322, %v5314
    %v5547 = vpack.c.b16 %v5323, %v5315
    %v5548 = vpack.c.b16 %v5332, %v5324
    %v5549 = vpack.c.b16 %v5333, %v5325
    %v5550 = vpack.c.b16 %v5334, %v5326
    %v5551 = vpack.c.b16 %v5335, %v5327
    %v5552 = vpack.c.b16 %v5336, %v5328
    %v5553 = vpack.c.b16 %v5337, %v5329
    %v5554 = vpack.c.b16 %v5338, %v5330
    %v5555 = vpack.c.b16 %v5339, %v5331
    %v5556 = vpack.c.b16 %v5348, %v5340
    %v5557 = vpack.c.b16 %v5349, %v5341
    %v5558 = vpack.c.b16 %v5350, %v5342
    %v5559 = vpack.c.b16 %v5351, %v5343
    %v5560 = vpack.c.b16 %v5352, %v5344
    %v5561 = vpack.c.b16 %v5353, %v5345
    %v5562 = vpack.c.b16 %v5354, %v5346
    %v5563 = vpack.c.b16 %v5355, %v5347
    %v5564 = vpack.c.b16 %v5364, %v5356
    %v5565 = vpack.c.b16 %v5365, %v5357
    %v5566 = vpack.c.b16 %v5366, %v5358
    %v5567 = vpack.c.b16 %v5367, %v5359
    %v5568 = vpack.c.b16 %v5368, %v5360
    %v5569 = vpack.c.b16 %v5369, %v5361
    %v5570 = vpack.c.b16 %v5370, %v5362
    %v5571 = vpack.c.b16 %v5371, %v5363
    %v5572 = vpack.c.b16 %v5380, %v5372
    %v5573 = vpack.c.b16 %v5381, %v5373
    %v5574 = vpack.c.b16 %v5382, %v5374
    %v5575 = vpack.c.b16 %v5383, %v5375
    %v5576 = vpack.c.b16 %v5384, %v5376
    %v5577 = vpack.c.b16 %v5385, %v5377
    %v5578 = vpack.c.b16 %v5386, %v5378
    %v5579 = vpack.c.b16 %v5387, %v5379
    %v5580 = vpack.c.b16 %v5396, %v5388
    %v5581 = vpack.c.b16 %v5397, %v5389
    %v5582 = vpack.c.b16 %v5398, %v5390
    %v5583 = vpack.c.b16 %v5399, %v5391
    %v5584 = vpack.c.b16 %v5400, %v5392
    %v5585 = vpack.c.b16 %v5401, %v5393
    %v5586 = vpack.c.b16 %v5402, %v5394
    %v5587 = vpack.c.b16 %v5403, %v5395
    %v5588 = vpack.c.b16 %v5412, %v5404
    %v5589 = vpack.c.b16 %v5413, %v5405
    %v5590 = vpack.c.b16 %v5414, %v5406
    %v5591 = vpack.c.b16 %v5415, %v5407
    %v5592 = vpack.c.b16 %v5416, %v5408
    %v5593 = vpack.c.b16 %v5417, %v5409
    %v5594 = vpack.c.b16 %v5418, %v5410
    %v5595 = vpack.c.b16 %v5419, %v5411
    %v5596 = vpack.c.b16 %v5428, %v5420
    %v5597 = vpack.c.b16 %v5429, %v5421
    %v5598 = vpack.c.b16 %v5430, %v5422
    %v5599 = vpack.c.b16 %v5431, %v5423
    %v5600 = vpack.c.b16 %v5432, %v5424
    %v5601 = vpack.c.b16 %v5433, %v5425
    %v5602 = vpack.c.b16 %v5434, %v5426
    %v5603 = vpack.c.b16 %v5435, %v5427
    %v5604 = vpack.c.b16 %v5444, %v5436
    %v5605 = vpack.c.b16 %v5445, %v5437
    %v5606 = vpack.c.b16 %v5446, %v5438
    %v5607 = vpack.c.b16 %v5447, %v5439
    %v5608 = vpack.c.b16 %v5448, %v5440
    %v5609 = vpack.c.b16 %v5449, %v5441
    %v5610 = vpack.c.b16 %v5450, %v5442
    %v5611 = vpack.c.b16 %v5451, %v5443
    %v5612 = vpack.c.b16 %v5460, %v5452
    %v5613 = vpack.c.b16 %v5461, %v5453
    %v5614 = vpack.c.b16 %v5462, %v5454
    %v5615 = vpack.c.b16 %v5463, %v5455
    %v5616 = vpack.c.b16 %v5464, %v5456
    %v5617 = vpack.c.b16 %v5465, %v5457
    %v5618 = vpack.c.b16 %v5466, %v5458
    %v5619 = vpack.c.b16 %v5467, %v5459
    %v5620 = vpack.c.b16 %v5476, %v5468
    %v5621 = vpack.c.b16 %v5477, %v5469
    %v5622 = vpack.c.b16 %v5478, %v5470
    %v5623 = vpack.c.b16 %v5479, %v5471
    %v5624 = vpack.c.b16 %v5480, %v5472
    %v5625 = vpack.c.b16 %v5481, %v5473
    %v5626 = vpack.c.b16 %v5482, %v5474
    %v5627 = vpack.c.b16 %v5483, %v5475
    %v5628 = vpack.c.b16 %v5492, %v5484
    %v5629 = vpack.c.b16 %v5493, %v5485
    %v5630 = vpack.c.b16 %v5494, %v5486
    %v5631 = vpack.c.b16 %v5495, %v5487
    %v5632 = vpack.c.b16 %v5496, %v5488
    %v5633 = vpack.c.b16 %v5497, %v5489
    %v5634 = vpack.c.b16 %v5498, %v5490
    %v5635 = vpack.c.b16 %v5499, %v5491
    %v5636 = vpack.c.b16 %v5508, %v5500
    %v5637 = vpack.c.b16 %v5509, %v5501
    %v5638 = vpack.c.b16 %v5510, %v5502
    %v5639 = vpack.c.b16 %v5511, %v5503
    %v5640 = vpack.c.b16 %v5512, %v5504
    %v5641 = vpack.c.b16 %v5513, %v5505
    %v5642 = vpack.c.b16 %v5514, %v5506
    %v5643 = vpack.c.b16 %v5515, %v5507
    %5772 = vmatprep.subr.bf16.mxu0 %v5573
    %5773 = vmatpush1.bf16.msra.mxu0 %v5572
    %5774 = vmatprep.subr.bf16.mxu0 %v5565
    %5775 = vmatpush1.bf16.msra.mxu0 %v5564
    %5776 = vmatprep.subr.bf16.mxu0 %v5557
    %5777 = vmatpush1.bf16.msra.mxu0 %v5556
    %5778 = vmatprep.subr.bf16.mxu0 %v5549
    %5779 = vmatpush1.bf16.msra.mxu0 %v5548
    %5780 = vmatprep.subr.bf16.mxu0 %v5541
    %5781 = vmatpush1.bf16.msra.mxu0 %v5540
    %5782 = vmatprep.subr.bf16.mxu0 %v5533
    %5783 = vmatpush1.bf16.msra.mxu0 %v5532
    %5784 = vmatprep.subr.bf16.mxu0 %v5525
    %5785 = vmatpush1.bf16.msra.mxu0 %v5524
    %5786 = vmatprep.subr.bf16.mxu0 %v5517
    %5787 = vmatpush1.bf16.msra.mxu0 %v5516
    %5788 = vmatprep.subr.bf16.mxu0 %v5637
    %5789 = vmatpush2.bf16.msra.mxu0 %v5636
    %5790 = vmatprep.subr.bf16.mxu0 %v5629
    %5791 = vmatpush2.bf16.msra.mxu0 %v5628
    %5792 = vmatprep.subr.bf16.mxu0 %v5621
    %5793 = vmatpush2.bf16.msra.mxu0 %v5620
    %5794 = vmatprep.subr.bf16.mxu0 %v5613
    %5795 = vmatpush2.bf16.msra.mxu0 %v5612
    %5796 = vmatprep.subr.bf16.mxu0 %v5605
    %5797 = vmatpush2.bf16.msra.mxu0 %v5604
    %5798 = vmatprep.subr.bf16.mxu0 %v5597
    %5799 = vmatpush2.bf16.msra.mxu0 %v5596
    %5800 = vmatprep.subr.bf16.mxu0 %v5589
    %5801 = vmatpush2.bf16.msra.mxu0 %v5588
    %5802 = vmatprep.subr.bf16.mxu0 %v5581
    %5803 = vmatpush2.bf16.msra.mxu0 %v5580
    %5804 = vmatprep.mubr.bf16.mxu0 %v5087
    %5805 = vmatmul.mubr.bf16.gmra.mxu0 %v5086
    %v5806 = vpop.f32.mrf.mxu0
    %v5807 = vadd.f32 %v5095, %v5806
    %v5808 = vpop.f32.mrf.mxu0
    %v5809 = vadd.f32 %v5099, %v5808
    %v5810 = vpop.f32.mrf.mxu0
    %v5811 = vadd.f32 %v5095, %v5810
    %v5812 = vpop.f32.mrf.mxu0
    %v5813 = vadd.f32 %v5099, %v5812
    %5814 = vmatprep.mubr.bf16.mxu0 %v4736
    %5815 = vmatmul.mubr.bf16.gmra.mxu0 %v5088
    %v5816 = vpop.f32.mrf.mxu0
    %v5817 = vadd.f32 %v5095, %v5816
    %v5818 = vpop.f32.mrf.mxu0
    %v5819 = vadd.f32 %v5099, %v5818
    %v5820 = vpop.f32.mrf.mxu0
    %v5821 = vpop.f32.mrf.mxu0
    %5822 = vdwg.mxu0
    %5823 = vmatprep.subr.bf16.mxu0 %v5575
    %5824 = vmatpush1.bf16.msra.mxu0 %v5574
    %5825 = vmatprep.subr.bf16.mxu0 %v5567
    %5826 = vmatpush1.bf16.msra.mxu0 %v5566
    %5827 = vmatprep.subr.bf16.mxu0 %v5559
    %5828 = vmatpush1.bf16.msra.mxu0 %v5558
    %5829 = vmatprep.subr.bf16.mxu0 %v5551
    %5830 = vmatpush1.bf16.msra.mxu0 %v5550
    %5831 = vmatprep.subr.bf16.mxu0 %v5543
    %5832 = vmatpush1.bf16.msra.mxu0 %v5542
    %5833 = vmatprep.subr.bf16.mxu0 %v5535
    %5834 = vmatpush1.bf16.msra.mxu0 %v5534
    %5835 = vmatprep.subr.bf16.mxu0 %v5527
    %5836 = vmatpush1.bf16.msra.mxu0 %v5526
    %5837 = vmatprep.subr.bf16.mxu0 %v5519
    %5838 = vmatpush1.bf16.msra.mxu0 %v5518
    %5839 = vmatprep.subr.bf16.mxu0 %v5639
    %5840 = vmatpush2.bf16.msra.mxu0 %v5638
    %5841 = vmatprep.subr.bf16.mxu0 %v5631
    %5842 = vmatpush2.bf16.msra.mxu0 %v5630
    %5843 = vmatprep.subr.bf16.mxu0 %v5623
    %5844 = vmatpush2.bf16.msra.mxu0 %v5622
    %5845 = vmatprep.subr.bf16.mxu0 %v5615
    %5846 = vmatpush2.bf16.msra.mxu0 %v5614
    %5847 = vmatprep.subr.bf16.mxu0 %v5607
    %5848 = vmatpush2.bf16.msra.mxu0 %v5606
    %5849 = vmatprep.subr.bf16.mxu0 %v5599
    %5850 = vmatpush2.bf16.msra.mxu0 %v5598
    %5851 = vmatprep.subr.bf16.mxu0 %v5591
    %5852 = vmatpush2.bf16.msra.mxu0 %v5590
    %5853 = vmatprep.subr.bf16.mxu0 %v5583
    %5854 = vmatpush2.bf16.msra.mxu0 %v5582
    %5855 = vmatprep.mubr.bf16.mxu0 %v5087
    %5856 = vmatmul.mubr.bf16.gmra.mxu0 %v5086
    %v5857 = vpop.f32.mrf.mxu0
    %v5858 = vadd.f32 %v5103, %v5857
    %v5859 = vpop.f32.mrf.mxu0
    %v5860 = vadd.f32 %v5107, %v5859
    %v5861 = vpop.f32.mrf.mxu0
    %v5862 = vadd.f32 %v5103, %v5861
    %v5863 = vpop.f32.mrf.mxu0
    %v5864 = vadd.f32 %v5107, %v5863
    %5865 = vmatprep.mubr.bf16.mxu0 %v4736
    %5866 = vmatmul.mubr.bf16.gmra.mxu0 %v5088
    %v5867 = vpop.f32.mrf.mxu0
    %v5868 = vadd.f32 %v5103, %v5867
    %v5869 = vpop.f32.mrf.mxu0
    %v5870 = vadd.f32 %v5107, %v5869
    %v5871 = vpop.f32.mrf.mxu0
    %v5872 = vpop.f32.mrf.mxu0
    %5873 = vdwg.mxu0
    %5874 = vmatprep.subr.bf16.mxu0 %v5577
    %5875 = vmatpush1.bf16.msra.mxu0 %v5576
    %5876 = vmatprep.subr.bf16.mxu0 %v5569
    %5877 = vmatpush1.bf16.msra.mxu0 %v5568
    %5878 = vmatprep.subr.bf16.mxu0 %v5561
    %5879 = vmatpush1.bf16.msra.mxu0 %v5560
    %5880 = vmatprep.subr.bf16.mxu0 %v5553
    %5881 = vmatpush1.bf16.msra.mxu0 %v5552
    %5882 = vmatprep.subr.bf16.mxu0 %v5545
    %5883 = vmatpush1.bf16.msra.mxu0 %v5544
    %5884 = vmatprep.subr.bf16.mxu0 %v5537
    %5885 = vmatpush1.bf16.msra.mxu0 %v5536
    %5886 = vmatprep.subr.bf16.mxu0 %v5529
    %5887 = vmatpush1.bf16.msra.mxu0 %v5528
    %5888 = vmatprep.subr.bf16.mxu0 %v5521
    %5889 = vmatpush1.bf16.msra.mxu0 %v5520
    %5890 = vmatprep.subr.bf16.mxu0 %v5641
    %5891 = vmatpush2.bf16.msra.mxu0 %v5640
    %5892 = vmatprep.subr.bf16.mxu0 %v5633
    %5893 = vmatpush2.bf16.msra.mxu0 %v5632
    %5894 = vmatprep.subr.bf16.mxu0 %v5625
    %5895 = vmatpush2.bf16.msra.mxu0 %v5624
    %5896 = vmatprep.subr.bf16.mxu0 %v5617
    %5897 = vmatpush2.bf16.msra.mxu0 %v5616
    %5898 = vmatprep.subr.bf16.mxu0 %v5609
    %5899 = vmatpush2.bf16.msra.mxu0 %v5608
    %5900 = vmatprep.subr.bf16.mxu0 %v5601
    %5901 = vmatpush2.bf16.msra.mxu0 %v5600
    %5902 = vmatprep.subr.bf16.mxu0 %v5593
    %5903 = vmatpush2.bf16.msra.mxu0 %v5592
    %5904 = vmatprep.subr.bf16.mxu0 %v5585
    %5905 = vmatpush2.bf16.msra.mxu0 %v5584
    %5906 = vmatprep.mubr.bf16.mxu0 %v5087
    %5907 = vmatmul.mubr.bf16.gmra.mxu0 %v5086
    %v5908 = vpop.f32.mrf.mxu0
    %v5909 = vadd.f32 %v5111, %v5908
    %v5910 = vpop.f32.mrf.mxu0
    %v5911 = vadd.f32 %v5115, %v5910
    %v5912 = vpop.f32.mrf.mxu0
    %v5913 = vadd.f32 %v5111, %v5912
    %v5914 = vpop.f32.mrf.mxu0
    %v5915 = vadd.f32 %v5115, %v5914
    %5916 = vmatprep.mubr.bf16.mxu0 %v4736
    %5917 = vmatmul.mubr.bf16.gmra.mxu0 %v5088
    %v5918 = vpop.f32.mrf.mxu0
    %v5919 = vadd.f32 %v5111, %v5918
    %v5920 = vpop.f32.mrf.mxu0
    %v5921 = vadd.f32 %v5115, %v5920
    %v5922 = vpop.f32.mrf.mxu0
    %v5923 = vpop.f32.mrf.mxu0
    %5924 = vdwg.mxu0
    %5925 = vmatprep.subr.bf16.mxu0 %v5579
    %5926 = vmatpush1.bf16.msra.mxu0 %v5578
    %5927 = vmatprep.subr.bf16.mxu0 %v5571
    %5928 = vmatpush1.bf16.msra.mxu0 %v5570
    %5929 = vmatprep.subr.bf16.mxu0 %v5563
    %5930 = vmatpush1.bf16.msra.mxu0 %v5562
    %5931 = vmatprep.subr.bf16.mxu0 %v5555
    %5932 = vmatpush1.bf16.msra.mxu0 %v5554
    %5933 = vmatprep.subr.bf16.mxu0 %v5547
    %5934 = vmatpush1.bf16.msra.mxu0 %v5546
    %5935 = vmatprep.subr.bf16.mxu0 %v5539
    %5936 = vmatpush1.bf16.msra.mxu0 %v5538
    %5937 = vmatprep.subr.bf16.mxu0 %v5531
    %5938 = vmatpush1.bf16.msra.mxu0 %v5530
    %5939 = vmatprep.subr.bf16.mxu0 %v5523
    %5940 = vmatpush1.bf16.msra.mxu0 %v5522
    %5941 = vmatprep.subr.bf16.mxu0 %v5643
    %5942 = vmatpush2.bf16.msra.mxu0 %v5642
    %5943 = vmatprep.subr.bf16.mxu0 %v5635
    %5944 = vmatpush2.bf16.msra.mxu0 %v5634
    %5945 = vmatprep.subr.bf16.mxu0 %v5627
    %5946 = vmatpush2.bf16.msra.mxu0 %v5626
    %5947 = vmatprep.subr.bf16.mxu0 %v5619
    %5948 = vmatpush2.bf16.msra.mxu0 %v5618
    %5949 = vmatprep.subr.bf16.mxu0 %v5611
    %5950 = vmatpush2.bf16.msra.mxu0 %v5610
    %5951 = vmatprep.subr.bf16.mxu0 %v5603
    %5952 = vmatpush2.bf16.msra.mxu0 %v5602
    %5953 = vmatprep.subr.bf16.mxu0 %v5595
    %5954 = vmatpush2.bf16.msra.mxu0 %v5594
    %5955 = vmatprep.subr.bf16.mxu0 %v5587
    %5956 = vmatpush2.bf16.msra.mxu0 %v5586
    %5957 = vmatprep.mubr.bf16.mxu0 %v5087
    %5958 = vmatmul.mubr.bf16.gmra.mxu0 %v5086
    %v5959 = vpop.f32.mrf.mxu0
    %v5960 = vadd.f32 %v5119, %v5959
    %v5961 = vpop.f32.mrf.mxu0
    %v5962 = vadd.f32 %v5123, %v5961
    %v5963 = vpop.f32.mrf.mxu0
    %v5964 = vadd.f32 %v5119, %v5963
    %v5965 = vpop.f32.mrf.mxu0
    %v5966 = vadd.f32 %v5123, %v5965
    %5967 = vmatprep.mubr.bf16.mxu0 %v4736
    %5968 = vmatmul.mubr.bf16.gmra.mxu0 %v5088
    %v5969 = vpop.f32.mrf.mxu0
    %v5970 = vadd.f32 %v5119, %v5969
    %v5971 = vpop.f32.mrf.mxu0
    %v5972 = vadd.f32 %v5123, %v5971
    %v5973 = vpop.f32.mrf.mxu0
    %v5974 = vpop.f32.mrf.mxu0
    %5975 = vdwg.mxu0
    %v5976 = vld [vmem:[#allocation5] sm:$0xff]
    %v5977 = vld [vmem:[#allocation5 + $0x8] sm:$0xff]
    %v5978 = vld [vmem:[#allocation5 + $0x10] sm:$0xff]
    %v5979 = vld [vmem:[#allocation5 + $0x18] sm:$0xff]
    %v5980 = vld [vmem:[#allocation5 + $0x20] sm:$0xff]
    %v5981 = vld [vmem:[#allocation5 + $0x28] sm:$0xff]
    %v5982 = vld [vmem:[#allocation5 + $0x30] sm:$0xff]
    %v5983 = vld [vmem:[#allocation5 + $0x38] sm:$0xff]
    %v5984 = vld [vmem:[#allocation5 + $0x40] sm:$0xff]
    %v5985 = vld [vmem:[#allocation5 + $0x48] sm:$0xff]
    %v5986 = vld [vmem:[#allocation5 + $0x50] sm:$0xff]
    %v5987 = vld [vmem:[#allocation5 + $0x58] sm:$0xff]
    %v5988 = vld [vmem:[#allocation5 + $0x60] sm:$0xff]
    %v5989 = vld [vmem:[#allocation5 + $0x68] sm:$0xff]
    %v5990 = vld [vmem:[#allocation5 + $0x70] sm:$0xff]
    %v5991 = vld [vmem:[#allocation5 + $0x78] sm:$0xff]
    %v5992 = vld [vmem:[#allocation5 + $0x80] sm:$0xff]
    %v5993 = vld [vmem:[#allocation5 + $0x88] sm:$0xff]
    %v5994 = vld [vmem:[#allocation5 + $0x90] sm:$0xff]
    %v5995 = vld [vmem:[#allocation5 + $0x98] sm:$0xff]
    %v5996 = vld [vmem:[#allocation5 + $0xa0] sm:$0xff]
    %v5997 = vld [vmem:[#allocation5 + $0xa8] sm:$0xff]
    %v5998 = vld [vmem:[#allocation5 + $0xb0] sm:$0xff]
    %v5999 = vld [vmem:[#allocation5 + $0xb8] sm:$0xff]
    %v6000 = vld [vmem:[#allocation5 + $0xc0] sm:$0xff]
    %v6001 = vld [vmem:[#allocation5 + $0xc8] sm:$0xff]
    %v6002 = vld [vmem:[#allocation5 + $0xd0] sm:$0xff]
    %v6003 = vld [vmem:[#allocation5 + $0xd8] sm:$0xff]
    %v6004 = vld [vmem:[#allocation5 + $0xe0] sm:$0xff]
    %v6005 = vld [vmem:[#allocation5 + $0xe8] sm:$0xff]
    %v6006 = vld [vmem:[#allocation5 + $0xf0] sm:$0xff]
    %v6007 = vld [vmem:[#allocation5 + $0xf8] sm:$0xff]
    %v6008 = vld [vmem:[#allocation5 + $0x100] sm:$0xff]
    %v6009 = vld [vmem:[#allocation5 + $0x108] sm:$0xff]
    %v6010 = vld [vmem:[#allocation5 + $0x110] sm:$0xff]
    %v6011 = vld [vmem:[#allocation5 + $0x118] sm:$0xff]
    %v6012 = vld [vmem:[#allocation5 + $0x120] sm:$0xff]
    %v6013 = vld [vmem:[#allocation5 + $0x128] sm:$0xff]
    %v6014 = vld [vmem:[#allocation5 + $0x130] sm:$0xff]
    %v6015 = vld [vmem:[#allocation5 + $0x138] sm:$0xff]
    %v6016 = vld [vmem:[#allocation5 + $0x140] sm:$0xff]
    %v6017 = vld [vmem:[#allocation5 + $0x148] sm:$0xff]
    %v6018 = vld [vmem:[#allocation5 + $0x150] sm:$0xff]
    %v6019 = vld [vmem:[#allocation5 + $0x158] sm:$0xff]
    %v6020 = vld [vmem:[#allocation5 + $0x160] sm:$0xff]
    %v6021 = vld [vmem:[#allocation5 + $0x168] sm:$0xff]
    %v6022 = vld [vmem:[#allocation5 + $0x170] sm:$0xff]
    %v6023 = vld [vmem:[#allocation5 + $0x178] sm:$0xff]
    %v6024 = vld [vmem:[#allocation5 + $0x180] sm:$0xff]
    %v6025 = vld [vmem:[#allocation5 + $0x188] sm:$0xff]
    %v6026 = vld [vmem:[#allocation5 + $0x190] sm:$0xff]
    %v6027 = vld [vmem:[#allocation5 + $0x198] sm:$0xff]
    %v6028 = vld [vmem:[#allocation5 + $0x1a0] sm:$0xff]
    %v6029 = vld [vmem:[#allocation5 + $0x1a8] sm:$0xff]
    %v6030 = vld [vmem:[#allocation5 + $0x1b0] sm:$0xff]
    %v6031 = vld [vmem:[#allocation5 + $0x1b8] sm:$0xff]
    %v6032 = vld [vmem:[#allocation5 + $0x1c0] sm:$0xff]
    %v6033 = vld [vmem:[#allocation5 + $0x1c8] sm:$0xff]
    %v6034 = vld [vmem:[#allocation5 + $0x1d0] sm:$0xff]
    %v6035 = vld [vmem:[#allocation5 + $0x1d8] sm:$0xff]
    %v6036 = vld [vmem:[#allocation5 + $0x1e0] sm:$0xff]
    %v6037 = vld [vmem:[#allocation5 + $0x1e8] sm:$0xff]
    %v6038 = vld [vmem:[#allocation5 + $0x1f0] sm:$0xff]
    %v6039 = vld [vmem:[#allocation5 + $0x1f8] sm:$0xff]
    %v6072 = vunpack.c.l.b16 %v5976
    %v6073 = vunpack.c.h.b16 %v5976
    %v6074 = vunpack.c.l.b16 %v5977
    %v6075 = vunpack.c.h.b16 %v5977
    %v6076 = vunpack.c.l.b16 %v5978
    %v6077 = vunpack.c.h.b16 %v5978
    %v6078 = vunpack.c.l.b16 %v5979
    %v6079 = vunpack.c.h.b16 %v5979
    %v6080 = vunpack.c.l.b16 %v5980
    %v6081 = vunpack.c.h.b16 %v5980
    %v6082 = vunpack.c.l.b16 %v5981
    %v6083 = vunpack.c.h.b16 %v5981
    %v6084 = vunpack.c.l.b16 %v5982
    %v6085 = vunpack.c.h.b16 %v5982
    %v6086 = vunpack.c.l.b16 %v5983
    %v6087 = vunpack.c.h.b16 %v5983
    %v6088 = vunpack.c.l.b16 %v5984
    %v6089 = vunpack.c.h.b16 %v5984
    %v6090 = vunpack.c.l.b16 %v5985
    %v6091 = vunpack.c.h.b16 %v5985
    %v6092 = vunpack.c.l.b16 %v5986
    %v6093 = vunpack.c.h.b16 %v5986
    %v6094 = vunpack.c.l.b16 %v5987
    %v6095 = vunpack.c.h.b16 %v5987
    %v6096 = vunpack.c.l.b16 %v5988
    %v6097 = vunpack.c.h.b16 %v5988
    %v6098 = vunpack.c.l.b16 %v5989
    %v6099 = vunpack.c.h.b16 %v5989
    %v6100 = vunpack.c.l.b16 %v5990
    %v6101 = vunpack.c.h.b16 %v5990
    %v6102 = vunpack.c.l.b16 %v5991
    %v6103 = vunpack.c.h.b16 %v5991
    %v6104 = vunpack.c.l.b16 %v5992
    %v6105 = vunpack.c.h.b16 %v5992
    %v6106 = vunpack.c.l.b16 %v5993
    %v6107 = vunpack.c.h.b16 %v5993
    %v6108 = vunpack.c.l.b16 %v5994
    %v6109 = vunpack.c.h.b16 %v5994
    %v6110 = vunpack.c.l.b16 %v5995
    %v6111 = vunpack.c.h.b16 %v5995
    %v6112 = vunpack.c.l.b16 %v5996
    %v6113 = vunpack.c.h.b16 %v5996
    %v6114 = vunpack.c.l.b16 %v5997
    %v6115 = vunpack.c.h.b16 %v5997
    %v6116 = vunpack.c.l.b16 %v5998
    %v6117 = vunpack.c.h.b16 %v5998
    %v6118 = vunpack.c.l.b16 %v5999
    %v6119 = vunpack.c.h.b16 %v5999
    %v6120 = vunpack.c.l.b16 %v6000
    %v6121 = vunpack.c.h.b16 %v6000
    %v6122 = vunpack.c.l.b16 %v6001
    %v6123 = vunpack.c.h.b16 %v6001
    %v6124 = vunpack.c.l.b16 %v6002
    %v6125 = vunpack.c.h.b16 %v6002
    %v6126 = vunpack.c.l.b16 %v6003
    %v6127 = vunpack.c.h.b16 %v6003
    %v6128 = vunpack.c.l.b16 %v6004
    %v6129 = vunpack.c.h.b16 %v6004
    %v6130 = vunpack.c.l.b16 %v6005
    %v6131 = vunpack.c.h.b16 %v6005
    %v6132 = vunpack.c.l.b16 %v6006
    %v6133 = vunpack.c.h.b16 %v6006
    %v6134 = vunpack.c.l.b16 %v6007
    %v6135 = vunpack.c.h.b16 %v6007
    %v6136 = vpack.c.b16 %v6076, %v6072
    %v6137 = vpack.c.b16 %v6077, %v6073
    %v6138 = vpack.c.b16 %v6078, %v6074
    %v6139 = vpack.c.b16 %v6079, %v6075
    %v6140 = vpack.c.b16 %v6084, %v6080
    %v6141 = vpack.c.b16 %v6085, %v6081
    %v6142 = vpack.c.b16 %v6086, %v6082
    %v6143 = vpack.c.b16 %v6087, %v6083
    %v6144 = vpack.c.b16 %v6092, %v6088
    %v6145 = vpack.c.b16 %v6093, %v6089
    %v6146 = vpack.c.b16 %v6094, %v6090
    %v6147 = vpack.c.b16 %v6095, %v6091
    %v6148 = vpack.c.b16 %v6100, %v6096
    %v6149 = vpack.c.b16 %v6101, %v6097
    %v6150 = vpack.c.b16 %v6102, %v6098
    %v6151 = vpack.c.b16 %v6103, %v6099
    %v6152 = vpack.c.b16 %v6108, %v6104
    %v6153 = vpack.c.b16 %v6109, %v6105
    %v6154 = vpack.c.b16 %v6110, %v6106
    %v6155 = vpack.c.b16 %v6111, %v6107
    %v6156 = vpack.c.b16 %v6116, %v6112
    %v6157 = vpack.c.b16 %v6117, %v6113
    %v6158 = vpack.c.b16 %v6118, %v6114
    %v6159 = vpack.c.b16 %v6119, %v6115
    %v6160 = vpack.c.b16 %v6124, %v6120
    %v6161 = vpack.c.b16 %v6125, %v6121
    %v6162 = vpack.c.b16 %v6126, %v6122
    %v6163 = vpack.c.b16 %v6127, %v6123
    %v6164 = vpack.c.b16 %v6132, %v6128
    %v6165 = vpack.c.b16 %v6133, %v6129
    %v6166 = vpack.c.b16 %v6134, %v6130
    %v6167 = vpack.c.b16 %v6135, %v6131
    %6200 = vmatprep.subr.bf16.mxu0 %v6165
    %6201 = vmatpush1.bf16.msra.mxu0 %v6164
    %6202 = vmatprep.subr.bf16.mxu0 %v6161
    %6203 = vmatpush1.bf16.msra.mxu0 %v6160
    %6204 = vmatprep.subr.bf16.mxu0 %v6157
    %6205 = vmatpush1.bf16.msra.mxu0 %v6156
    %6206 = vmatprep.subr.bf16.mxu0 %v6153
    %6207 = vmatpush1.bf16.msra.mxu0 %v6152
    %6208 = vmatprep.subr.bf16.mxu0 %v6149
    %6209 = vmatpush1.bf16.msra.mxu0 %v6148
    %6210 = vmatprep.subr.bf16.mxu0 %v6145
    %6211 = vmatpush1.bf16.msra.mxu0 %v6144
    %6212 = vmatprep.subr.bf16.mxu0 %v6141
    %6213 = vmatpush1.bf16.msra.mxu0 %v6140
    %6214 = vmatprep.subr.bf16.mxu0 %v6137
    %6215 = vmatpush1.bf16.msra.mxu0 %v6136
    %6216 = vmatprep.subr.bf16.mxu0 0
    %6217 = vmatpush2.bf16.msra.mxu0 0
    %6218 = vmatprep.subr.bf16.mxu0 0
    %6219 = vmatpush2.bf16.msra.mxu0 0
    %6220 = vmatprep.subr.bf16.mxu0 0
    %6221 = vmatpush2.bf16.msra.mxu0 0
    %6222 = vmatprep.subr.bf16.mxu0 0
    %6223 = vmatpush2.bf16.msra.mxu0 0
    %6224 = vmatprep.subr.bf16.mxu0 0
    %6225 = vmatpush2.bf16.msra.mxu0 0
    %6226 = vmatprep.subr.bf16.mxu0 0
    %6227 = vmatpush2.bf16.msra.mxu0 0
    %6228 = vmatprep.subr.bf16.mxu0 0
    %6229 = vmatpush2.bf16.msra.mxu0 0
    %6230 = vmatprep.subr.bf16.mxu0 0
    %6231 = vmatpush2.bf16.msra.mxu0 0
    %6232 = vmatprep.mubr.bf16.mxu0 0
    %6233 = vmatmul.mubr.bf16.gmra.mxu0 0
    %v6234 = vpop.f32.mrf.mxu0
    %v6235 = vadd.f32 0.0, %v6234
    %v6236 = vpop.f32.mrf.mxu0
    %v6237 = vadd.f32 0.0, %v6236
    %v6238 = vpop.f32.mrf.mxu0
    %v6239 = vpop.f32.mrf.mxu0
    %6240 = vdwg.mxu0
    %6241 = vmatprep.subr.bf16.mxu0 %v6167
    %6242 = vmatpush1.bf16.msra.mxu0 %v6166
    %6243 = vmatprep.subr.bf16.mxu0 %v6163
    %6244 = vmatpush1.bf16.msra.mxu0 %v6162
    %6245 = vmatprep.subr.bf16.mxu0 %v6159
    %6246 = vmatpush1.bf16.msra.mxu0 %v6158
    %6247 = vmatprep.subr.bf16.mxu0 %v6155
    %6248 = vmatpush1.bf16.msra.mxu0 %v6154
    %6249 = vmatprep.subr.bf16.mxu0 %v6151
    %6250 = vmatpush1.bf16.msra.mxu0 %v6150
    %6251 = vmatprep.subr.bf16.mxu0 %v6147
    %6252 = vmatpush1.bf16.msra.mxu0 %v6146
    %6253 = vmatprep.subr.bf16.mxu0 %v6143
    %6254 = vmatpush1.bf16.msra.mxu0 %v6142
    %6255 = vmatprep.subr.bf16.mxu0 %v6139
    %6256 = vmatpush1.bf16.msra.mxu0 %v6138
    %6257 = vmatprep.subr.bf16.mxu0 0
    %6258 = vmatpush2.bf16.msra.mxu0 0
    %6259 = vmatprep.subr.bf16.mxu0 0
    %6260 = vmatpush2.bf16.msra.mxu0 0
    %6261 = vmatprep.subr.bf16.mxu0 0
    %6262 = vmatpush2.bf16.msra.mxu0 0
    %6263 = vmatprep.subr.bf16.mxu0 0
    %6264 = vmatpush2.bf16.msra.mxu0 0
    %6265 = vmatprep.subr.bf16.mxu0 0
    %6266 = vmatpush2.bf16.msra.mxu0 0
    %6267 = vmatprep.subr.bf16.mxu0 0
    %6268 = vmatpush2.bf16.msra.mxu0 0
    %6269 = vmatprep.subr.bf16.mxu0 0
    %6270 = vmatpush2.bf16.msra.mxu0 0
    %6271 = vmatprep.subr.bf16.mxu0 0
    %6272 = vmatpush2.bf16.msra.mxu0 0
    %6273 = vmatprep.mubr.bf16.mxu0 0
    %6274 = vmatmul.mubr.bf16.gmra.mxu0 0
    %v6275 = vpop.f32.mrf.mxu0
    %v6276 = vadd.f32 0.0, %v6275
    %v6277 = vpop.f32.mrf.mxu0
    %v6278 = vadd.f32 0.0, %v6277
    %v6279 = vpop.f32.mrf.mxu0
    %v6280 = vpop.f32.mrf.mxu0
    %6281 = vdwg.mxu0
    %v6282 = vadd.f32 %v5807, %v6235
    %v6283 = vadd.f32 %v5809, %v6237
    %v6284 = vadd.f32 %v5858, %v6276
    %v6285 = vadd.f32 %v5860, %v6278
    %v6286 = vxor.u32 %v6282, 2147483648
    %v6287 = vmul.f32 %v6286, 1.442695
    %v6288 = vpow.pop %v6287
    %v6289 = vadd.f32 %v6288, 1.0
    %v6290 = vrcp.pop %v6289
    %v6291 = vmul.f32 1.0, %v6290
    %v6292 = vxor.u32 %v6283, 2147483648
    %v6293 = vmul.f32 %v6292, 1.442695
    %v6294 = vpow.pop %v6293
    %v6295 = vadd.f32 %v6294, 1.0
    %v6296 = vrcp.pop %v6295
    %v6297 = vmul.f32 1.0, %v6296
    %v6298 = vtanh.pop %v6284
    %v6299 = vxor.u32 %v6285, 2147483648
    %v6300 = vmul.f32 %v6299, 1.442695
    %v6301 = vpow.pop %v6300
    %v6302 = vadd.f32 %v6301, 1.0
    %v6303 = vrcp.pop %v6302
    %v6304 = vmul.f32 1.0, %v6303
    %v6305 = vmul.f32 %v6297, 0.0
    %v6306 = vmul.f32 %v6291, %v6298
    %v6307 = vadd.f32 %v6305, %v6306
    %v6308 = vtanh.pop %v6307
    %v6309 = vmul.f32 %v6304, %v6308
    %v6310 = vadd.f32 %v6309, 0.0
    %v6311 = vpack.c.bf16 %v6309, %v6309
    %6312 = vmatprep.subr.bf16.mxu0 %v6165
    %6313 = vmatpush1.bf16.msra.mxu0 %v6164
    %6314 = vmatprep.subr.bf16.mxu0 %v6161
    %6315 = vmatpush1.bf16.msra.mxu0 %v6160
    %6316 = vmatprep.subr.bf16.mxu0 %v6157
    %6317 = vmatpush1.bf16.msra.mxu0 %v6156
    %6318 = vmatprep.subr.bf16.mxu0 %v6153
    %6319 = vmatpush1.bf16.msra.mxu0 %v6152
    %6320 = vmatprep.subr.bf16.mxu0 %v6149
    %6321 = vmatpush1.bf16.msra.mxu0 %v6148
    %6322 = vmatprep.subr.bf16.mxu0 %v6145
    %6323 = vmatpush1.bf16.msra.mxu0 %v6144
    %6324 = vmatprep.subr.bf16.mxu0 %v6141
    %6325 = vmatpush1.bf16.msra.mxu0 %v6140
    %6326 = vmatprep.subr.bf16.mxu0 %v6137
    %6327 = vmatpush1.bf16.msra.mxu0 %v6136
    %6328 = vmatprep.subr.bf16.mxu0 0
    %6329 = vmatpush2.bf16.msra.mxu0 0
    %6330 = vmatprep.subr.bf16.mxu0 0
    %6331 = vmatpush2.bf16.msra.mxu0 0
    %6332 = vmatprep.subr.bf16.mxu0 0
    %6333 = vmatpush2.bf16.msra.mxu0 0
    %6334 = vmatprep.subr.bf16.mxu0 0
    %6335 = vmatpush2.bf16.msra.mxu0 0
    %6336 = vmatprep.subr.bf16.mxu0 0
    %6337 = vmatpush2.bf16.msra.mxu0 0
    %6338 = vmatprep.subr.bf16.mxu0 0
    %6339 = vmatpush2.bf16.msra.mxu0 0
    %6340 = vmatprep.subr.bf16.mxu0 0
    %6341 = vmatpush2.bf16.msra.mxu0 0
    %6342 = vmatprep.subr.bf16.mxu0 0
    %6343 = vmatpush2.bf16.msra.mxu0 0
    %6344 = vmatprep.mubr.bf16.mxu0 0
    %6345 = vmatmul.mubr.bf16.gmra.mxu0 %v6311
    %v6346 = vpop.f32.mrf.mxu0
    %v6347 = vadd.f32 0.0, %v6346
    %v6348 = vpop.f32.mrf.mxu0
    %v6349 = vadd.f32 0.0, %v6348
    %v6350 = vpop.f32.mrf.mxu0
    %v6351 = vpop.f32.mrf.mxu0
    %6352 = vdwg.mxu0
    %6353 = vmatprep.subr.bf16.mxu0 %v6167
    %6354 = vmatpush1.bf16.msra.mxu0 %v6166
    %6355 = vmatprep.subr.bf16.mxu0 %v6163
    %6356 = vmatpush1.bf16.msra.mxu0 %v6162
    %6357 = vmatprep.subr.bf16.mxu0 %v6159
    %6358 = vmatpush1.bf16.msra.mxu0 %v6158
    %6359 = vmatprep.subr.bf16.mxu0 %v6155
    %6360 = vmatpush1.bf16.msra.mxu0 %v6154
    %6361 = vmatprep.subr.bf16.mxu0 %v6151
    %6362 = vmatpush1.bf16.msra.mxu0 %v6150
    %6363 = vmatprep.subr.bf16.mxu0 %v6147
    %6364 = vmatpush1.bf16.msra.mxu0 %v6146
    %6365 = vmatprep.subr.bf16.mxu0 %v6143
    %6366 = vmatpush1.bf16.msra.mxu0 %v6142
    %6367 = vmatprep.subr.bf16.mxu0 %v6139
    %6368 = vmatpush1.bf16.msra.mxu0 %v6138
    %6369 = vmatprep.subr.bf16.mxu0 0
    %6370 = vmatpush2.bf16.msra.mxu0 0
    %6371 = vmatprep.subr.bf16.mxu0 0
    %6372 = vmatpush2.bf16.msra.mxu0 0
    %6373 = vmatprep.subr.bf16.mxu0 0
    %6374 = vmatpush2.bf16.msra.mxu0 0
    %6375 = vmatprep.subr.bf16.mxu0 0
    %6376 = vmatpush2.bf16.msra.mxu0 0
    %6377 = vmatprep.subr.bf16.mxu0 0
    %6378 = vmatpush2.bf16.msra.mxu0 0
    %6379 = vmatprep.subr.bf16.mxu0 0
    %6380 = vmatpush2.bf16.msra.mxu0 0
    %6381 = vmatprep.subr.bf16.mxu0 0
    %6382 = vmatpush2.bf16.msra.mxu0 0
    %6383 = vmatprep.subr.bf16.mxu0 0
    %6384 = vmatpush2.bf16.msra.mxu0 0
    %6385 = vmatprep.mubr.bf16.mxu0 0
    %6386 = vmatmul.mubr.bf16.gmra.mxu0 %v6311
    %v6387 = vpop.f32.mrf.mxu0
    %v6388 = vadd.f32 0.0, %v6387
    %v6389 = vpop.f32.mrf.mxu0
    %v6390 = vadd.f32 0.0, %v6389
    %v6391 = vpop.f32.mrf.mxu0
    %v6392 = vpop.f32.mrf.mxu0
    %6393 = vdwg.mxu0
    %v6394 = vadd.f32 %v5811, %v6347
    %v6395 = vadd.f32 %v5813, %v6349
    %v6396 = vadd.f32 %v5862, %v6388
    %v6397 = vadd.f32 %v5864, %v6390
    %v6398 = vxor.u32 %v6394, 2147483648
    %v6399 = vmul.f32 %v6398, 1.442695
    %v6400 = vpow.pop %v6399
    %v6401 = vadd.f32 %v6400, 1.0
    %v6402 = vrcp.pop %v6401
    %v6403 = vmul.f32 1.0, %v6402
    %v6404 = vxor.u32 %v6395, 2147483648
    %v6405 = vmul.f32 %v6404, 1.442695
    %v6406 = vpow.pop %v6405
    %v6407 = vadd.f32 %v6406, 1.0
    %v6408 = vrcp.pop %v6407
    %v6409 = vmul.f32 1.0, %v6408
    %v6410 = vtanh.pop %v6396
    %v6411 = vxor.u32 %v6397, 2147483648
    %v6412 = vmul.f32 %v6411, 1.442695
    %v6413 = vpow.pop %v6412
    %v6414 = vadd.f32 %v6413, 1.0
    %v6415 = vrcp.pop %v6414
    %v6416 = vmul.f32 1.0, %v6415
    %v6417 = vmul.f32 %v6409, %v6307
    %v6418 = vmul.f32 %v6403, %v6410
    %v6419 = vadd.f32 %v6417, %v6418
    %v6420 = vtanh.pop %v6419
    %v6421 = vmul.f32 %v6416, %v6420
    %v6422 = vadd.f32 %v6310, %v6421
    %v6423 = vpack.c.bf16 %v6421, %v6421
    %6424 = vmatprep.subr.bf16.mxu0 %v6165
    %6425 = vmatpush1.bf16.msra.mxu0 %v6164
    %6426 = vmatprep.subr.bf16.mxu0 %v6161
    %6427 = vmatpush1.bf16.msra.mxu0 %v6160
    %6428 = vmatprep.subr.bf16.mxu0 %v6157
    %6429 = vmatpush1.bf16.msra.mxu0 %v6156
    %6430 = vmatprep.subr.bf16.mxu0 %v6153
    %6431 = vmatpush1.bf16.msra.mxu0 %v6152
    %6432 = vmatprep.subr.bf16.mxu0 %v6149
    %6433 = vmatpush1.bf16.msra.mxu0 %v6148
    %6434 = vmatprep.subr.bf16.mxu0 %v6145
    %6435 = vmatpush1.bf16.msra.mxu0 %v6144
    %6436 = vmatprep.subr.bf16.mxu0 %v6141
    %6437 = vmatpush1.bf16.msra.mxu0 %v6140
    %6438 = vmatprep.subr.bf16.mxu0 %v6137
    %6439 = vmatpush1.bf16.msra.mxu0 %v6136
    %6440 = vmatprep.subr.bf16.mxu0 0
    %6441 = vmatpush2.bf16.msra.mxu0 0
    %6442 = vmatprep.subr.bf16.mxu0 0
    %6443 = vmatpush2.bf16.msra.mxu0 0
    %6444 = vmatprep.subr.bf16.mxu0 0
    %6445 = vmatpush2.bf16.msra.mxu0 0
    %6446 = vmatprep.subr.bf16.mxu0 0
    %6447 = vmatpush2.bf16.msra.mxu0 0
    %6448 = vmatprep.subr.bf16.mxu0 0
    %6449 = vmatpush2.bf16.msra.mxu0 0
    %6450 = vmatprep.subr.bf16.mxu0 0
    %6451 = vmatpush2.bf16.msra.mxu0 0
    %6452 = vmatprep.subr.bf16.mxu0 0
    %6453 = vmatpush2.bf16.msra.mxu0 0
    %6454 = vmatprep.subr.bf16.mxu0 0
    %6455 = vmatpush2.bf16.msra.mxu0 0
    %6456 = vmatprep.mubr.bf16.mxu0 0
    %6457 = vmatmul.mubr.bf16.gmra.mxu0 %v6423
    %v6458 = vpop.f32.mrf.mxu0
    %v6459 = vadd.f32 0.0, %v6458
    %v6460 = vpop.f32.mrf.mxu0
    %v6461 = vadd.f32 0.0, %v6460
    %v6462 = vpop.f32.mrf.mxu0
    %v6463 = vpop.f32.mrf.mxu0
    %6464 = vdwg.mxu0
    %6465 = vmatprep.subr.bf16.mxu0 %v6167
    %6466 = vmatpush1.bf16.msra.mxu0 %v6166
    %6467 = vmatprep.subr.bf16.mxu0 %v6163
    %6468 = vmatpush1.bf16.msra.mxu0 %v6162
    %6469 = vmatprep.subr.bf16.mxu0 %v6159
    %6470 = vmatpush1.bf16.msra.mxu0 %v6158
    %6471 = vmatprep.subr.bf16.mxu0 %v6155
    %6472 = vmatpush1.bf16.msra.mxu0 %v6154
    %6473 = vmatprep.subr.bf16.mxu0 %v6151
    %6474 = vmatpush1.bf16.msra.mxu0 %v6150
    %6475 = vmatprep.subr.bf16.mxu0 %v6147
    %6476 = vmatpush1.bf16.msra.mxu0 %v6146
    %6477 = vmatprep.subr.bf16.mxu0 %v6143
    %6478 = vmatpush1.bf16.msra.mxu0 %v6142
    %6479 = vmatprep.subr.bf16.mxu0 %v6139
    %6480 = vmatpush1.bf16.msra.mxu0 %v6138
    %6481 = vmatprep.subr.bf16.mxu0 0
    %6482 = vmatpush2.bf16.msra.mxu0 0
    %6483 = vmatprep.subr.bf16.mxu0 0
    %6484 = vmatpush2.bf16.msra.mxu0 0
    %6485 = vmatprep.subr.bf16.mxu0 0
    %6486 = vmatpush2.bf16.msra.mxu0 0
    %6487 = vmatprep.subr.bf16.mxu0 0
    %6488 = vmatpush2.bf16.msra.mxu0 0
    %6489 = vmatprep.subr.bf16.mxu0 0
    %6490 = vmatpush2.bf16.msra.mxu0 0
    %6491 = vmatprep.subr.bf16.mxu0 0
    %6492 = vmatpush2.bf16.msra.mxu0 0
    %6493 = vmatprep.subr.bf16.mxu0 0
    %6494 = vmatpush2.bf16.msra.mxu0 0
    %6495 = vmatprep.subr.bf16.mxu0 0
    %6496 = vmatpush2.bf16.msra.mxu0 0
    %6497 = vmatprep.mubr.bf16.mxu0 0
    %6498 = vmatmul.mubr.bf16.gmra.mxu0 %v6423
    %v6499 = vpop.f32.mrf.mxu0
    %v6500 = vadd.f32 0.0, %v6499
    %v6501 = vpop.f32.mrf.mxu0
    %v6502 = vadd.f32 0.0, %v6501
    %v6503 = vpop.f32.mrf.mxu0
    %v6504 = vpop.f32.mrf.mxu0
    %6505 = vdwg.mxu0
    %v6506 = vadd.f32 %v5817, %v6459
    %v6507 = vadd.f32 %v5819, %v6461
    %v6508 = vadd.f32 %v5868, %v6500
    %v6509 = vadd.f32 %v5870, %v6502
    %v6510 = vxor.u32 %v6506, 2147483648
    %v6511 = vmul.f32 %v6510, 1.442695
    %v6512 = vpow.pop %v6511
    %v6513 = vadd.f32 %v6512, 1.0
    %v6514 = vrcp.pop %v6513
    %v6515 = vmul.f32 1.0, %v6514
    %v6516 = vxor.u32 %v6507, 2147483648
    %v6517 = vmul.f32 %v6516, 1.442695
    %v6518 = vpow.pop %v6517
    %v6519 = vadd.f32 %v6518, 1.0
    %v6520 = vrcp.pop %v6519
    %v6521 = vmul.f32 1.0, %v6520
    %v6522 = vtanh.pop %v6508
    %v6523 = vxor.u32 %v6509, 2147483648
    %v6524 = vmul.f32 %v6523, 1.442695
    %v6525 = vpow.pop %v6524
    %v6526 = vadd.f32 %v6525, 1.0
    %v6527 = vrcp.pop %v6526
    %v6528 = vmul.f32 1.0, %v6527
    %v6529 = vmul.f32 %v6521, %v6419
    %v6530 = vmul.f32 %v6515, %v6522
    %v6531 = vadd.f32 %v6529, %v6530
    %v6532 = vtanh.pop %v6531
    %v6533 = vmul.f32 %v6528, %v6532
    %v6534 = vadd.f32 %v6422, %v6533
    %v6567 = vunpack.c.l.b16 %v6008
    %v6568 = vunpack.c.h.b16 %v6008
    %v6569 = vunpack.c.l.b16 %v6009
    %v6570 = vunpack.c.h.b16 %v6009
    %v6571 = vunpack.c.l.b16 %v6010
    %v6572 = vunpack.c.h.b16 %v6010
    %v6573 = vunpack.c.l.b16 %v6011
    %v6574 = vunpack.c.h.b16 %v6011
    %v6575 = vunpack.c.l.b16 %v6012
    %v6576 = vunpack.c.h.b16 %v6012
    %v6577 = vunpack.c.l.b16 %v6013
    %v6578 = vunpack.c.h.b16 %v6013
    %v6579 = vunpack.c.l.b16 %v6014
    %v6580 = vunpack.c.h.b16 %v6014
    %v6581 = vunpack.c.l.b16 %v6015
    %v6582 = vunpack.c.h.b16 %v6015
    %v6583 = vunpack.c.l.b16 %v6016
    %v6584 = vunpack.c.h.b16 %v6016
    %v6585 = vunpack.c.l.b16 %v6017
    %v6586 = vunpack.c.h.b16 %v6017
    %v6587 = vunpack.c.l.b16 %v6018
    %v6588 = vunpack.c.h.b16 %v6018
    %v6589 = vunpack.c.l.b16 %v6019
    %v6590 = vunpack.c.h.b16 %v6019
    %v6591 = vunpack.c.l.b16 %v6020
    %v6592 = vunpack.c.h.b16 %v6020
    %v6593 = vunpack.c.l.b16 %v6021
    %v6594 = vunpack.c.h.b16 %v6021
    %v6595 = vunpack.c.l.b16 %v6022
    %v6596 = vunpack.c.h.b16 %v6022
    %v6597 = vunpack.c.l.b16 %v6023
    %v6598 = vunpack.c.h.b16 %v6023
    %v6599 = vunpack.c.l.b16 %v6024
    %v6600 = vunpack.c.h.b16 %v6024
    %v6601 = vunpack.c.l.b16 %v6025
    %v6602 = vunpack.c.h.b16 %v6025
    %v6603 = vunpack.c.l.b16 %v6026
    %v6604 = vunpack.c.h.b16 %v6026
    %v6605 = vunpack.c.l.b16 %v6027
    %v6606 = vunpack.c.h.b16 %v6027
    %v6607 = vunpack.c.l.b16 %v6028
    %v6608 = vunpack.c.h.b16 %v6028
    %v6609 = vunpack.c.l.b16 %v6029
    %v6610 = vunpack.c.h.b16 %v6029
    %v6611 = vunpack.c.l.b16 %v6030
    %v6612 = vunpack.c.h.b16 %v6030
    %v6613 = vunpack.c.l.b16 %v6031
    %v6614 = vunpack.c.h.b16 %v6031
    %v6615 = vunpack.c.l.b16 %v6032
    %v6616 = vunpack.c.h.b16 %v6032
    %v6617 = vunpack.c.l.b16 %v6033
    %v6618 = vunpack.c.h.b16 %v6033
    %v6619 = vunpack.c.l.b16 %v6034
    %v6620 = vunpack.c.h.b16 %v6034
    %v6621 = vunpack.c.l.b16 %v6035
    %v6622 = vunpack.c.h.b16 %v6035
    %v6623 = vunpack.c.l.b16 %v6036
    %v6624 = vunpack.c.h.b16 %v6036
    %v6625 = vunpack.c.l.b16 %v6037
    %v6626 = vunpack.c.h.b16 %v6037
    %v6627 = vunpack.c.l.b16 %v6038
    %v6628 = vunpack.c.h.b16 %v6038
    %v6629 = vunpack.c.l.b16 %v6039
    %v6630 = vunpack.c.h.b16 %v6039
    %v6631 = vpack.c.b16 %v6571, %v6567
    %v6632 = vpack.c.b16 %v6572, %v6568
    %v6633 = vpack.c.b16 %v6573, %v6569
    %v6634 = vpack.c.b16 %v6574, %v6570
    %v6635 = vpack.c.b16 %v6579, %v6575
    %v6636 = vpack.c.b16 %v6580, %v6576
    %v6637 = vpack.c.b16 %v6581, %v6577
    %v6638 = vpack.c.b16 %v6582, %v6578
    %v6639 = vpack.c.b16 %v6587, %v6583
    %v6640 = vpack.c.b16 %v6588, %v6584
    %v6641 = vpack.c.b16 %v6589, %v6585
    %v6642 = vpack.c.b16 %v6590, %v6586
    %v6643 = vpack.c.b16 %v6595, %v6591
    %v6644 = vpack.c.b16 %v6596, %v6592
    %v6645 = vpack.c.b16 %v6597, %v6593
    %v6646 = vpack.c.b16 %v6598, %v6594
    %v6647 = vpack.c.b16 %v6603, %v6599
    %v6648 = vpack.c.b16 %v6604, %v6600
    %v6649 = vpack.c.b16 %v6605, %v6601
    %v6650 = vpack.c.b16 %v6606, %v6602
    %v6651 = vpack.c.b16 %v6611, %v6607
    %v6652 = vpack.c.b16 %v6612, %v6608
    %v6653 = vpack.c.b16 %v6613, %v6609
    %v6654 = vpack.c.b16 %v6614, %v6610
    %v6655 = vpack.c.b16 %v6619, %v6615
    %v6656 = vpack.c.b16 %v6620, %v6616
    %v6657 = vpack.c.b16 %v6621, %v6617
    %v6658 = vpack.c.b16 %v6622, %v6618
    %v6659 = vpack.c.b16 %v6627, %v6623
    %v6660 = vpack.c.b16 %v6628, %v6624
    %v6661 = vpack.c.b16 %v6629, %v6625
    %v6662 = vpack.c.b16 %v6630, %v6626
    %6695 = vmatprep.subr.bf16.mxu0 %v6660
    %6696 = vmatpush1.bf16.msra.mxu0 %v6659
    %6697 = vmatprep.subr.bf16.mxu0 %v6656
    %6698 = vmatpush1.bf16.msra.mxu0 %v6655
    %6699 = vmatprep.subr.bf16.mxu0 %v6652
    %6700 = vmatpush1.bf16.msra.mxu0 %v6651
    %6701 = vmatprep.subr.bf16.mxu0 %v6648
    %6702 = vmatpush1.bf16.msra.mxu0 %v6647
    %6703 = vmatprep.subr.bf16.mxu0 %v6644
    %6704 = vmatpush1.bf16.msra.mxu0 %v6643
    %6705 = vmatprep.subr.bf16.mxu0 %v6640
    %6706 = vmatpush1.bf16.msra.mxu0 %v6639
    %6707 = vmatprep.subr.bf16.mxu0 %v6636
    %6708 = vmatpush1.bf16.msra.mxu0 %v6635
    %6709 = vmatprep.subr.bf16.mxu0 %v6632
    %6710 = vmatpush1.bf16.msra.mxu0 %v6631
    %6711 = vmatprep.subr.bf16.mxu0 0
    %6712 = vmatpush2.bf16.msra.mxu0 0
    %6713 = vmatprep.subr.bf16.mxu0 0
    %6714 = vmatpush2.bf16.msra.mxu0 0
    %6715 = vmatprep.subr.bf16.mxu0 0
    %6716 = vmatpush2.bf16.msra.mxu0 0
    %6717 = vmatprep.subr.bf16.mxu0 0
    %6718 = vmatpush2.bf16.msra.mxu0 0
    %6719 = vmatprep.subr.bf16.mxu0 0
    %6720 = vmatpush2.bf16.msra.mxu0 0
    %6721 = vmatprep.subr.bf16.mxu0 0
    %6722 = vmatpush2.bf16.msra.mxu0 0
    %6723 = vmatprep.subr.bf16.mxu0 0
    %6724 = vmatpush2.bf16.msra.mxu0 0
    %6725 = vmatprep.subr.bf16.mxu0 0
    %6726 = vmatpush2.bf16.msra.mxu0 0
    %6727 = vmatprep.mubr.bf16.mxu0 0
    %6728 = vmatmul.mubr.bf16.gmra.mxu0 0
    %v6729 = vpop.f32.mrf.mxu0
    %v6730 = vadd.f32 0.0, %v6729
    %v6731 = vpop.f32.mrf.mxu0
    %v6732 = vadd.f32 0.0, %v6731
    %v6733 = vpop.f32.mrf.mxu0
    %v6734 = vpop.f32.mrf.mxu0
    %6735 = vdwg.mxu0
    %6736 = vmatprep.subr.bf16.mxu0 %v6662
    %6737 = vmatpush1.bf16.msra.mxu0 %v6661
    %6738 = vmatprep.subr.bf16.mxu0 %v6658
    %6739 = vmatpush1.bf16.msra.mxu0 %v6657
    %6740 = vmatprep.subr.bf16.mxu0 %v6654
    %6741 = vmatpush1.bf16.msra.mxu0 %v6653
    %6742 = vmatprep.subr.bf16.mxu0 %v6650
    %6743 = vmatpush1.bf16.msra.mxu0 %v6649
    %6744 = vmatprep.subr.bf16.mxu0 %v6646
    %6745 = vmatpush1.bf16.msra.mxu0 %v6645
    %6746 = vmatprep.subr.bf16.mxu0 %v6642
    %6747 = vmatpush1.bf16.msra.mxu0 %v6641
    %6748 = vmatprep.subr.bf16.mxu0 %v6638
    %6749 = vmatpush1.bf16.msra.mxu0 %v6637
    %6750 = vmatprep.subr.bf16.mxu0 %v6634
    %6751 = vmatpush1.bf16.msra.mxu0 %v6633
    %6752 = vmatprep.subr.bf16.mxu0 0
    %6753 = vmatpush2.bf16.msra.mxu0 0
    %6754 = vmatprep.subr.bf16.mxu0 0
    %6755 = vmatpush2.bf16.msra.mxu0 0
    %6756 = vmatprep.subr.bf16.mxu0 0
    %6757 = vmatpush2.bf16.msra.mxu0 0
    %6758 = vmatprep.subr.bf16.mxu0 0
    %6759 = vmatpush2.bf16.msra.mxu0 0
    %6760 = vmatprep.subr.bf16.mxu0 0
    %6761 = vmatpush2.bf16.msra.mxu0 0
    %6762 = vmatprep.subr.bf16.mxu0 0
    %6763 = vmatpush2.bf16.msra.mxu0 0
    %6764 = vmatprep.subr.bf16.mxu0 0
    %6765 = vmatpush2.bf16.msra.mxu0 0
    %6766 = vmatprep.subr.bf16.mxu0 0
    %6767 = vmatpush2.bf16.msra.mxu0 0
    %6768 = vmatprep.mubr.bf16.mxu0 0
    %6769 = vmatmul.mubr.bf16.gmra.mxu0 0
    %v6770 = vpop.f32.mrf.mxu0
    %v6771 = vadd.f32 0.0, %v6770
    %v6772 = vpop.f32.mrf.mxu0
    %v6773 = vadd.f32 0.0, %v6772
    %v6774 = vpop.f32.mrf.mxu0
    %v6775 = vpop.f32.mrf.mxu0
    %6776 = vdwg.mxu0
    %v6777 = vadd.f32 %v5919, %v6730
    %v6778 = vadd.f32 %v5921, %v6732
    %v6779 = vadd.f32 %v5970, %v6771
    %v6780 = vadd.f32 %v5972, %v6773
    %v6781 = vxor.u32 %v6777, 2147483648
    %v6782 = vmul.f32 %v6781, 1.442695
    %v6783 = vpow.pop %v6782
    %v6784 = vadd.f32 %v6783, 1.0
    %v6785 = vrcp.pop %v6784
    %v6786 = vmul.f32 1.0, %v6785
    %v6787 = vxor.u32 %v6778, 2147483648
    %v6788 = vmul.f32 %v6787, 1.442695
    %v6789 = vpow.pop %v6788
    %v6790 = vadd.f32 %v6789, 1.0
    %v6791 = vrcp.pop %v6790
    %v6792 = vmul.f32 1.0, %v6791
    %v6793 = vtanh.pop %v6779
    %v6794 = vxor.u32 %v6780, 2147483648
    %v6795 = vmul.f32 %v6794, 1.442695
    %v6796 = vpow.pop %v6795
    %v6797 = vadd.f32 %v6796, 1.0
    %v6798 = vrcp.pop %v6797
    %v6799 = vmul.f32 1.0, %v6798
    %v6800 = vmul.f32 %v6792, 0.0
    %v6801 = vmul.f32 %v6786, %v6793
    %v6802 = vadd.f32 %v6800, %v6801
    %v6803 = vtanh.pop %v6802
    %v6804 = vmul.f32 %v6799, %v6803
    %v6805 = vadd.f32 %v6804, 0.0
    %v6806 = vpack.c.bf16 %v6804, %v6804
    %6807 = vmatprep.subr.bf16.mxu0 %v6660
    %6808 = vmatpush1.bf16.msra.mxu0 %v6659
    %6809 = vmatprep.subr.bf16.mxu0 %v6656
    %6810 = vmatpush1.bf16.msra.mxu0 %v6655
    %6811 = vmatprep.subr.bf16.mxu0 %v6652
    %6812 = vmatpush1.bf16.msra.mxu0 %v6651
    %6813 = vmatprep.subr.bf16.mxu0 %v6648
    %6814 = vmatpush1.bf16.msra.mxu0 %v6647
    %6815 = vmatprep.subr.bf16.mxu0 %v6644
    %6816 = vmatpush1.bf16.msra.mxu0 %v6643
    %6817 = vmatprep.subr.bf16.mxu0 %v6640
    %6818 = vmatpush1.bf16.msra.mxu0 %v6639
    %6819 = vmatprep.subr.bf16.mxu0 %v6636
    %6820 = vmatpush1.bf16.msra.mxu0 %v6635
    %6821 = vmatprep.subr.bf16.mxu0 %v6632
    %6822 = vmatpush1.bf16.msra.mxu0 %v6631
    %6823 = vmatprep.subr.bf16.mxu0 0
    %6824 = vmatpush2.bf16.msra.mxu0 0
    %6825 = vmatprep.subr.bf16.mxu0 0
    %6826 = vmatpush2.bf16.msra.mxu0 0
    %6827 = vmatprep.subr.bf16.mxu0 0
    %6828 = vmatpush2.bf16.msra.mxu0 0
    %6829 = vmatprep.subr.bf16.mxu0 0
    %6830 = vmatpush2.bf16.msra.mxu0 0
    %6831 = vmatprep.subr.bf16.mxu0 0
    %6832 = vmatpush2.bf16.msra.mxu0 0
    %6833 = vmatprep.subr.bf16.mxu0 0
    %6834 = vmatpush2.bf16.msra.mxu0 0
    %6835 = vmatprep.subr.bf16.mxu0 0
    %6836 = vmatpush2.bf16.msra.mxu0 0
    %6837 = vmatprep.subr.bf16.mxu0 0
    %6838 = vmatpush2.bf16.msra.mxu0 0
    %6839 = vmatprep.mubr.bf16.mxu0 0
    %6840 = vmatmul.mubr.bf16.gmra.mxu0 %v6806
    %v6841 = vpop.f32.mrf.mxu0
    %v6842 = vadd.f32 0.0, %v6841
    %v6843 = vpop.f32.mrf.mxu0
    %v6844 = vadd.f32 0.0, %v6843
    %v6845 = vpop.f32.mrf.mxu0
    %v6846 = vpop.f32.mrf.mxu0
    %6847 = vdwg.mxu0
    %6848 = vmatprep.subr.bf16.mxu0 %v6662
    %6849 = vmatpush1.bf16.msra.mxu0 %v6661
    %6850 = vmatprep.subr.bf16.mxu0 %v6658
    %6851 = vmatpush1.bf16.msra.mxu0 %v6657
    %6852 = vmatprep.subr.bf16.mxu0 %v6654
    %6853 = vmatpush1.bf16.msra.mxu0 %v6653
    %6854 = vmatprep.subr.bf16.mxu0 %v6650
    %6855 = vmatpush1.bf16.msra.mxu0 %v6649
    %6856 = vmatprep.subr.bf16.mxu0 %v6646
    %6857 = vmatpush1.bf16.msra.mxu0 %v6645
    %6858 = vmatprep.subr.bf16.mxu0 %v6642
    %6859 = vmatpush1.bf16.msra.mxu0 %v6641
    %6860 = vmatprep.subr.bf16.mxu0 %v6638
    %6861 = vmatpush1.bf16.msra.mxu0 %v6637
    %6862 = vmatprep.subr.bf16.mxu0 %v6634
    %6863 = vmatpush1.bf16.msra.mxu0 %v6633
    %6864 = vmatprep.subr.bf16.mxu0 0
    %6865 = vmatpush2.bf16.msra.mxu0 0
    %6866 = vmatprep.subr.bf16.mxu0 0
    %6867 = vmatpush2.bf16.msra.mxu0 0
    %6868 = vmatprep.subr.bf16.mxu0 0
    %6869 = vmatpush2.bf16.msra.mxu0 0
    %6870 = vmatprep.subr.bf16.mxu0 0
    %6871 = vmatpush2.bf16.msra.mxu0 0
    %6872 = vmatprep.subr.bf16.mxu0 0
    %6873 = vmatpush2.bf16.msra.mxu0 0
    %6874 = vmatprep.subr.bf16.mxu0 0
    %6875 = vmatpush2.bf16.msra.mxu0 0
    %6876 = vmatprep.subr.bf16.mxu0 0
    %6877 = vmatpush2.bf16.msra.mxu0 0
    %6878 = vmatprep.subr.bf16.mxu0 0
    %6879 = vmatpush2.bf16.msra.mxu0 0
    %6880 = vmatprep.mubr.bf16.mxu0 0
    %6881 = vmatmul.mubr.bf16.gmra.mxu0 %v6806
    %v6882 = vpop.f32.mrf.mxu0
    %v6883 = vadd.f32 0.0, %v6882
    %v6884 = vpop.f32.mrf.mxu0
    %v6885 = vadd.f32 0.0, %v6884
    %v6886 = vpop.f32.mrf.mxu0
    %v6887 = vpop.f32.mrf.mxu0
    %6888 = vdwg.mxu0
    %v6889 = vadd.f32 %v5913, %v6842
    %v6890 = vadd.f32 %v5915, %v6844
    %v6891 = vadd.f32 %v5964, %v6883
    %v6892 = vadd.f32 %v5966, %v6885
    %v6893 = vxor.u32 %v6889, 2147483648
    %v6894 = vmul.f32 %v6893, 1.442695
    %v6895 = vpow.pop %v6894
    %v6896 = vadd.f32 %v6895, 1.0
    %v6897 = vrcp.pop %v6896
    %v6898 = vmul.f32 1.0, %v6897
    %v6899 = vxor.u32 %v6890, 2147483648
    %v6900 = vmul.f32 %v6899, 1.442695
    %v6901 = vpow.pop %v6900
    %v6902 = vadd.f32 %v6901, 1.0
    %v6903 = vrcp.pop %v6902
    %v6904 = vmul.f32 1.0, %v6903
    %v6905 = vtanh.pop %v6891
    %v6906 = vxor.u32 %v6892, 2147483648
    %v6907 = vmul.f32 %v6906, 1.442695
    %v6908 = vpow.pop %v6907
    %v6909 = vadd.f32 %v6908, 1.0
    %v6910 = vrcp.pop %v6909
    %v6911 = vmul.f32 1.0, %v6910
    %v6912 = vmul.f32 %v6904, %v6802
    %v6913 = vmul.f32 %v6898, %v6905
    %v6914 = vadd.f32 %v6912, %v6913
    %v6915 = vtanh.pop %v6914
    %v6916 = vmul.f32 %v6911, %v6915
    %v6917 = vadd.f32 %v6805, %v6916
    %v6918 = vpack.c.bf16 %v6916, %v6916
    %6919 = vmatprep.subr.bf16.mxu0 %v6660
    %6920 = vmatpush1.bf16.msra.mxu0 %v6659
    %6921 = vmatprep.subr.bf16.mxu0 %v6656
    %6922 = vmatpush1.bf16.msra.mxu0 %v6655
    %6923 = vmatprep.subr.bf16.mxu0 %v6652
    %6924 = vmatpush1.bf16.msra.mxu0 %v6651
    %6925 = vmatprep.subr.bf16.mxu0 %v6648
    %6926 = vmatpush1.bf16.msra.mxu0 %v6647
    %6927 = vmatprep.subr.bf16.mxu0 %v6644
    %6928 = vmatpush1.bf16.msra.mxu0 %v6643
    %6929 = vmatprep.subr.bf16.mxu0 %v6640
    %6930 = vmatpush1.bf16.msra.mxu0 %v6639
    %6931 = vmatprep.subr.bf16.mxu0 %v6636
    %6932 = vmatpush1.bf16.msra.mxu0 %v6635
    %6933 = vmatprep.subr.bf16.mxu0 %v6632
    %6934 = vmatpush1.bf16.msra.mxu0 %v6631
    %6935 = vmatprep.subr.bf16.mxu0 0
    %6936 = vmatpush2.bf16.msra.mxu0 0
    %6937 = vmatprep.subr.bf16.mxu0 0
    %6938 = vmatpush2.bf16.msra.mxu0 0
    %6939 = vmatprep.subr.bf16.mxu0 0
    %6940 = vmatpush2.bf16.msra.mxu0 0
    %6941 = vmatprep.subr.bf16.mxu0 0
    %6942 = vmatpush2.bf16.msra.mxu0 0
    %6943 = vmatprep.subr.bf16.mxu0 0
    %6944 = vmatpush2.bf16.msra.mxu0 0
    %6945 = vmatprep.subr.bf16.mxu0 0
    %6946 = vmatpush2.bf16.msra.mxu0 0
    %6947 = vmatprep.subr.bf16.mxu0 0
    %6948 = vmatpush2.bf16.msra.mxu0 0
    %6949 = vmatprep.subr.bf16.mxu0 0
    %6950 = vmatpush2.bf16.msra.mxu0 0
    %6951 = vmatprep.mubr.bf16.mxu0 0
    %6952 = vmatmul.mubr.bf16.gmra.mxu0 %v6918
    %v6953 = vpop.f32.mrf.mxu0
    %v6954 = vadd.f32 0.0, %v6953
    %v6955 = vpop.f32.mrf.mxu0
    %v6956 = vadd.f32 0.0, %v6955
    %v6957 = vpop.f32.mrf.mxu0
    %v6958 = vpop.f32.mrf.mxu0
    %6959 = vdwg.mxu0
    %6960 = vmatprep.subr.bf16.mxu0 %v6662
    %6961 = vmatpush1.bf16.msra.mxu0 %v6661
    %6962 = vmatprep.subr.bf16.mxu0 %v6658
    %6963 = vmatpush1.bf16.msra.mxu0 %v6657
    %6964 = vmatprep.subr.bf16.mxu0 %v6654
    %6965 = vmatpush1.bf16.msra.mxu0 %v6653
    %6966 = vmatprep.subr.bf16.mxu0 %v6650
    %6967 = vmatpush1.bf16.msra.mxu0 %v6649
    %6968 = vmatprep.subr.bf16.mxu0 %v6646
    %6969 = vmatpush1.bf16.msra.mxu0 %v6645
    %6970 = vmatprep.subr.bf16.mxu0 %v6642
    %6971 = vmatpush1.bf16.msra.mxu0 %v6641
    %6972 = vmatprep.subr.bf16.mxu0 %v6638
    %6973 = vmatpush1.bf16.msra.mxu0 %v6637
    %6974 = vmatprep.subr.bf16.mxu0 %v6634
    %6975 = vmatpush1.bf16.msra.mxu0 %v6633
    %6976 = vmatprep.subr.bf16.mxu0 0
    %6977 = vmatpush2.bf16.msra.mxu0 0
    %6978 = vmatprep.subr.bf16.mxu0 0
    %6979 = vmatpush2.bf16.msra.mxu0 0
    %6980 = vmatprep.subr.bf16.mxu0 0
    %6981 = vmatpush2.bf16.msra.mxu0 0
    %6982 = vmatprep.subr.bf16.mxu0 0
    %6983 = vmatpush2.bf16.msra.mxu0 0
    %6984 = vmatprep.subr.bf16.mxu0 0
    %6985 = vmatpush2.bf16.msra.mxu0 0
    %6986 = vmatprep.subr.bf16.mxu0 0
    %6987 = vmatpush2.bf16.msra.mxu0 0
    %6988 = vmatprep.subr.bf16.mxu0 0
    %6989 = vmatpush2.bf16.msra.mxu0 0
    %6990 = vmatprep.subr.bf16.mxu0 0
    %6991 = vmatpush2.bf16.msra.mxu0 0
    %6992 = vmatprep.mubr.bf16.mxu0 0
    %6993 = vmatmul.mubr.bf16.gmra.mxu0 %v6918
    %v6994 = vpop.f32.mrf.mxu0
    %v6995 = vadd.f32 0.0, %v6994
    %v6996 = vpop.f32.mrf.mxu0
    %v6997 = vadd.f32 0.0, %v6996
    %v6998 = vpop.f32.mrf.mxu0
    %v6999 = vpop.f32.mrf.mxu0
    %7000 = vdwg.mxu0
    %v7001 = vadd.f32 %v5909, %v6954
    %v7002 = vadd.f32 %v5911, %v6956
    %v7003 = vadd.f32 %v5960, %v6995
    %v7004 = vadd.f32 %v5962, %v6997
    %v7005 = vxor.u32 %v7001, 2147483648
    %v7006 = vmul.f32 %v7005, 1.442695
    %v7007 = vpow.pop %v7006
    %v7008 = vadd.f32 %v7007, 1.0
    %v7009 = vrcp.pop %v7008
    %v7010 = vmul.f32 1.0, %v7009
    %v7011 = vxor.u32 %v7002, 2147483648
    %v7012 = vmul.f32 %v7011, 1.442695
    %v7013 = vpow.pop %v7012
    %v7014 = vadd.f32 %v7013, 1.0
    %v7015 = vrcp.pop %v7014
    %v7016 = vmul.f32 1.0, %v7015
    %v7017 = vtanh.pop %v7003
    %v7018 = vxor.u32 %v7004, 2147483648
    %v7019 = vmul.f32 %v7018, 1.442695
    %v7020 = vpow.pop %v7019
    %v7021 = vadd.f32 %v7020, 1.0
    %v7022 = vrcp.pop %v7021
    %v7023 = vmul.f32 1.0, %v7022
    %v7024 = vmul.f32 %v7016, %v6914
    %v7025 = vmul.f32 %v7010, %v7017
    %v7026 = vadd.f32 %v7024, %v7025
    %v7027 = vtanh.pop %v7026
    %v7028 = vmul.f32 %v7023, %v7027
    %v7029 = vadd.f32 %v6917, %v7028
    %v7030 = vld [vmem:[#allocation6] sm:$0xf]
    %v7031 = vld [vmem:[#allocation6 + $0x4] sm:$0xf]
    %v7032 = vld [vmem:[#allocation6 + $0x8] sm:$0xf]
    %v7033 = vld [vmem:[#allocation6 + $0xc] sm:$0xf]
    %v7034 = vld [vmem:[#allocation6 + $0x10] sm:$0xf]
    %v7035 = vld [vmem:[#allocation6 + $0x14] sm:$0xf]
    %v7036 = vld [vmem:[#allocation6 + $0x18] sm:$0xf]
    %v7037 = vld [vmem:[#allocation6 + $0x1c] sm:$0xf]
    %v7038 = vld [vmem:[#allocation6 + $0x20] sm:$0xf]
    %v7039 = vld [vmem:[#allocation6 + $0x24] sm:$0xf]
    %v7040 = vld [vmem:[#allocation6 + $0x28] sm:$0xf]
    %v7041 = vld [vmem:[#allocation6 + $0x2c] sm:$0xf]
    %v7042 = vld [vmem:[#allocation6 + $0x30] sm:$0xf]
    %v7043 = vld [vmem:[#allocation6 + $0x34] sm:$0xf]
    %v7044 = vld [vmem:[#allocation6 + $0x38] sm:$0xf]
    %v7045 = vld [vmem:[#allocation6 + $0x3c] sm:$0xf]
    %v7046 = vld [vmem:[#allocation6 + $0x40] sm:$0xf]
    %v7047 = vld [vmem:[#allocation6 + $0x44] sm:$0xf]
    %v7048 = vld [vmem:[#allocation6 + $0x48] sm:$0xf]
    %v7049 = vld [vmem:[#allocation6 + $0x4c] sm:$0xf]
    %v7050 = vld [vmem:[#allocation6 + $0x50] sm:$0xf]
    %v7051 = vld [vmem:[#allocation6 + $0x54] sm:$0xf]
    %v7052 = vld [vmem:[#allocation6 + $0x58] sm:$0xf]
    %v7053 = vld [vmem:[#allocation6 + $0x5c] sm:$0xf]
    %v7054 = vld [vmem:[#allocation6 + $0x60] sm:$0xf]
    %v7055 = vld [vmem:[#allocation6 + $0x64] sm:$0xf]
    %v7056 = vld [vmem:[#allocation6 + $0x68] sm:$0xf]
    %v7057 = vld [vmem:[#allocation6 + $0x6c] sm:$0xf]
    %v7058 = vld [vmem:[#allocation6 + $0x70] sm:$0xf]
    %v7059 = vld [vmem:[#allocation6 + $0x74] sm:$0xf]
    %v7060 = vld [vmem:[#allocation6 + $0x78] sm:$0xf]
    %v7061 = vld [vmem:[#allocation6 + $0x7c] sm:$0xf]
    %v7062 = vpack.c.bf16 %v6534, %v6534
    %v7063 = vpack.c.bf16 %v7029, %v7029
    %v7064 = vlaneseq
    %v7065 = vshrl.u32 %v7064, 7
    %v7066 = vsub.s32 0, %v7065
    %v7067 = vrot.slane %v3253, %v7066
    %v7100 = vunpack.c.l.b16 %v7030
    %v7101 = vunpack.c.l.b16 %v7031
    %v7102 = vunpack.c.l.b16 %v7032
    %v7103 = vunpack.c.l.b16 %v7033
    %v7104 = vunpack.c.l.b16 %v7034
    %v7105 = vunpack.c.l.b16 %v7035
    %v7106 = vunpack.c.l.b16 %v7036
    %v7107 = vunpack.c.l.b16 %v7037
    %v7108 = vunpack.c.l.b16 %v7038
    %v7109 = vunpack.c.l.b16 %v7039
    %v7110 = vunpack.c.l.b16 %v7040
    %v7111 = vunpack.c.l.b16 %v7041
    %v7112 = vunpack.c.l.b16 %v7042
    %v7113 = vunpack.c.l.b16 %v7043
    %v7114 = vunpack.c.l.b16 %v7044
    %v7115 = vunpack.c.l.b16 %v7045
    %v7116 = vunpack.c.l.b16 %v7046
    %v7117 = vunpack.c.l.b16 %v7047
    %v7118 = vunpack.c.l.b16 %v7048
    %v7119 = vunpack.c.l.b16 %v7049
    %v7120 = vunpack.c.l.b16 %v7050
    %v7121 = vunpack.c.l.b16 %v7051
    %v7122 = vunpack.c.l.b16 %v7052
    %v7123 = vunpack.c.l.b16 %v7053
    %v7124 = vunpack.c.l.b16 %v7054
    %v7125 = vunpack.c.l.b16 %v7055
    %v7126 = vunpack.c.l.b16 %v7056
    %v7127 = vunpack.c.l.b16 %v7057
    %v7128 = vunpack.c.l.b16 %v7058
    %v7129 = vunpack.c.l.b16 %v7059
    %v7130 = vunpack.c.l.b16 %v7060
    %v7131 = vunpack.c.l.b16 %v7061
    %v7132 = vpack.c.b16 %v7101, %v7100
    %v7133 = vpack.c.b16 %v7103, %v7102
    %v7134 = vpack.c.b16 %v7105, %v7104
    %v7135 = vpack.c.b16 %v7107, %v7106
    %v7136 = vpack.c.b16 %v7109, %v7108
    %v7137 = vpack.c.b16 %v7111, %v7110
    %v7138 = vpack.c.b16 %v7113, %v7112
    %v7139 = vpack.c.b16 %v7115, %v7114
    %v7140 = vpack.c.b16 %v7117, %v7116
    %v7141 = vpack.c.b16 %v7119, %v7118
    %v7142 = vpack.c.b16 %v7121, %v7120
    %v7143 = vpack.c.b16 %v7123, %v7122
    %v7144 = vpack.c.b16 %v7125, %v7124
    %v7145 = vpack.c.b16 %v7127, %v7126
    %v7146 = vpack.c.b16 %v7129, %v7128
    %v7147 = vpack.c.b16 %v7131, %v7130
    %7164 = vmatprep.subr.bf16.mxu0 0
    %7165 = vmatpush1.bf16.msra.mxu0 %v7139
    %7166 = vmatprep.subr.bf16.mxu0 0
    %7167 = vmatpush1.bf16.msra.mxu0 %v7138
    %7168 = vmatprep.subr.bf16.mxu0 0
    %7169 = vmatpush1.bf16.msra.mxu0 %v7137
    %7170 = vmatprep.subr.bf16.mxu0 0
    %7171 = vmatpush1.bf16.msra.mxu0 %v7136
    %7172 = vmatprep.subr.bf16.mxu0 0
    %7173 = vmatpush1.bf16.msra.mxu0 %v7135
    %7174 = vmatprep.subr.bf16.mxu0 0
    %7175 = vmatpush1.bf16.msra.mxu0 %v7134
    %7176 = vmatprep.subr.bf16.mxu0 0
    %7177 = vmatpush1.bf16.msra.mxu0 %v7133
    %7178 = vmatprep.subr.bf16.mxu0 0
    %7179 = vmatpush1.bf16.msra.mxu0 %v7132
    %7180 = vmatprep.subr.bf16.mxu0 0
    %7181 = vmatpush2.bf16.msra.mxu0 %v7147
    %7182 = vmatprep.subr.bf16.mxu0 0
    %7183 = vmatpush2.bf16.msra.mxu0 %v7146
    %7184 = vmatprep.subr.bf16.mxu0 0
    %7185 = vmatpush2.bf16.msra.mxu0 %v7145
    %7186 = vmatprep.subr.bf16.mxu0 0
    %7187 = vmatpush2.bf16.msra.mxu0 %v7144
    %7188 = vmatprep.subr.bf16.mxu0 0
    %7189 = vmatpush2.bf16.msra.mxu0 %v7143
    %7190 = vmatprep.subr.bf16.mxu0 0
    %7191 = vmatpush2.bf16.msra.mxu0 %v7142
    %7192 = vmatprep.subr.bf16.mxu0 0
    %7193 = vmatpush2.bf16.msra.mxu0 %v7141
    %7194 = vmatprep.subr.bf16.mxu0 0
    %7195 = vmatpush2.bf16.msra.mxu0 %v7140
    %7196 = vmatprep.mubr.bf16.mxu0 %v7063
    %7197 = vmatmul.mubr.bf16.gmra.mxu0 %v7062
    %v7198 = vpop.f32.mrf.mxu0
    %v7199 = vadd.f32 %v7067, %v7198
    %v7200 = vpop.f32.mrf.mxu0
    %v7201 = vpop.f32.mrf.mxu0
    %v7202 = vpop.f32.mrf.mxu0
    %7203 = vdwg.mxu0
    %7204 = vadd.xlane.f32.xlu0 %v7199
    %v7205 = vpop.xlane.xlu0 %7204
    %v7206 = vmul.f32 %v7205, %v3258
    %v7207 = vsub.f32 %v7199, %v7206
    %v7208 = vmul.f32 %v7207, %v7207
    %7209 = vadd.xlane.f32.xlu0 %v7208
    %v7210 = vpop.xlane.xlu0 %7209
    %v7211 = vmul.f32 %v7210, %v3258
    %v7212 = vadd.f32 %v7211, 1e-06
    %v7213 = vrsqrt.pop %v7212
    %v7214 = vmul.f32 %v7207, %v7213
    %v7215 = vlaneseq
    %v7216 = vshrl.u32 %v7215, 7
    %v7217 = vsub.s32 0, %v7216
    %v7218 = vrot.slane %v3251, %v7217
    %v7219 = vmul.f32 %v7214, %v7218
    %v7220 = vlaneseq
    %v7221 = vshrl.u32 %v7220, 7
    %v7222 = vsub.s32 0, %v7221
    %v7223 = vrot.slane %v3252, %v7222
    %v7224 = vadd.f32 %v7219, %v7223
    %v7225 = vadd.f32 %v3277, %v7224
    %v7226 = vld [vmem:[%s21] sm:$0xff]
    %v7227 = vld [vmem:[%s21 + $0x8] sm:$0xff]
    %v7228 = vld [vmem:[%s21 + $0x10] sm:$0xff]
    %v7229 = vld [vmem:[%s21 + $0x18] sm:$0xff]
    %v7230 = vld [vmem:[%s21 + $0x20] sm:$0xff]
    %v7231 = vld [vmem:[%s21 + $0x28] sm:$0xff]
    %v7232 = vld [vmem:[%s21 + $0x30] sm:$0xff]
    %v7233 = vld [vmem:[%s21 + $0x38] sm:$0xff]
    %v7234 = vld [vmem:[%s21 + $0x40] sm:$0xff]
    %v7235 = vld [vmem:[%s21 + $0x48] sm:$0xff]
    %v7236 = vld [vmem:[%s21 + $0x50] sm:$0xff]
    %v7237 = vld [vmem:[%s21 + $0x58] sm:$0xff]
    %v7238 = vld [vmem:[%s21 + $0x60] sm:$0xff]
    %v7239 = vld [vmem:[%s21 + $0x68] sm:$0xff]
    %v7240 = vld [vmem:[%s21 + $0x70] sm:$0xff]
    %v7241 = vld [vmem:[%s21 + $0x78] sm:$0xff]
    %v7242 = vld [vmem:[#allocation31] sm:$0x1]
    %v7244 = vlaneseq
    %v7245 = vshrl.u32 %v7244, 7
    %v7246 = vsub.s32 0, %v7245
    %v7247 = vrot.slane %v7242, %v7246
    %7249 = vmatprep.subr.mxu0 0.0
    %7250 = vmatpush1.msra.mxu0 %v7241
    %7251 = vmatprep.subr.mxu0 0.0
    %7252 = vmatpush1.msra.mxu0 %v7240
    %7253 = vmatprep.subr.mxu0 0.0
    %7254 = vmatpush1.msra.mxu0 %v7239
    %7255 = vmatprep.subr.mxu0 0.0
    %7256 = vmatpush1.msra.mxu0 %v7238
    %7257 = vmatprep.subr.mxu0 0.0
    %7258 = vmatpush1.msra.mxu0 %v7237
    %7259 = vmatprep.subr.mxu0 0.0
    %7260 = vmatpush1.msra.mxu0 %v7236
    %7261 = vmatprep.subr.mxu0 0.0
    %7262 = vmatpush1.msra.mxu0 %v7235
    %7263 = vmatprep.subr.mxu0 0.0
    %7264 = vmatpush1.msra.mxu0 %v7234
    %7265 = vmatprep.subr.mxu0 0.0
    %7266 = vmatpush1.msra.mxu0 %v7233
    %7267 = vmatprep.subr.mxu0 0.0
    %7268 = vmatpush1.msra.mxu0 %v7232
    %7269 = vmatprep.subr.mxu0 0.0
    %7270 = vmatpush1.msra.mxu0 %v7231
    %7271 = vmatprep.subr.mxu0 0.0
    %7272 = vmatpush1.msra.mxu0 %v7230
    %7273 = vmatprep.subr.mxu0 0.0
    %7274 = vmatpush1.msra.mxu0 %v7229
    %7275 = vmatprep.subr.mxu0 0.0
    %7276 = vmatpush1.msra.mxu0 %v7228
    %7277 = vmatprep.subr.mxu0 0.0
    %7278 = vmatpush1.msra.mxu0 %v7227
    %7279 = vmatprep.subr.mxu0 0.0
    %7280 = vmatpush1.msra.mxu0 %v7226
    %7281 = vmatprep.subr.mxu0 0.0
    %7282 = vmatpush2.msra.mxu0 0.0
    %7283 = vmatprep.subr.mxu0 0.0
    %7284 = vmatpush2.msra.mxu0 0.0
    %7285 = vmatprep.subr.mxu0 0.0
    %7286 = vmatpush2.msra.mxu0 0.0
    %7287 = vmatprep.subr.mxu0 0.0
    %7288 = vmatpush2.msra.mxu0 0.0
    %7289 = vmatprep.subr.mxu0 0.0
    %7290 = vmatpush2.msra.mxu0 0.0
    %7291 = vmatprep.subr.mxu0 0.0
    %7292 = vmatpush2.msra.mxu0 0.0
    %7293 = vmatprep.subr.mxu0 0.0
    %7294 = vmatpush2.msra.mxu0 0.0
    %7295 = vmatprep.subr.mxu0 0.0
    %7296 = vmatpush2.msra.mxu0 0.0
    %7297 = vmatprep.subr.mxu0 0.0
    %7298 = vmatpush2.msra.mxu0 0.0
    %7299 = vmatprep.subr.mxu0 0.0
    %7300 = vmatpush2.msra.mxu0 0.0
    %7301 = vmatprep.subr.mxu0 0.0
    %7302 = vmatpush2.msra.mxu0 0.0
    %7303 = vmatprep.subr.mxu0 0.0
    %7304 = vmatpush2.msra.mxu0 0.0
    %7305 = vmatprep.subr.mxu0 0.0
    %7306 = vmatpush2.msra.mxu0 0.0
    %7307 = vmatprep.subr.mxu0 0.0
    %7308 = vmatpush2.msra.mxu0 0.0
    %7309 = vmatprep.subr.mxu0 0.0
    %7310 = vmatpush2.msra.mxu0 0.0
    %7311 = vmatprep.subr.mxu0 0.0
    %7312 = vmatpush2.msra.mxu0 0.0
    %7313 = vmatprep.mubr.f32.mxu0 0.0
    %7314 = vmatmul.mubr.f32.gmra.mxu0 %v7225
    %v7315 = vpop.f32.mrf.mxu0
    %v7316 = vadd.f32 %v7247, %v7315
    %v7317 = vpop.f32.mrf.mxu0
    %7318 = vdwg.mxu0
    %v7319 = vxor.u32 %v7316, 2147483648
    %v7320 = vmul.f32 %v7319, 1.442695
    %v7321 = vpow.pop %v7320
    %v7322 = vadd.f32 %v7321, 1.0
    %v7323 = vrcp.pop %v7322
    %v7324 = vmul.f32 1.0, %v7323
    %vm7325 = vcmask 64512
    %7326 = vst.msk [vmem:[%s28] sm:$0xff] %vm7325, %v7324
    // Predicated region
    $region208: #{net3_forward.1} parent=1 // pred_check
      _
    $region209: #{net3_forward.1} parent=1 // pred_check_branch
      %7328 = sbr.rel (0) target = $region211
    $region210: #{net3_forward.1} parent=1 // pred_region
      _
    $region211: #{net3_forward.1} parent=1 // pred_fallthru
      _
    // Predicated region
    $region212: #{net3_forward.1} parent=1 // pred_check
      _
    $region213: #{net3_forward.1} parent=1 // pred_check_branch
      %7330 = sbr.rel (0) target = $region215
    $region214: #{net3_forward.1} parent=1 // pred_region
      _
    $region215: #{net3_forward.1} parent=1 // pred_fallthru
      _
    %7331 = vsyncpa [#allocation9], 1
    %7332 = vsyncpa [#allocation11], 1
    %7333 = vsyncpa [#allocation14], 1
    %7334 = vsyncpa [#allocation17], 1
    %7335 = vsyncpa [#allocation20], 1
    %7336 = vsyncpa [#allocation23], 1
    %7337 = vsyncpa [#allocation26], 1
    %7338 = vsyncpa [#allocation29], 1
    %7339 = vsyncpa [#allocation32], 1
  %7340 = vsyncmov [#allocation7]
  %s7341 = vpop.sfrf %7340
  %p7342 = scmp.eq.s32.totalorder %s7341, 0
  %p7343 = pneg %p7342
  %7345 = shalt.err (%p7343)
  %s7346 = scalar_lea.sflag [#allocation7], 1
  %7347 = vsyncmov %s7346
  %s7348 = vpop.sfrf %7347
  %p7349 = scmp.eq.s32.totalorder %s7348, 0
  %p7350 = pneg %p7349
  %7352 = shalt.err (%p7350)
  %s7353 = scalar_lea.sflag [#allocation7], 2
  %7354 = vsyncmov %s7353
  %s7355 = vpop.sfrf %7354
  %p7356 = scmp.eq.s32.totalorder %s7355, 0
  %p7357 = pneg %p7356
  %7359 = shalt.err (%p7357)
  %s7360 = scalar_lea.sflag [#allocation7], 3
  %7361 = vsyncmov %s7360
  %s7362 = vpop.sfrf %7361
  %p7363 = scmp.eq.s32.totalorder %s7362, 0
  %p7364 = pneg %p7363
  %7366 = shalt.err (%p7364)
  %s7367 = scalar_lea.sflag [#allocation7], 4
  %7368 = vsyncmov %s7367
  %s7369 = vpop.sfrf %7368
  %p7370 = scmp.eq.s32.totalorder %s7369, 0
  %p7371 = pneg %p7370
  %7373 = shalt.err (%p7371)

</llo_original>
